<compile_context>
chip_gen: v7x
topology: tpu7x:2x2x1
jax: 0.10.0
libtpu: 0.0.40
codegen_flags: <defaults>
</compile_context>

<pallas_src>
import functools

import jax
import jax.numpy as jnp
from jax import lax
from jax.experimental import pallas as pl
from jax.experimental.pallas import tpu as pltpu

# ---- model constants (from bigram.py) ----
N_EMBED = 384
N_HEAD = 6
HEAD_SIZE = N_EMBED // N_HEAD          # Block overrides head_size -> 64
N_LAYER = 6
BLOCK_SIZE = 256
VOCAB = 65                             # synthetic vocab (len(set(text)))
VOCAB_PAD = 128                        # lane-dense lm_head output
FF = 4 * N_EMBED
EPS = 1e-5
NEG_INF = -1e30


def _use_bf16_exp():
    """bf16 EUP exists on v6e / v7x; keep exp in f32 on v5e and older."""
    try:
        kind = jax.devices()[0].device_kind.lower()
    except Exception:
        return False
    return ("v6" in kind) or ("v7" in kind) or ("7x" in kind)


def _vmem_limit_bytes():
    """Generation-conditional scoped-VMEM limit (review items 9-11).

    Actual need is ~24 MiB (resident weights ~21 MiB + activations/scratch);
    raise the cap on 128 MiB parts (v5e/v6e) for buffering headroom, stay
    conservative on 64 MiB parts (v7x)."""
    try:
        cap = int(pltpu.get_tpu_info().vmem_capacity_bytes)
    except Exception:
        cap = 64 * 1024 * 1024
    return int(min(cap * 0.85, 110 * 1024 * 1024))


def _layernorm(h, w, b):
    mu = jnp.mean(h, axis=-1, keepdims=True)
    var = jnp.mean((h - mu) ** 2, axis=-1, keepdims=True)
    return (h - mu) * lax.rsqrt(var + EPS) * w + b


def transformer_kernel(use_bf16_exp,
                       x_in, ln1w, ln1b, wqkv, wp, bp,
                       ln2w, ln2b, w1, b1, w2, b2,
                       lnfw, lnfb, wh, bh,
                       logits_ref,
                       x_scr, qkv_scr, att_scr, mask_scr):
    layer = pl.program_id(1)
    T = x_scr.shape[0]

    @pl.when(layer == 0)
    def _():
        x_scr[...] = x_in[0]                                        # (T, D)
        # additive causal mask built once per batch step (layer axis is sequential)
        row = lax.broadcasted_iota(jnp.int32, (T, T), 0)
        col = lax.broadcasted_iota(jnp.int32, (T, T), 1)
        mask_scr[...] = jnp.where(col <= row, 0.0, NEG_INF).astype(jnp.float32)

    x = x_scr[...]                                                  # (T, D) f32

    # ---- attention block: x = proj(multihead(ln1(x))) ----
    h = _layernorm(x, ln1w[layer], ln1b[layer]).astype(jnp.bfloat16)
    # fused QKV projection (attention scale folded into the Q columns on host);
    # cast once to bf16 and park in VMEM, slice heads from the ref.
    qkv_scr[...] = jnp.dot(h, wqkv[layer],
                           preferred_element_type=jnp.float32).astype(jnp.bfloat16)
    mask = mask_scr[...]                                            # (T, T) additive

    # heads processed in pairs -> 128-lane-aligned unmasked stores into att_scr
    for pair in range(N_HEAD // 2):
        outs = []
        for hh in (2 * pair, 2 * pair + 1):
            s = hh * HEAD_SIZE
            qh = qkv_scr[:, s:s + HEAD_SIZE]                        # (T, 64) bf16
            kh = qkv_scr[:, N_EMBED + s:N_EMBED + s + HEAD_SIZE]
            vh = qkv_scr[:, 2 * N_EMBED + s:2 * N_EMBED + s + HEAD_SIZE]
            # TODO(synk): audit Mosaic dump for an XLU transpose feeding this QK^T.
            wei = lax.dot_general(qh, kh, (((1,), (1,)), ((), ())),
                                  preferred_element_type=jnp.float32)   # (T, T)
            wei = wei + mask
            wei = wei - jnp.max(wei, axis=-1, keepdims=True)
            exp_in = wei.astype(jnp.bfloat16) if use_bf16_exp else wei
            e = jnp.exp(exp_in)                                     # unnormalized probs
            denom = jnp.sum(e.astype(jnp.float32), axis=-1, keepdims=True)
            # TODO(synk): attention dropout omitted (eval mode)
            out_h = jnp.dot(e.astype(jnp.bfloat16), vh,
                            preferred_element_type=jnp.float32)     # (T, HS) f32
            out_h = out_h * pl.reciprocal(denom, approx=True)       # normalize post-matmul
            outs.append(out_h.astype(jnp.bfloat16))
        off = pair * 2 * HEAD_SIZE
        att_scr[:, off:off + 2 * HEAD_SIZE] = jnp.concatenate(outs, axis=-1)

    x = jnp.dot(att_scr[...], wp[layer],
                preferred_element_type=jnp.float32) + bp[layer]
    # TODO(synk): proj dropout omitted (eval mode)

    # ---- feedforward block: x = ffwd(ln2(x)) ----
    h = _layernorm(x, ln2w[layer], ln2b[layer]).astype(jnp.bfloat16)
    h = jnp.maximum(jnp.dot(h, w1[layer],
                            preferred_element_type=jnp.float32) + b1[layer], 0.0)
    x = jnp.dot(h.astype(jnp.bfloat16), w2[layer],
                preferred_element_type=jnp.float32) + b2[layer]
    # TODO(synk): ffwd dropout omitted (eval mode)

    x_scr[...] = x

    @pl.when(layer == pl.num_programs(1) - 1)
    def _():
        hf = _layernorm(x, lnfw[0], lnfb[0]).astype(jnp.bfloat16)
        logits = jnp.dot(hf, wh[...], preferred_element_type=jnp.float32) + bh[0]
        logits_ref[0] = logits                                      # (T, VOCAB_PAD)


def pack_params(p):
    """Host-side packing: fuse QKV (+fold attention scale), bf16 weights, pad lm_head."""
    scale = jnp.float32(N_EMBED) ** -0.5          # PyTorch Head uses C**-0.5, C=n_embed
    wqkv = jnp.concatenate([p["wq"] * scale, p["wk"], p["wv"]], axis=-1)
    wh_pad = jnp.zeros((N_EMBED, VOCAB_PAD), jnp.float32).at[:, :VOCAB].set(p["wh"])
    bh_pad = jnp.zeros((1, 1, VOCAB_PAD), jnp.float32).at[:, :, :VOCAB].set(p["bh"])
    return dict(
        tok_emb=p["tok_emb"], pos_emb=p["pos_emb"],
        ln1w=p["ln1w"], ln1b=p["ln1b"],
        wqkv=wqkv.astype(jnp.bfloat16),
        wp=p["wp"].astype(jnp.bfloat16), bp=p["bp"],
        ln2w=p["ln2w"], ln2b=p["ln2b"],
        w1=p["w1"].astype(jnp.bfloat16), b1=p["b1"],
        w2=p["w2"].astype(jnp.bfloat16), b2=p["b2"],
        lnfw=p["lnfw"], lnfb=p["lnfb"],
        wh=wh_pad.astype(jnp.bfloat16), bh=bh_pad,
    )


def bigram_forward(packed, idx):
    """Returns (logits (B, T, vocab), loss=None) — matches targets=None path."""
    B, T = idx.shape
    tok = packed["tok_emb"][idx]                 # (B, T, D)  glue: embedding gather
    pos = packed["pos_emb"][:T]                  # (T, D)
    x = (tok + pos[None]).astype(jnp.float32)    # (B, T, D)

    use_bf16_exp = _use_bf16_exp()

    # VMEM-resident (single-buffered, copied HBM->VMEM once per call) operands.
    def resident():
        return pl.BlockSpec(memory_space=pltpu.MemorySpace.VMEM)

    grid_spec = pltpu.PrefetchScalarGridSpec(
        num_scalar_prefetch=0,
        grid=(B, N_LAYER),
        in_specs=[
            pl.BlockSpec((1, T, N_EMBED), lambda b, l: (b, 0, 0)),   # x_in (pipelined)
            resident(), resident(),                                  # ln1 w, b
            resident(),                                              # fused wqkv
            resident(), resident(),                                  # w_proj, b_proj
            resident(), resident(),                                  # ln2 w, b
            resident(), resident(),                                  # w_fc1, b_fc1
            resident(), resident(),                                  # w_fc2, b_fc2
            resident(), resident(),                                  # ln_f w, b
            resident(), resident(),                                  # lm_head W, b (padded)
        ],
        out_specs=pl.BlockSpec((1, T, VOCAB_PAD), lambda b, l: (b, 0, 0)),
        scratch_shapes=[
            pltpu.VMEM((T, N_EMBED), jnp.float32),       # running activation
            pltpu.VMEM((T, 3 * N_EMBED), jnp.bfloat16),  # fused QKV (bf16, cast once)
            pltpu.VMEM((T, N_EMBED), jnp.bfloat16),      # multi-head attention output
            pltpu.VMEM((T, T), jnp.float32),             # additive causal mask
        ],
    )

    # TODO(synk): on v7x, verify the batch axis actually splits across the 2 TCs;
    # pltpu.CORE_PARALLEL could be used there but is kept off for cross-gen safety.
    logits = pl.pallas_call(
        functools.partial(transformer_kernel, use_bf16_exp),
        out_shape=jax.ShapeDtypeStruct((B, T, VOCAB_PAD), jnp.float32),
        grid_spec=grid_spec,
        compiler_params=pltpu.CompilerParams(
            dimension_semantics=("parallel", "arbitrary"),
            vmem_limit_bytes=_vmem_limit_bytes(),
        ),
    )(x,
      packed["ln1w"], packed["ln1b"], packed["wqkv"], packed["wp"], packed["bp"],
      packed["ln2w"], packed["ln2b"],
      packed["w1"], packed["b1"], packed["w2"], packed["b2"],
      packed["lnfw"], packed["lnfb"], packed["wh"], packed["bh"])

    return logits[:, :, :VOCAB], None


def init_params(key):
    ks = jax.random.split(key, 12)
    n = lambda k, s: jax.random.normal(k, s, jnp.float32) * 0.02
    return dict(
        tok_emb=n(ks[0], (VOCAB, N_EMBED)),
        pos_emb=n(ks[1], (BLOCK_SIZE, N_EMBED)),
        ln1w=jnp.ones((N_LAYER, 1, N_EMBED), jnp.float32),
        ln1b=jnp.zeros((N_LAYER, 1, N_EMBED), jnp.float32),
        wq=n(ks[2], (N_LAYER, N_EMBED, N_EMBED)),
        wk=n(ks[3], (N_LAYER, N_EMBED, N_EMBED)),
        wv=n(ks[4], (N_LAYER, N_EMBED, N_EMBED)),
        wp=n(ks[5], (N_LAYER, N_EMBED, N_EMBED)),
        bp=n(ks[6], (N_LAYER, 1, N_EMBED)),
        ln2w=jnp.ones((N_LAYER, 1, N_EMBED), jnp.float32),
        ln2b=jnp.zeros((N_LAYER, 1, N_EMBED), jnp.float32),
        w1=n(ks[7], (N_LAYER, N_EMBED, FF)),
        b1=n(ks[8], (N_LAYER, 1, FF)),
        w2=n(ks[9], (N_LAYER, FF, N_EMBED)),
        b2=n(ks[10], (N_LAYER, 1, N_EMBED)),
        lnfw=jnp.ones((1, 1, N_EMBED), jnp.float32),
        lnfb=jnp.zeros((1, 1, N_EMBED), jnp.float32),
        wh=n(ks[11], (N_EMBED, VOCAB)),
        bh=jnp.zeros((1, 1, VOCAB), jnp.float32),
    )


def reference_forward(params, idx, use_bf16_exp=False):
    """Pure-JAX mirror of the PyTorch forward (eval mode), using the same mixed
    precision as the kernel (bf16 matmul inputs / exp dtype, f32 accumulation)."""
    B, T = idx.shape
    x = (params["tok_emb"][idx] + params["pos_emb"][:T][None]).astype(jnp.float32)
    causal = jnp.tril(jnp.ones((T, T), bool))
    scale = jnp.float32(N_EMBED) ** -0.5

    def mm(a, w):
        return jnp.dot(a.astype(jnp.bfloat16), w.astype(jnp.bfloat16),
                       preferred_element_type=jnp.float32)

    def ln(h, w, b):
        mu = h.mean(-1, keepdims=True)
        var = ((h - mu) ** 2).mean(-1, keepdims=True)
        return (h - mu) * lax.rsqrt(var + EPS) * w.reshape(-1) + b.reshape(-1)

    for l in range(N_LAYER):
        h = ln(x, params["ln1w"][l], params["ln1b"][l])
        q = mm(h, params["wq"][l] * scale).reshape(B, T, N_HEAD, HEAD_SIZE)
        k = mm(h, params["wk"][l]).reshape(B, T, N_HEAD, HEAD_SIZE)
        v = mm(h, params["wv"][l]).reshape(B, T, N_HEAD, HEAD_SIZE)
        wei = jnp.einsum("bthd,bshd->bhts",
                         q.astype(jnp.bfloat16), k.astype(jnp.bfloat16),
                         preferred_element_type=jnp.float32)
        wei = jnp.where(causal[None, None], wei, NEG_INF)
        wei = wei - wei.max(-1, keepdims=True)
        e = jnp.exp(wei.astype(jnp.bfloat16)).astype(jnp.float32) if use_bf16_exp \
            else jnp.exp(wei)
        p = e / e.sum(-1, keepdims=True)
        att = jnp.einsum("bhts,bshd->bthd",
                         p.astype(jnp.bfloat16), v.astype(jnp.bfloat16),
                         preferred_element_type=jnp.float32).reshape(B, T, N_EMBED)
        x = mm(att, params["wp"][l]) + params["bp"][l].reshape(-1)
        h = ln(x, params["ln2w"][l], params["ln2b"][l])
        h = jax.nn.relu(mm(h, params["w1"][l]) + params["b1"][l].reshape(-1))
        x = mm(h, params["w2"][l]) + params["b2"][l].reshape(-1)
    x = ln(x, params["lnfw"][0], params["lnfb"][0])
    return mm(x, params["wh"]) + params["bh"].reshape(-1)


if __name__ == "__main__":
    key = jax.random.PRNGKey(0)
    k_idx, k_params = jax.random.split(key)
    B, T = 2, 8
    idx = jax.random.randint(k_idx, (B, T), 0, VOCAB, dtype=jnp.int32)
    params = init_params(k_params)
    packed = pack_params(params)

    logits, loss = jax.jit(bigram_forward)(packed, idx)
    logits = jax.block_until_ready(logits)

    ref = reference_forward(params, idx, use_bf16_exp=_use_bf16_exp())
    assert logits.shape == (B, T, VOCAB)
    assert loss is None
    assert jnp.all(jnp.isfinite(logits))
    assert jnp.allclose(logits, ref, atol=2e-2, rtol=2e-2)
    print("KERNEL_OK")
</pallas_src>

<mosaic_0001>
module attributes {stable_mosaic.version = 11 : i64} {
  func.func @transformer_kernel(%arg0: i32, %arg1: i32, %arg2: memref<1x8x384xf32, #tpu.memory_space<vmem>>, %arg3: memref<6x1x384xf32, #tpu.memory_space<vmem>>, %arg4: memref<6x1x384xf32, #tpu.memory_space<vmem>>, %arg5: memref<6x384x1152xbf16, #tpu.memory_space<vmem>>, %arg6: memref<6x384x384xbf16, #tpu.memory_space<vmem>>, %arg7: memref<6x1x384xf32, #tpu.memory_space<vmem>>, %arg8: memref<6x1x384xf32, #tpu.memory_space<vmem>>, %arg9: memref<6x1x384xf32, #tpu.memory_space<vmem>>, %arg10: memref<6x384x1536xbf16, #tpu.memory_space<vmem>>, %arg11: memref<6x1x1536xf32, #tpu.memory_space<vmem>>, %arg12: memref<6x1536x384xbf16, #tpu.memory_space<vmem>>, %arg13: memref<6x1x384xf32, #tpu.memory_space<vmem>>, %arg14: memref<1x1x384xf32, #tpu.memory_space<vmem>>, %arg15: memref<1x1x384xf32, #tpu.memory_space<vmem>>, %arg16: memref<384x128xbf16, #tpu.memory_space<vmem>>, %arg17: memref<1x1x128xf32, #tpu.memory_space<vmem>>, %arg18: memref<1x8x128xf32, #tpu.memory_space<vmem>>, %arg19: memref<8x384xf32, #tpu.memory_space<vmem>>, %arg20: memref<8x1152xbf16, #tpu.memory_space<vmem>>, %arg21: memref<8x384xbf16, #tpu.memory_space<vmem>>, %arg22: memref<8x8xf32, #tpu.memory_space<vmem>>) attributes {dimension_semantics = [#tpu.dimension_semantics<parallel>, #tpu.dimension_semantics<arbitrary>], iteration_bounds = array<i64: 2, 6>, scalar_prefetch = 0 : i64, scratch_operands = 4 : i64, tpu.core_type = #tpu.core_type<tc>, window_params = [{transform_indices = @transform_0, window_bounds = array<i64: 1, 8, 384>}, {pipeline_mode = #tpu.pipeline_mode<synchronous>, transform_indices = @transform_1, window_bounds = array<i64: 6, 1, 384>}, {pipeline_mode = #tpu.pipeline_mode<synchronous>, transform_indices = @transform_2, window_bounds = array<i64: 6, 1, 384>}, {pipeline_mode = #tpu.pipeline_mode<synchronous>, transform_indices = @transform_3, window_bounds = array<i64: 6, 384, 1152>}, {pipeline_mode = #tpu.pipeline_mode<synchronous>, transform_indices = @transform_4, window_bounds = array<i64: 6, 384, 384>}, {pipeline_mode = #tpu.pipeline_mode<synchronous>, transform_indices = @transform_5, window_bounds = array<i64: 6, 1, 384>}, {pipeline_mode = #tpu.pipeline_mode<synchronous>, transform_indices = @transform_6, window_bounds = array<i64: 6, 1, 384>}, {pipeline_mode = #tpu.pipeline_mode<synchronous>, transform_indices = @transform_7, window_bounds = array<i64: 6, 1, 384>}, {pipeline_mode = #tpu.pipeline_mode<synchronous>, transform_indices = @transform_8, window_bounds = array<i64: 6, 384, 1536>}, {pipeline_mode = #tpu.pipeline_mode<synchronous>, transform_indices = @transform_9, window_bounds = array<i64: 6, 1, 1536>}, {pipeline_mode = #tpu.pipeline_mode<synchronous>, transform_indices = @transform_10, window_bounds = array<i64: 6, 1536, 384>}, {pipeline_mode = #tpu.pipeline_mode<synchronous>, transform_indices = @transform_11, window_bounds = array<i64: 6, 1, 384>}, {pipeline_mode = #tpu.pipeline_mode<synchronous>, transform_indices = @transform_12, window_bounds = array<i64: 1, 1, 384>}, {pipeline_mode = #tpu.pipeline_mode<synchronous>, transform_indices = @transform_13, window_bounds = array<i64: 1, 1, 384>}, {pipeline_mode = #tpu.pipeline_mode<synchronous>, transform_indices = @transform_14, window_bounds = array<i64: 384, 128>}, {pipeline_mode = #tpu.pipeline_mode<synchronous>, transform_indices = @transform_15, window_bounds = array<i64: 1, 1, 128>}, {transform_indices = @transform_16, window_bounds = array<i64: 1, 8, 128>}]} {
    %c0_i32 = arith.constant 0 : i32
    %0 = arith.cmpi eq, %arg1, %c0_i32 : i32
    %1 = arith.extui %0 : i1 to i32
    %c0_i32_0 = arith.constant 0 : i32
    %2 = arith.cmpi ne, %1, %c0_i32_0 : i32
    scf.if %2 {
      %c0_96 = arith.constant 0 : index
      %c0_97 = arith.constant 0 : index
      %c0_98 = arith.constant 0 : index
      %218 = vector.load %arg2[%c0_96, %c0_97, %c0_98] : memref<1x8x384xf32, #tpu.memory_space<vmem>>, vector<1x8x384xf32>
      %219 = vector.shape_cast %218 : vector<1x8x384xf32> to vector<8x384xf32>
      %c0_99 = arith.constant 0 : index
      %c0_100 = arith.constant 0 : index
      %220 = vector.load %arg19[%c0_99, %c0_100] : memref<8x384xf32, #tpu.memory_space<vmem>>, vector<8x384xf32>
      tpu.vector_store %arg19[%c0_99, %c0_100], %219 {strides = array<i32>} : memref<8x384xf32, #tpu.memory_space<vmem>>, vector<8x384xf32>,
      %221 = tpu.iota {dimensions = array<i32: 0>} : vector<8x8xi32>
      %222 = tpu.iota {dimensions = array<i32: 1>} : vector<8x8xi32>
      %223 = arith.cmpi sle, %222, %221 : vector<8x8xi32>
      %cst_101 = arith.constant 0.000000e+00 : f32
      %cst_102 = arith.constant -1.000000e+30 : f32
      %224 = vector.broadcast %cst_101 : f32 to vector<8x8xf32>
      %225 = vector.broadcast %cst_102 : f32 to vector<8x8xf32>
      %226 = arith.select %223, %224, %225 : vector<8x8xi1>, vector<8x8xf32>
      %c0_103 = arith.constant 0 : index
      %c0_104 = arith.constant 0 : index
      %227 = vector.load %arg22[%c0_103, %c0_104] : memref<8x8xf32, #tpu.memory_space<vmem>>, vector<8x8xf32>
      tpu.vector_store %arg22[%c0_103, %c0_104], %226 {strides = array<i32>} : memref<8x8xf32, #tpu.memory_space<vmem>>, vector<8x8xf32>,
    } else {
    }
    %c0 = arith.constant 0 : index
    %c0_1 = arith.constant 0 : index
    %3 = vector.load %arg19[%c0, %c0_1] : memref<8x384xf32, #tpu.memory_space<vmem>>, vector<8x384xf32>
    %4 = arith.index_cast %arg1 : i32 to index
    %c0_2 = arith.constant 0 : index
    %c0_3 = arith.constant 0 : index
    %5 = vector.load %arg3[%4, %c0_2, %c0_3] : memref<6x1x384xf32, #tpu.memory_space<vmem>>, vector<1x1x384xf32>
    %6 = vector.shape_cast %5 : vector<1x1x384xf32> to vector<1x384xf32>
    %7 = arith.index_cast %arg1 : i32 to index
    %c0_4 = arith.constant 0 : index
    %c0_5 = arith.constant 0 : index
    %8 = vector.load %arg4[%7, %c0_4, %c0_5] : memref<6x1x384xf32, #tpu.memory_space<vmem>>, vector<1x1x384xf32>
    %9 = vector.shape_cast %8 : vector<1x1x384xf32> to vector<1x384xf32>
    %cst = arith.constant dense<0.000000e+00> : vector<8xf32>
    %10 = vector.multi_reduction <add>, %3, %cst [1] : vector<8x384xf32> to vector<8xf32>
    %11 = vector.shape_cast %10 : vector<8xf32> to vector<8x1xf32>
    %cst_6 = arith.constant 3.840000e+02 : f32
    %12 = vector.broadcast %cst_6 : f32 to vector<8x1xf32>
    %13 = arith.divf %11, %12 : vector<8x1xf32>
    %14 = vector.broadcast %13 : vector<8x1xf32> to vector<8x384xf32>
    %15 = arith.subf %3, %14 : vector<8x384xf32>
    %16 = arith.mulf %15, %15 : vector<8x384xf32>
    %cst_7 = arith.constant dense<0.000000e+00> : vector<8xf32>
    %17 = vector.multi_reduction <add>, %16, %cst_7 [1] : vector<8x384xf32> to vector<8xf32>
    %18 = vector.shape_cast %17 : vector<8xf32> to vector<8x1xf32>
    %cst_8 = arith.constant 3.840000e+02 : f32
    %19 = vector.broadcast %cst_8 : f32 to vector<8x1xf32>
    %20 = arith.divf %18, %19 : vector<8x1xf32>
    %21 = vector.broadcast %13 : vector<8x1xf32> to vector<8x384xf32>
    %22 = arith.subf %3, %21 : vector<8x384xf32>
    %cst_9 = arith.constant 9.99999974E-6 : f32
    %23 = vector.broadcast %cst_9 : f32 to vector<8x1xf32>
    %24 = arith.addf %20, %23 : vector<8x1xf32>
    %25 = math.rsqrt %24 : vector<8x1xf32>
    %26 = vector.broadcast %25 : vector<8x1xf32> to vector<8x384xf32>
    %27 = arith.mulf %22, %26 : vector<8x384xf32>
    %28 = vector.broadcast %6 : vector<1x384xf32> to vector<8x384xf32>
    %29 = arith.mulf %27, %28 : vector<8x384xf32>
    %30 = vector.broadcast %9 : vector<1x384xf32> to vector<8x384xf32>
    %31 = arith.addf %29, %30 : vector<8x384xf32>
    %32 = arith.truncf %31 : vector<8x384xf32> to vector<8x384xbf16>
    %33 = arith.index_cast %arg1 : i32 to index
    %c0_10 = arith.constant 0 : index
    %c0_11 = arith.constant 0 : index
    %34 = vector.load %arg5[%33, %c0_10, %c0_11] : memref<6x384x1152xbf16, #tpu.memory_space<vmem>>, vector<1x384x1152xbf16>
    %35 = vector.shape_cast %34 : vector<1x384x1152xbf16> to vector<384x1152xbf16>
    %cst_12 = arith.constant dense<0.000000e+00> : vector<8x1152xf32>
    %36 = tpu.matmul %32, %35, %cst_12 {dimension_numbers = #tpu.dot_dimension_numbers<[1], [0], [0], [1], [0, 0, 1, 1], [], []>} : vector<8x384xbf16>, vector<384x1152xbf16>, vector<8x1152xf32> -> vector<8x1152xf32>
    %37 = arith.truncf %36 : vector<8x1152xf32> to vector<8x1152xbf16>
    %c0_13 = arith.constant 0 : index
    %c0_14 = arith.constant 0 : index
    %38 = vector.load %arg20[%c0_13, %c0_14] : memref<8x1152xbf16, #tpu.memory_space<vmem>>, vector<8x1152xbf16>
    tpu.vector_store %arg20[%c0_13, %c0_14], %37 {strides = array<i32>} : memref<8x1152xbf16, #tpu.memory_space<vmem>>, vector<8x1152xbf16>,
    %c0_15 = arith.constant 0 : index
    %c0_16 = arith.constant 0 : index
    %39 = vector.load %arg22[%c0_15, %c0_16] : memref<8x8xf32, #tpu.memory_space<vmem>>, vector<8x8xf32>
    %c0_17 = arith.constant 0 : index
    %c0_18 = arith.constant 0 : index
    %40 = vector.load %arg20[%c0_17, %c0_18] : memref<8x1152xbf16, #tpu.memory_space<vmem>>, vector<8x64xbf16>
    %c0_19 = arith.constant 0 : index
    %c384 = arith.constant 384 : index
    %41 = vector.load %arg20[%c0_19, %c384] : memref<8x1152xbf16, #tpu.memory_space<vmem>>, vector<8x64xbf16>
    %c0_20 = arith.constant 0 : index
    %c768 = arith.constant 768 : index
    %42 = vector.load %arg20[%c0_20, %c768] : memref<8x1152xbf16, #tpu.memory_space<vmem>>, vector<8x64xbf16>
    %cst_21 = arith.constant dense<0.000000e+00> : vector<8x8xf32>
    %43 = tpu.matmul %40, %41, %cst_21 {dimension_numbers = #tpu.dot_dimension_numbers<[1], [1], [0], [0], [0, 0, 1, 0], [], []>} : vector<8x64xbf16>, vector<8x64xbf16>, vector<8x8xf32> -> vector<8x8xf32>
    %44 = arith.addf %43, %39 : vector<8x8xf32>
    %cst_22 = arith.constant dense<0xFF800000> : vector<8xf32>
    %45 = vector.multi_reduction <maximumf>, %44, %cst_22 [1] : vector<8x8xf32> to vector<8xf32>
    %46 = vector.shape_cast %45 : vector<8xf32> to vector<8x1xf32>
    %47 = vector.broadcast %46 : vector<8x1xf32> to vector<8x8xf32>
    %48 = arith.subf %44, %47 : vector<8x8xf32>
    %49 = math.exp %48 : vector<8x8xf32>
    %cst_23 = arith.constant dense<0.000000e+00> : vector<8xf32>
    %50 = vector.multi_reduction <add>, %49, %cst_23 [1] : vector<8x8xf32> to vector<8xf32>
    %51 = vector.shape_cast %50 : vector<8xf32> to vector<8x1xf32>
    %52 = arith.truncf %49 : vector<8x8xf32> to vector<8x8xbf16>
    %cst_24 = arith.constant dense<0.000000e+00> : vector<8x64xf32>
    %53 = tpu.matmul %52, %42, %cst_24 {dimension_numbers = #tpu.dot_dimension_numbers<[1], [0], [0], [1], [0, 0, 1, 1], [], []>} : vector<8x8xbf16>, vector<8x64xbf16>, vector<8x64xf32> -> vector<8x64xf32>
    %54 = tpu.reciprocal %51 {approx = true} : vector<8x1xf32> -> vector<8x1xf32>
    %55 = vector.broadcast %54 : vector<8x1xf32> to vector<8x64xf32>
    %56 = arith.mulf %53, %55 : vector<8x64xf32>
    %57 = arith.truncf %56 : vector<8x64xf32> to vector<8x64xbf16>
    %c0_25 = arith.constant 0 : index
    %c64 = arith.constant 64 : index
    %58 = vector.load %arg20[%c0_25, %c64] : memref<8x1152xbf16, #tpu.memory_space<vmem>>, vector<8x64xbf16>
    %c0_26 = arith.constant 0 : index
    %c448 = arith.constant 448 : index
    %59 = vector.load %arg20[%c0_26, %c448] : memref<8x1152xbf16, #tpu.memory_space<vmem>>, vector<8x64xbf16>
    %c0_27 = arith.constant 0 : index
    %c832 = arith.constant 832 : index
    %60 = vector.load %arg20[%c0_27, %c832] : memref<8x1152xbf16, #tpu.memory_space<vmem>>, vector<8x64xbf16>
    %cst_28 = arith.constant dense<0.000000e+00> : vector<8x8xf32>
    %61 = tpu.matmul %58, %59, %cst_28 {dimension_numbers = #tpu.dot_dimension_numbers<[1], [1], [0], [0], [0, 0, 1, 0], [], []>} : vector<8x64xbf16>, vector<8x64xbf16>, vector<8x8xf32> -> vector<8x8xf32>
    %62 = arith.addf %61, %39 : vector<8x8xf32>
    %cst_29 = arith.constant dense<0xFF800000> : vector<8xf32>
    %63 = vector.multi_reduction <maximumf>, %62, %cst_29 [1] : vector<8x8xf32> to vector<8xf32>
    %64 = vector.shape_cast %63 : vector<8xf32> to vector<8x1xf32>
    %65 = vector.broadcast %64 : vector<8x1xf32> to vector<8x8xf32>
    %66 = arith.subf %62, %65 : vector<8x8xf32>
    %67 = math.exp %66 : vector<8x8xf32>
    %cst_30 = arith.constant dense<0.000000e+00> : vector<8xf32>
    %68 = vector.multi_reduction <add>, %67, %cst_30 [1] : vector<8x8xf32> to vector<8xf32>
    %69 = vector.shape_cast %68 : vector<8xf32> to vector<8x1xf32>
    %70 = arith.truncf %67 : vector<8x8xf32> to vector<8x8xbf16>
    %cst_31 = arith.constant dense<0.000000e+00> : vector<8x64xf32>
    %71 = tpu.matmul %70, %60, %cst_31 {dimension_numbers = #tpu.dot_dimension_numbers<[1], [0], [0], [1], [0, 0, 1, 1], [], []>} : vector<8x8xbf16>, vector<8x64xbf16>, vector<8x64xf32> -> vector<8x64xf32>
    %72 = tpu.reciprocal %69 {approx = true} : vector<8x1xf32> -> vector<8x1xf32>
    %73 = vector.broadcast %72 : vector<8x1xf32> to vector<8x64xf32>
    %74 = arith.mulf %71, %73 : vector<8x64xf32>
    %75 = arith.truncf %74 : vector<8x64xf32> to vector<8x64xbf16>
    %76 = tpu.concatenate %57, %75 in 1 : vector<8x64xbf16>, vector<8x64xbf16> -> vector<8x128xbf16>
    %c0_32 = arith.constant 0 : index
    %c0_33 = arith.constant 0 : index
    %77 = vector.load %arg21[%c0_32, %c0_33] : memref<8x384xbf16, #tpu.memory_space<vmem>>, vector<8x128xbf16>
    tpu.vector_store %arg21[%c0_32, %c0_33], %76 {strides = array<i32>} : memref<8x384xbf16, #tpu.memory_space<vmem>>, vector<8x128xbf16>,
    %c0_34 = arith.constant 0 : index
    %c128 = arith.constant 128 : index
    %78 = vector.load %arg20[%c0_34, %c128] : memref<8x1152xbf16, #tpu.memory_space<vmem>>, vector<8x64xbf16>
    %c0_35 = arith.constant 0 : index
    %c512 = arith.constant 512 : index
    %79 = vector.load %arg20[%c0_35, %c512] : memref<8x1152xbf16, #tpu.memory_space<vmem>>, vector<8x64xbf16>
    %c0_36 = arith.constant 0 : index
    %c896 = arith.constant 896 : index
    %80 = vector.load %arg20[%c0_36, %c896] : memref<8x1152xbf16, #tpu.memory_space<vmem>>, vector<8x64xbf16>
    %cst_37 = arith.constant dense<0.000000e+00> : vector<8x8xf32>
    %81 = tpu.matmul %78, %79, %cst_37 {dimension_numbers = #tpu.dot_dimension_numbers<[1], [1], [0], [0], [0, 0, 1, 0], [], []>} : vector<8x64xbf16>, vector<8x64xbf16>, vector<8x8xf32> -> vector<8x8xf32>
    %82 = arith.addf %81, %39 : vector<8x8xf32>
    %cst_38 = arith.constant dense<0xFF800000> : vector<8xf32>
    %83 = vector.multi_reduction <maximumf>, %82, %cst_38 [1] : vector<8x8xf32> to vector<8xf32>
    %84 = vector.shape_cast %83 : vector<8xf32> to vector<8x1xf32>
    %85 = vector.broadcast %84 : vector<8x1xf32> to vector<8x8xf32>
    %86 = arith.subf %82, %85 : vector<8x8xf32>
    %87 = math.exp %86 : vector<8x8xf32>
    %cst_39 = arith.constant dense<0.000000e+00> : vector<8xf32>
    %88 = vector.multi_reduction <add>, %87, %cst_39 [1] : vector<8x8xf32> to vector<8xf32>
    %89 = vector.shape_cast %88 : vector<8xf32> to vector<8x1xf32>
    %90 = arith.truncf %87 : vector<8x8xf32> to vector<8x8xbf16>
    %cst_40 = arith.constant dense<0.000000e+00> : vector<8x64xf32>
    %91 = tpu.matmul %90, %80, %cst_40 {dimension_numbers = #tpu.dot_dimension_numbers<[1], [0], [0], [1], [0, 0, 1, 1], [], []>} : vector<8x8xbf16>, vector<8x64xbf16>, vector<8x64xf32> -> vector<8x64xf32>
    %92 = tpu.reciprocal %89 {approx = true} : vector<8x1xf32> -> vector<8x1xf32>
    %93 = vector.broadcast %92 : vector<8x1xf32> to vector<8x64xf32>
    %94 = arith.mulf %91, %93 : vector<8x64xf32>
    %95 = arith.truncf %94 : vector<8x64xf32> to vector<8x64xbf16>
    %c0_41 = arith.constant 0 : index
    %c192 = arith.constant 192 : index
    %96 = vector.load %arg20[%c0_41, %c192] : memref<8x1152xbf16, #tpu.memory_space<vmem>>, vector<8x64xbf16>
    %c0_42 = arith.constant 0 : index
    %c576 = arith.constant 576 : index
    %97 = vector.load %arg20[%c0_42, %c576] : memref<8x1152xbf16, #tpu.memory_space<vmem>>, vector<8x64xbf16>
    %c0_43 = arith.constant 0 : index
    %c960 = arith.constant 960 : index
    %98 = vector.load %arg20[%c0_43, %c960] : memref<8x1152xbf16, #tpu.memory_space<vmem>>, vector<8x64xbf16>
    %cst_44 = arith.constant dense<0.000000e+00> : vector<8x8xf32>
    %99 = tpu.matmul %96, %97, %cst_44 {dimension_numbers = #tpu.dot_dimension_numbers<[1], [1], [0], [0], [0, 0, 1, 0], [], []>} : vector<8x64xbf16>, vector<8x64xbf16>, vector<8x8xf32> -> vector<8x8xf32>
    %100 = arith.addf %99, %39 : vector<8x8xf32>
    %cst_45 = arith.constant dense<0xFF800000> : vector<8xf32>
    %101 = vector.multi_reduction <maximumf>, %100, %cst_45 [1] : vector<8x8xf32> to vector<8xf32>
    %102 = vector.shape_cast %101 : vector<8xf32> to vector<8x1xf32>
    %103 = vector.broadcast %102 : vector<8x1xf32> to vector<8x8xf32>
    %104 = arith.subf %100, %103 : vector<8x8xf32>
    %105 = math.exp %104 : vector<8x8xf32>
    %cst_46 = arith.constant dense<0.000000e+00> : vector<8xf32>
    %106 = vector.multi_reduction <add>, %105, %cst_46 [1] : vector<8x8xf32> to vector<8xf32>
    %107 = vector.shape_cast %106 : vector<8xf32> to vector<8x1xf32>
    %108 = arith.truncf %105 : vector<8x8xf32> to vector<8x8xbf16>
    %cst_47 = arith.constant dense<0.000000e+00> : vector<8x64xf32>
    %109 = tpu.matmul %108, %98, %cst_47 {dimension_numbers = #tpu.dot_dimension_numbers<[1], [0], [0], [1], [0, 0, 1, 1], [], []>} : vector<8x8xbf16>, vector<8x64xbf16>, vector<8x64xf32> -> vector<8x64xf32>
    %110 = tpu.reciprocal %107 {approx = true} : vector<8x1xf32> -> vector<8x1xf32>
    %111 = vector.broadcast %110 : vector<8x1xf32> to vector<8x64xf32>
    %112 = arith.mulf %109, %111 : vector<8x64xf32>
    %113 = arith.truncf %112 : vector<8x64xf32> to vector<8x64xbf16>
    %114 = tpu.concatenate %95, %113 in 1 : vector<8x64xbf16>, vector<8x64xbf16> -> vector<8x128xbf16>
    %c0_48 = arith.constant 0 : index
    %c128_49 = arith.constant 128 : index
    %115 = vector.load %arg21[%c0_48, %c128_49] : memref<8x384xbf16, #tpu.memory_space<vmem>>, vector<8x128xbf16>
    tpu.vector_store %arg21[%c0_48, %c128_49], %114 {strides = array<i32>} : memref<8x384xbf16, #tpu.memory_space<vmem>>, vector<8x128xbf16>,
    %c0_50 = arith.constant 0 : index
    %c256 = arith.constant 256 : index
    %116 = vector.load %arg20[%c0_50, %c256] : memref<8x1152xbf16, #tpu.memory_space<vmem>>, vector<8x64xbf16>
    %c0_51 = arith.constant 0 : index
    %c640 = arith.constant 640 : index
    %117 = vector.load %arg20[%c0_51, %c640] : memref<8x1152xbf16, #tpu.memory_space<vmem>>, vector<8x64xbf16>
    %c0_52 = arith.constant 0 : index
    %c1024 = arith.constant 1024 : index
    %118 = vector.load %arg20[%c0_52, %c1024] : memref<8x1152xbf16, #tpu.memory_space<vmem>>, vector<8x64xbf16>
    %cst_53 = arith.constant dense<0.000000e+00> : vector<8x8xf32>
    %119 = tpu.matmul %116, %117, %cst_53 {dimension_numbers = #tpu.dot_dimension_numbers<[1], [1], [0], [0], [0, 0, 1, 0], [], []>} : vector<8x64xbf16>, vector<8x64xbf16>, vector<8x8xf32> -> vector<8x8xf32>
    %120 = arith.addf %119, %39 : vector<8x8xf32>
    %cst_54 = arith.constant dense<0xFF800000> : vector<8xf32>
    %121 = vector.multi_reduction <maximumf>, %120, %cst_54 [1] : vector<8x8xf32> to vector<8xf32>
    %122 = vector.shape_cast %121 : vector<8xf32> to vector<8x1xf32>
    %123 = vector.broadcast %122 : vector<8x1xf32> to vector<8x8xf32>
    %124 = arith.subf %120, %123 : vector<8x8xf32>
    %125 = math.exp %124 : vector<8x8xf32>
    %cst_55 = arith.constant dense<0.000000e+00> : vector<8xf32>
    %126 = vector.multi_reduction <add>, %125, %cst_55 [1] : vector<8x8xf32> to vector<8xf32>
    %127 = vector.shape_cast %126 : vector<8xf32> to vector<8x1xf32>
    %128 = arith.truncf %125 : vector<8x8xf32> to vector<8x8xbf16>
    %cst_56 = arith.constant dense<0.000000e+00> : vector<8x64xf32>
    %129 = tpu.matmul %128, %118, %cst_56 {dimension_numbers = #tpu.dot_dimension_numbers<[1], [0], [0], [1], [0, 0, 1, 1], [], []>} : vector<8x8xbf16>, vector<8x64xbf16>, vector<8x64xf32> -> vector<8x64xf32>
    %130 = tpu.reciprocal %127 {approx = true} : vector<8x1xf32> -> vector<8x1xf32>
    %131 = vector.broadcast %130 : vector<8x1xf32> to vector<8x64xf32>
    %132 = arith.mulf %129, %131 : vector<8x64xf32>
    %133 = arith.truncf %132 : vector<8x64xf32> to vector<8x64xbf16>
    %c0_57 = arith.constant 0 : index
    %c320 = arith.constant 320 : index
    %134 = vector.load %arg20[%c0_57, %c320] : memref<8x1152xbf16, #tpu.memory_space<vmem>>, vector<8x64xbf16>
    %c0_58 = arith.constant 0 : index
    %c704 = arith.constant 704 : index
    %135 = vector.load %arg20[%c0_58, %c704] : memref<8x1152xbf16, #tpu.memory_space<vmem>>, vector<8x64xbf16>
    %c0_59 = arith.constant 0 : index
    %c1088 = arith.constant 1088 : index
    %136 = vector.load %arg20[%c0_59, %c1088] : memref<8x1152xbf16, #tpu.memory_space<vmem>>, vector<8x64xbf16>
    %cst_60 = arith.constant dense<0.000000e+00> : vector<8x8xf32>
    %137 = tpu.matmul %134, %135, %cst_60 {dimension_numbers = #tpu.dot_dimension_numbers<[1], [1], [0], [0], [0, 0, 1, 0], [], []>} : vector<8x64xbf16>, vector<8x64xbf16>, vector<8x8xf32> -> vector<8x8xf32>
    %138 = arith.addf %137, %39 : vector<8x8xf32>
    %cst_61 = arith.constant dense<0xFF800000> : vector<8xf32>
    %139 = vector.multi_reduction <maximumf>, %138, %cst_61 [1] : vector<8x8xf32> to vector<8xf32>
    %140 = vector.shape_cast %139 : vector<8xf32> to vector<8x1xf32>
    %141 = vector.broadcast %140 : vector<8x1xf32> to vector<8x8xf32>
    %142 = arith.subf %138, %141 : vector<8x8xf32>
    %143 = math.exp %142 : vector<8x8xf32>
    %cst_62 = arith.constant dense<0.000000e+00> : vector<8xf32>
    %144 = vector.multi_reduction <add>, %143, %cst_62 [1] : vector<8x8xf32> to vector<8xf32>
    %145 = vector.shape_cast %144 : vector<8xf32> to vector<8x1xf32>
    %146 = arith.truncf %143 : vector<8x8xf32> to vector<8x8xbf16>
    %cst_63 = arith.constant dense<0.000000e+00> : vector<8x64xf32>
    %147 = tpu.matmul %146, %136, %cst_63 {dimension_numbers = #tpu.dot_dimension_numbers<[1], [0], [0], [1], [0, 0, 1, 1], [], []>} : vector<8x8xbf16>, vector<8x64xbf16>, vector<8x64xf32> -> vector<8x64xf32>
    %148 = tpu.reciprocal %145 {approx = true} : vector<8x1xf32> -> vector<8x1xf32>
    %149 = vector.broadcast %148 : vector<8x1xf32> to vector<8x64xf32>
    %150 = arith.mulf %147, %149 : vector<8x64xf32>
    %151 = arith.truncf %150 : vector<8x64xf32> to vector<8x64xbf16>
    %152 = tpu.concatenate %133, %151 in 1 : vector<8x64xbf16>, vector<8x64xbf16> -> vector<8x128xbf16>
    %c0_64 = arith.constant 0 : index
    %c256_65 = arith.constant 256 : index
    %153 = vector.load %arg21[%c0_64, %c256_65] : memref<8x384xbf16, #tpu.memory_space<vmem>>, vector<8x128xbf16>
    tpu.vector_store %arg21[%c0_64, %c256_65], %152 {strides = array<i32>} : memref<8x384xbf16, #tpu.memory_space<vmem>>, vector<8x128xbf16>,
    %c0_66 = arith.constant 0 : index
    %c0_67 = arith.constant 0 : index
    %154 = vector.load %arg21[%c0_66, %c0_67] : memref<8x384xbf16, #tpu.memory_space<vmem>>, vector<8x384xbf16>
    %155 = arith.index_cast %arg1 : i32 to index
    %c0_68 = arith.constant 0 : index
    %c0_69 = arith.constant 0 : index
    %156 = vector.load %arg6[%155, %c0_68, %c0_69] : memref<6x384x384xbf16, #tpu.memory_space<vmem>>, vector<1x384x384xbf16>
    %157 = vector.shape_cast %156 : vector<1x384x384xbf16> to vector<384x384xbf16>
    %cst_70 = arith.constant dense<0.000000e+00> : vector<8x384xf32>
    %158 = tpu.matmul %154, %157, %cst_70 {dimension_numbers = #tpu.dot_dimension_numbers<[1], [0], [0], [1], [0, 0, 1, 1], [], []>} : vector<8x384xbf16>, vector<384x384xbf16>, vector<8x384xf32> -> vector<8x384xf32>
    %159 = arith.index_cast %arg1 : i32 to index
    %c0_71 = arith.constant 0 : index
    %c0_72 = arith.constant 0 : index
    %160 = vector.load %arg7[%159, %c0_71, %c0_72] : memref<6x1x384xf32, #tpu.memory_space<vmem>>, vector<1x1x384xf32>
    %161 = vector.shape_cast %160 : vector<1x1x384xf32> to vector<1x384xf32>
    %162 = vector.broadcast %161 : vector<1x384xf32> to vector<8x384xf32>
    %163 = arith.addf %158, %162 : vector<8x384xf32>
    %164 = arith.index_cast %arg1 : i32 to index
    %c0_73 = arith.constant 0 : index
    %c0_74 = arith.constant 0 : index
    %165 = vector.load %arg8[%164, %c0_73, %c0_74] : memref<6x1x384xf32, #tpu.memory_space<vmem>>, vector<1x1x384xf32>
    %166 = vector.shape_cast %165 : vector<1x1x384xf32> to vector<1x384xf32>
    %167 = arith.index_cast %arg1 : i32 to index
    %c0_75 = arith.constant 0 : index
    %c0_76 = arith.constant 0 : index
    %168 = vector.load %arg9[%167, %c0_75, %c0_76] : memref<6x1x384xf32, #tpu.memory_space<vmem>>, vector<1x1x384xf32>
    %169 = vector.shape_cast %168 : vector<1x1x384xf32> to vector<1x384xf32>
    %cst_77 = arith.constant dense<0.000000e+00> : vector<8xf32>
    %170 = vector.multi_reduction <add>, %163, %cst_77 [1] : vector<8x384xf32> to vector<8xf32>
    %171 = vector.shape_cast %170 : vector<8xf32> to vector<8x1xf32>
    %cst_78 = arith.constant 3.840000e+02 : f32
    %172 = vector.broadcast %cst_78 : f32 to vector<8x1xf32>
    %173 = arith.divf %171, %172 : vector<8x1xf32>
    %174 = vector.broadcast %173 : vector<8x1xf32> to vector<8x384xf32>
    %175 = arith.subf %163, %174 : vector<8x384xf32>
    %176 = arith.mulf %175, %175 : vector<8x384xf32>
    %cst_79 = arith.constant dense<0.000000e+00> : vector<8xf32>
    %177 = vector.multi_reduction <add>, %176, %cst_79 [1] : vector<8x384xf32> to vector<8xf32>
    %178 = vector.shape_cast %177 : vector<8xf32> to vector<8x1xf32>
    %cst_80 = arith.constant 3.840000e+02 : f32
    %179 = vector.broadcast %cst_80 : f32 to vector<8x1xf32>
    %180 = arith.divf %178, %179 : vector<8x1xf32>
    %181 = vector.broadcast %173 : vector<8x1xf32> to vector<8x384xf32>
    %182 = arith.subf %163, %181 : vector<8x384xf32>
    %cst_81 = arith.constant 9.99999974E-6 : f32
    %183 = vector.broadcast %cst_81 : f32 to vector<8x1xf32>
    %184 = arith.addf %180, %183 : vector<8x1xf32>
    %185 = math.rsqrt %184 : vector<8x1xf32>
    %186 = vector.broadcast %185 : vector<8x1xf32> to vector<8x384xf32>
    %187 = arith.mulf %182, %186 : vector<8x384xf32>
    %188 = vector.broadcast %166 : vector<1x384xf32> to vector<8x384xf32>
    %189 = arith.mulf %187, %188 : vector<8x384xf32>
    %190 = vector.broadcast %169 : vector<1x384xf32> to vector<8x384xf32>
    %191 = arith.addf %189, %190 : vector<8x384xf32>
    %192 = arith.truncf %191 : vector<8x384xf32> to vector<8x384xbf16>
    %193 = arith.index_cast %arg1 : i32 to index
    %c0_82 = arith.constant 0 : index
    %c0_83 = arith.constant 0 : index
    %194 = vector.load %arg10[%193, %c0_82, %c0_83] : memref<6x384x1536xbf16, #tpu.memory_space<vmem>>, vector<1x384x1536xbf16>
    %195 = vector.shape_cast %194 : vector<1x384x1536xbf16> to vector<384x1536xbf16>
    %cst_84 = arith.constant dense<0.000000e+00> : vector<8x1536xf32>
    %196 = tpu.matmul %192, %195, %cst_84 {dimension_numbers = #tpu.dot_dimension_numbers<[1], [0], [0], [1], [0, 0, 1, 1], [], []>} : vector<8x384xbf16>, vector<384x1536xbf16>, vector<8x1536xf32> -> vector<8x1536xf32>
    %197 = arith.index_cast %arg1 : i32 to index
    %c0_85 = arith.constant 0 : index
    %c0_86 = arith.constant 0 : index
    %198 = vector.load %arg11[%197, %c0_85, %c0_86] : memref<6x1x1536xf32, #tpu.memory_space<vmem>>, vector<1x1x1536xf32>
    %199 = vector.shape_cast %198 : vector<1x1x1536xf32> to vector<1x1536xf32>
    %200 = vector.broadcast %199 : vector<1x1536xf32> to vector<8x1536xf32>
    %201 = arith.addf %196, %200 : vector<8x1536xf32>
    %cst_87 = arith.constant 0.000000e+00 : f32
    %202 = vector.broadcast %cst_87 : f32 to vector<8x1536xf32>
    %203 = arith.maximumf %201, %202 : vector<8x1536xf32>
    %204 = arith.truncf %203 : vector<8x1536xf32> to vector<8x1536xbf16>
    %205 = arith.index_cast %arg1 : i32 to index
    %c0_88 = arith.constant 0 : index
    %c0_89 = arith.constant 0 : index
    %206 = vector.load %arg12[%205, %c0_88, %c0_89] : memref<6x1536x384xbf16, #tpu.memory_space<vmem>>, vector<1x1536x384xbf16>
    %207 = vector.shape_cast %206 : vector<1x1536x384xbf16> to vector<1536x384xbf16>
    %cst_90 = arith.constant dense<0.000000e+00> : vector<8x384xf32>
    %208 = tpu.matmul %204, %207, %cst_90 {dimension_numbers = #tpu.dot_dimension_numbers<[1], [0], [0], [1], [0, 0, 1, 1], [], []>} : vector<8x1536xbf16>, vector<1536x384xbf16>, vector<8x384xf32> -> vector<8x384xf32>
    %209 = arith.index_cast %arg1 : i32 to index
    %c0_91 = arith.constant 0 : index
    %c0_92 = arith.constant 0 : index
    %210 = vector.load %arg13[%209, %c0_91, %c0_92] : memref<6x1x384xf32, #tpu.memory_space<vmem>>, vector<1x1x384xf32>
    %211 = vector.shape_cast %210 : vector<1x1x384xf32> to vector<1x384xf32>
    %212 = vector.broadcast %211 : vector<1x384xf32> to vector<8x384xf32>
    %213 = arith.addf %208, %212 : vector<8x384xf32>
    %c0_93 = arith.constant 0 : index
    %c0_94 = arith.constant 0 : index
    %214 = vector.load %arg19[%c0_93, %c0_94] : memref<8x384xf32, #tpu.memory_space<vmem>>, vector<8x384xf32>
    tpu.vector_store %arg19[%c0_93, %c0_94], %213 {strides = array<i32>} : memref<8x384xf32, #tpu.memory_space<vmem>>, vector<8x384xf32>,
    %c5_i32 = arith.constant 5 : i32
    %215 = arith.cmpi eq, %arg1, %c5_i32 : i32
    %216 = arith.extui %215 : i1 to i32
    %c0_i32_95 = arith.constant 0 : i32
    %217 = arith.cmpi ne, %216, %c0_i32_95 : i32
    scf.if %217 {
      %c0_96 = arith.constant 0 : index
      %c0_97 = arith.constant 0 : index
      %c0_98 = arith.constant 0 : index
      %218 = vector.load %arg14[%c0_96, %c0_97, %c0_98] : memref<1x1x384xf32, #tpu.memory_space<vmem>>, vector<1x1x384xf32>
      %219 = vector.shape_cast %218 : vector<1x1x384xf32> to vector<1x384xf32>
      %c0_99 = arith.constant 0 : index
      %c0_100 = arith.constant 0 : index
      %c0_101 = arith.constant 0 : index
      %220 = vector.load %arg15[%c0_99, %c0_100, %c0_101] : memref<1x1x384xf32, #tpu.memory_space<vmem>>, vector<1x1x384xf32>
      %221 = vector.shape_cast %220 : vector<1x1x384xf32> to vector<1x384xf32>
      %cst_102 = arith.constant dense<0.000000e+00> : vector<8xf32>
      %222 = vector.multi_reduction <add>, %213, %cst_102 [1] : vector<8x384xf32> to vector<8xf32>
      %223 = vector.shape_cast %222 : vector<8xf32> to vector<8x1xf32>
      %cst_103 = arith.constant 3.840000e+02 : f32
      %224 = vector.broadcast %cst_103 : f32 to vector<8x1xf32>
      %225 = arith.divf %223, %224 : vector<8x1xf32>
      %226 = vector.broadcast %225 : vector<8x1xf32> to vector<8x384xf32>
      %227 = arith.subf %213, %226 : vector<8x384xf32>
      %228 = arith.mulf %227, %227 : vector<8x384xf32>
      %cst_104 = arith.constant dense<0.000000e+00> : vector<8xf32>
      %229 = vector.multi_reduction <add>, %228, %cst_104 [1] : vector<8x384xf32> to vector<8xf32>
      %230 = vector.shape_cast %229 : vector<8xf32> to vector<8x1xf32>
      %cst_105 = arith.constant 3.840000e+02 : f32
      %231 = vector.broadcast %cst_105 : f32 to vector<8x1xf32>
      %232 = arith.divf %230, %231 : vector<8x1xf32>
      %233 = vector.broadcast %225 : vector<8x1xf32> to vector<8x384xf32>
      %234 = arith.subf %213, %233 : vector<8x384xf32>
      %cst_106 = arith.constant 9.99999974E-6 : f32
      %235 = vector.broadcast %cst_106 : f32 to vector<8x1xf32>
      %236 = arith.addf %232, %235 : vector<8x1xf32>
      %237 = math.rsqrt %236 : vector<8x1xf32>
      %238 = vector.broadcast %237 : vector<8x1xf32> to vector<8x384xf32>
      %239 = arith.mulf %234, %238 : vector<8x384xf32>
      %240 = vector.broadcast %219 : vector<1x384xf32> to vector<8x384xf32>
      %241 = arith.mulf %239, %240 : vector<8x384xf32>
      %242 = vector.broadcast %221 : vector<1x384xf32> to vector<8x384xf32>
      %243 = arith.addf %241, %242 : vector<8x384xf32>
      %244 = arith.truncf %243 : vector<8x384xf32> to vector<8x384xbf16>
      %c0_107 = arith.constant 0 : index
      %c0_108 = arith.constant 0 : index
      %245 = vector.load %arg16[%c0_107, %c0_108] : memref<384x128xbf16, #tpu.memory_space<vmem>>, vector<384x128xbf16>
      %cst_109 = arith.constant dense<0.000000e+00> : vector<8x128xf32>
      %246 = tpu.matmul %244, %245, %cst_109 {dimension_numbers = #tpu.dot_dimension_numbers<[1], [0], [0], [1], [0, 0, 1, 1], [], []>} : vector<8x384xbf16>, vector<384x128xbf16>, vector<8x128xf32> -> vector<8x128xf32>
      %c0_110 = arith.constant 0 : index
      %c0_111 = arith.constant 0 : index
      %c0_112 = arith.constant 0 : index
      %247 = vector.load %arg17[%c0_110, %c0_111, %c0_112] : memref<1x1x128xf32, #tpu.memory_space<vmem>>, vector<1x1x128xf32>
      %248 = vector.shape_cast %247 : vector<1x1x128xf32> to vector<1x128xf32>
      %249 = vector.broadcast %248 : vector<1x128xf32> to vector<8x128xf32>
      %250 = arith.addf %246, %249 : vector<8x128xf32>
      %c0_113 = arith.constant 0 : index
      %c0_114 = arith.constant 0 : index
      %c0_115 = arith.constant 0 : index
      %251 = vector.load %arg18[%c0_113, %c0_114, %c0_115] : memref<1x8x128xf32, #tpu.memory_space<vmem>>, vector<1x8x128xf32>
      %252 = vector.shape_cast %251 : vector<1x8x128xf32> to vector<8x128xf32>
      %253 = vector.shape_cast %250 : vector<8x128xf32> to vector<1x8x128xf32>
      tpu.vector_store %arg18[%c0_113, %c0_114, %c0_115], %253 {strides = array<i32>} : memref<1x8x128xf32, #tpu.memory_space<vmem>>, vector<1x8x128xf32>,
    } else {
    }
    return
  }
  func.func @transform_0(%arg0: i32, %arg1: i32) -> (i32, i32, i32) {
    %c0_i32 = arith.constant 0 : i32
    %c0_i32_0 = arith.constant 0 : i32
    %c0_i32_1 = arith.constant 0 : i32
    return %arg0, %c0_i32, %c0_i32_0 : i32, i32, i32
  }
  func.func @transform_1(%arg0: i32, %arg1: i32) -> (i32, i32, i32) {
    %c0_i32 = arith.constant 0 : i32
    %c0_i32_0 = arith.constant 0 : i32
    %c0_i32_1 = arith.constant 0 : i32
    %c0_i32_2 = arith.constant 0 : i32
    return %c0_i32, %c0_i32_0, %c0_i32_1 : i32, i32, i32
  }
  func.func @transform_2(%arg0: i32, %arg1: i32) -> (i32, i32, i32) {
    %c0_i32 = arith.constant 0 : i32
    %c0_i32_0 = arith.constant 0 : i32
    %c0_i32_1 = arith.constant 0 : i32
    %c0_i32_2 = arith.constant 0 : i32
    return %c0_i32, %c0_i32_0, %c0_i32_1 : i32, i32, i32
  }
  func.func @transform_3(%arg0: i32, %arg1: i32) -> (i32, i32, i32) {
    %c0_i32 = arith.constant 0 : i32
    %c0_i32_0 = arith.constant 0 : i32
    %c0_i32_1 = arith.constant 0 : i32
    %c0_i32_2 = arith.constant 0 : i32
    return %c0_i32, %c0_i32_0, %c0_i32_1 : i32, i32, i32
  }
  func.func @transform_4(%arg0: i32, %arg1: i32) -> (i32, i32, i32) {
    %c0_i32 = arith.constant 0 : i32
    %c0_i32_0 = arith.constant 0 : i32
    %c0_i32_1 = arith.constant 0 : i32
    %c0_i32_2 = arith.constant 0 : i32
    return %c0_i32, %c0_i32_0, %c0_i32_1 : i32, i32, i32
  }
  func.func @transform_5(%arg0: i32, %arg1: i32) -> (i32, i32, i32) {
    %c0_i32 = arith.constant 0 : i32
    %c0_i32_0 = arith.constant 0 : i32
    %c0_i32_1 = arith.constant 0 : i32
    %c0_i32_2 = arith.constant 0 : i32
    return %c0_i32, %c0_i32_0, %c0_i32_1 : i32, i32, i32
  }
  func.func @transform_6(%arg0: i32, %arg1: i32) -> (i32, i32, i32) {
    %c0_i32 = arith.constant 0 : i32
    %c0_i32_0 = arith.constant 0 : i32
    %c0_i32_1 = arith.constant 0 : i32
    %c0_i32_2 = arith.constant 0 : i32
    return %c0_i32, %c0_i32_0, %c0_i32_1 : i32, i32, i32
  }
  func.func @transform_7(%arg0: i32, %arg1: i32) -> (i32, i32, i32) {
    %c0_i32 = arith.constant 0 : i32
    %c0_i32_0 = arith.constant 0 : i32
    %c0_i32_1 = arith.constant 0 : i32
    %c0_i32_2 = arith.constant 0 : i32
    return %c0_i32, %c0_i32_0, %c0_i32_1 : i32, i32, i32
  }
  func.func @transform_8(%arg0: i32, %arg1: i32) -> (i32, i32, i32) {
    %c0_i32 = arith.constant 0 : i32
    %c0_i32_0 = arith.constant 0 : i32
    %c0_i32_1 = arith.constant 0 : i32
    %c0_i32_2 = arith.constant 0 : i32
    return %c0_i32, %c0_i32_0, %c0_i32_1 : i32, i32, i32
  }
  func.func @transform_9(%arg0: i32, %arg1: i32) -> (i32, i32, i32) {
    %c0_i32 = arith.constant 0 : i32
    %c0_i32_0 = arith.constant 0 : i32
    %c0_i32_1 = arith.constant 0 : i32
    %c0_i32_2 = arith.constant 0 : i32
    return %c0_i32, %c0_i32_0, %c0_i32_1 : i32, i32, i32
  }
  func.func @transform_10(%arg0: i32, %arg1: i32) -> (i32, i32, i32) {
    %c0_i32 = arith.constant 0 : i32
    %c0_i32_0 = arith.constant 0 : i32
    %c0_i32_1 = arith.constant 0 : i32
    %c0_i32_2 = arith.constant 0 : i32
    return %c0_i32, %c0_i32_0, %c0_i32_1 : i32, i32, i32
  }
  func.func @transform_11(%arg0: i32, %arg1: i32) -> (i32, i32, i32) {
    %c0_i32 = arith.constant 0 : i32
    %c0_i32_0 = arith.constant 0 : i32
    %c0_i32_1 = arith.constant 0 : i32
    %c0_i32_2 = arith.constant 0 : i32
    return %c0_i32, %c0_i32_0, %c0_i32_1 : i32, i32, i32
  }
  func.func @transform_12(%arg0: i32, %arg1: i32) -> (i32, i32, i32) {
    %c0_i32 = arith.constant 0 : i32
    %c0_i32_0 = arith.constant 0 : i32
    %c0_i32_1 = arith.constant 0 : i32
    %c0_i32_2 = arith.constant 0 : i32
    return %c0_i32, %c0_i32_0, %c0_i32_1 : i32, i32, i32
  }
  func.func @transform_13(%arg0: i32, %arg1: i32) -> (i32, i32, i32) {
    %c0_i32 = arith.constant 0 : i32
    %c0_i32_0 = arith.constant 0 : i32
    %c0_i32_1 = arith.constant 0 : i32
    %c0_i32_2 = arith.constant 0 : i32
    return %c0_i32, %c0_i32_0, %c0_i32_1 : i32, i32, i32
  }
  func.func @transform_14(%arg0: i32, %arg1: i32) -> (i32, i32) {
    %c0_i32 = arith.constant 0 : i32
    %c0_i32_0 = arith.constant 0 : i32
    %c0_i32_1 = arith.constant 0 : i32
    return %c0_i32, %c0_i32_0 : i32, i32
  }
  func.func @transform_15(%arg0: i32, %arg1: i32) -> (i32, i32, i32) {
    %c0_i32 = arith.constant 0 : i32
    %c0_i32_0 = arith.constant 0 : i32
    %c0_i32_1 = arith.constant 0 : i32
    %c0_i32_2 = arith.constant 0 : i32
    return %c0_i32, %c0_i32_0, %c0_i32_1 : i32, i32, i32
  }
  func.func @transform_16(%arg0: i32, %arg1: i32) -> (i32, i32, i32) {
    %c0_i32 = arith.constant 0 : i32
    %c0_i32_0 = arith.constant 0 : i32
    %c0_i32_1 = arith.constant 0 : i32
    return %arg0, %c0_i32, %c0_i32_0 : i32, i32, i32
  }
}

</mosaic_0001>

<llo_original>
// kernel: bigram_forward.1
$region0: #{bigram_forward.1}
  #allocation0 [shape = 'u32[]', space=smem, size = 0x4, offset = 0x4, fixed_abs, tag = 'smem constant byte address 0x4 - core index']
  #allocation1 [shape = 'u32[144,128]{1,0:T(1,128)}', space=vmem, size = 0x12000, scoped, tag = 'internal scratch']
  #allocation2 [shape = 'f32[8,384]{1,0:T(8,128)}', space=vmem, size = 0x3000, scoped, tag = 'scratch operand']
  #allocation3 [shape = 'bf16[8,1152]{1,0:T(8,128)(2,1)}', space=vmem, size = 0x4800, scoped, tag = 'scratch operand']
  #allocation4 [shape = 'bf16[8,384]{1,0:T(8,128)(2,1)}', space=vmem, size = 0x1800, scoped, tag = 'scratch operand']
  #allocation5 [shape = 'f32[8,8]{1,0:T(8,128)}', space=vmem, size = 0x1000, scoped, tag = 'scratch operand']
  %s0 = inlined_call_operand.vmem [shape: f32[2,8,384], index: 0, kind: input, shape index: {}]
  %s1 = inlined_call_operand.hbm [shape: f32[6,1,384], index: 1, kind: input, shape index: {}]
  %s2 = inlined_call_operand.hbm [shape: f32[6,1,384], index: 2, kind: input, shape index: {}]
  %s3 = inlined_call_operand.hbm [shape: bf16[6,384,1152], index: 3, kind: input, shape index: {}]
  %s4 = inlined_call_operand.hbm [shape: bf16[6,384,384], index: 4, kind: input, shape index: {}]
  %s5 = inlined_call_operand.hbm [shape: f32[6,1,384], index: 5, kind: input, shape index: {}]
  %s6 = inlined_call_operand.hbm [shape: f32[6,1,384], index: 6, kind: input, shape index: {}]
  %s7 = inlined_call_operand.hbm [shape: f32[6,1,384], index: 7, kind: input, shape index: {}]
  %s8 = inlined_call_operand.hbm [shape: bf16[6,384,1536], index: 8, kind: input, shape index: {}]
  %s9 = inlined_call_operand.hbm [shape: f32[6,1,1536], index: 9, kind: input, shape index: {}]
  %s10 = inlined_call_operand.hbm [shape: bf16[6,1536,384], index: 10, kind: input, shape index: {}]
  %s11 = inlined_call_operand.hbm [shape: f32[6,1,384], index: 11, kind: input, shape index: {}]
  %s12 = inlined_call_operand.hbm [shape: f32[1,1,384], index: 12, kind: input, shape index: {}]
  %s13 = inlined_call_operand.hbm [shape: f32[1,1,384], index: 13, kind: input, shape index: {}]
  %s14 = inlined_call_operand.hbm [shape: bf16[384,128], index: 14, kind: input, shape index: {}]
  %s15 = inlined_call_operand.hbm [shape: f32[1,1,128], index: 15, kind: input, shape index: {}]
  %s16 = inlined_call_operand.hbm [shape: f32[2,8,128], index: 16, kind: output, shape index: {}]
  %s17 = sld [smem:[#allocation0]]
  $region165: #{bigram_forward.1} parent=0
    _
  %s19 = ssub.s32 1, %s17
  %s20 = scalar_select 0, %s19, %s17
  $region1: #{bigram_forward.1} parent=0
    #allocation6 [shape = 'u8[9216]{0}', space=vmem, size = 0x2400, scoped, tag = 'input window, operand 1, single buffered']
    #allocation7 [shape = 's32[2]{0}', space=sflag, size = 0x8, scoped, tag = 'scoped memory for bigram_forward.1']
    #allocation8 [shape = 's32[2]{0}', space=sflag, size = 0x8, scoped, tag = 'scoped memory for bigram_forward.1']
    #allocation9 [shape = 'u8[9216]{0}', space=vmem, size = 0x2400, scoped, tag = 'input window, operand 2, single buffered']
    #allocation10 [shape = 's32[1]{0}', space=sflag, size = 0x4, scoped, tag = 'scoped memory for bigram_forward.1']
    #allocation11 [shape = 'u8[5308416]{0}', space=vmem, size = 0x510000, scoped, tag = 'input window, operand 3, single buffered']
    #allocation12 [shape = 'u8[1769472]{0}', space=vmem, size = 0x1b0000, scoped, tag = 'input window, operand 4, single buffered']
    #allocation13 [shape = 's32[1]{0}', space=sflag, size = 0x4, scoped, tag = 'scoped memory for bigram_forward.1']
    #allocation14 [shape = 'u8[9216]{0}', space=vmem, size = 0x2400, scoped, tag = 'input window, operand 5, single buffered']
    #allocation15 [shape = 'u8[9216]{0}', space=vmem, size = 0x2400, scoped, tag = 'input window, operand 6, single buffered']
    #allocation16 [shape = 's32[1]{0}', space=sflag, size = 0x4, scoped, tag = 'scoped memory for bigram_forward.1']
    #allocation17 [shape = 'u8[9216]{0}', space=vmem, size = 0x2400, scoped, tag = 'input window, operand 7, single buffered']
    #allocation18 [shape = 'u8[7077888]{0}', space=vmem, size = 0x6c0000, scoped, tag = 'input window, operand 8, single buffered']
    #allocation19 [shape = 's32[1]{0}', space=sflag, size = 0x4, scoped, tag = 'scoped memory for bigram_forward.1']
    #allocation20 [shape = 'u8[36864]{0}', space=vmem, size = 0x9000, scoped, tag = 'input window, operand 9, single buffered']
    #allocation21 [shape = 'u8[7077888]{0}', space=vmem, size = 0x6c0000, scoped, tag = 'input window, operand 10, single buffered']
    #allocation22 [shape = 's32[1]{0}', space=sflag, size = 0x4, scoped, tag = 'scoped memory for bigram_forward.1']
    #allocation23 [shape = 'u8[9216]{0}', space=vmem, size = 0x2400, scoped, tag = 'input window, operand 11, single buffered']
    #allocation24 [shape = 'u8[1536]{0}', space=vmem, size = 0x800, scoped, tag = 'input window, operand 12, single buffered']
    #allocation25 [shape = 's32[1]{0}', space=sflag, size = 0x4, scoped, tag = 'scoped memory for bigram_forward.1']
    #allocation26 [shape = 'u8[1536]{0}', space=vmem, size = 0x800, scoped, tag = 'input window, operand 13, single buffered']
    #allocation27 [shape = 'u8[98304]{0}', space=vmem, size = 0x18000, scoped, tag = 'input window, operand 14, single buffered']
    #allocation28 [shape = 's32[1]{0}', space=sflag, size = 0x4, scoped, tag = 'scoped memory for bigram_forward.1']
    #allocation29 [shape = 'u8[512]{0}', space=vmem, size = 0x400, scoped, tag = 'input window, operand 15, single buffered']
    #allocation30 [shape = 'u8[8192]{0}', space=vmem, size = 0x2000, scoped, tag = 'output window, operand 0']
    %21 = vsyncpa [#allocation7], 0
    %22 = vsyncpa [#allocation10], 0
    %23 = vsyncpa [#allocation13], 0
    %24 = vsyncpa [#allocation16], 0
    %25 = vsyncpa [#allocation19], 0
    %26 = vsyncpa [#allocation22], 0
    %27 = vsyncpa [#allocation25], 0
    %28 = vsyncpa [#allocation28], 0
    %29 = vsyncpa [#allocation8], 0
    %s30 = scalar_lea.sflag [#allocation8], 1
    %31 = vsyncpa %s30, 0
    loop: start=0, step=1, limit=14
    $region2: #{bigram_forward.1} parent=1 // loop_pre_header
      _
    $region3: #{bigram_forward.1} parent=1 // loop_header
      %s33 = sphi 0, %s37
      %p34 = scmp.ge.s32.totalorder %s33, 14
      %s40 = sphi 0, %s52
      %s41 = sphi 0, %s48
      %s42 = sphi 0, %s40
      %s43 = sphi 0, %s41
      %s44 = sphi 0, %s42
      %s45 = sphi 0, %s43
      %s55 = sphi 0, %s57
      %s58 = sphi 0, %s55
      %s59 = sphi 0, %s58
      %s75 = sphi 0, %s59
      %s79 = sphi 0, %s79
      %s81 = sphi 0, %s79
      %s82 = sphi 0, %s81
      %s96 = sphi 0, %s82
      %s100 = sphi 0, %s100
      %s102 = sphi 0, %s100
      %s103 = sphi 0, %s102
      %s117 = sphi 0, %s103
      %s121 = sphi 0, %s121
      %s123 = sphi 0, %s121
      %s124 = sphi 0, %s123
      %s138 = sphi 0, %s124
      %s142 = sphi 0, %s142
      %s144 = sphi 0, %s142
      %s145 = sphi 0, %s144
      %s159 = sphi 0, %s145
      %s163 = sphi 0, %s163
      %s165 = sphi 0, %s163
      %s166 = sphi 0, %s165
      %s180 = sphi 0, %s166
      %s184 = sphi 0, %s184
      %s186 = sphi 0, %s184
      %s187 = sphi 0, %s186
      %s201 = sphi 0, %s187
      %s205 = sphi 0, %s205
      %s207 = sphi 0, %s205
      %s208 = sphi 0, %s207
      %s222 = sphi 0, %s208
      %s226 = sphi 0, %s226
      %s228 = sphi 0, %s226
      %s229 = sphi 0, %s228
      %s243 = sphi 0, %s229
      %s247 = sphi 0, %s247
      %s249 = sphi 0, %s247
      %s250 = sphi 0, %s249
      %s264 = sphi 0, %s250
      %s268 = sphi 0, %s268
      %s270 = sphi 0, %s268
      %s271 = sphi 0, %s270
      %s285 = sphi 0, %s271
      %s289 = sphi 0, %s289
      %s291 = sphi 0, %s289
      %s292 = sphi 0, %s291
      %s306 = sphi 0, %s292
      %s310 = sphi 0, %s310
      %s312 = sphi 0, %s310
      %s313 = sphi 0, %s312
      %s327 = sphi 0, %s313
      %s331 = sphi 0, %s331
      %s333 = sphi 0, %s331
      %s334 = sphi 0, %s333
      %s348 = sphi 0, %s334
      %s352 = sphi 0, %s352
      %s354 = sphi 0, %s352
      %s355 = sphi 0, %s354
      %s369 = sphi 0, %s355
      %s373 = sphi 0, %s373
      %s375 = sphi 0, %s373
      %s376 = sphi 0, %s375
      %s390 = sphi 0, %s376
      %s396 = sphi 0, %s398
      %s399 = sphi 0, %s396
      %s400 = sphi 0, %s399
      %s416 = sphi 0, %s400
    $region4: #{bigram_forward.1} parent=1 // loop_header_branch
      %36 = sbr.rel (%p34) target = $region8
    $region5: #{bigram_forward.1} parent=1 // loop_body
      %s38 = ssub.s32 %s33, 1
      %s39 = ssub.s32 %s33, 2
      %s46 = sadd.s32 1, %s41
      %p47 = scmp.ge.s32.totalorder %s46, 6
      %s48 = scalar_select %p47, 0, %s46
      %s49 = sadd.s32 1, %s40
      %s50 = scalar_select %p47, %s49, %s40
      %p51 = scmp.ge.s32.totalorder %s50, 2
      %s52 = scalar_select %p51, 0, %s50
      %s53 = ssub.s32 %s40, %s52
      %p54 = scmp.eq.s32.totalorder %s53, 0
      %s56 = sadd.s32 %s55, 1
      %s57 = scalar_select %p54, %s55, %s56
      %p60 = pneg %p54
      %p61 = scmp.eq.s32.totalorder %s33, 11
      %p62 = por %p60, %p61
      %p63 = scmp.ne.s32.totalorder %s55, %s58
      %p64 = scmp.eq.s32.totalorder %s33, 0
      %p65 = por %p63, %p64
      %p66 = scmp.ne.s32.totalorder %s55, %s58
      %p67 = scmp.eq.s32.totalorder %s38, 11
      %p68 = por %p66, %p67
      %p69 = scmp.ne.s32.totalorder %s58, %s59
      %p70 = scmp.eq.s32.totalorder %s38, 0
      %p71 = por %p69, %p70
      %p72 = scmp.ne.s32.totalorder %s58, %s59
      %p73 = scmp.eq.s32.totalorder %s39, 11
      %p74 = por %p72, %p73
      %p76 = scmp.ne.s32.totalorder %s59, %s75
      %p77 = scmp.eq.s32.totalorder %s39, 0
      %p78 = por %p76, %p77
      %s80 = sadd.s32 %s79, 1
      %p83 = scmp.eq.s32.totalorder %s33, 11
      %p84 = scmp.ne.s32.totalorder %s79, %s81
      %p85 = scmp.eq.s32.totalorder %s33, 0
      %p86 = por %p84, %p85
      %p87 = scmp.ne.s32.totalorder %s79, %s81
      %p88 = scmp.eq.s32.totalorder %s38, 11
      %p89 = por %p87, %p88
      %p90 = scmp.ne.s32.totalorder %s81, %s82
      %p91 = scmp.eq.s32.totalorder %s38, 0
      %p92 = por %p90, %p91
      %p93 = scmp.ne.s32.totalorder %s81, %s82
      %p94 = scmp.eq.s32.totalorder %s39, 11
      %p95 = por %p93, %p94
      %p97 = scmp.ne.s32.totalorder %s82, %s96
      %p98 = scmp.eq.s32.totalorder %s39, 0
      %p99 = por %p97, %p98
      %s101 = sadd.s32 %s100, 1
      %p104 = scmp.eq.s32.totalorder %s33, 11
      %p105 = scmp.ne.s32.totalorder %s100, %s102
      %p106 = scmp.eq.s32.totalorder %s33, 0
      %p107 = por %p105, %p106
      %p108 = scmp.ne.s32.totalorder %s100, %s102
      %p109 = scmp.eq.s32.totalorder %s38, 11
      %p110 = por %p108, %p109
      %p111 = scmp.ne.s32.totalorder %s102, %s103
      %p112 = scmp.eq.s32.totalorder %s38, 0
      %p113 = por %p111, %p112
      %p114 = scmp.ne.s32.totalorder %s102, %s103
      %p115 = scmp.eq.s32.totalorder %s39, 11
      %p116 = por %p114, %p115
      %p118 = scmp.ne.s32.totalorder %s103, %s117
      %p119 = scmp.eq.s32.totalorder %s39, 0
      %p120 = por %p118, %p119
      %s122 = sadd.s32 %s121, 1
      %p125 = scmp.eq.s32.totalorder %s33, 11
      %p126 = scmp.ne.s32.totalorder %s121, %s123
      %p127 = scmp.eq.s32.totalorder %s33, 0
      %p128 = por %p126, %p127
      %p129 = scmp.ne.s32.totalorder %s121, %s123
      %p130 = scmp.eq.s32.totalorder %s38, 11
      %p131 = por %p129, %p130
      %p132 = scmp.ne.s32.totalorder %s123, %s124
      %p133 = scmp.eq.s32.totalorder %s38, 0
      %p134 = por %p132, %p133
      %p135 = scmp.ne.s32.totalorder %s123, %s124
      %p136 = scmp.eq.s32.totalorder %s39, 11
      %p137 = por %p135, %p136
      %p139 = scmp.ne.s32.totalorder %s124, %s138
      %p140 = scmp.eq.s32.totalorder %s39, 0
      %p141 = por %p139, %p140
      %s143 = sadd.s32 %s142, 1
      %p146 = scmp.eq.s32.totalorder %s33, 11
      %p147 = scmp.ne.s32.totalorder %s142, %s144
      %p148 = scmp.eq.s32.totalorder %s33, 0
      %p149 = por %p147, %p148
      %p150 = scmp.ne.s32.totalorder %s142, %s144
      %p151 = scmp.eq.s32.totalorder %s38, 11
      %p152 = por %p150, %p151
      %p153 = scmp.ne.s32.totalorder %s144, %s145
      %p154 = scmp.eq.s32.totalorder %s38, 0
      %p155 = por %p153, %p154
      %p156 = scmp.ne.s32.totalorder %s144, %s145
      %p157 = scmp.eq.s32.totalorder %s39, 11
      %p158 = por %p156, %p157
      %p160 = scmp.ne.s32.totalorder %s145, %s159
      %p161 = scmp.eq.s32.totalorder %s39, 0
      %p162 = por %p160, %p161
      %s164 = sadd.s32 %s163, 1
      %p167 = scmp.eq.s32.totalorder %s33, 11
      %p168 = scmp.ne.s32.totalorder %s163, %s165
      %p169 = scmp.eq.s32.totalorder %s33, 0
      %p170 = por %p168, %p169
      %p171 = scmp.ne.s32.totalorder %s163, %s165
      %p172 = scmp.eq.s32.totalorder %s38, 11
      %p173 = por %p171, %p172
      %p174 = scmp.ne.s32.totalorder %s165, %s166
      %p175 = scmp.eq.s32.totalorder %s38, 0
      %p176 = por %p174, %p175
      %p177 = scmp.ne.s32.totalorder %s165, %s166
      %p178 = scmp.eq.s32.totalorder %s39, 11
      %p179 = por %p177, %p178
      %p181 = scmp.ne.s32.totalorder %s166, %s180
      %p182 = scmp.eq.s32.totalorder %s39, 0
      %p183 = por %p181, %p182
      %s185 = sadd.s32 %s184, 1
      %p188 = scmp.eq.s32.totalorder %s33, 11
      %p189 = scmp.ne.s32.totalorder %s184, %s186
      %p190 = scmp.eq.s32.totalorder %s33, 0
      %p191 = por %p189, %p190
      %p192 = scmp.ne.s32.totalorder %s184, %s186
      %p193 = scmp.eq.s32.totalorder %s38, 11
      %p194 = por %p192, %p193
      %p195 = scmp.ne.s32.totalorder %s186, %s187
      %p196 = scmp.eq.s32.totalorder %s38, 0
      %p197 = por %p195, %p196
      %p198 = scmp.ne.s32.totalorder %s186, %s187
      %p199 = scmp.eq.s32.totalorder %s39, 11
      %p200 = por %p198, %p199
      %p202 = scmp.ne.s32.totalorder %s187, %s201
      %p203 = scmp.eq.s32.totalorder %s39, 0
      %p204 = por %p202, %p203
      %s206 = sadd.s32 %s205, 1
      %p209 = scmp.eq.s32.totalorder %s33, 11
      %p210 = scmp.ne.s32.totalorder %s205, %s207
      %p211 = scmp.eq.s32.totalorder %s33, 0
      %p212 = por %p210, %p211
      %p213 = scmp.ne.s32.totalorder %s205, %s207
      %p214 = scmp.eq.s32.totalorder %s38, 11
      %p215 = por %p213, %p214
      %p216 = scmp.ne.s32.totalorder %s207, %s208
      %p217 = scmp.eq.s32.totalorder %s38, 0
      %p218 = por %p216, %p217
      %p219 = scmp.ne.s32.totalorder %s207, %s208
      %p220 = scmp.eq.s32.totalorder %s39, 11
      %p221 = por %p219, %p220
      %p223 = scmp.ne.s32.totalorder %s208, %s222
      %p224 = scmp.eq.s32.totalorder %s39, 0
      %p225 = por %p223, %p224
      %s227 = sadd.s32 %s226, 1
      %p230 = scmp.eq.s32.totalorder %s33, 11
      %p231 = scmp.ne.s32.totalorder %s226, %s228
      %p232 = scmp.eq.s32.totalorder %s33, 0
      %p233 = por %p231, %p232
      %p234 = scmp.ne.s32.totalorder %s226, %s228
      %p235 = scmp.eq.s32.totalorder %s38, 11
      %p236 = por %p234, %p235
      %p237 = scmp.ne.s32.totalorder %s228, %s229
      %p238 = scmp.eq.s32.totalorder %s38, 0
      %p239 = por %p237, %p238
      %p240 = scmp.ne.s32.totalorder %s228, %s229
      %p241 = scmp.eq.s32.totalorder %s39, 11
      %p242 = por %p240, %p241
      %p244 = scmp.ne.s32.totalorder %s229, %s243
      %p245 = scmp.eq.s32.totalorder %s39, 0
      %p246 = por %p244, %p245
      %s248 = sadd.s32 %s247, 1
      %p251 = scmp.eq.s32.totalorder %s33, 11
      %p252 = scmp.ne.s32.totalorder %s247, %s249
      %p253 = scmp.eq.s32.totalorder %s33, 0
      %p254 = por %p252, %p253
      %p255 = scmp.ne.s32.totalorder %s247, %s249
      %p256 = scmp.eq.s32.totalorder %s38, 11
      %p257 = por %p255, %p256
      %p258 = scmp.ne.s32.totalorder %s249, %s250
      %p259 = scmp.eq.s32.totalorder %s38, 0
      %p260 = por %p258, %p259
      %p261 = scmp.ne.s32.totalorder %s249, %s250
      %p262 = scmp.eq.s32.totalorder %s39, 11
      %p263 = por %p261, %p262
      %p265 = scmp.ne.s32.totalorder %s250, %s264
      %p266 = scmp.eq.s32.totalorder %s39, 0
      %p267 = por %p265, %p266
      %s269 = sadd.s32 %s268, 1
      %p272 = scmp.eq.s32.totalorder %s33, 11
      %p273 = scmp.ne.s32.totalorder %s268, %s270
      %p274 = scmp.eq.s32.totalorder %s33, 0
      %p275 = por %p273, %p274
      %p276 = scmp.ne.s32.totalorder %s268, %s270
      %p277 = scmp.eq.s32.totalorder %s38, 11
      %p278 = por %p276, %p277
      %p279 = scmp.ne.s32.totalorder %s270, %s271
      %p280 = scmp.eq.s32.totalorder %s38, 0
      %p281 = por %p279, %p280
      %p282 = scmp.ne.s32.totalorder %s270, %s271
      %p283 = scmp.eq.s32.totalorder %s39, 11
      %p284 = por %p282, %p283
      %p286 = scmp.ne.s32.totalorder %s271, %s285
      %p287 = scmp.eq.s32.totalorder %s39, 0
      %p288 = por %p286, %p287
      %s290 = sadd.s32 %s289, 1
      %p293 = scmp.eq.s32.totalorder %s33, 11
      %p294 = scmp.ne.s32.totalorder %s289, %s291
      %p295 = scmp.eq.s32.totalorder %s33, 0
      %p296 = por %p294, %p295
      %p297 = scmp.ne.s32.totalorder %s289, %s291
      %p298 = scmp.eq.s32.totalorder %s38, 11
      %p299 = por %p297, %p298
      %p300 = scmp.ne.s32.totalorder %s291, %s292
      %p301 = scmp.eq.s32.totalorder %s38, 0
      %p302 = por %p300, %p301
      %p303 = scmp.ne.s32.totalorder %s291, %s292
      %p304 = scmp.eq.s32.totalorder %s39, 11
      %p305 = por %p303, %p304
      %p307 = scmp.ne.s32.totalorder %s292, %s306
      %p308 = scmp.eq.s32.totalorder %s39, 0
      %p309 = por %p307, %p308
      %s311 = sadd.s32 %s310, 1
      %p314 = scmp.eq.s32.totalorder %s33, 11
      %p315 = scmp.ne.s32.totalorder %s310, %s312
      %p316 = scmp.eq.s32.totalorder %s33, 0
      %p317 = por %p315, %p316
      %p318 = scmp.ne.s32.totalorder %s310, %s312
      %p319 = scmp.eq.s32.totalorder %s38, 11
      %p320 = por %p318, %p319
      %p321 = scmp.ne.s32.totalorder %s312, %s313
      %p322 = scmp.eq.s32.totalorder %s38, 0
      %p323 = por %p321, %p322
      %p324 = scmp.ne.s32.totalorder %s312, %s313
      %p325 = scmp.eq.s32.totalorder %s39, 11
      %p326 = por %p324, %p325
      %p328 = scmp.ne.s32.totalorder %s313, %s327
      %p329 = scmp.eq.s32.totalorder %s39, 0
      %p330 = por %p328, %p329
      %s332 = sadd.s32 %s331, 1
      %p335 = scmp.eq.s32.totalorder %s33, 11
      %p336 = scmp.ne.s32.totalorder %s331, %s333
      %p337 = scmp.eq.s32.totalorder %s33, 0
      %p338 = por %p336, %p337
      %p339 = scmp.ne.s32.totalorder %s331, %s333
      %p340 = scmp.eq.s32.totalorder %s38, 11
      %p341 = por %p339, %p340
      %p342 = scmp.ne.s32.totalorder %s333, %s334
      %p343 = scmp.eq.s32.totalorder %s38, 0
      %p344 = por %p342, %p343
      %p345 = scmp.ne.s32.totalorder %s333, %s334
      %p346 = scmp.eq.s32.totalorder %s39, 11
      %p347 = por %p345, %p346
      %p349 = scmp.ne.s32.totalorder %s334, %s348
      %p350 = scmp.eq.s32.totalorder %s39, 0
      %p351 = por %p349, %p350
      %s353 = sadd.s32 %s352, 1
      %p356 = scmp.eq.s32.totalorder %s33, 11
      %p357 = scmp.ne.s32.totalorder %s352, %s354
      %p358 = scmp.eq.s32.totalorder %s33, 0
      %p359 = por %p357, %p358
      %p360 = scmp.ne.s32.totalorder %s352, %s354
      %p361 = scmp.eq.s32.totalorder %s38, 11
      %p362 = por %p360, %p361
      %p363 = scmp.ne.s32.totalorder %s354, %s355
      %p364 = scmp.eq.s32.totalorder %s38, 0
      %p365 = por %p363, %p364
      %p366 = scmp.ne.s32.totalorder %s354, %s355
      %p367 = scmp.eq.s32.totalorder %s39, 11
      %p368 = por %p366, %p367
      %p370 = scmp.ne.s32.totalorder %s355, %s369
      %p371 = scmp.eq.s32.totalorder %s39, 0
      %p372 = por %p370, %p371
      %s374 = sadd.s32 %s373, 1
      %p377 = scmp.eq.s32.totalorder %s33, 11
      %p378 = scmp.ne.s32.totalorder %s373, %s375
      %p379 = scmp.eq.s32.totalorder %s33, 0
      %p380 = por %p378, %p379
      %p381 = scmp.ne.s32.totalorder %s373, %s375
      %p382 = scmp.eq.s32.totalorder %s38, 11
      %p383 = por %p381, %p382
      %p384 = scmp.ne.s32.totalorder %s375, %s376
      %p385 = scmp.eq.s32.totalorder %s38, 0
      %p386 = por %p384, %p385
      %p387 = scmp.ne.s32.totalorder %s375, %s376
      %p388 = scmp.eq.s32.totalorder %s39, 11
      %p389 = por %p387, %p388
      %p391 = scmp.ne.s32.totalorder %s376, %s390
      %p392 = scmp.eq.s32.totalorder %s39, 0
      %p393 = por %p391, %p392
      %s394 = ssub.s32 %s40, %s52
      %p395 = scmp.eq.s32.totalorder %s394, 0
      %s397 = sadd.s32 %s396, 1
      %s398 = scalar_select %p395, %s396, %s397
      %p401 = pneg %p395
      %p402 = scmp.eq.s32.totalorder %s33, 11
      %p403 = por %p401, %p402
      %p404 = scmp.ne.s32.totalorder %s396, %s399
      %p405 = scmp.eq.s32.totalorder %s33, 0
      %p406 = por %p404, %p405
      %p407 = scmp.ne.s32.totalorder %s396, %s399
      %p408 = scmp.eq.s32.totalorder %s38, 11
      %p409 = por %p407, %p408
      %p410 = scmp.ne.s32.totalorder %s399, %s400
      %p411 = scmp.eq.s32.totalorder %s38, 0
      %p412 = por %p410, %p411
      %p413 = scmp.ne.s32.totalorder %s399, %s400
      %p414 = scmp.eq.s32.totalorder %s39, 11
      %p415 = por %p413, %p414
      %p417 = scmp.ne.s32.totalorder %s400, %s416
      %p418 = scmp.eq.s32.totalorder %s39, 0
      %p419 = por %p417, %p418
      %p420 = scmp.le.s32.totalorder 1, %s33
      %p421 = scmp.lt.s32.totalorder %s33, 13
      %p422 = pnand %p420, %p421
      %p423 = pneg %p422
      // Predicated region
      $region9: #{bigram_forward.1} parent=5 // pred_check
        _
      $region10: #{bigram_forward.1} parent=5 // pred_check_branch
        %425 = sbr.rel (%p422) target = $region12
      $region11: #{bigram_forward.1} parent=5 // pred_region
        %s426 = ssub.s32 %s33, 1
        // Predicated region
        $region13: #{bigram_forward.1} parent=11 // pred_check
          %p427 = pneg %p92
        $region14: #{bigram_forward.1} parent=11 // pred_check_branch
          %429 = sbr.rel (%p427) target = $region16
        $region15: #{bigram_forward.1} parent=11 // pred_region
          %s431 = ssub.s32 288, 288
          %432 = vsyncadd [#allocation7], %s431
          %s433 = sshll.u32 [#allocation6], 4
          %s434 = int_to_ptr.vmem [resolvable:$true] %s433
          %439 = dma.hbm_to_vmem [thread:$0]  %s1, 288, %s434, [#allocation7], 48, 48, 3
        $region16: #{bigram_forward.1} parent=11 // pred_fallthru
          _
        // Predicated region
        $region17: #{bigram_forward.1} parent=11 // pred_check
          %p440 = pneg %p113
        $region18: #{bigram_forward.1} parent=11 // pred_check_branch
          %442 = sbr.rel (%p440) target = $region20
        $region19: #{bigram_forward.1} parent=11 // pred_region
          %s444 = ssub.s32 288, 288
          %445 = vsyncadd [#allocation10], %s444
          %s446 = sshll.u32 [#allocation9], 4
          %s447 = int_to_ptr.vmem [resolvable:$true] %s446
          %452 = dma.hbm_to_vmem [thread:$0]  %s2, 288, %s447, [#allocation10], 48, 48, 3
        $region20: #{bigram_forward.1} parent=11 // pred_fallthru
          _
        // Predicated region
        $region21: #{bigram_forward.1} parent=11 // pred_check
          %p453 = pneg %p134
        $region22: #{bigram_forward.1} parent=11 // pred_check_branch
          %455 = sbr.rel (%p453) target = $region24
        $region23: #{bigram_forward.1} parent=11 // pred_region
          %s457 = ssub.s32 165888, 165888
          %458 = vsyncadd [#allocation10], %s457
          %s459 = sshll.u32 [#allocation11], 4
          %s460 = int_to_ptr.vmem [resolvable:$true] %s459
          %465 = dma.hbm_to_vmem [thread:$0]  %s3, 165888, %s460, [#allocation10], 576, 576, 36
        $region24: #{bigram_forward.1} parent=11 // pred_fallthru
          _
        // Predicated region
        $region25: #{bigram_forward.1} parent=11 // pred_check
          %p466 = pneg %p155
        $region26: #{bigram_forward.1} parent=11 // pred_check_branch
          %468 = sbr.rel (%p466) target = $region28
        $region27: #{bigram_forward.1} parent=11 // pred_region
          %s470 = ssub.s32 55296, 55296
          %471 = vsyncadd [#allocation13], %s470
          %s472 = sshll.u32 [#allocation12], 4
          %s473 = int_to_ptr.vmem [resolvable:$true] %s472
          %478 = dma.hbm_to_vmem [thread:$0]  %s4, 55296, %s473, [#allocation13], 192, 192, 12
        $region28: #{bigram_forward.1} parent=11 // pred_fallthru
          _
        // Predicated region
        $region29: #{bigram_forward.1} parent=11 // pred_check
          %p479 = pneg %p176
        $region30: #{bigram_forward.1} parent=11 // pred_check_branch
          %481 = sbr.rel (%p479) target = $region32
        $region31: #{bigram_forward.1} parent=11 // pred_region
          %s483 = ssub.s32 288, 288
          %484 = vsyncadd [#allocation13], %s483
          %s485 = sshll.u32 [#allocation14], 4
          %s486 = int_to_ptr.vmem [resolvable:$true] %s485
          %491 = dma.hbm_to_vmem [thread:$0]  %s5, 288, %s486, [#allocation13], 48, 48, 3
        $region32: #{bigram_forward.1} parent=11 // pred_fallthru
          _
        // Predicated region
        $region33: #{bigram_forward.1} parent=11 // pred_check
          %p492 = pneg %p197
        $region34: #{bigram_forward.1} parent=11 // pred_check_branch
          %494 = sbr.rel (%p492) target = $region36
        $region35: #{bigram_forward.1} parent=11 // pred_region
          %s496 = ssub.s32 288, 288
          %497 = vsyncadd [#allocation16], %s496
          %s498 = sshll.u32 [#allocation15], 4
          %s499 = int_to_ptr.vmem [resolvable:$true] %s498
          %504 = dma.hbm_to_vmem [thread:$0]  %s6, 288, %s499, [#allocation16], 48, 48, 3
        $region36: #{bigram_forward.1} parent=11 // pred_fallthru
          _
        // Predicated region
        $region37: #{bigram_forward.1} parent=11 // pred_check
          %p505 = pneg %p218
        $region38: #{bigram_forward.1} parent=11 // pred_check_branch
          %507 = sbr.rel (%p505) target = $region40
        $region39: #{bigram_forward.1} parent=11 // pred_region
          %s509 = ssub.s32 288, 288
          %510 = vsyncadd [#allocation16], %s509
          %s511 = sshll.u32 [#allocation17], 4
          %s512 = int_to_ptr.vmem [resolvable:$true] %s511
          %517 = dma.hbm_to_vmem [thread:$0]  %s7, 288, %s512, [#allocation16], 48, 48, 3
        $region40: #{bigram_forward.1} parent=11 // pred_fallthru
          _
        // Predicated region
        $region41: #{bigram_forward.1} parent=11 // pred_check
          %p518 = pneg %p239
        $region42: #{bigram_forward.1} parent=11 // pred_check_branch
          %520 = sbr.rel (%p518) target = $region44
        $region43: #{bigram_forward.1} parent=11 // pred_region
          %s522 = ssub.s32 221184, 221184
          %523 = vsyncadd [#allocation19], %s522
          %s524 = sshll.u32 [#allocation18], 4
          %s525 = int_to_ptr.vmem [resolvable:$true] %s524
          %530 = dma.hbm_to_vmem [thread:$0]  %s8, 221184, %s525, [#allocation19], 768, 768, 48
        $region44: #{bigram_forward.1} parent=11 // pred_fallthru
          _
        // Predicated region
        $region45: #{bigram_forward.1} parent=11 // pred_check
          %p531 = pneg %p260
        $region46: #{bigram_forward.1} parent=11 // pred_check_branch
          %533 = sbr.rel (%p531) target = $region48
        $region47: #{bigram_forward.1} parent=11 // pred_region
          %s535 = ssub.s32 1152, 1152
          %536 = vsyncadd [#allocation19], %s535
          %s537 = sshll.u32 [#allocation20], 4
          %s538 = int_to_ptr.vmem [resolvable:$true] %s537
          %543 = dma.hbm_to_vmem [thread:$0]  %s9, 1152, %s538, [#allocation19], 192, 192, 12
        $region48: #{bigram_forward.1} parent=11 // pred_fallthru
          _
        // Predicated region
        $region49: #{bigram_forward.1} parent=11 // pred_check
          %p544 = pneg %p281
        $region50: #{bigram_forward.1} parent=11 // pred_check_branch
          %546 = sbr.rel (%p544) target = $region52
        $region51: #{bigram_forward.1} parent=11 // pred_region
          %s548 = ssub.s32 221184, 221184
          %549 = vsyncadd [#allocation22], %s548
          %s550 = sshll.u32 [#allocation21], 4
          %s551 = int_to_ptr.vmem [resolvable:$true] %s550
          %556 = dma.hbm_to_vmem [thread:$0]  %s10, 221184, %s551, [#allocation22], 192, 192, 12
        $region52: #{bigram_forward.1} parent=11 // pred_fallthru
          _
        // Predicated region
        $region53: #{bigram_forward.1} parent=11 // pred_check
          %p557 = pneg %p302
        $region54: #{bigram_forward.1} parent=11 // pred_check_branch
          %559 = sbr.rel (%p557) target = $region56
        $region55: #{bigram_forward.1} parent=11 // pred_region
          %s561 = ssub.s32 288, 288
          %562 = vsyncadd [#allocation22], %s561
          %s563 = sshll.u32 [#allocation23], 4
          %s564 = int_to_ptr.vmem [resolvable:$true] %s563
          %569 = dma.hbm_to_vmem [thread:$0]  %s11, 288, %s564, [#allocation22], 48, 48, 3
        $region56: #{bigram_forward.1} parent=11 // pred_fallthru
          _
        // Predicated region
        $region57: #{bigram_forward.1} parent=11 // pred_check
          %p570 = pneg %p323
        $region58: #{bigram_forward.1} parent=11 // pred_check_branch
          %572 = sbr.rel (%p570) target = $region60
        $region59: #{bigram_forward.1} parent=11 // pred_region
          %s574 = ssub.s32 48, 48
          %575 = vsyncadd [#allocation25], %s574
          %s577 = sshll.u32 [#allocation24], 4
          %s578 = int_to_ptr.vmem [resolvable:$true] %s577
          %580 = dma.hbm_to_vmem [thread:$0]  %s12, 48, %s578, [#allocation25]
        $region60: #{bigram_forward.1} parent=11 // pred_fallthru
          _
        // Predicated region
        $region61: #{bigram_forward.1} parent=11 // pred_check
          %p581 = pneg %p344
        $region62: #{bigram_forward.1} parent=11 // pred_check_branch
          %583 = sbr.rel (%p581) target = $region64
        $region63: #{bigram_forward.1} parent=11 // pred_region
          %s585 = ssub.s32 48, 48
          %586 = vsyncadd [#allocation25], %s585
          %s588 = sshll.u32 [#allocation26], 4
          %s589 = int_to_ptr.vmem [resolvable:$true] %s588
          %591 = dma.hbm_to_vmem [thread:$0]  %s13, 48, %s589, [#allocation25]
        $region64: #{bigram_forward.1} parent=11 // pred_fallthru
          _
        // Predicated region
        $region65: #{bigram_forward.1} parent=11 // pred_check
          %p592 = pneg %p365
        $region66: #{bigram_forward.1} parent=11 // pred_check_branch
          %594 = sbr.rel (%p592) target = $region68
        $region67: #{bigram_forward.1} parent=11 // pred_region
          %s596 = ssub.s32 3072, 3072
          %597 = vsyncadd [#allocation28], %s596
          %s598 = sshll.u32 [#allocation27], 4
          %s599 = int_to_ptr.vmem [resolvable:$true] %s598
          %604 = dma.hbm_to_vmem [thread:$0]  %s14, 3072, %s599, [#allocation28], 64, 64, 4
        $region68: #{bigram_forward.1} parent=11 // pred_fallthru
          _
        // Predicated region
        $region69: #{bigram_forward.1} parent=11 // pred_check
          %p605 = pneg %p386
        $region70: #{bigram_forward.1} parent=11 // pred_check_branch
          %607 = sbr.rel (%p605) target = $region72
        $region71: #{bigram_forward.1} parent=11 // pred_region
          %s609 = ssub.s32 16, 16
          %610 = vsyncadd [#allocation28], %s609
          %s612 = sshll.u32 [#allocation29], 4
          %s613 = int_to_ptr.vmem [resolvable:$true] %s612
          %615 = dma.hbm_to_vmem [thread:$0]  %s15, 16, %s613, [#allocation28]
        $region72: #{bigram_forward.1} parent=11 // pred_fallthru
          _
      $region12: #{bigram_forward.1} parent=5 // pred_fallthru
        _
      %p616 = scmp.lt.s32.totalorder %s33, 12
      // Predicated region
      $region73: #{bigram_forward.1} parent=5 // pred_check
        %p617 = pneg %p616
      $region74: #{bigram_forward.1} parent=5 // pred_check_branch
        %619 = sbr.rel (%p617) target = $region76
      $region75: #{bigram_forward.1} parent=5 // pred_region
        // Predicated region
        $region77: #{bigram_forward.1} parent=75 // pred_check
          %p620 = pneg %p65
        $region78: #{bigram_forward.1} parent=75 // pred_check_branch
          %622 = sbr.rel (%p620) target = $region80
        $region79: #{bigram_forward.1} parent=75 // pred_region
          %p623 = scmp.lt.s32.totalorder %s40, 1
          %s624 = scalar_select %p623, %s40, 1
          %s625 = smul.addr %s624, 3
          %s626 = smul.addr %s625, 8
          %s627 = scalar_lea.vmem %s0, %s626
        $region80: #{bigram_forward.1} parent=75 // pred_fallthru
          _
      $region76: #{bigram_forward.1} parent=5 // pred_fallthru
        _
      %p628 = scmp.le.s32.totalorder 1, %s33
      %p629 = scmp.lt.s32.totalorder %s33, 13
      %p630 = pnand %p628, %p629
      %p631 = pneg %p630
      // Predicated region
      $region81: #{bigram_forward.1} parent=5 // pred_check
        _
      $region82: #{bigram_forward.1} parent=5 // pred_check_branch
        %633 = sbr.rel (%p630) target = $region84
      $region83: #{bigram_forward.1} parent=5 // pred_region
        %s634 = ssub.s32 %s33, 1
        // Predicated region
        $region85: #{bigram_forward.1} parent=83 // pred_check
          %p635 = pneg %p92
        $region86: #{bigram_forward.1} parent=83 // pred_check_branch
          %637 = sbr.rel (%p635) target = $region88
        $region87: #{bigram_forward.1} parent=83 // pred_region
          %638 = dma.done [#allocation7], 288
        $region88: #{bigram_forward.1} parent=83 // pred_fallthru
          _
        // Predicated region
        $region89: #{bigram_forward.1} parent=83 // pred_check
          %p639 = pneg %p113
        $region90: #{bigram_forward.1} parent=83 // pred_check_branch
          %641 = sbr.rel (%p639) target = $region92
        $region91: #{bigram_forward.1} parent=83 // pred_region
          %642 = dma.done [#allocation10], 288
        $region92: #{bigram_forward.1} parent=83 // pred_fallthru
          _
        // Predicated region
        $region93: #{bigram_forward.1} parent=83 // pred_check
          %p643 = pneg %p134
        $region94: #{bigram_forward.1} parent=83 // pred_check_branch
          %645 = sbr.rel (%p643) target = $region96
        $region95: #{bigram_forward.1} parent=83 // pred_region
          %646 = dma.done [#allocation10], 165888
        $region96: #{bigram_forward.1} parent=83 // pred_fallthru
          _
        // Predicated region
        $region97: #{bigram_forward.1} parent=83 // pred_check
          %p647 = pneg %p155
        $region98: #{bigram_forward.1} parent=83 // pred_check_branch
          %649 = sbr.rel (%p647) target = $region100
        $region99: #{bigram_forward.1} parent=83 // pred_region
          %650 = dma.done [#allocation13], 55296
        $region100: #{bigram_forward.1} parent=83 // pred_fallthru
          _
        // Predicated region
        $region101: #{bigram_forward.1} parent=83 // pred_check
          %p651 = pneg %p176
        $region102: #{bigram_forward.1} parent=83 // pred_check_branch
          %653 = sbr.rel (%p651) target = $region104
        $region103: #{bigram_forward.1} parent=83 // pred_region
          %654 = dma.done [#allocation13], 288
        $region104: #{bigram_forward.1} parent=83 // pred_fallthru
          _
        // Predicated region
        $region105: #{bigram_forward.1} parent=83 // pred_check
          %p655 = pneg %p197
        $region106: #{bigram_forward.1} parent=83 // pred_check_branch
          %657 = sbr.rel (%p655) target = $region108
        $region107: #{bigram_forward.1} parent=83 // pred_region
          %658 = dma.done [#allocation16], 288
        $region108: #{bigram_forward.1} parent=83 // pred_fallthru
          _
        // Predicated region
        $region109: #{bigram_forward.1} parent=83 // pred_check
          %p659 = pneg %p218
        $region110: #{bigram_forward.1} parent=83 // pred_check_branch
          %661 = sbr.rel (%p659) target = $region112
        $region111: #{bigram_forward.1} parent=83 // pred_region
          %662 = dma.done [#allocation16], 288
        $region112: #{bigram_forward.1} parent=83 // pred_fallthru
          _
        // Predicated region
        $region113: #{bigram_forward.1} parent=83 // pred_check
          %p663 = pneg %p239
        $region114: #{bigram_forward.1} parent=83 // pred_check_branch
          %665 = sbr.rel (%p663) target = $region116
        $region115: #{bigram_forward.1} parent=83 // pred_region
          %666 = dma.done [#allocation19], 221184
        $region116: #{bigram_forward.1} parent=83 // pred_fallthru
          _
        // Predicated region
        $region117: #{bigram_forward.1} parent=83 // pred_check
          %p667 = pneg %p260
        $region118: #{bigram_forward.1} parent=83 // pred_check_branch
          %669 = sbr.rel (%p667) target = $region120
        $region119: #{bigram_forward.1} parent=83 // pred_region
          %670 = dma.done [#allocation19], 1152
        $region120: #{bigram_forward.1} parent=83 // pred_fallthru
          _
        // Predicated region
        $region121: #{bigram_forward.1} parent=83 // pred_check
          %p671 = pneg %p281
        $region122: #{bigram_forward.1} parent=83 // pred_check_branch
          %673 = sbr.rel (%p671) target = $region124
        $region123: #{bigram_forward.1} parent=83 // pred_region
          %674 = dma.done [#allocation22], 221184
        $region124: #{bigram_forward.1} parent=83 // pred_fallthru
          _
        // Predicated region
        $region125: #{bigram_forward.1} parent=83 // pred_check
          %p675 = pneg %p302
        $region126: #{bigram_forward.1} parent=83 // pred_check_branch
          %677 = sbr.rel (%p675) target = $region128
        $region127: #{bigram_forward.1} parent=83 // pred_region
          %678 = dma.done [#allocation22], 288
        $region128: #{bigram_forward.1} parent=83 // pred_fallthru
          _
        // Predicated region
        $region129: #{bigram_forward.1} parent=83 // pred_check
          %p679 = pneg %p323
        $region130: #{bigram_forward.1} parent=83 // pred_check_branch
          %681 = sbr.rel (%p679) target = $region132
        $region131: #{bigram_forward.1} parent=83 // pred_region
          %682 = dma.done [#allocation25], 48
        $region132: #{bigram_forward.1} parent=83 // pred_fallthru
          _
        // Predicated region
        $region133: #{bigram_forward.1} parent=83 // pred_check
          %p683 = pneg %p344
        $region134: #{bigram_forward.1} parent=83 // pred_check_branch
          %685 = sbr.rel (%p683) target = $region136
        $region135: #{bigram_forward.1} parent=83 // pred_region
          %686 = dma.done [#allocation25], 48
        $region136: #{bigram_forward.1} parent=83 // pred_fallthru
          _
        // Predicated region
        $region137: #{bigram_forward.1} parent=83 // pred_check
          %p687 = pneg %p365
        $region138: #{bigram_forward.1} parent=83 // pred_check_branch
          %689 = sbr.rel (%p687) target = $region140
        $region139: #{bigram_forward.1} parent=83 // pred_region
          %690 = dma.done [#allocation28], 3072
        $region140: #{bigram_forward.1} parent=83 // pred_fallthru
          _
        // Predicated region
        $region141: #{bigram_forward.1} parent=83 // pred_check
          %p691 = pneg %p386
        $region142: #{bigram_forward.1} parent=83 // pred_check_branch
          %693 = sbr.rel (%p691) target = $region144
        $region143: #{bigram_forward.1} parent=83 // pred_region
          %694 = dma.done [#allocation28], 16
        $region144: #{bigram_forward.1} parent=83 // pred_fallthru
          _
        %p695 = scmp.lt.s32.totalorder %s42, 1
        %s696 = scalar_select %p695, %s42, 1
        %s697 = smul.addr %s696, 3
        %s698 = smul.addr %s697, 8
        %s699 = scalar_lea.vmem %s0, %s698
        %p700 = pneg %p71
        %p701 = pneg %p68
        %p702 = pneg %p92
        %p703 = pneg %p89
        %p704 = pneg %p113
        %p705 = pneg %p110
        %p706 = pneg %p134
        %p707 = pneg %p131
        %p708 = pneg %p155
        %p709 = pneg %p152
        %p710 = pneg %p176
        %p711 = pneg %p173
        %p712 = pneg %p197
        %p713 = pneg %p194
        %p714 = pneg %p218
        %p715 = pneg %p215
        %p716 = pneg %p239
        %p717 = pneg %p236
        %p718 = pneg %p260
        %p719 = pneg %p257
        %p720 = pneg %p281
        %p721 = pneg %p278
        %p722 = pneg %p302
        %p723 = pneg %p299
        %p724 = pneg %p323
        %p725 = pneg %p320
        %p726 = pneg %p344
        %p727 = pneg %p341
        %p728 = pneg %p365
        %p729 = pneg %p362
        %p730 = pneg %p386
        %p731 = pneg %p383
        %p732 = pneg %p412
        %p733 = pneg %p409
        %s734 = sand.u32 %s399, 1
        %s735 = scalar_lea.sflag [#allocation8], %s734
        %s736 = sand.u32 %s399, 1
        %s737 = smul.addr %s736, 8
        %s738 = scalar_lea.vmem [#allocation30], %s737
        %p739 = scmp.lt.s32.totalorder %s42, 1
        %s740 = scalar_select %p739, %s42, 1
        %s741 = smul.addr %s740, 3
        %s742 = smul.addr %s741, 8
        %s743 = scalar_lea.vmem %s0, %s742
        %p745 = scmp.eq.s32.totalorder %s43, 0
        // Predicated region
        $region145: #{bigram_forward.1} parent=83 // pred_check
          %p746 = pneg %p745
        $region146: #{bigram_forward.1} parent=83 // pred_check_branch
          %748 = sbr.rel (%p746) target = $region148
        $region147: #{bigram_forward.1} parent=83 // pred_region
          %v749 = vld [vmem:[%s743] sm:$0xff]
          %v750 = vld [vmem:[%s743 + $0x8] sm:$0xff]
          %v751 = vld [vmem:[%s743 + $0x10] sm:$0xff]
          %752 = vst [vmem:[#allocation2] sm:$0xff] %v749
          %753 = vst [vmem:[#allocation2 + $0x8] sm:$0xff] %v750
          %754 = vst [vmem:[#allocation2 + $0x10] sm:$0xff] %v751
          %v755 = vlaneseq
          %v756 = vshrl.u32 %v755, 7
          %v757 = vlaneseq
          %v758 = vand.u32 %v757, 127
          %vm759 = vcmp.le.s32.totalorder %v758, %v756
          %v760 = vsel %vm759, 0.0, -1e+30
          %vm761 = vcmask 64512
          %762 = vst.msk [vmem:[#allocation5] sm:$0xff] %vm761, %v760
        $region148: #{bigram_forward.1} parent=83 // pred_fallthru
          _
        %v763 = vld [vmem:[#allocation2] sm:$0xff]
        %v764 = vld [vmem:[#allocation2 + $0x8] sm:$0xff]
        %v765 = vld [vmem:[#allocation2 + $0x10] sm:$0xff]
        %s766 = smul.u32 %s43, 3
        %s767 = scalar_lea.vmem [#allocation6], %s766
        %v768 = vld [vmem:[%s767] sm:$0x7]
        %s769 = scalar_lea.vmem [#allocation9], %s766
        %v770 = vld [vmem:[%s769] sm:$0x7]
        %v771 = vadd.f32 %v763, %v764
        %v772 = vadd.f32 %v771, %v765
        %773 = vadd.xlane.f32.xlu0 %v772
        %v774 = vpop.xlane.xlu0 %773
        %v775 = vrcp.pop 384.0
        %v776 = vmul.f32 %v774, %v775
        %v777 = vsub.f32 %v763, %v776
        %v778 = vsub.f32 %v764, %v776
        %v779 = vsub.f32 %v765, %v776
        %v780 = vmul.f32 %v777, %v777
        %v781 = vmul.f32 %v778, %v778
        %v782 = vmul.f32 %v779, %v779
        %v783 = vadd.f32 %v780, %v781
        %v784 = vadd.f32 %v783, %v782
        %785 = vadd.xlane.f32.xlu0 %v784
        %v786 = vpop.xlane.xlu0 %785
        %v787 = vmul.f32 %v786, %v775
        %v788 = vadd.f32 %v787, 1e-05
        %v789 = vrsqrt.pop %v788
        %v790 = vmul.f32 %v777, %v789
        %v791 = vmul.f32 %v778, %v789
        %v792 = vmul.f32 %v779, %v789
        %v794 = vlaneseq
        %v795 = vshrl.u32 %v794, 7
        %v796 = vsub.s32 0, %v795
        %v797 = vrot.slane %v768, %v796
        %v798 = vlaneseq
        %v799 = vshrl.u32 %v798, 7
        %v800 = vsub.s32 1, %v799
        %v801 = vrot.slane %v768, %v800
        %v802 = vlaneseq
        %v803 = vshrl.u32 %v802, 7
        %v804 = vsub.s32 2, %v803
        %v805 = vrot.slane %v768, %v804
        %v809 = vmul.f32 %v790, %v797
        %v810 = vmul.f32 %v791, %v801
        %v811 = vmul.f32 %v792, %v805
        %v813 = vlaneseq
        %v814 = vshrl.u32 %v813, 7
        %v815 = vsub.s32 0, %v814
        %v816 = vrot.slane %v770, %v815
        %v817 = vlaneseq
        %v818 = vshrl.u32 %v817, 7
        %v819 = vsub.s32 1, %v818
        %v820 = vrot.slane %v770, %v819
        %v821 = vlaneseq
        %v822 = vshrl.u32 %v821, 7
        %v823 = vsub.s32 2, %v822
        %v824 = vrot.slane %v770, %v823
        %v828 = vadd.f32 %v809, %v816
        %v829 = vadd.f32 %v810, %v820
        %v830 = vadd.f32 %v811, %v824
        %v831 = vpack.c.bf16 %v828, %v828
        %v832 = vpack.c.bf16 %v829, %v829
        %v833 = vpack.c.bf16 %v830, %v830
        %s834 = smul.u32 %s43, 432
        %s835 = smul.addr %s834, 4
        %s836 = scalar_lea.vmem [#allocation11], %s835
        %v837 = vld [vmem:[%s836] sm:$0xff]
        %v838 = vld [vmem:[%s836 + $0x8] sm:$0xff]
        %v839 = vld [vmem:[%s836 + $0x10] sm:$0xff]
        %v840 = vld [vmem:[%s836 + $0x18] sm:$0xff]
        %v841 = vld [vmem:[%s836 + $0x20] sm:$0xf]
        %v842 = vld [vmem:[%s836 + $0x24] sm:$0xff]
        %v843 = vld [vmem:[%s836 + $0x2c] sm:$0xff]
        %v844 = vld [vmem:[%s836 + $0x34] sm:$0xff]
        %v845 = vld [vmem:[%s836 + $0x3c] sm:$0xff]
        %v846 = vld [vmem:[%s836 + $0x44] sm:$0xf]
        %v847 = vld [vmem:[%s836 + $0x48] sm:$0xff]
        %v848 = vld [vmem:[%s836 + $0x50] sm:$0xff]
        %v849 = vld [vmem:[%s836 + $0x58] sm:$0xff]
        %v850 = vld [vmem:[%s836 + $0x60] sm:$0xff]
        %v851 = vld [vmem:[%s836 + $0x68] sm:$0xf]
        %v852 = vld [vmem:[%s836 + $0x6c] sm:$0xff]
        %v853 = vld [vmem:[%s836 + $0x74] sm:$0xff]
        %v854 = vld [vmem:[%s836 + $0x7c] sm:$0xff]
        %v855 = vld [vmem:[%s836 + $0x84] sm:$0xff]
        %v856 = vld [vmem:[%s836 + $0x8c] sm:$0xf]
        %v857 = vld [vmem:[%s836 + $0x90] sm:$0xff]
        %v858 = vld [vmem:[%s836 + $0x98] sm:$0xff]
        %v859 = vld [vmem:[%s836 + $0xa0] sm:$0xff]
        %v860 = vld [vmem:[%s836 + $0xa8] sm:$0xff]
        %v861 = vld [vmem:[%s836 + $0xb0] sm:$0xf]
        %v862 = vld [vmem:[%s836 + $0xb4] sm:$0xff]
        %v863 = vld [vmem:[%s836 + $0xbc] sm:$0xff]
        %v864 = vld [vmem:[%s836 + $0xc4] sm:$0xff]
        %v865 = vld [vmem:[%s836 + $0xcc] sm:$0xff]
        %v866 = vld [vmem:[%s836 + $0xd4] sm:$0xf]
        %v867 = vld [vmem:[%s836 + $0xd8] sm:$0xff]
        %v868 = vld [vmem:[%s836 + $0xe0] sm:$0xff]
        %v869 = vld [vmem:[%s836 + $0xe8] sm:$0xff]
        %v870 = vld [vmem:[%s836 + $0xf0] sm:$0xff]
        %v871 = vld [vmem:[%s836 + $0xf8] sm:$0xf]
        %v872 = vld [vmem:[%s836 + $0xfc] sm:$0xff]
        %v873 = vld [vmem:[%s836 + $0x104] sm:$0xff]
        %v874 = vld [vmem:[%s836 + $0x10c] sm:$0xff]
        %v875 = vld [vmem:[%s836 + $0x114] sm:$0xff]
        %v876 = vld [vmem:[%s836 + $0x11c] sm:$0xf]
        %v877 = vld [vmem:[%s836 + $0x120] sm:$0xff]
        %v878 = vld [vmem:[%s836 + $0x128] sm:$0xff]
        %v879 = vld [vmem:[%s836 + $0x130] sm:$0xff]
        %v880 = vld [vmem:[%s836 + $0x138] sm:$0xff]
        %v881 = vld [vmem:[%s836 + $0x140] sm:$0xf]
        %v882 = vld [vmem:[%s836 + $0x144] sm:$0xff]
        %v883 = vld [vmem:[%s836 + $0x14c] sm:$0xff]
        %v884 = vld [vmem:[%s836 + $0x154] sm:$0xff]
        %v885 = vld [vmem:[%s836 + $0x15c] sm:$0xff]
        %v886 = vld [vmem:[%s836 + $0x164] sm:$0xf]
        %v887 = vld [vmem:[%s836 + $0x168] sm:$0xff]
        %v888 = vld [vmem:[%s836 + $0x170] sm:$0xff]
        %v889 = vld [vmem:[%s836 + $0x178] sm:$0xff]
        %v890 = vld [vmem:[%s836 + $0x180] sm:$0xff]
        %v891 = vld [vmem:[%s836 + $0x188] sm:$0xf]
        %v892 = vld [vmem:[%s836 + $0x18c] sm:$0xff]
        %v893 = vld [vmem:[%s836 + $0x194] sm:$0xff]
        %v894 = vld [vmem:[%s836 + $0x19c] sm:$0xff]
        %v895 = vld [vmem:[%s836 + $0x1a4] sm:$0xff]
        %v896 = vld [vmem:[%s836 + $0x1ac] sm:$0xf]
        %v897 = vld [vmem:[%s836 + $0x1b0] sm:$0xff]
        %v898 = vld [vmem:[%s836 + $0x1b8] sm:$0xff]
        %v899 = vld [vmem:[%s836 + $0x1c0] sm:$0xff]
        %v900 = vld [vmem:[%s836 + $0x1c8] sm:$0xff]
        %v901 = vld [vmem:[%s836 + $0x1d0] sm:$0xf]
        %v902 = vld [vmem:[%s836 + $0x1d4] sm:$0xff]
        %v903 = vld [vmem:[%s836 + $0x1dc] sm:$0xff]
        %v904 = vld [vmem:[%s836 + $0x1e4] sm:$0xff]
        %v905 = vld [vmem:[%s836 + $0x1ec] sm:$0xff]
        %v906 = vld [vmem:[%s836 + $0x1f4] sm:$0xf]
        %v907 = vld [vmem:[%s836 + $0x1f8] sm:$0xff]
        %v908 = vld [vmem:[%s836 + $0x200] sm:$0xff]
        %v909 = vld [vmem:[%s836 + $0x208] sm:$0xff]
        %v910 = vld [vmem:[%s836 + $0x210] sm:$0xff]
        %v911 = vld [vmem:[%s836 + $0x218] sm:$0xf]
        %v912 = vld [vmem:[%s836 + $0x21c] sm:$0xff]
        %v913 = vld [vmem:[%s836 + $0x224] sm:$0xff]
        %v914 = vld [vmem:[%s836 + $0x22c] sm:$0xff]
        %v915 = vld [vmem:[%s836 + $0x234] sm:$0xff]
        %v916 = vld [vmem:[%s836 + $0x23c] sm:$0xf]
        %v917 = vld [vmem:[%s836 + $0x240] sm:$0xff]
        %v918 = vld [vmem:[%s836 + $0x248] sm:$0xff]
        %v919 = vld [vmem:[%s836 + $0x250] sm:$0xff]
        %v920 = vld [vmem:[%s836 + $0x258] sm:$0xff]
        %v921 = vld [vmem:[%s836 + $0x260] sm:$0xf]
        %v922 = vld [vmem:[%s836 + $0x264] sm:$0xff]
        %v923 = vld [vmem:[%s836 + $0x26c] sm:$0xff]
        %v924 = vld [vmem:[%s836 + $0x274] sm:$0xff]
        %v925 = vld [vmem:[%s836 + $0x27c] sm:$0xff]
        %v926 = vld [vmem:[%s836 + $0x284] sm:$0xf]
        %v927 = vld [vmem:[%s836 + $0x288] sm:$0xff]
        %v928 = vld [vmem:[%s836 + $0x290] sm:$0xff]
        %v929 = vld [vmem:[%s836 + $0x298] sm:$0xff]
        %v930 = vld [vmem:[%s836 + $0x2a0] sm:$0xff]
        %v931 = vld [vmem:[%s836 + $0x2a8] sm:$0xf]
        %v932 = vld [vmem:[%s836 + $0x2ac] sm:$0xff]
        %v933 = vld [vmem:[%s836 + $0x2b4] sm:$0xff]
        %v934 = vld [vmem:[%s836 + $0x2bc] sm:$0xff]
        %v935 = vld [vmem:[%s836 + $0x2c4] sm:$0xff]
        %v936 = vld [vmem:[%s836 + $0x2cc] sm:$0xf]
        %v937 = vld [vmem:[%s836 + $0x2d0] sm:$0xff]
        %v938 = vld [vmem:[%s836 + $0x2d8] sm:$0xff]
        %v939 = vld [vmem:[%s836 + $0x2e0] sm:$0xff]
        %v940 = vld [vmem:[%s836 + $0x2e8] sm:$0xff]
        %v941 = vld [vmem:[%s836 + $0x2f0] sm:$0xf]
        %v942 = vld [vmem:[%s836 + $0x2f4] sm:$0xff]
        %v943 = vld [vmem:[%s836 + $0x2fc] sm:$0xff]
        %v944 = vld [vmem:[%s836 + $0x304] sm:$0xff]
        %v945 = vld [vmem:[%s836 + $0x30c] sm:$0xff]
        %v946 = vld [vmem:[%s836 + $0x314] sm:$0xf]
        %v947 = vld [vmem:[%s836 + $0x318] sm:$0xff]
        %v948 = vld [vmem:[%s836 + $0x320] sm:$0xff]
        %v949 = vld [vmem:[%s836 + $0x328] sm:$0xff]
        %v950 = vld [vmem:[%s836 + $0x330] sm:$0xff]
        %v951 = vld [vmem:[%s836 + $0x338] sm:$0xf]
        %v952 = vld [vmem:[%s836 + $0x33c] sm:$0xff]
        %v953 = vld [vmem:[%s836 + $0x344] sm:$0xff]
        %v954 = vld [vmem:[%s836 + $0x34c] sm:$0xff]
        %v955 = vld [vmem:[%s836 + $0x354] sm:$0xff]
        %v956 = vld [vmem:[%s836 + $0x35c] sm:$0xf]
        %v957 = vld [vmem:[%s836 + $0x360] sm:$0xff]
        %v958 = vld [vmem:[%s836 + $0x368] sm:$0xff]
        %v959 = vld [vmem:[%s836 + $0x370] sm:$0xff]
        %v960 = vld [vmem:[%s836 + $0x378] sm:$0xff]
        %v961 = vld [vmem:[%s836 + $0x380] sm:$0xf]
        %v962 = vld [vmem:[%s836 + $0x384] sm:$0xff]
        %v963 = vld [vmem:[%s836 + $0x38c] sm:$0xff]
        %v964 = vld [vmem:[%s836 + $0x394] sm:$0xff]
        %v965 = vld [vmem:[%s836 + $0x39c] sm:$0xff]
        %v966 = vld [vmem:[%s836 + $0x3a4] sm:$0xf]
        %v967 = vld [vmem:[%s836 + $0x3a8] sm:$0xff]
        %v968 = vld [vmem:[%s836 + $0x3b0] sm:$0xff]
        %v969 = vld [vmem:[%s836 + $0x3b8] sm:$0xff]
        %v970 = vld [vmem:[%s836 + $0x3c0] sm:$0xff]
        %v971 = vld [vmem:[%s836 + $0x3c8] sm:$0xf]
        %v972 = vld [vmem:[%s836 + $0x3cc] sm:$0xff]
        %v973 = vld [vmem:[%s836 + $0x3d4] sm:$0xff]
        %v974 = vld [vmem:[%s836 + $0x3dc] sm:$0xff]
        %v975 = vld [vmem:[%s836 + $0x3e4] sm:$0xff]
        %v976 = vld [vmem:[%s836 + $0x3ec] sm:$0xf]
        %v977 = vld [vmem:[%s836 + $0x3f0] sm:$0xff]
        %v978 = vld [vmem:[%s836 + $0x3f8] sm:$0xff]
        %v979 = vld [vmem:[%s836 + $0x400] sm:$0xff]
        %v980 = vld [vmem:[%s836 + $0x408] sm:$0xff]
        %v981 = vld [vmem:[%s836 + $0x410] sm:$0xf]
        %v982 = vld [vmem:[%s836 + $0x414] sm:$0xff]
        %v983 = vld [vmem:[%s836 + $0x41c] sm:$0xff]
        %v984 = vld [vmem:[%s836 + $0x424] sm:$0xff]
        %v985 = vld [vmem:[%s836 + $0x42c] sm:$0xff]
        %v986 = vld [vmem:[%s836 + $0x434] sm:$0xf]
        %v987 = vld [vmem:[%s836 + $0x438] sm:$0xff]
        %v988 = vld [vmem:[%s836 + $0x440] sm:$0xff]
        %v989 = vld [vmem:[%s836 + $0x448] sm:$0xff]
        %v990 = vld [vmem:[%s836 + $0x450] sm:$0xff]
        %v991 = vld [vmem:[%s836 + $0x458] sm:$0xf]
        %v992 = vld [vmem:[%s836 + $0x45c] sm:$0xff]
        %v993 = vld [vmem:[%s836 + $0x464] sm:$0xff]
        %v994 = vld [vmem:[%s836 + $0x46c] sm:$0xff]
        %v995 = vld [vmem:[%s836 + $0x474] sm:$0xff]
        %v996 = vld [vmem:[%s836 + $0x47c] sm:$0xf]
        %v997 = vld [vmem:[%s836 + $0x480] sm:$0xff]
        %v998 = vld [vmem:[%s836 + $0x488] sm:$0xff]
        %v999 = vld [vmem:[%s836 + $0x490] sm:$0xff]
        %v1000 = vld [vmem:[%s836 + $0x498] sm:$0xff]
        %v1001 = vld [vmem:[%s836 + $0x4a0] sm:$0xf]
        %v1002 = vld [vmem:[%s836 + $0x4a4] sm:$0xff]
        %v1003 = vld [vmem:[%s836 + $0x4ac] sm:$0xff]
        %v1004 = vld [vmem:[%s836 + $0x4b4] sm:$0xff]
        %v1005 = vld [vmem:[%s836 + $0x4bc] sm:$0xff]
        %v1006 = vld [vmem:[%s836 + $0x4c4] sm:$0xf]
        %v1007 = vld [vmem:[%s836 + $0x4c8] sm:$0xff]
        %v1008 = vld [vmem:[%s836 + $0x4d0] sm:$0xff]
        %v1009 = vld [vmem:[%s836 + $0x4d8] sm:$0xff]
        %v1010 = vld [vmem:[%s836 + $0x4e0] sm:$0xff]
        %v1011 = vld [vmem:[%s836 + $0x4e8] sm:$0xf]
        %v1012 = vld [vmem:[%s836 + $0x4ec] sm:$0xff]
        %v1013 = vld [vmem:[%s836 + $0x4f4] sm:$0xff]
        %v1014 = vld [vmem:[%s836 + $0x4fc] sm:$0xff]
        %v1015 = vld [vmem:[%s836 + $0x504] sm:$0xff]
        %v1016 = vld [vmem:[%s836 + $0x50c] sm:$0xf]
        %v1017 = vld [vmem:[%s836 + $0x510] sm:$0xff]
        %v1018 = vld [vmem:[%s836 + $0x518] sm:$0xff]
        %v1019 = vld [vmem:[%s836 + $0x520] sm:$0xff]
        %v1020 = vld [vmem:[%s836 + $0x528] sm:$0xff]
        %v1021 = vld [vmem:[%s836 + $0x530] sm:$0xf]
        %v1022 = vld [vmem:[%s836 + $0x534] sm:$0xff]
        %v1023 = vld [vmem:[%s836 + $0x53c] sm:$0xff]
        %v1024 = vld [vmem:[%s836 + $0x544] sm:$0xff]
        %v1025 = vld [vmem:[%s836 + $0x54c] sm:$0xff]
        %v1026 = vld [vmem:[%s836 + $0x554] sm:$0xf]
        %v1027 = vld [vmem:[%s836 + $0x558] sm:$0xff]
        %v1028 = vld [vmem:[%s836 + $0x560] sm:$0xff]
        %v1029 = vld [vmem:[%s836 + $0x568] sm:$0xff]
        %v1030 = vld [vmem:[%s836 + $0x570] sm:$0xff]
        %v1031 = vld [vmem:[%s836 + $0x578] sm:$0xf]
        %v1032 = vld [vmem:[%s836 + $0x57c] sm:$0xff]
        %v1033 = vld [vmem:[%s836 + $0x584] sm:$0xff]
        %v1034 = vld [vmem:[%s836 + $0x58c] sm:$0xff]
        %v1035 = vld [vmem:[%s836 + $0x594] sm:$0xff]
        %v1036 = vld [vmem:[%s836 + $0x59c] sm:$0xf]
        %v1037 = vld [vmem:[%s836 + $0x5a0] sm:$0xff]
        %v1038 = vld [vmem:[%s836 + $0x5a8] sm:$0xff]
        %v1039 = vld [vmem:[%s836 + $0x5b0] sm:$0xff]
        %v1040 = vld [vmem:[%s836 + $0x5b8] sm:$0xff]
        %v1041 = vld [vmem:[%s836 + $0x5c0] sm:$0xf]
        %v1042 = vld [vmem:[%s836 + $0x5c4] sm:$0xff]
        %v1043 = vld [vmem:[%s836 + $0x5cc] sm:$0xff]
        %v1044 = vld [vmem:[%s836 + $0x5d4] sm:$0xff]
        %v1045 = vld [vmem:[%s836 + $0x5dc] sm:$0xff]
        %v1046 = vld [vmem:[%s836 + $0x5e4] sm:$0xf]
        %v1047 = vld [vmem:[%s836 + $0x5e8] sm:$0xff]
        %v1048 = vld [vmem:[%s836 + $0x5f0] sm:$0xff]
        %v1049 = vld [vmem:[%s836 + $0x5f8] sm:$0xff]
        %v1050 = vld [vmem:[%s836 + $0x600] sm:$0xff]
        %v1051 = vld [vmem:[%s836 + $0x608] sm:$0xf]
        %v1052 = vld [vmem:[%s836 + $0x60c] sm:$0xff]
        %v1053 = vld [vmem:[%s836 + $0x614] sm:$0xff]
        %v1054 = vld [vmem:[%s836 + $0x61c] sm:$0xff]
        %v1055 = vld [vmem:[%s836 + $0x624] sm:$0xff]
        %v1056 = vld [vmem:[%s836 + $0x62c] sm:$0xf]
        %v1057 = vld [vmem:[%s836 + $0x630] sm:$0xff]
        %v1058 = vld [vmem:[%s836 + $0x638] sm:$0xff]
        %v1059 = vld [vmem:[%s836 + $0x640] sm:$0xff]
        %v1060 = vld [vmem:[%s836 + $0x648] sm:$0xff]
        %v1061 = vld [vmem:[%s836 + $0x650] sm:$0xf]
        %v1062 = vld [vmem:[%s836 + $0x654] sm:$0xff]
        %v1063 = vld [vmem:[%s836 + $0x65c] sm:$0xff]
        %v1064 = vld [vmem:[%s836 + $0x664] sm:$0xff]
        %v1065 = vld [vmem:[%s836 + $0x66c] sm:$0xff]
        %v1066 = vld [vmem:[%s836 + $0x674] sm:$0xf]
        %v1067 = vld [vmem:[%s836 + $0x678] sm:$0xff]
        %v1068 = vld [vmem:[%s836 + $0x680] sm:$0xff]
        %v1069 = vld [vmem:[%s836 + $0x688] sm:$0xff]
        %v1070 = vld [vmem:[%s836 + $0x690] sm:$0xff]
        %v1071 = vld [vmem:[%s836 + $0x698] sm:$0xf]
        %v1072 = vld [vmem:[%s836 + $0x69c] sm:$0xff]
        %v1073 = vld [vmem:[%s836 + $0x6a4] sm:$0xff]
        %v1074 = vld [vmem:[%s836 + $0x6ac] sm:$0xff]
        %v1075 = vld [vmem:[%s836 + $0x6b4] sm:$0xff]
        %v1076 = vld [vmem:[%s836 + $0x6bc] sm:$0xf]
        %v1317 = vunpack.c.l.b16 %v837
        %v1318 = vunpack.c.h.b16 %v837
        %v1319 = vunpack.c.l.b16 %v838
        %v1320 = vunpack.c.h.b16 %v838
        %v1321 = vunpack.c.l.b16 %v839
        %v1322 = vunpack.c.h.b16 %v839
        %v1323 = vunpack.c.l.b16 %v840
        %v1324 = vunpack.c.h.b16 %v840
        %v1325 = vunpack.c.l.b16 %v841
        %v1326 = vunpack.c.l.b16 %v842
        %v1327 = vunpack.c.h.b16 %v842
        %v1328 = vunpack.c.l.b16 %v843
        %v1329 = vunpack.c.h.b16 %v843
        %v1330 = vunpack.c.l.b16 %v844
        %v1331 = vunpack.c.h.b16 %v844
        %v1332 = vunpack.c.l.b16 %v845
        %v1333 = vunpack.c.h.b16 %v845
        %v1334 = vunpack.c.l.b16 %v846
        %v1335 = vunpack.c.l.b16 %v847
        %v1336 = vunpack.c.h.b16 %v847
        %v1337 = vunpack.c.l.b16 %v848
        %v1338 = vunpack.c.h.b16 %v848
        %v1339 = vunpack.c.l.b16 %v849
        %v1340 = vunpack.c.h.b16 %v849
        %v1341 = vunpack.c.l.b16 %v850
        %v1342 = vunpack.c.h.b16 %v850
        %v1343 = vunpack.c.l.b16 %v851
        %v1344 = vunpack.c.l.b16 %v852
        %v1345 = vunpack.c.h.b16 %v852
        %v1346 = vunpack.c.l.b16 %v853
        %v1347 = vunpack.c.h.b16 %v853
        %v1348 = vunpack.c.l.b16 %v854
        %v1349 = vunpack.c.h.b16 %v854
        %v1350 = vunpack.c.l.b16 %v855
        %v1351 = vunpack.c.h.b16 %v855
        %v1352 = vunpack.c.l.b16 %v856
        %v1353 = vunpack.c.l.b16 %v857
        %v1354 = vunpack.c.h.b16 %v857
        %v1355 = vunpack.c.l.b16 %v858
        %v1356 = vunpack.c.h.b16 %v858
        %v1357 = vunpack.c.l.b16 %v859
        %v1358 = vunpack.c.h.b16 %v859
        %v1359 = vunpack.c.l.b16 %v860
        %v1360 = vunpack.c.h.b16 %v860
        %v1361 = vunpack.c.l.b16 %v861
        %v1362 = vunpack.c.l.b16 %v862
        %v1363 = vunpack.c.h.b16 %v862
        %v1364 = vunpack.c.l.b16 %v863
        %v1365 = vunpack.c.h.b16 %v863
        %v1366 = vunpack.c.l.b16 %v864
        %v1367 = vunpack.c.h.b16 %v864
        %v1368 = vunpack.c.l.b16 %v865
        %v1369 = vunpack.c.h.b16 %v865
        %v1370 = vunpack.c.l.b16 %v866
        %v1371 = vunpack.c.l.b16 %v867
        %v1372 = vunpack.c.h.b16 %v867
        %v1373 = vunpack.c.l.b16 %v868
        %v1374 = vunpack.c.h.b16 %v868
        %v1375 = vunpack.c.l.b16 %v869
        %v1376 = vunpack.c.h.b16 %v869
        %v1377 = vunpack.c.l.b16 %v870
        %v1378 = vunpack.c.h.b16 %v870
        %v1379 = vunpack.c.l.b16 %v871
        %v1380 = vunpack.c.l.b16 %v872
        %v1381 = vunpack.c.h.b16 %v872
        %v1382 = vunpack.c.l.b16 %v873
        %v1383 = vunpack.c.h.b16 %v873
        %v1384 = vunpack.c.l.b16 %v874
        %v1385 = vunpack.c.h.b16 %v874
        %v1386 = vunpack.c.l.b16 %v875
        %v1387 = vunpack.c.h.b16 %v875
        %v1388 = vunpack.c.l.b16 %v876
        %v1389 = vunpack.c.l.b16 %v877
        %v1390 = vunpack.c.h.b16 %v877
        %v1391 = vunpack.c.l.b16 %v878
        %v1392 = vunpack.c.h.b16 %v878
        %v1393 = vunpack.c.l.b16 %v879
        %v1394 = vunpack.c.h.b16 %v879
        %v1395 = vunpack.c.l.b16 %v880
        %v1396 = vunpack.c.h.b16 %v880
        %v1397 = vunpack.c.l.b16 %v881
        %v1398 = vunpack.c.l.b16 %v882
        %v1399 = vunpack.c.h.b16 %v882
        %v1400 = vunpack.c.l.b16 %v883
        %v1401 = vunpack.c.h.b16 %v883
        %v1402 = vunpack.c.l.b16 %v884
        %v1403 = vunpack.c.h.b16 %v884
        %v1404 = vunpack.c.l.b16 %v885
        %v1405 = vunpack.c.h.b16 %v885
        %v1406 = vunpack.c.l.b16 %v886
        %v1407 = vunpack.c.l.b16 %v887
        %v1408 = vunpack.c.h.b16 %v887
        %v1409 = vunpack.c.l.b16 %v888
        %v1410 = vunpack.c.h.b16 %v888
        %v1411 = vunpack.c.l.b16 %v889
        %v1412 = vunpack.c.h.b16 %v889
        %v1413 = vunpack.c.l.b16 %v890
        %v1414 = vunpack.c.h.b16 %v890
        %v1415 = vunpack.c.l.b16 %v891
        %v1416 = vunpack.c.l.b16 %v892
        %v1417 = vunpack.c.h.b16 %v892
        %v1418 = vunpack.c.l.b16 %v893
        %v1419 = vunpack.c.h.b16 %v893
        %v1420 = vunpack.c.l.b16 %v894
        %v1421 = vunpack.c.h.b16 %v894
        %v1422 = vunpack.c.l.b16 %v895
        %v1423 = vunpack.c.h.b16 %v895
        %v1424 = vunpack.c.l.b16 %v896
        %v1425 = vunpack.c.l.b16 %v897
        %v1426 = vunpack.c.h.b16 %v897
        %v1427 = vunpack.c.l.b16 %v898
        %v1428 = vunpack.c.h.b16 %v898
        %v1429 = vunpack.c.l.b16 %v899
        %v1430 = vunpack.c.h.b16 %v899
        %v1431 = vunpack.c.l.b16 %v900
        %v1432 = vunpack.c.h.b16 %v900
        %v1433 = vunpack.c.l.b16 %v901
        %v1434 = vunpack.c.l.b16 %v902
        %v1435 = vunpack.c.h.b16 %v902
        %v1436 = vunpack.c.l.b16 %v903
        %v1437 = vunpack.c.h.b16 %v903
        %v1438 = vunpack.c.l.b16 %v904
        %v1439 = vunpack.c.h.b16 %v904
        %v1440 = vunpack.c.l.b16 %v905
        %v1441 = vunpack.c.h.b16 %v905
        %v1442 = vunpack.c.l.b16 %v906
        %v1443 = vunpack.c.l.b16 %v907
        %v1444 = vunpack.c.h.b16 %v907
        %v1445 = vunpack.c.l.b16 %v908
        %v1446 = vunpack.c.h.b16 %v908
        %v1447 = vunpack.c.l.b16 %v909
        %v1448 = vunpack.c.h.b16 %v909
        %v1449 = vunpack.c.l.b16 %v910
        %v1450 = vunpack.c.h.b16 %v910
        %v1451 = vunpack.c.l.b16 %v911
        %v1452 = vunpack.c.l.b16 %v912
        %v1453 = vunpack.c.h.b16 %v912
        %v1454 = vunpack.c.l.b16 %v913
        %v1455 = vunpack.c.h.b16 %v913
        %v1456 = vunpack.c.l.b16 %v914
        %v1457 = vunpack.c.h.b16 %v914
        %v1458 = vunpack.c.l.b16 %v915
        %v1459 = vunpack.c.h.b16 %v915
        %v1460 = vunpack.c.l.b16 %v916
        %v1461 = vunpack.c.l.b16 %v917
        %v1462 = vunpack.c.h.b16 %v917
        %v1463 = vunpack.c.l.b16 %v918
        %v1464 = vunpack.c.h.b16 %v918
        %v1465 = vunpack.c.l.b16 %v919
        %v1466 = vunpack.c.h.b16 %v919
        %v1467 = vunpack.c.l.b16 %v920
        %v1468 = vunpack.c.h.b16 %v920
        %v1469 = vunpack.c.l.b16 %v921
        %v1470 = vunpack.c.l.b16 %v922
        %v1471 = vunpack.c.h.b16 %v922
        %v1472 = vunpack.c.l.b16 %v923
        %v1473 = vunpack.c.h.b16 %v923
        %v1474 = vunpack.c.l.b16 %v924
        %v1475 = vunpack.c.h.b16 %v924
        %v1476 = vunpack.c.l.b16 %v925
        %v1477 = vunpack.c.h.b16 %v925
        %v1478 = vunpack.c.l.b16 %v926
        %v1479 = vunpack.c.l.b16 %v927
        %v1480 = vunpack.c.h.b16 %v927
        %v1481 = vunpack.c.l.b16 %v928
        %v1482 = vunpack.c.h.b16 %v928
        %v1483 = vunpack.c.l.b16 %v929
        %v1484 = vunpack.c.h.b16 %v929
        %v1485 = vunpack.c.l.b16 %v930
        %v1486 = vunpack.c.h.b16 %v930
        %v1487 = vunpack.c.l.b16 %v931
        %v1488 = vunpack.c.l.b16 %v932
        %v1489 = vunpack.c.h.b16 %v932
        %v1490 = vunpack.c.l.b16 %v933
        %v1491 = vunpack.c.h.b16 %v933
        %v1492 = vunpack.c.l.b16 %v934
        %v1493 = vunpack.c.h.b16 %v934
        %v1494 = vunpack.c.l.b16 %v935
        %v1495 = vunpack.c.h.b16 %v935
        %v1496 = vunpack.c.l.b16 %v936
        %v1497 = vunpack.c.l.b16 %v937
        %v1498 = vunpack.c.h.b16 %v937
        %v1499 = vunpack.c.l.b16 %v938
        %v1500 = vunpack.c.h.b16 %v938
        %v1501 = vunpack.c.l.b16 %v939
        %v1502 = vunpack.c.h.b16 %v939
        %v1503 = vunpack.c.l.b16 %v940
        %v1504 = vunpack.c.h.b16 %v940
        %v1505 = vunpack.c.l.b16 %v941
        %v1506 = vunpack.c.l.b16 %v942
        %v1507 = vunpack.c.h.b16 %v942
        %v1508 = vunpack.c.l.b16 %v943
        %v1509 = vunpack.c.h.b16 %v943
        %v1510 = vunpack.c.l.b16 %v944
        %v1511 = vunpack.c.h.b16 %v944
        %v1512 = vunpack.c.l.b16 %v945
        %v1513 = vunpack.c.h.b16 %v945
        %v1514 = vunpack.c.l.b16 %v946
        %v1515 = vunpack.c.l.b16 %v947
        %v1516 = vunpack.c.h.b16 %v947
        %v1517 = vunpack.c.l.b16 %v948
        %v1518 = vunpack.c.h.b16 %v948
        %v1519 = vunpack.c.l.b16 %v949
        %v1520 = vunpack.c.h.b16 %v949
        %v1521 = vunpack.c.l.b16 %v950
        %v1522 = vunpack.c.h.b16 %v950
        %v1523 = vunpack.c.l.b16 %v951
        %v1524 = vunpack.c.l.b16 %v952
        %v1525 = vunpack.c.h.b16 %v952
        %v1526 = vunpack.c.l.b16 %v953
        %v1527 = vunpack.c.h.b16 %v953
        %v1528 = vunpack.c.l.b16 %v954
        %v1529 = vunpack.c.h.b16 %v954
        %v1530 = vunpack.c.l.b16 %v955
        %v1531 = vunpack.c.h.b16 %v955
        %v1532 = vunpack.c.l.b16 %v956
        %v1533 = vunpack.c.l.b16 %v957
        %v1534 = vunpack.c.h.b16 %v957
        %v1535 = vunpack.c.l.b16 %v958
        %v1536 = vunpack.c.h.b16 %v958
        %v1537 = vunpack.c.l.b16 %v959
        %v1538 = vunpack.c.h.b16 %v959
        %v1539 = vunpack.c.l.b16 %v960
        %v1540 = vunpack.c.h.b16 %v960
        %v1541 = vunpack.c.l.b16 %v961
        %v1542 = vunpack.c.l.b16 %v962
        %v1543 = vunpack.c.h.b16 %v962
        %v1544 = vunpack.c.l.b16 %v963
        %v1545 = vunpack.c.h.b16 %v963
        %v1546 = vunpack.c.l.b16 %v964
        %v1547 = vunpack.c.h.b16 %v964
        %v1548 = vunpack.c.l.b16 %v965
        %v1549 = vunpack.c.h.b16 %v965
        %v1550 = vunpack.c.l.b16 %v966
        %v1551 = vunpack.c.l.b16 %v967
        %v1552 = vunpack.c.h.b16 %v967
        %v1553 = vunpack.c.l.b16 %v968
        %v1554 = vunpack.c.h.b16 %v968
        %v1555 = vunpack.c.l.b16 %v969
        %v1556 = vunpack.c.h.b16 %v969
        %v1557 = vunpack.c.l.b16 %v970
        %v1558 = vunpack.c.h.b16 %v970
        %v1559 = vunpack.c.l.b16 %v971
        %v1560 = vunpack.c.l.b16 %v972
        %v1561 = vunpack.c.h.b16 %v972
        %v1562 = vunpack.c.l.b16 %v973
        %v1563 = vunpack.c.h.b16 %v973
        %v1564 = vunpack.c.l.b16 %v974
        %v1565 = vunpack.c.h.b16 %v974
        %v1566 = vunpack.c.l.b16 %v975
        %v1567 = vunpack.c.h.b16 %v975
        %v1568 = vunpack.c.l.b16 %v976
        %v1569 = vunpack.c.l.b16 %v977
        %v1570 = vunpack.c.h.b16 %v977
        %v1571 = vunpack.c.l.b16 %v978
        %v1572 = vunpack.c.h.b16 %v978
        %v1573 = vunpack.c.l.b16 %v979
        %v1574 = vunpack.c.h.b16 %v979
        %v1575 = vunpack.c.l.b16 %v980
        %v1576 = vunpack.c.h.b16 %v980
        %v1577 = vunpack.c.l.b16 %v981
        %v1578 = vunpack.c.l.b16 %v982
        %v1579 = vunpack.c.h.b16 %v982
        %v1580 = vunpack.c.l.b16 %v983
        %v1581 = vunpack.c.h.b16 %v983
        %v1582 = vunpack.c.l.b16 %v984
        %v1583 = vunpack.c.h.b16 %v984
        %v1584 = vunpack.c.l.b16 %v985
        %v1585 = vunpack.c.h.b16 %v985
        %v1586 = vunpack.c.l.b16 %v986
        %v1587 = vunpack.c.l.b16 %v987
        %v1588 = vunpack.c.h.b16 %v987
        %v1589 = vunpack.c.l.b16 %v988
        %v1590 = vunpack.c.h.b16 %v988
        %v1591 = vunpack.c.l.b16 %v989
        %v1592 = vunpack.c.h.b16 %v989
        %v1593 = vunpack.c.l.b16 %v990
        %v1594 = vunpack.c.h.b16 %v990
        %v1595 = vunpack.c.l.b16 %v991
        %v1596 = vunpack.c.l.b16 %v992
        %v1597 = vunpack.c.h.b16 %v992
        %v1598 = vunpack.c.l.b16 %v993
        %v1599 = vunpack.c.h.b16 %v993
        %v1600 = vunpack.c.l.b16 %v994
        %v1601 = vunpack.c.h.b16 %v994
        %v1602 = vunpack.c.l.b16 %v995
        %v1603 = vunpack.c.h.b16 %v995
        %v1604 = vunpack.c.l.b16 %v996
        %v1605 = vunpack.c.l.b16 %v997
        %v1606 = vunpack.c.h.b16 %v997
        %v1607 = vunpack.c.l.b16 %v998
        %v1608 = vunpack.c.h.b16 %v998
        %v1609 = vunpack.c.l.b16 %v999
        %v1610 = vunpack.c.h.b16 %v999
        %v1611 = vunpack.c.l.b16 %v1000
        %v1612 = vunpack.c.h.b16 %v1000
        %v1613 = vunpack.c.l.b16 %v1001
        %v1614 = vunpack.c.l.b16 %v1002
        %v1615 = vunpack.c.h.b16 %v1002
        %v1616 = vunpack.c.l.b16 %v1003
        %v1617 = vunpack.c.h.b16 %v1003
        %v1618 = vunpack.c.l.b16 %v1004
        %v1619 = vunpack.c.h.b16 %v1004
        %v1620 = vunpack.c.l.b16 %v1005
        %v1621 = vunpack.c.h.b16 %v1005
        %v1622 = vunpack.c.l.b16 %v1006
        %v1623 = vunpack.c.l.b16 %v1007
        %v1624 = vunpack.c.h.b16 %v1007
        %v1625 = vunpack.c.l.b16 %v1008
        %v1626 = vunpack.c.h.b16 %v1008
        %v1627 = vunpack.c.l.b16 %v1009
        %v1628 = vunpack.c.h.b16 %v1009
        %v1629 = vunpack.c.l.b16 %v1010
        %v1630 = vunpack.c.h.b16 %v1010
        %v1631 = vunpack.c.l.b16 %v1011
        %v1632 = vunpack.c.l.b16 %v1012
        %v1633 = vunpack.c.h.b16 %v1012
        %v1634 = vunpack.c.l.b16 %v1013
        %v1635 = vunpack.c.h.b16 %v1013
        %v1636 = vunpack.c.l.b16 %v1014
        %v1637 = vunpack.c.h.b16 %v1014
        %v1638 = vunpack.c.l.b16 %v1015
        %v1639 = vunpack.c.h.b16 %v1015
        %v1640 = vunpack.c.l.b16 %v1016
        %v1641 = vunpack.c.l.b16 %v1017
        %v1642 = vunpack.c.h.b16 %v1017
        %v1643 = vunpack.c.l.b16 %v1018
        %v1644 = vunpack.c.h.b16 %v1018
        %v1645 = vunpack.c.l.b16 %v1019
        %v1646 = vunpack.c.h.b16 %v1019
        %v1647 = vunpack.c.l.b16 %v1020
        %v1648 = vunpack.c.h.b16 %v1020
        %v1649 = vunpack.c.l.b16 %v1021
        %v1650 = vunpack.c.l.b16 %v1022
        %v1651 = vunpack.c.h.b16 %v1022
        %v1652 = vunpack.c.l.b16 %v1023
        %v1653 = vunpack.c.h.b16 %v1023
        %v1654 = vunpack.c.l.b16 %v1024
        %v1655 = vunpack.c.h.b16 %v1024
        %v1656 = vunpack.c.l.b16 %v1025
        %v1657 = vunpack.c.h.b16 %v1025
        %v1658 = vunpack.c.l.b16 %v1026
        %v1659 = vunpack.c.l.b16 %v1027
        %v1660 = vunpack.c.h.b16 %v1027
        %v1661 = vunpack.c.l.b16 %v1028
        %v1662 = vunpack.c.h.b16 %v1028
        %v1663 = vunpack.c.l.b16 %v1029
        %v1664 = vunpack.c.h.b16 %v1029
        %v1665 = vunpack.c.l.b16 %v1030
        %v1666 = vunpack.c.h.b16 %v1030
        %v1667 = vunpack.c.l.b16 %v1031
        %v1668 = vunpack.c.l.b16 %v1032
        %v1669 = vunpack.c.h.b16 %v1032
        %v1670 = vunpack.c.l.b16 %v1033
        %v1671 = vunpack.c.h.b16 %v1033
        %v1672 = vunpack.c.l.b16 %v1034
        %v1673 = vunpack.c.h.b16 %v1034
        %v1674 = vunpack.c.l.b16 %v1035
        %v1675 = vunpack.c.h.b16 %v1035
        %v1676 = vunpack.c.l.b16 %v1036
        %v1677 = vunpack.c.l.b16 %v1037
        %v1678 = vunpack.c.h.b16 %v1037
        %v1679 = vunpack.c.l.b16 %v1038
        %v1680 = vunpack.c.h.b16 %v1038
        %v1681 = vunpack.c.l.b16 %v1039
        %v1682 = vunpack.c.h.b16 %v1039
        %v1683 = vunpack.c.l.b16 %v1040
        %v1684 = vunpack.c.h.b16 %v1040
        %v1685 = vunpack.c.l.b16 %v1041
        %v1686 = vunpack.c.l.b16 %v1042
        %v1687 = vunpack.c.h.b16 %v1042
        %v1688 = vunpack.c.l.b16 %v1043
        %v1689 = vunpack.c.h.b16 %v1043
        %v1690 = vunpack.c.l.b16 %v1044
        %v1691 = vunpack.c.h.b16 %v1044
        %v1692 = vunpack.c.l.b16 %v1045
        %v1693 = vunpack.c.h.b16 %v1045
        %v1694 = vunpack.c.l.b16 %v1046
        %v1695 = vunpack.c.l.b16 %v1047
        %v1696 = vunpack.c.h.b16 %v1047
        %v1697 = vunpack.c.l.b16 %v1048
        %v1698 = vunpack.c.h.b16 %v1048
        %v1699 = vunpack.c.l.b16 %v1049
        %v1700 = vunpack.c.h.b16 %v1049
        %v1701 = vunpack.c.l.b16 %v1050
        %v1702 = vunpack.c.h.b16 %v1050
        %v1703 = vunpack.c.l.b16 %v1051
        %v1704 = vunpack.c.l.b16 %v1052
        %v1705 = vunpack.c.h.b16 %v1052
        %v1706 = vunpack.c.l.b16 %v1053
        %v1707 = vunpack.c.h.b16 %v1053
        %v1708 = vunpack.c.l.b16 %v1054
        %v1709 = vunpack.c.h.b16 %v1054
        %v1710 = vunpack.c.l.b16 %v1055
        %v1711 = vunpack.c.h.b16 %v1055
        %v1712 = vunpack.c.l.b16 %v1056
        %v1713 = vunpack.c.l.b16 %v1057
        %v1714 = vunpack.c.h.b16 %v1057
        %v1715 = vunpack.c.l.b16 %v1058
        %v1716 = vunpack.c.h.b16 %v1058
        %v1717 = vunpack.c.l.b16 %v1059
        %v1718 = vunpack.c.h.b16 %v1059
        %v1719 = vunpack.c.l.b16 %v1060
        %v1720 = vunpack.c.h.b16 %v1060
        %v1721 = vunpack.c.l.b16 %v1061
        %v1722 = vunpack.c.l.b16 %v1062
        %v1723 = vunpack.c.h.b16 %v1062
        %v1724 = vunpack.c.l.b16 %v1063
        %v1725 = vunpack.c.h.b16 %v1063
        %v1726 = vunpack.c.l.b16 %v1064
        %v1727 = vunpack.c.h.b16 %v1064
        %v1728 = vunpack.c.l.b16 %v1065
        %v1729 = vunpack.c.h.b16 %v1065
        %v1730 = vunpack.c.l.b16 %v1066
        %v1731 = vunpack.c.l.b16 %v1067
        %v1732 = vunpack.c.h.b16 %v1067
        %v1733 = vunpack.c.l.b16 %v1068
        %v1734 = vunpack.c.h.b16 %v1068
        %v1735 = vunpack.c.l.b16 %v1069
        %v1736 = vunpack.c.h.b16 %v1069
        %v1737 = vunpack.c.l.b16 %v1070
        %v1738 = vunpack.c.h.b16 %v1070
        %v1739 = vunpack.c.l.b16 %v1071
        %v1740 = vunpack.c.l.b16 %v1072
        %v1741 = vunpack.c.h.b16 %v1072
        %v1742 = vunpack.c.l.b16 %v1073
        %v1743 = vunpack.c.h.b16 %v1073
        %v1744 = vunpack.c.l.b16 %v1074
        %v1745 = vunpack.c.h.b16 %v1074
        %v1746 = vunpack.c.l.b16 %v1075
        %v1747 = vunpack.c.h.b16 %v1075
        %v1748 = vunpack.c.l.b16 %v1076
        %v1749 = vpack.c.b16 %v1326, %v1317
        %v1750 = vpack.c.b16 %v1327, %v1318
        %v1751 = vpack.c.b16 %v1328, %v1319
        %v1752 = vpack.c.b16 %v1329, %v1320
        %v1753 = vpack.c.b16 %v1330, %v1321
        %v1754 = vpack.c.b16 %v1331, %v1322
        %v1755 = vpack.c.b16 %v1332, %v1323
        %v1756 = vpack.c.b16 %v1333, %v1324
        %v1757 = vpack.c.b16 %v1334, %v1325
        %v1758 = vpack.c.b16 %v1344, %v1335
        %v1759 = vpack.c.b16 %v1345, %v1336
        %v1760 = vpack.c.b16 %v1346, %v1337
        %v1761 = vpack.c.b16 %v1347, %v1338
        %v1762 = vpack.c.b16 %v1348, %v1339
        %v1763 = vpack.c.b16 %v1349, %v1340
        %v1764 = vpack.c.b16 %v1350, %v1341
        %v1765 = vpack.c.b16 %v1351, %v1342
        %v1766 = vpack.c.b16 %v1352, %v1343
        %v1767 = vpack.c.b16 %v1362, %v1353
        %v1768 = vpack.c.b16 %v1363, %v1354
        %v1769 = vpack.c.b16 %v1364, %v1355
        %v1770 = vpack.c.b16 %v1365, %v1356
        %v1771 = vpack.c.b16 %v1366, %v1357
        %v1772 = vpack.c.b16 %v1367, %v1358
        %v1773 = vpack.c.b16 %v1368, %v1359
        %v1774 = vpack.c.b16 %v1369, %v1360
        %v1775 = vpack.c.b16 %v1370, %v1361
        %v1776 = vpack.c.b16 %v1380, %v1371
        %v1777 = vpack.c.b16 %v1381, %v1372
        %v1778 = vpack.c.b16 %v1382, %v1373
        %v1779 = vpack.c.b16 %v1383, %v1374
        %v1780 = vpack.c.b16 %v1384, %v1375
        %v1781 = vpack.c.b16 %v1385, %v1376
        %v1782 = vpack.c.b16 %v1386, %v1377
        %v1783 = vpack.c.b16 %v1387, %v1378
        %v1784 = vpack.c.b16 %v1388, %v1379
        %v1785 = vpack.c.b16 %v1398, %v1389
        %v1786 = vpack.c.b16 %v1399, %v1390
        %v1787 = vpack.c.b16 %v1400, %v1391
        %v1788 = vpack.c.b16 %v1401, %v1392
        %v1789 = vpack.c.b16 %v1402, %v1393
        %v1790 = vpack.c.b16 %v1403, %v1394
        %v1791 = vpack.c.b16 %v1404, %v1395
        %v1792 = vpack.c.b16 %v1405, %v1396
        %v1793 = vpack.c.b16 %v1406, %v1397
        %v1794 = vpack.c.b16 %v1416, %v1407
        %v1795 = vpack.c.b16 %v1417, %v1408
        %v1796 = vpack.c.b16 %v1418, %v1409
        %v1797 = vpack.c.b16 %v1419, %v1410
        %v1798 = vpack.c.b16 %v1420, %v1411
        %v1799 = vpack.c.b16 %v1421, %v1412
        %v1800 = vpack.c.b16 %v1422, %v1413
        %v1801 = vpack.c.b16 %v1423, %v1414
        %v1802 = vpack.c.b16 %v1424, %v1415
        %v1803 = vpack.c.b16 %v1434, %v1425
        %v1804 = vpack.c.b16 %v1435, %v1426
        %v1805 = vpack.c.b16 %v1436, %v1427
        %v1806 = vpack.c.b16 %v1437, %v1428
        %v1807 = vpack.c.b16 %v1438, %v1429
        %v1808 = vpack.c.b16 %v1439, %v1430
        %v1809 = vpack.c.b16 %v1440, %v1431
        %v1810 = vpack.c.b16 %v1441, %v1432
        %v1811 = vpack.c.b16 %v1442, %v1433
        %v1812 = vpack.c.b16 %v1452, %v1443
        %v1813 = vpack.c.b16 %v1453, %v1444
        %v1814 = vpack.c.b16 %v1454, %v1445
        %v1815 = vpack.c.b16 %v1455, %v1446
        %v1816 = vpack.c.b16 %v1456, %v1447
        %v1817 = vpack.c.b16 %v1457, %v1448
        %v1818 = vpack.c.b16 %v1458, %v1449
        %v1819 = vpack.c.b16 %v1459, %v1450
        %v1820 = vpack.c.b16 %v1460, %v1451
        %v1821 = vpack.c.b16 %v1470, %v1461
        %v1822 = vpack.c.b16 %v1471, %v1462
        %v1823 = vpack.c.b16 %v1472, %v1463
        %v1824 = vpack.c.b16 %v1473, %v1464
        %v1825 = vpack.c.b16 %v1474, %v1465
        %v1826 = vpack.c.b16 %v1475, %v1466
        %v1827 = vpack.c.b16 %v1476, %v1467
        %v1828 = vpack.c.b16 %v1477, %v1468
        %v1829 = vpack.c.b16 %v1478, %v1469
        %v1830 = vpack.c.b16 %v1488, %v1479
        %v1831 = vpack.c.b16 %v1489, %v1480
        %v1832 = vpack.c.b16 %v1490, %v1481
        %v1833 = vpack.c.b16 %v1491, %v1482
        %v1834 = vpack.c.b16 %v1492, %v1483
        %v1835 = vpack.c.b16 %v1493, %v1484
        %v1836 = vpack.c.b16 %v1494, %v1485
        %v1837 = vpack.c.b16 %v1495, %v1486
        %v1838 = vpack.c.b16 %v1496, %v1487
        %v1839 = vpack.c.b16 %v1506, %v1497
        %v1840 = vpack.c.b16 %v1507, %v1498
        %v1841 = vpack.c.b16 %v1508, %v1499
        %v1842 = vpack.c.b16 %v1509, %v1500
        %v1843 = vpack.c.b16 %v1510, %v1501
        %v1844 = vpack.c.b16 %v1511, %v1502
        %v1845 = vpack.c.b16 %v1512, %v1503
        %v1846 = vpack.c.b16 %v1513, %v1504
        %v1847 = vpack.c.b16 %v1514, %v1505
        %v1848 = vpack.c.b16 %v1524, %v1515
        %v1849 = vpack.c.b16 %v1525, %v1516
        %v1850 = vpack.c.b16 %v1526, %v1517
        %v1851 = vpack.c.b16 %v1527, %v1518
        %v1852 = vpack.c.b16 %v1528, %v1519
        %v1853 = vpack.c.b16 %v1529, %v1520
        %v1854 = vpack.c.b16 %v1530, %v1521
        %v1855 = vpack.c.b16 %v1531, %v1522
        %v1856 = vpack.c.b16 %v1532, %v1523
        %v1857 = vpack.c.b16 %v1542, %v1533
        %v1858 = vpack.c.b16 %v1543, %v1534
        %v1859 = vpack.c.b16 %v1544, %v1535
        %v1860 = vpack.c.b16 %v1545, %v1536
        %v1861 = vpack.c.b16 %v1546, %v1537
        %v1862 = vpack.c.b16 %v1547, %v1538
        %v1863 = vpack.c.b16 %v1548, %v1539
        %v1864 = vpack.c.b16 %v1549, %v1540
        %v1865 = vpack.c.b16 %v1550, %v1541
        %v1866 = vpack.c.b16 %v1560, %v1551
        %v1867 = vpack.c.b16 %v1561, %v1552
        %v1868 = vpack.c.b16 %v1562, %v1553
        %v1869 = vpack.c.b16 %v1563, %v1554
        %v1870 = vpack.c.b16 %v1564, %v1555
        %v1871 = vpack.c.b16 %v1565, %v1556
        %v1872 = vpack.c.b16 %v1566, %v1557
        %v1873 = vpack.c.b16 %v1567, %v1558
        %v1874 = vpack.c.b16 %v1568, %v1559
        %v1875 = vpack.c.b16 %v1578, %v1569
        %v1876 = vpack.c.b16 %v1579, %v1570
        %v1877 = vpack.c.b16 %v1580, %v1571
        %v1878 = vpack.c.b16 %v1581, %v1572
        %v1879 = vpack.c.b16 %v1582, %v1573
        %v1880 = vpack.c.b16 %v1583, %v1574
        %v1881 = vpack.c.b16 %v1584, %v1575
        %v1882 = vpack.c.b16 %v1585, %v1576
        %v1883 = vpack.c.b16 %v1586, %v1577
        %v1884 = vpack.c.b16 %v1596, %v1587
        %v1885 = vpack.c.b16 %v1597, %v1588
        %v1886 = vpack.c.b16 %v1598, %v1589
        %v1887 = vpack.c.b16 %v1599, %v1590
        %v1888 = vpack.c.b16 %v1600, %v1591
        %v1889 = vpack.c.b16 %v1601, %v1592
        %v1890 = vpack.c.b16 %v1602, %v1593
        %v1891 = vpack.c.b16 %v1603, %v1594
        %v1892 = vpack.c.b16 %v1604, %v1595
        %v1893 = vpack.c.b16 %v1614, %v1605
        %v1894 = vpack.c.b16 %v1615, %v1606
        %v1895 = vpack.c.b16 %v1616, %v1607
        %v1896 = vpack.c.b16 %v1617, %v1608
        %v1897 = vpack.c.b16 %v1618, %v1609
        %v1898 = vpack.c.b16 %v1619, %v1610
        %v1899 = vpack.c.b16 %v1620, %v1611
        %v1900 = vpack.c.b16 %v1621, %v1612
        %v1901 = vpack.c.b16 %v1622, %v1613
        %v1902 = vpack.c.b16 %v1632, %v1623
        %v1903 = vpack.c.b16 %v1633, %v1624
        %v1904 = vpack.c.b16 %v1634, %v1625
        %v1905 = vpack.c.b16 %v1635, %v1626
        %v1906 = vpack.c.b16 %v1636, %v1627
        %v1907 = vpack.c.b16 %v1637, %v1628
        %v1908 = vpack.c.b16 %v1638, %v1629
        %v1909 = vpack.c.b16 %v1639, %v1630
        %v1910 = vpack.c.b16 %v1640, %v1631
        %v1911 = vpack.c.b16 %v1650, %v1641
        %v1912 = vpack.c.b16 %v1651, %v1642
        %v1913 = vpack.c.b16 %v1652, %v1643
        %v1914 = vpack.c.b16 %v1653, %v1644
        %v1915 = vpack.c.b16 %v1654, %v1645
        %v1916 = vpack.c.b16 %v1655, %v1646
        %v1917 = vpack.c.b16 %v1656, %v1647
        %v1918 = vpack.c.b16 %v1657, %v1648
        %v1919 = vpack.c.b16 %v1658, %v1649
        %v1920 = vpack.c.b16 %v1668, %v1659
        %v1921 = vpack.c.b16 %v1669, %v1660
        %v1922 = vpack.c.b16 %v1670, %v1661
        %v1923 = vpack.c.b16 %v1671, %v1662
        %v1924 = vpack.c.b16 %v1672, %v1663
        %v1925 = vpack.c.b16 %v1673, %v1664
        %v1926 = vpack.c.b16 %v1674, %v1665
        %v1927 = vpack.c.b16 %v1675, %v1666
        %v1928 = vpack.c.b16 %v1676, %v1667
        %v1929 = vpack.c.b16 %v1686, %v1677
        %v1930 = vpack.c.b16 %v1687, %v1678
        %v1931 = vpack.c.b16 %v1688, %v1679
        %v1932 = vpack.c.b16 %v1689, %v1680
        %v1933 = vpack.c.b16 %v1690, %v1681
        %v1934 = vpack.c.b16 %v1691, %v1682
        %v1935 = vpack.c.b16 %v1692, %v1683
        %v1936 = vpack.c.b16 %v1693, %v1684
        %v1937 = vpack.c.b16 %v1694, %v1685
        %v1938 = vpack.c.b16 %v1704, %v1695
        %v1939 = vpack.c.b16 %v1705, %v1696
        %v1940 = vpack.c.b16 %v1706, %v1697
        %v1941 = vpack.c.b16 %v1707, %v1698
        %v1942 = vpack.c.b16 %v1708, %v1699
        %v1943 = vpack.c.b16 %v1709, %v1700
        %v1944 = vpack.c.b16 %v1710, %v1701
        %v1945 = vpack.c.b16 %v1711, %v1702
        %v1946 = vpack.c.b16 %v1712, %v1703
        %v1947 = vpack.c.b16 %v1722, %v1713
        %v1948 = vpack.c.b16 %v1723, %v1714
        %v1949 = vpack.c.b16 %v1724, %v1715
        %v1950 = vpack.c.b16 %v1725, %v1716
        %v1951 = vpack.c.b16 %v1726, %v1717
        %v1952 = vpack.c.b16 %v1727, %v1718
        %v1953 = vpack.c.b16 %v1728, %v1719
        %v1954 = vpack.c.b16 %v1729, %v1720
        %v1955 = vpack.c.b16 %v1730, %v1721
        %v1956 = vpack.c.b16 %v1740, %v1731
        %v1957 = vpack.c.b16 %v1741, %v1732
        %v1958 = vpack.c.b16 %v1742, %v1733
        %v1959 = vpack.c.b16 %v1743, %v1734
        %v1960 = vpack.c.b16 %v1744, %v1735
        %v1961 = vpack.c.b16 %v1745, %v1736
        %v1962 = vpack.c.b16 %v1746, %v1737
        %v1963 = vpack.c.b16 %v1747, %v1738
        %v1964 = vpack.c.b16 %v1748, %v1739
        %2181 = vmatprep.subr.bf16.mxu0 %v1750
        %2182 = vmatpush1.bf16.msra.mxu0 %v1749
        %2183 = vmatprep.subr.bf16.mxu0 %v1759
        %2184 = vmatpush1.bf16.msra.mxu0 %v1758
        %2185 = vmatprep.subr.bf16.mxu0 %v1768
        %2186 = vmatpush1.bf16.msra.mxu0 %v1767
        %2187 = vmatprep.subr.bf16.mxu0 %v1777
        %2188 = vmatpush1.bf16.msra.mxu0 %v1776
        %2189 = vmatprep.subr.bf16.mxu0 %v1786
        %2190 = vmatpush1.bf16.msra.mxu0 %v1785
        %2191 = vmatprep.subr.bf16.mxu0 %v1795
        %2192 = vmatpush1.bf16.msra.mxu0 %v1794
        %2193 = vmatprep.subr.bf16.mxu0 %v1804
        %2194 = vmatpush1.bf16.msra.mxu0 %v1803
        %2195 = vmatprep.subr.bf16.mxu0 %v1813
        %2196 = vmatpush1.bf16.msra.mxu0 %v1812
        %2197 = vmatprep.subr.bf16.mxu0 %v1822
        %2198 = vmatpush1.bf16.msra.mxu0 %v1821
        %2199 = vmatprep.subr.bf16.mxu0 %v1831
        %2200 = vmatpush1.bf16.msra.mxu0 %v1830
        %2201 = vmatprep.subr.bf16.mxu0 %v1840
        %2202 = vmatpush1.bf16.msra.mxu0 %v1839
        %2203 = vmatprep.subr.bf16.mxu0 %v1849
        %2204 = vmatpush1.bf16.msra.mxu0 %v1848
        %2205 = vmatprep.subr.bf16.mxu0 %v1858
        %2206 = vmatpush1.bf16.msra.mxu0 %v1857
        %2207 = vmatprep.subr.bf16.mxu0 %v1867
        %2208 = vmatpush1.bf16.msra.mxu0 %v1866
        %2209 = vmatprep.subr.bf16.mxu0 %v1876
        %2210 = vmatpush1.bf16.msra.mxu0 %v1875
        %2211 = vmatprep.subr.bf16.mxu0 %v1885
        %2212 = vmatpush1.bf16.msra.mxu0 %v1884
        %2213 = vmatprep.mubr.bf16.mxu0 %v832
        %2214 = vmatmul.mubr.bf16.gmra.mrb[0].mxu0 %v831
        %v2215 = vpop.f32.mrb[0].mxu0
        %v2216 = vadd.f32 0.0, %v2215
        %v2217 = vpop.f32.mrb[0].mxu0
        %v2218 = vadd.f32 0.0, %v2217
        %v2219 = vpop.f32.mrb[0].mxu0
        %v2220 = vpop.f32.mrb[0].mxu0
        %2221 = vdwg.mxu0
        %2222 = vmatprep.subr.bf16.mxu0 %v1894
        %2223 = vmatpush1.bf16.msra.mxu0 %v1893
        %2224 = vmatprep.subr.bf16.mxu0 %v1903
        %2225 = vmatpush1.bf16.msra.mxu0 %v1902
        %2226 = vmatprep.subr.bf16.mxu0 %v1912
        %2227 = vmatpush1.bf16.msra.mxu0 %v1911
        %2228 = vmatprep.subr.bf16.mxu0 %v1921
        %2229 = vmatpush1.bf16.msra.mxu0 %v1920
        %2230 = vmatprep.subr.bf16.mxu0 %v1930
        %2231 = vmatpush1.bf16.msra.mxu0 %v1929
        %2232 = vmatprep.subr.bf16.mxu0 %v1939
        %2233 = vmatpush1.bf16.msra.mxu0 %v1938
        %2234 = vmatprep.subr.bf16.mxu0 %v1948
        %2235 = vmatpush1.bf16.msra.mxu0 %v1947
        %2236 = vmatprep.subr.bf16.mxu0 %v1957
        %2237 = vmatpush1.bf16.msra.mxu0 %v1956
        %2238 = vmatprep.subr.bf16.mxu0 0
        %2239 = vmatpush1.bf16.msra.mxu0 0
        %2240 = vmatprep.subr.bf16.mxu0 0
        %2241 = vmatpush1.bf16.msra.mxu0 0
        %2242 = vmatprep.subr.bf16.mxu0 0
        %2243 = vmatpush1.bf16.msra.mxu0 0
        %2244 = vmatprep.subr.bf16.mxu0 0
        %2245 = vmatpush1.bf16.msra.mxu0 0
        %2246 = vmatprep.subr.bf16.mxu0 0
        %2247 = vmatpush1.bf16.msra.mxu0 0
        %2248 = vmatprep.subr.bf16.mxu0 0
        %2249 = vmatpush1.bf16.msra.mxu0 0
        %2250 = vmatprep.subr.bf16.mxu0 0
        %2251 = vmatpush1.bf16.msra.mxu0 0
        %2252 = vmatprep.subr.bf16.mxu0 0
        %2253 = vmatpush1.bf16.msra.mxu0 0
        %2254 = vmatprep.mubr.bf16.mxu0 0
        %2255 = vmatmul.mubr.bf16.gmra.mrb[0].mxu0 %v833
        %v2256 = vpop.f32.mrb[0].mxu0
        %v2257 = vadd.f32 %v2216, %v2256
        %v2258 = vpop.f32.mrb[0].mxu0
        %v2259 = vadd.f32 %v2218, %v2258
        %v2260 = vpop.f32.mrb[0].mxu0
        %v2261 = vpop.f32.mrb[0].mxu0
        %2262 = vdwg.mxu0
        %2263 = vmatprep.subr.bf16.mxu0 %v1752
        %2264 = vmatpush1.bf16.msra.mxu0 %v1751
        %2265 = vmatprep.subr.bf16.mxu0 %v1761
        %2266 = vmatpush1.bf16.msra.mxu0 %v1760
        %2267 = vmatprep.subr.bf16.mxu0 %v1770
        %2268 = vmatpush1.bf16.msra.mxu0 %v1769
        %2269 = vmatprep.subr.bf16.mxu0 %v1779
        %2270 = vmatpush1.bf16.msra.mxu0 %v1778
        %2271 = vmatprep.subr.bf16.mxu0 %v1788
        %2272 = vmatpush1.bf16.msra.mxu0 %v1787
        %2273 = vmatprep.subr.bf16.mxu0 %v1797
        %2274 = vmatpush1.bf16.msra.mxu0 %v1796
        %2275 = vmatprep.subr.bf16.mxu0 %v1806
        %2276 = vmatpush1.bf16.msra.mxu0 %v1805
        %2277 = vmatprep.subr.bf16.mxu0 %v1815
        %2278 = vmatpush1.bf16.msra.mxu0 %v1814
        %2279 = vmatprep.subr.bf16.mxu0 %v1824
        %2280 = vmatpush1.bf16.msra.mxu0 %v1823
        %2281 = vmatprep.subr.bf16.mxu0 %v1833
        %2282 = vmatpush1.bf16.msra.mxu0 %v1832
        %2283 = vmatprep.subr.bf16.mxu0 %v1842
        %2284 = vmatpush1.bf16.msra.mxu0 %v1841
        %2285 = vmatprep.subr.bf16.mxu0 %v1851
        %2286 = vmatpush1.bf16.msra.mxu0 %v1850
        %2287 = vmatprep.subr.bf16.mxu0 %v1860
        %2288 = vmatpush1.bf16.msra.mxu0 %v1859
        %2289 = vmatprep.subr.bf16.mxu0 %v1869
        %2290 = vmatpush1.bf16.msra.mxu0 %v1868
        %2291 = vmatprep.subr.bf16.mxu0 %v1878
        %2292 = vmatpush1.bf16.msra.mxu0 %v1877
        %2293 = vmatprep.subr.bf16.mxu0 %v1887
        %2294 = vmatpush1.bf16.msra.mxu0 %v1886
        %2295 = vmatprep.mubr.bf16.mxu0 %v832
        %2296 = vmatmul.mubr.bf16.gmra.mrb[0].mxu0 %v831
        %v2297 = vpop.f32.mrb[0].mxu0
        %v2298 = vadd.f32 0.0, %v2297
        %v2299 = vpop.f32.mrb[0].mxu0
        %v2300 = vadd.f32 0.0, %v2299
        %v2301 = vpop.f32.mrb[0].mxu0
        %v2302 = vpop.f32.mrb[0].mxu0
        %2303 = vdwg.mxu0
        %2304 = vmatprep.subr.bf16.mxu0 %v1896
        %2305 = vmatpush1.bf16.msra.mxu0 %v1895
        %2306 = vmatprep.subr.bf16.mxu0 %v1905
        %2307 = vmatpush1.bf16.msra.mxu0 %v1904
        %2308 = vmatprep.subr.bf16.mxu0 %v1914
        %2309 = vmatpush1.bf16.msra.mxu0 %v1913
        %2310 = vmatprep.subr.bf16.mxu0 %v1923
        %2311 = vmatpush1.bf16.msra.mxu0 %v1922
        %2312 = vmatprep.subr.bf16.mxu0 %v1932
        %2313 = vmatpush1.bf16.msra.mxu0 %v1931
        %2314 = vmatprep.subr.bf16.mxu0 %v1941
        %2315 = vmatpush1.bf16.msra.mxu0 %v1940
        %2316 = vmatprep.subr.bf16.mxu0 %v1950
        %2317 = vmatpush1.bf16.msra.mxu0 %v1949
        %2318 = vmatprep.subr.bf16.mxu0 %v1959
        %2319 = vmatpush1.bf16.msra.mxu0 %v1958
        %2320 = vmatprep.subr.bf16.mxu0 0
        %2321 = vmatpush1.bf16.msra.mxu0 0
        %2322 = vmatprep.subr.bf16.mxu0 0
        %2323 = vmatpush1.bf16.msra.mxu0 0
        %2324 = vmatprep.subr.bf16.mxu0 0
        %2325 = vmatpush1.bf16.msra.mxu0 0
        %2326 = vmatprep.subr.bf16.mxu0 0
        %2327 = vmatpush1.bf16.msra.mxu0 0
        %2328 = vmatprep.subr.bf16.mxu0 0
        %2329 = vmatpush1.bf16.msra.mxu0 0
        %2330 = vmatprep.subr.bf16.mxu0 0
        %2331 = vmatpush1.bf16.msra.mxu0 0
        %2332 = vmatprep.subr.bf16.mxu0 0
        %2333 = vmatpush1.bf16.msra.mxu0 0
        %2334 = vmatprep.subr.bf16.mxu0 0
        %2335 = vmatpush1.bf16.msra.mxu0 0
        %2336 = vmatprep.mubr.bf16.mxu0 0
        %2337 = vmatmul.mubr.bf16.gmra.mrb[0].mxu0 %v833
        %v2338 = vpop.f32.mrb[0].mxu0
        %v2339 = vadd.f32 %v2298, %v2338
        %v2340 = vpop.f32.mrb[0].mxu0
        %v2341 = vadd.f32 %v2300, %v2340
        %v2342 = vpop.f32.mrb[0].mxu0
        %v2343 = vpop.f32.mrb[0].mxu0
        %2344 = vdwg.mxu0
        %2345 = vmatprep.subr.bf16.mxu0 %v1754
        %2346 = vmatpush1.bf16.msra.mxu0 %v1753
        %2347 = vmatprep.subr.bf16.mxu0 %v1763
        %2348 = vmatpush1.bf16.msra.mxu0 %v1762
        %2349 = vmatprep.subr.bf16.mxu0 %v1772
        %2350 = vmatpush1.bf16.msra.mxu0 %v1771
        %2351 = vmatprep.subr.bf16.mxu0 %v1781
        %2352 = vmatpush1.bf16.msra.mxu0 %v1780
        %2353 = vmatprep.subr.bf16.mxu0 %v1790
        %2354 = vmatpush1.bf16.msra.mxu0 %v1789
        %2355 = vmatprep.subr.bf16.mxu0 %v1799
        %2356 = vmatpush1.bf16.msra.mxu0 %v1798
        %2357 = vmatprep.subr.bf16.mxu0 %v1808
        %2358 = vmatpush1.bf16.msra.mxu0 %v1807
        %2359 = vmatprep.subr.bf16.mxu0 %v1817
        %2360 = vmatpush1.bf16.msra.mxu0 %v1816
        %2361 = vmatprep.subr.bf16.mxu0 %v1826
        %2362 = vmatpush1.bf16.msra.mxu0 %v1825
        %2363 = vmatprep.subr.bf16.mxu0 %v1835
        %2364 = vmatpush1.bf16.msra.mxu0 %v1834
        %2365 = vmatprep.subr.bf16.mxu0 %v1844
        %2366 = vmatpush1.bf16.msra.mxu0 %v1843
        %2367 = vmatprep.subr.bf16.mxu0 %v1853
        %2368 = vmatpush1.bf16.msra.mxu0 %v1852
        %2369 = vmatprep.subr.bf16.mxu0 %v1862
        %2370 = vmatpush1.bf16.msra.mxu0 %v1861
        %2371 = vmatprep.subr.bf16.mxu0 %v1871
        %2372 = vmatpush1.bf16.msra.mxu0 %v1870
        %2373 = vmatprep.subr.bf16.mxu0 %v1880
        %2374 = vmatpush1.bf16.msra.mxu0 %v1879
        %2375 = vmatprep.subr.bf16.mxu0 %v1889
        %2376 = vmatpush1.bf16.msra.mxu0 %v1888
        %2377 = vmatprep.mubr.bf16.mxu0 %v832
        %2378 = vmatmul.mubr.bf16.gmra.mrb[0].mxu0 %v831
        %v2379 = vpop.f32.mrb[0].mxu0
        %v2380 = vadd.f32 0.0, %v2379
        %v2381 = vpop.f32.mrb[0].mxu0
        %v2382 = vadd.f32 0.0, %v2381
        %v2383 = vpop.f32.mrb[0].mxu0
        %v2384 = vpop.f32.mrb[0].mxu0
        %2385 = vdwg.mxu0
        %2386 = vmatprep.subr.bf16.mxu0 %v1898
        %2387 = vmatpush1.bf16.msra.mxu0 %v1897
        %2388 = vmatprep.subr.bf16.mxu0 %v1907
        %2389 = vmatpush1.bf16.msra.mxu0 %v1906
        %2390 = vmatprep.subr.bf16.mxu0 %v1916
        %2391 = vmatpush1.bf16.msra.mxu0 %v1915
        %2392 = vmatprep.subr.bf16.mxu0 %v1925
        %2393 = vmatpush1.bf16.msra.mxu0 %v1924
        %2394 = vmatprep.subr.bf16.mxu0 %v1934
        %2395 = vmatpush1.bf16.msra.mxu0 %v1933
        %2396 = vmatprep.subr.bf16.mxu0 %v1943
        %2397 = vmatpush1.bf16.msra.mxu0 %v1942
        %2398 = vmatprep.subr.bf16.mxu0 %v1952
        %2399 = vmatpush1.bf16.msra.mxu0 %v1951
        %2400 = vmatprep.subr.bf16.mxu0 %v1961
        %2401 = vmatpush1.bf16.msra.mxu0 %v1960
        %2402 = vmatprep.subr.bf16.mxu0 0
        %2403 = vmatpush1.bf16.msra.mxu0 0
        %2404 = vmatprep.subr.bf16.mxu0 0
        %2405 = vmatpush1.bf16.msra.mxu0 0
        %2406 = vmatprep.subr.bf16.mxu0 0
        %2407 = vmatpush1.bf16.msra.mxu0 0
        %2408 = vmatprep.subr.bf16.mxu0 0
        %2409 = vmatpush1.bf16.msra.mxu0 0
        %2410 = vmatprep.subr.bf16.mxu0 0
        %2411 = vmatpush1.bf16.msra.mxu0 0
        %2412 = vmatprep.subr.bf16.mxu0 0
        %2413 = vmatpush1.bf16.msra.mxu0 0
        %2414 = vmatprep.subr.bf16.mxu0 0
        %2415 = vmatpush1.bf16.msra.mxu0 0
        %2416 = vmatprep.subr.bf16.mxu0 0
        %2417 = vmatpush1.bf16.msra.mxu0 0
        %2418 = vmatprep.mubr.bf16.mxu0 0
        %2419 = vmatmul.mubr.bf16.gmra.mrb[0].mxu0 %v833
        %v2420 = vpop.f32.mrb[0].mxu0
        %v2421 = vadd.f32 %v2380, %v2420
        %v2422 = vpop.f32.mrb[0].mxu0
        %v2423 = vadd.f32 %v2382, %v2422
        %v2424 = vpop.f32.mrb[0].mxu0
        %v2425 = vpop.f32.mrb[0].mxu0
        %2426 = vdwg.mxu0
        %2427 = vmatprep.subr.bf16.mxu0 %v1756
        %2428 = vmatpush1.bf16.msra.mxu0 %v1755
        %2429 = vmatprep.subr.bf16.mxu0 %v1765
        %2430 = vmatpush1.bf16.msra.mxu0 %v1764
        %2431 = vmatprep.subr.bf16.mxu0 %v1774
        %2432 = vmatpush1.bf16.msra.mxu0 %v1773
        %2433 = vmatprep.subr.bf16.mxu0 %v1783
        %2434 = vmatpush1.bf16.msra.mxu0 %v1782
        %2435 = vmatprep.subr.bf16.mxu0 %v1792
        %2436 = vmatpush1.bf16.msra.mxu0 %v1791
        %2437 = vmatprep.subr.bf16.mxu0 %v1801
        %2438 = vmatpush1.bf16.msra.mxu0 %v1800
        %2439 = vmatprep.subr.bf16.mxu0 %v1810
        %2440 = vmatpush1.bf16.msra.mxu0 %v1809
        %2441 = vmatprep.subr.bf16.mxu0 %v1819
        %2442 = vmatpush1.bf16.msra.mxu0 %v1818
        %2443 = vmatprep.subr.bf16.mxu0 %v1828
        %2444 = vmatpush1.bf16.msra.mxu0 %v1827
        %2445 = vmatprep.subr.bf16.mxu0 %v1837
        %2446 = vmatpush1.bf16.msra.mxu0 %v1836
        %2447 = vmatprep.subr.bf16.mxu0 %v1846
        %2448 = vmatpush1.bf16.msra.mxu0 %v1845
        %2449 = vmatprep.subr.bf16.mxu0 %v1855
        %2450 = vmatpush1.bf16.msra.mxu0 %v1854
        %2451 = vmatprep.subr.bf16.mxu0 %v1864
        %2452 = vmatpush1.bf16.msra.mxu0 %v1863
        %2453 = vmatprep.subr.bf16.mxu0 %v1873
        %2454 = vmatpush1.bf16.msra.mxu0 %v1872
        %2455 = vmatprep.subr.bf16.mxu0 %v1882
        %2456 = vmatpush1.bf16.msra.mxu0 %v1881
        %2457 = vmatprep.subr.bf16.mxu0 %v1891
        %2458 = vmatpush1.bf16.msra.mxu0 %v1890
        %2459 = vmatprep.mubr.bf16.mxu0 %v832
        %2460 = vmatmul.mubr.bf16.gmra.mrb[0].mxu0 %v831
        %v2461 = vpop.f32.mrb[0].mxu0
        %v2462 = vadd.f32 0.0, %v2461
        %v2463 = vpop.f32.mrb[0].mxu0
        %v2464 = vadd.f32 0.0, %v2463
        %v2465 = vpop.f32.mrb[0].mxu0
        %v2466 = vpop.f32.mrb[0].mxu0
        %2467 = vdwg.mxu0
        %2468 = vmatprep.subr.bf16.mxu0 %v1900
        %2469 = vmatpush1.bf16.msra.mxu0 %v1899
        %2470 = vmatprep.subr.bf16.mxu0 %v1909
        %2471 = vmatpush1.bf16.msra.mxu0 %v1908
        %2472 = vmatprep.subr.bf16.mxu0 %v1918
        %2473 = vmatpush1.bf16.msra.mxu0 %v1917
        %2474 = vmatprep.subr.bf16.mxu0 %v1927
        %2475 = vmatpush1.bf16.msra.mxu0 %v1926
        %2476 = vmatprep.subr.bf16.mxu0 %v1936
        %2477 = vmatpush1.bf16.msra.mxu0 %v1935
        %2478 = vmatprep.subr.bf16.mxu0 %v1945
        %2479 = vmatpush1.bf16.msra.mxu0 %v1944
        %2480 = vmatprep.subr.bf16.mxu0 %v1954
        %2481 = vmatpush1.bf16.msra.mxu0 %v1953
        %2482 = vmatprep.subr.bf16.mxu0 %v1963
        %2483 = vmatpush1.bf16.msra.mxu0 %v1962
        %2484 = vmatprep.subr.bf16.mxu0 0
        %2485 = vmatpush1.bf16.msra.mxu0 0
        %2486 = vmatprep.subr.bf16.mxu0 0
        %2487 = vmatpush1.bf16.msra.mxu0 0
        %2488 = vmatprep.subr.bf16.mxu0 0
        %2489 = vmatpush1.bf16.msra.mxu0 0
        %2490 = vmatprep.subr.bf16.mxu0 0
        %2491 = vmatpush1.bf16.msra.mxu0 0
        %2492 = vmatprep.subr.bf16.mxu0 0
        %2493 = vmatpush1.bf16.msra.mxu0 0
        %2494 = vmatprep.subr.bf16.mxu0 0
        %2495 = vmatpush1.bf16.msra.mxu0 0
        %2496 = vmatprep.subr.bf16.mxu0 0
        %2497 = vmatpush1.bf16.msra.mxu0 0
        %2498 = vmatprep.subr.bf16.mxu0 0
        %2499 = vmatpush1.bf16.msra.mxu0 0
        %2500 = vmatprep.mubr.bf16.mxu0 0
        %2501 = vmatmul.mubr.bf16.gmra.mrb[0].mxu0 %v833
        %v2502 = vpop.f32.mrb[0].mxu0
        %v2503 = vadd.f32 %v2462, %v2502
        %v2504 = vpop.f32.mrb[0].mxu0
        %v2505 = vadd.f32 %v2464, %v2504
        %v2506 = vpop.f32.mrb[0].mxu0
        %v2507 = vpop.f32.mrb[0].mxu0
        %2508 = vdwg.mxu0
        %2509 = vmatprep.subr.bf16.mxu0 0
        %2510 = vmatpush1.bf16.msra.mxu0 %v1757
        %2511 = vmatprep.subr.bf16.mxu0 0
        %2512 = vmatpush1.bf16.msra.mxu0 %v1766
        %2513 = vmatprep.subr.bf16.mxu0 0
        %2514 = vmatpush1.bf16.msra.mxu0 %v1775
        %2515 = vmatprep.subr.bf16.mxu0 0
        %2516 = vmatpush1.bf16.msra.mxu0 %v1784
        %2517 = vmatprep.subr.bf16.mxu0 0
        %2518 = vmatpush1.bf16.msra.mxu0 %v1793
        %2519 = vmatprep.subr.bf16.mxu0 0
        %2520 = vmatpush1.bf16.msra.mxu0 %v1802
        %2521 = vmatprep.subr.bf16.mxu0 0
        %2522 = vmatpush1.bf16.msra.mxu0 %v1811
        %2523 = vmatprep.subr.bf16.mxu0 0
        %2524 = vmatpush1.bf16.msra.mxu0 %v1820
        %2525 = vmatprep.subr.bf16.mxu0 0
        %2526 = vmatpush1.bf16.msra.mxu0 %v1829
        %2527 = vmatprep.subr.bf16.mxu0 0
        %2528 = vmatpush1.bf16.msra.mxu0 %v1838
        %2529 = vmatprep.subr.bf16.mxu0 0
        %2530 = vmatpush1.bf16.msra.mxu0 %v1847
        %2531 = vmatprep.subr.bf16.mxu0 0
        %2532 = vmatpush1.bf16.msra.mxu0 %v1856
        %2533 = vmatprep.subr.bf16.mxu0 0
        %2534 = vmatpush1.bf16.msra.mxu0 %v1865
        %2535 = vmatprep.subr.bf16.mxu0 0
        %2536 = vmatpush1.bf16.msra.mxu0 %v1874
        %2537 = vmatprep.subr.bf16.mxu0 0
        %2538 = vmatpush1.bf16.msra.mxu0 %v1883
        %2539 = vmatprep.subr.bf16.mxu0 0
        %2540 = vmatpush1.bf16.msra.mxu0 %v1892
        %2541 = vmatprep.mubr.bf16.mxu0 %v832
        %2542 = vmatmul.mubr.bf16.gmra.mrb[0].mxu0 %v831
        %v2543 = vpop.f32.mrb[0].mxu0
        %v2544 = vadd.f32 0.0, %v2543
        %v2545 = vpop.f32.mrb[0].mxu0
        %v2546 = vpop.f32.mrb[0].mxu0
        %v2547 = vpop.f32.mrb[0].mxu0
        %2548 = vdwg.mxu0
        %2549 = vmatprep.subr.bf16.mxu0 0
        %2550 = vmatpush1.bf16.msra.mxu0 %v1901
        %2551 = vmatprep.subr.bf16.mxu0 0
        %2552 = vmatpush1.bf16.msra.mxu0 %v1910
        %2553 = vmatprep.subr.bf16.mxu0 0
        %2554 = vmatpush1.bf16.msra.mxu0 %v1919
        %2555 = vmatprep.subr.bf16.mxu0 0
        %2556 = vmatpush1.bf16.msra.mxu0 %v1928
        %2557 = vmatprep.subr.bf16.mxu0 0
        %2558 = vmatpush1.bf16.msra.mxu0 %v1937
        %2559 = vmatprep.subr.bf16.mxu0 0
        %2560 = vmatpush1.bf16.msra.mxu0 %v1946
        %2561 = vmatprep.subr.bf16.mxu0 0
        %2562 = vmatpush1.bf16.msra.mxu0 %v1955
        %2563 = vmatprep.subr.bf16.mxu0 0
        %2564 = vmatpush1.bf16.msra.mxu0 %v1964
        %2565 = vmatprep.subr.bf16.mxu0 0
        %2566 = vmatpush1.bf16.msra.mxu0 0
        %2567 = vmatprep.subr.bf16.mxu0 0
        %2568 = vmatpush1.bf16.msra.mxu0 0
        %2569 = vmatprep.subr.bf16.mxu0 0
        %2570 = vmatpush1.bf16.msra.mxu0 0
        %2571 = vmatprep.subr.bf16.mxu0 0
        %2572 = vmatpush1.bf16.msra.mxu0 0
        %2573 = vmatprep.subr.bf16.mxu0 0
        %2574 = vmatpush1.bf16.msra.mxu0 0
        %2575 = vmatprep.subr.bf16.mxu0 0
        %2576 = vmatpush1.bf16.msra.mxu0 0
        %2577 = vmatprep.subr.bf16.mxu0 0
        %2578 = vmatpush1.bf16.msra.mxu0 0
        %2579 = vmatprep.subr.bf16.mxu0 0
        %2580 = vmatpush1.bf16.msra.mxu0 0
        %2581 = vmatprep.mubr.bf16.mxu0 0
        %2582 = vmatmul.mubr.bf16.gmra.mrb[0].mxu0 %v833
        %v2583 = vpop.f32.mrb[0].mxu0
        %v2584 = vadd.f32 %v2544, %v2583
        %v2585 = vpop.f32.mrb[0].mxu0
        %v2586 = vpop.f32.mrb[0].mxu0
        %v2587 = vpop.f32.mrb[0].mxu0
        %2588 = vdwg.mxu0
        %v2589 = vpack.c.bf16 %v2257, %v2257
        %v2590 = vpack.c.bf16 %v2259, %v2259
        %v2591 = vpack.c.bf16 %v2339, %v2339
        %v2592 = vpack.c.bf16 %v2341, %v2341
        %v2593 = vpack.c.bf16 %v2421, %v2421
        %v2594 = vpack.c.bf16 %v2423, %v2423
        %v2595 = vpack.c.bf16 %v2503, %v2503
        %v2596 = vpack.c.bf16 %v2505, %v2505
        %v2597 = vpack.c.bf16 %v2584, %v2584
        %v2607 = vunpack.c.l.b16 %v2589
        %v2608 = vunpack.c.l.b16 %v2590
        %v2609 = vunpack.c.l.b16 %v2591
        %v2610 = vunpack.c.l.b16 %v2592
        %v2611 = vunpack.c.l.b16 %v2593
        %v2612 = vunpack.c.l.b16 %v2594
        %v2613 = vunpack.c.l.b16 %v2595
        %v2614 = vunpack.c.l.b16 %v2596
        %v2615 = vunpack.c.l.b16 %v2597
        %v2616 = vpack.c.b16 %v2608, %v2607
        %v2617 = vpack.c.b16 %v2610, %v2609
        %v2618 = vpack.c.b16 %v2612, %v2611
        %v2619 = vpack.c.b16 %v2614, %v2613
        %v2620 = vpack.c.b16 %v2615, %v2615
        %2626 = vst [vmem:[#allocation3] sm:$0xff] %v2616
        %2627 = vst [vmem:[#allocation3 + $0x8] sm:$0xff] %v2617
        %2628 = vst [vmem:[#allocation3 + $0x10] sm:$0xff] %v2618
        %2629 = vst [vmem:[#allocation3 + $0x18] sm:$0xff] %v2619
        %2630 = vst [vmem:[#allocation3 + $0x20] sm:$0xf] %v2620
        %v2631 = vld [vmem:[#allocation5] sm:$0xff]
        %v2632 = vld [vmem:[#allocation3] sm:$0xf]
        %v2633 = vld [vmem:[#allocation3 + $0xc] sm:$0xf]
        %v2634 = vld [vmem:[#allocation3 + $0x18] sm:$0xf]
        %vm2635 = vcmask 523264
        %v2637 = vsel %vm2635, %v2632, 0
        %v2640 = vsel %vm2635, %v2633, 0
        %2642 = vmatprep.subr.bf16.mxu0 0
        %2643 = vmatpush1.bf16.xpose.msra.mxu0 %v2640
        %2644 = vmatprep.subr.bf16.mxu0 0
        %2645 = vmatpush1.bf16.xpose.msra.mxu0 0
        %2646 = vmatprep.subr.bf16.mxu0 0
        %2647 = vmatpush1.bf16.xpose.msra.mxu0 0
        %2648 = vmatprep.subr.bf16.mxu0 0
        %2649 = vmatpush1.bf16.xpose.msra.mxu0 0
        %2650 = vmatprep.subr.bf16.mxu0 0
        %2651 = vmatpush1.bf16.xpose.msra.mxu0 0
        %2652 = vmatprep.subr.bf16.mxu0 0
        %2653 = vmatpush1.bf16.xpose.msra.mxu0 0
        %2654 = vmatprep.subr.bf16.mxu0 0
        %2655 = vmatpush1.bf16.xpose.msra.mxu0 0
        %2656 = vmatprep.subr.bf16.mxu0 0
        %2657 = vmatpush1.bf16.xpose.msra.mxu0 0
        %2658 = vmatprep.subr.bf16.mxu0 0
        %2659 = vmatpush1.bf16.xpose.msra.mxu0 0
        %2660 = vmatprep.subr.bf16.mxu0 0
        %2661 = vmatpush1.bf16.xpose.msra.mxu0 0
        %2662 = vmatprep.subr.bf16.mxu0 0
        %2663 = vmatpush1.bf16.xpose.msra.mxu0 0
        %2664 = vmatprep.subr.bf16.mxu0 0
        %2665 = vmatpush1.bf16.xpose.msra.mxu0 0
        %2666 = vmatprep.subr.bf16.mxu0 0
        %2667 = vmatpush1.bf16.xpose.msra.mxu0 0
        %2668 = vmatprep.subr.bf16.mxu0 0
        %2669 = vmatpush1.bf16.xpose.msra.mxu0 0
        %2670 = vmatprep.subr.bf16.mxu0 0
        %2671 = vmatpush1.bf16.xpose.msra.mxu0 0
        %2672 = vmatprep.subr.bf16.mxu0 0
        %2673 = vmatpush1.bf16.xpose.msra.mxu0 0
        %2674 = vmatprep.mubr.bf16.mxu0 0
        %2675 = vmatmul.mubr.bf16.gmra.mrb[0].mxu0 %v2637
        %v2676 = vpop.f32.mrb[0].mxu0
        %v2677 = vadd.f32 %v2631, %v2676
        %v2678 = vpop.f32.mrb[0].mxu0
        %v2679 = vpop.f32.mrb[0].mxu0
        %v2680 = vpop.f32.mrb[0].mxu0
        %2681 = vdwg.mxu0
        %vm2682 = vcmask 64512
        %v2683 = vsel %vm2682, %v2677, -inf
        %2684 = vmax.xlane.f32.xlu0 %v2683
        %v2685 = vpop.xlane.xlu0 %2684
        %v2686 = vsub.f32 %v2677, %v2685
        %v2687 = vmul.f32 %v2686, 1.442695
        %v2688 = vpow.pop %v2687
        %v2689 = vsel %vm2682, %v2688, 0.0
        %2690 = vadd.xlane.f32.xlu0 %v2689
        %v2691 = vpop.xlane.xlu0 %2690
        %v2692 = vpack.c.bf16 %v2688, %v2688
        %v2694 = vsel %vm2682, %v2692, 0
        %vm2696 = vcmask 1043456
        %v2698 = vsel %vm2696, %v2634, 0
        %2700 = vmatprep.subr.bf16.mxu0 0
        %2701 = vmatpush1.bf16.msra.mxu0 %v2698
        %2702 = vmatprep.subr.bf16.mxu0 0
        %2703 = vmatpush1.bf16.msra.mxu0 0
        %2704 = vmatprep.subr.bf16.mxu0 0
        %2705 = vmatpush1.bf16.msra.mxu0 0
        %2706 = vmatprep.subr.bf16.mxu0 0
        %2707 = vmatpush1.bf16.msra.mxu0 0
        %2708 = vmatprep.subr.bf16.mxu0 0
        %2709 = vmatpush1.bf16.msra.mxu0 0
        %2710 = vmatprep.subr.bf16.mxu0 0
        %2711 = vmatpush1.bf16.msra.mxu0 0
        %2712 = vmatprep.subr.bf16.mxu0 0
        %2713 = vmatpush1.bf16.msra.mxu0 0
        %2714 = vmatprep.subr.bf16.mxu0 0
        %2715 = vmatpush1.bf16.msra.mxu0 0
        %2716 = vmatprep.subr.bf16.mxu0 0
        %2717 = vmatpush1.bf16.msra.mxu0 0
        %2718 = vmatprep.subr.bf16.mxu0 0
        %2719 = vmatpush1.bf16.msra.mxu0 0
        %2720 = vmatprep.subr.bf16.mxu0 0
        %2721 = vmatpush1.bf16.msra.mxu0 0
        %2722 = vmatprep.subr.bf16.mxu0 0
        %2723 = vmatpush1.bf16.msra.mxu0 0
        %2724 = vmatprep.subr.bf16.mxu0 0
        %2725 = vmatpush1.bf16.msra.mxu0 0
        %2726 = vmatprep.subr.bf16.mxu0 0
        %2727 = vmatpush1.bf16.msra.mxu0 0
        %2728 = vmatprep.subr.bf16.mxu0 0
        %2729 = vmatpush1.bf16.msra.mxu0 0
        %2730 = vmatprep.subr.bf16.mxu0 0
        %2731 = vmatpush1.bf16.msra.mxu0 0
        %2732 = vmatprep.mubr.bf16.mxu0 0
        %2733 = vmatmul.mubr.bf16.gmra.mrb[0].mxu0 %v2694
        %v2734 = vpop.f32.mrb[0].mxu0
        %v2735 = vadd.f32 0.0, %v2734
        %v2736 = vpop.f32.mrb[0].mxu0
        %v2737 = vpop.f32.mrb[0].mxu0
        %v2738 = vpop.f32.mrb[0].mxu0
        %2739 = vdwg.mxu0
        %v2740 = vrcp.pop %v2691
        %v2741 = vmul.f32 %v2735, %v2740
        %v2742 = vpack.c.bf16 %v2741, %v2741
        %v2744 = vunpack.c.l.b16 %v2632
        %v2745 = vpack.c.b16 %v2744, %v2744
        %2746 = vrot.lane.b32.xlu0 %v2745, 64
        %v2747 = vpop.permute.xlu0 %2746
        %v2749 = vunpack.c.l.b16 %v2633
        %v2750 = vpack.c.b16 %v2749, %v2749
        %2751 = vrot.lane.b32.xlu0 %v2750, 64
        %v2752 = vpop.permute.xlu0 %2751
        %v2754 = vsel %vm2635, %v2747, 0
        %v2757 = vsel %vm2635, %v2752, 0
        %2759 = vmatprep.subr.bf16.mxu0 0
        %2760 = vmatpush1.bf16.xpose.msra.mxu0 %v2757
        %2761 = vmatprep.subr.bf16.mxu0 0
        %2762 = vmatpush1.bf16.xpose.msra.mxu0 0
        %2763 = vmatprep.subr.bf16.mxu0 0
        %2764 = vmatpush1.bf16.xpose.msra.mxu0 0
        %2765 = vmatprep.subr.bf16.mxu0 0
        %2766 = vmatpush1.bf16.xpose.msra.mxu0 0
        %2767 = vmatprep.subr.bf16.mxu0 0
        %2768 = vmatpush1.bf16.xpose.msra.mxu0 0
        %2769 = vmatprep.subr.bf16.mxu0 0
        %2770 = vmatpush1.bf16.xpose.msra.mxu0 0
        %2771 = vmatprep.subr.bf16.mxu0 0
        %2772 = vmatpush1.bf16.xpose.msra.mxu0 0
        %2773 = vmatprep.subr.bf16.mxu0 0
        %2774 = vmatpush1.bf16.xpose.msra.mxu0 0
        %2775 = vmatprep.subr.bf16.mxu0 0
        %2776 = vmatpush1.bf16.xpose.msra.mxu0 0
        %2777 = vmatprep.subr.bf16.mxu0 0
        %2778 = vmatpush1.bf16.xpose.msra.mxu0 0
        %2779 = vmatprep.subr.bf16.mxu0 0
        %2780 = vmatpush1.bf16.xpose.msra.mxu0 0
        %2781 = vmatprep.subr.bf16.mxu0 0
        %2782 = vmatpush1.bf16.xpose.msra.mxu0 0
        %2783 = vmatprep.subr.bf16.mxu0 0
        %2784 = vmatpush1.bf16.xpose.msra.mxu0 0
        %2785 = vmatprep.subr.bf16.mxu0 0
        %2786 = vmatpush1.bf16.xpose.msra.mxu0 0
        %2787 = vmatprep.subr.bf16.mxu0 0
        %2788 = vmatpush1.bf16.xpose.msra.mxu0 0
        %2789 = vmatprep.subr.bf16.mxu0 0
        %2790 = vmatpush1.bf16.xpose.msra.mxu0 0
        %2791 = vmatprep.mubr.bf16.mxu0 0
        %2792 = vmatmul.mubr.bf16.gmra.mrb[0].mxu0 %v2754
        %v2793 = vpop.f32.mrb[0].mxu0
        %v2794 = vadd.f32 %v2631, %v2793
        %v2795 = vpop.f32.mrb[0].mxu0
        %v2796 = vpop.f32.mrb[0].mxu0
        %v2797 = vpop.f32.mrb[0].mxu0
        %2798 = vdwg.mxu0
        %v2799 = vsel %vm2682, %v2794, -inf
        %2800 = vmax.xlane.f32.xlu0 %v2799
        %v2801 = vpop.xlane.xlu0 %2800
        %v2802 = vsub.f32 %v2794, %v2801
        %v2803 = vmul.f32 %v2802, 1.442695
        %v2804 = vpow.pop %v2803
        %v2805 = vsel %vm2682, %v2804, 0.0
        %2806 = vadd.xlane.f32.xlu0 %v2805
        %v2807 = vpop.xlane.xlu0 %2806
        %v2808 = vpack.c.bf16 %v2804, %v2804
        %v2810 = vunpack.c.l.b16 %v2634
        %v2811 = vpack.c.b16 %v2810, %v2810
        %2812 = vrot.lane.b32.xlu0 %v2811, 64
        %v2813 = vpop.permute.xlu0 %2812
        %v2815 = vsel %vm2682, %v2808, 0
        %v2818 = vsel %vm2696, %v2813, 0
        %2820 = vmatprep.subr.bf16.mxu0 0
        %2821 = vmatpush1.bf16.msra.mxu0 %v2818
        %2822 = vmatprep.subr.bf16.mxu0 0
        %2823 = vmatpush1.bf16.msra.mxu0 0
        %2824 = vmatprep.subr.bf16.mxu0 0
        %2825 = vmatpush1.bf16.msra.mxu0 0
        %2826 = vmatprep.subr.bf16.mxu0 0
        %2827 = vmatpush1.bf16.msra.mxu0 0
        %2828 = vmatprep.subr.bf16.mxu0 0
        %2829 = vmatpush1.bf16.msra.mxu0 0
        %2830 = vmatprep.subr.bf16.mxu0 0
        %2831 = vmatpush1.bf16.msra.mxu0 0
        %2832 = vmatprep.subr.bf16.mxu0 0
        %2833 = vmatpush1.bf16.msra.mxu0 0
        %2834 = vmatprep.subr.bf16.mxu0 0
        %2835 = vmatpush1.bf16.msra.mxu0 0
        %2836 = vmatprep.subr.bf16.mxu0 0
        %2837 = vmatpush1.bf16.msra.mxu0 0
        %2838 = vmatprep.subr.bf16.mxu0 0
        %2839 = vmatpush1.bf16.msra.mxu0 0
        %2840 = vmatprep.subr.bf16.mxu0 0
        %2841 = vmatpush1.bf16.msra.mxu0 0
        %2842 = vmatprep.subr.bf16.mxu0 0
        %2843 = vmatpush1.bf16.msra.mxu0 0
        %2844 = vmatprep.subr.bf16.mxu0 0
        %2845 = vmatpush1.bf16.msra.mxu0 0
        %2846 = vmatprep.subr.bf16.mxu0 0
        %2847 = vmatpush1.bf16.msra.mxu0 0
        %2848 = vmatprep.subr.bf16.mxu0 0
        %2849 = vmatpush1.bf16.msra.mxu0 0
        %2850 = vmatprep.subr.bf16.mxu0 0
        %2851 = vmatpush1.bf16.msra.mxu0 0
        %2852 = vmatprep.mubr.bf16.mxu0 0
        %2853 = vmatmul.mubr.bf16.gmra.mrb[0].mxu0 %v2815
        %v2854 = vpop.f32.mrb[0].mxu0
        %v2855 = vadd.f32 0.0, %v2854
        %v2856 = vpop.f32.mrb[0].mxu0
        %v2857 = vpop.f32.mrb[0].mxu0
        %v2858 = vpop.f32.mrb[0].mxu0
        %2859 = vdwg.mxu0
        %v2860 = vrcp.pop %v2807
        %v2861 = vmul.f32 %v2855, %v2860
        %v2862 = vpack.c.bf16 %v2861, %v2861
        %2864 = vrot.lane.b32.xlu0 %v2862, 64
        %v2865 = vpop.permute.xlu0 %2864
        %v2868 = vsel %vm2635, %v2742, %v2865
        %2870 = vst [vmem:[#allocation4] sm:$0xf] %v2868
        %v2871 = vld [vmem:[#allocation3 + $0x4] sm:$0xf]
        %v2872 = vld [vmem:[#allocation3 + $0x10] sm:$0xf]
        %v2873 = vld [vmem:[#allocation3 + $0x1c] sm:$0xf]
        %v2875 = vsel %vm2635, %v2871, 0
        %v2878 = vsel %vm2635, %v2872, 0
        %2880 = vmatprep.subr.bf16.mxu0 0
        %2881 = vmatpush1.bf16.xpose.msra.mxu0 %v2878
        %2882 = vmatprep.subr.bf16.mxu0 0
        %2883 = vmatpush1.bf16.xpose.msra.mxu0 0
        %2884 = vmatprep.subr.bf16.mxu0 0
        %2885 = vmatpush1.bf16.xpose.msra.mxu0 0
        %2886 = vmatprep.subr.bf16.mxu0 0
        %2887 = vmatpush1.bf16.xpose.msra.mxu0 0
        %2888 = vmatprep.subr.bf16.mxu0 0
        %2889 = vmatpush1.bf16.xpose.msra.mxu0 0
        %2890 = vmatprep.subr.bf16.mxu0 0
        %2891 = vmatpush1.bf16.xpose.msra.mxu0 0
        %2892 = vmatprep.subr.bf16.mxu0 0
        %2893 = vmatpush1.bf16.xpose.msra.mxu0 0
        %2894 = vmatprep.subr.bf16.mxu0 0
        %2895 = vmatpush1.bf16.xpose.msra.mxu0 0
        %2896 = vmatprep.subr.bf16.mxu0 0
        %2897 = vmatpush1.bf16.xpose.msra.mxu0 0
        %2898 = vmatprep.subr.bf16.mxu0 0
        %2899 = vmatpush1.bf16.xpose.msra.mxu0 0
        %2900 = vmatprep.subr.bf16.mxu0 0
        %2901 = vmatpush1.bf16.xpose.msra.mxu0 0
        %2902 = vmatprep.subr.bf16.mxu0 0
        %2903 = vmatpush1.bf16.xpose.msra.mxu0 0
        %2904 = vmatprep.subr.bf16.mxu0 0
        %2905 = vmatpush1.bf16.xpose.msra.mxu0 0
        %2906 = vmatprep.subr.bf16.mxu0 0
        %2907 = vmatpush1.bf16.xpose.msra.mxu0 0
        %2908 = vmatprep.subr.bf16.mxu0 0
        %2909 = vmatpush1.bf16.xpose.msra.mxu0 0
        %2910 = vmatprep.subr.bf16.mxu0 0
        %2911 = vmatpush1.bf16.xpose.msra.mxu0 0
        %2912 = vmatprep.mubr.bf16.mxu0 0
        %2913 = vmatmul.mubr.bf16.gmra.mrb[0].mxu0 %v2875
        %v2914 = vpop.f32.mrb[0].mxu0
        %v2915 = vadd.f32 %v2631, %v2914
        %v2916 = vpop.f32.mrb[0].mxu0
        %v2917 = vpop.f32.mrb[0].mxu0
        %v2918 = vpop.f32.mrb[0].mxu0
        %2919 = vdwg.mxu0
        %v2920 = vsel %vm2682, %v2915, -inf
        %2921 = vmax.xlane.f32.xlu0 %v2920
        %v2922 = vpop.xlane.xlu0 %2921
        %v2923 = vsub.f32 %v2915, %v2922
        %v2924 = vmul.f32 %v2923, 1.442695
        %v2925 = vpow.pop %v2924
        %v2926 = vsel %vm2682, %v2925, 0.0
        %2927 = vadd.xlane.f32.xlu0 %v2926
        %v2928 = vpop.xlane.xlu0 %2927
        %v2929 = vpack.c.bf16 %v2925, %v2925
        %v2931 = vsel %vm2682, %v2929, 0
        %v2934 = vsel %vm2696, %v2873, 0
        %2936 = vmatprep.subr.bf16.mxu0 0
        %2937 = vmatpush1.bf16.msra.mxu0 %v2934
        %2938 = vmatprep.subr.bf16.mxu0 0
        %2939 = vmatpush1.bf16.msra.mxu0 0
        %2940 = vmatprep.subr.bf16.mxu0 0
        %2941 = vmatpush1.bf16.msra.mxu0 0
        %2942 = vmatprep.subr.bf16.mxu0 0
        %2943 = vmatpush1.bf16.msra.mxu0 0
        %2944 = vmatprep.subr.bf16.mxu0 0
        %2945 = vmatpush1.bf16.msra.mxu0 0
        %2946 = vmatprep.subr.bf16.mxu0 0
        %2947 = vmatpush1.bf16.msra.mxu0 0
        %2948 = vmatprep.subr.bf16.mxu0 0
        %2949 = vmatpush1.bf16.msra.mxu0 0
        %2950 = vmatprep.subr.bf16.mxu0 0
        %2951 = vmatpush1.bf16.msra.mxu0 0
        %2952 = vmatprep.subr.bf16.mxu0 0
        %2953 = vmatpush1.bf16.msra.mxu0 0
        %2954 = vmatprep.subr.bf16.mxu0 0
        %2955 = vmatpush1.bf16.msra.mxu0 0
        %2956 = vmatprep.subr.bf16.mxu0 0
        %2957 = vmatpush1.bf16.msra.mxu0 0
        %2958 = vmatprep.subr.bf16.mxu0 0
        %2959 = vmatpush1.bf16.msra.mxu0 0
        %2960 = vmatprep.subr.bf16.mxu0 0
        %2961 = vmatpush1.bf16.msra.mxu0 0
        %2962 = vmatprep.subr.bf16.mxu0 0
        %2963 = vmatpush1.bf16.msra.mxu0 0
        %2964 = vmatprep.subr.bf16.mxu0 0
        %2965 = vmatpush1.bf16.msra.mxu0 0
        %2966 = vmatprep.subr.bf16.mxu0 0
        %2967 = vmatpush1.bf16.msra.mxu0 0
        %2968 = vmatprep.mubr.bf16.mxu0 0
        %2969 = vmatmul.mubr.bf16.gmra.mrb[0].mxu0 %v2931
        %v2970 = vpop.f32.mrb[0].mxu0
        %v2971 = vadd.f32 0.0, %v2970
        %v2972 = vpop.f32.mrb[0].mxu0
        %v2973 = vpop.f32.mrb[0].mxu0
        %v2974 = vpop.f32.mrb[0].mxu0
        %2975 = vdwg.mxu0
        %v2976 = vrcp.pop %v2928
        %v2977 = vmul.f32 %v2971, %v2976
        %v2978 = vpack.c.bf16 %v2977, %v2977
        %v2980 = vunpack.c.l.b16 %v2871
        %v2981 = vpack.c.b16 %v2980, %v2980
        %2982 = vrot.lane.b32.xlu0 %v2981, 64
        %v2983 = vpop.permute.xlu0 %2982
        %v2985 = vunpack.c.l.b16 %v2872
        %v2986 = vpack.c.b16 %v2985, %v2985
        %2987 = vrot.lane.b32.xlu0 %v2986, 64
        %v2988 = vpop.permute.xlu0 %2987
        %v2990 = vsel %vm2635, %v2983, 0
        %v2993 = vsel %vm2635, %v2988, 0
        %2995 = vmatprep.subr.bf16.mxu0 0
        %2996 = vmatpush1.bf16.xpose.msra.mxu0 %v2993
        %2997 = vmatprep.subr.bf16.mxu0 0
        %2998 = vmatpush1.bf16.xpose.msra.mxu0 0
        %2999 = vmatprep.subr.bf16.mxu0 0
        %3000 = vmatpush1.bf16.xpose.msra.mxu0 0
        %3001 = vmatprep.subr.bf16.mxu0 0
        %3002 = vmatpush1.bf16.xpose.msra.mxu0 0
        %3003 = vmatprep.subr.bf16.mxu0 0
        %3004 = vmatpush1.bf16.xpose.msra.mxu0 0
        %3005 = vmatprep.subr.bf16.mxu0 0
        %3006 = vmatpush1.bf16.xpose.msra.mxu0 0
        %3007 = vmatprep.subr.bf16.mxu0 0
        %3008 = vmatpush1.bf16.xpose.msra.mxu0 0
        %3009 = vmatprep.subr.bf16.mxu0 0
        %3010 = vmatpush1.bf16.xpose.msra.mxu0 0
        %3011 = vmatprep.subr.bf16.mxu0 0
        %3012 = vmatpush1.bf16.xpose.msra.mxu0 0
        %3013 = vmatprep.subr.bf16.mxu0 0
        %3014 = vmatpush1.bf16.xpose.msra.mxu0 0
        %3015 = vmatprep.subr.bf16.mxu0 0
        %3016 = vmatpush1.bf16.xpose.msra.mxu0 0
        %3017 = vmatprep.subr.bf16.mxu0 0
        %3018 = vmatpush1.bf16.xpose.msra.mxu0 0
        %3019 = vmatprep.subr.bf16.mxu0 0
        %3020 = vmatpush1.bf16.xpose.msra.mxu0 0
        %3021 = vmatprep.subr.bf16.mxu0 0
        %3022 = vmatpush1.bf16.xpose.msra.mxu0 0
        %3023 = vmatprep.subr.bf16.mxu0 0
        %3024 = vmatpush1.bf16.xpose.msra.mxu0 0
        %3025 = vmatprep.subr.bf16.mxu0 0
        %3026 = vmatpush1.bf16.xpose.msra.mxu0 0
        %3027 = vmatprep.mubr.bf16.mxu0 0
        %3028 = vmatmul.mubr.bf16.gmra.mrb[0].mxu0 %v2990
        %v3029 = vpop.f32.mrb[0].mxu0
        %v3030 = vadd.f32 %v2631, %v3029
        %v3031 = vpop.f32.mrb[0].mxu0
        %v3032 = vpop.f32.mrb[0].mxu0
        %v3033 = vpop.f32.mrb[0].mxu0
        %3034 = vdwg.mxu0
        %v3035 = vsel %vm2682, %v3030, -inf
        %3036 = vmax.xlane.f32.xlu0 %v3035
        %v3037 = vpop.xlane.xlu0 %3036
        %v3038 = vsub.f32 %v3030, %v3037
        %v3039 = vmul.f32 %v3038, 1.442695
        %v3040 = vpow.pop %v3039
        %v3041 = vsel %vm2682, %v3040, 0.0
        %3042 = vadd.xlane.f32.xlu0 %v3041
        %v3043 = vpop.xlane.xlu0 %3042
        %v3044 = vpack.c.bf16 %v3040, %v3040
        %v3046 = vunpack.c.l.b16 %v2873
        %v3047 = vpack.c.b16 %v3046, %v3046
        %3048 = vrot.lane.b32.xlu0 %v3047, 64
        %v3049 = vpop.permute.xlu0 %3048
        %v3051 = vsel %vm2682, %v3044, 0
        %v3054 = vsel %vm2696, %v3049, 0
        %3056 = vmatprep.subr.bf16.mxu0 0
        %3057 = vmatpush1.bf16.msra.mxu0 %v3054
        %3058 = vmatprep.subr.bf16.mxu0 0
        %3059 = vmatpush1.bf16.msra.mxu0 0
        %3060 = vmatprep.subr.bf16.mxu0 0
        %3061 = vmatpush1.bf16.msra.mxu0 0
        %3062 = vmatprep.subr.bf16.mxu0 0
        %3063 = vmatpush1.bf16.msra.mxu0 0
        %3064 = vmatprep.subr.bf16.mxu0 0
        %3065 = vmatpush1.bf16.msra.mxu0 0
        %3066 = vmatprep.subr.bf16.mxu0 0
        %3067 = vmatpush1.bf16.msra.mxu0 0
        %3068 = vmatprep.subr.bf16.mxu0 0
        %3069 = vmatpush1.bf16.msra.mxu0 0
        %3070 = vmatprep.subr.bf16.mxu0 0
        %3071 = vmatpush1.bf16.msra.mxu0 0
        %3072 = vmatprep.subr.bf16.mxu0 0
        %3073 = vmatpush1.bf16.msra.mxu0 0
        %3074 = vmatprep.subr.bf16.mxu0 0
        %3075 = vmatpush1.bf16.msra.mxu0 0
        %3076 = vmatprep.subr.bf16.mxu0 0
        %3077 = vmatpush1.bf16.msra.mxu0 0
        %3078 = vmatprep.subr.bf16.mxu0 0
        %3079 = vmatpush1.bf16.msra.mxu0 0
        %3080 = vmatprep.subr.bf16.mxu0 0
        %3081 = vmatpush1.bf16.msra.mxu0 0
        %3082 = vmatprep.subr.bf16.mxu0 0
        %3083 = vmatpush1.bf16.msra.mxu0 0
        %3084 = vmatprep.subr.bf16.mxu0 0
        %3085 = vmatpush1.bf16.msra.mxu0 0
        %3086 = vmatprep.subr.bf16.mxu0 0
        %3087 = vmatpush1.bf16.msra.mxu0 0
        %3088 = vmatprep.mubr.bf16.mxu0 0
        %3089 = vmatmul.mubr.bf16.gmra.mrb[0].mxu0 %v3051
        %v3090 = vpop.f32.mrb[0].mxu0
        %v3091 = vadd.f32 0.0, %v3090
        %v3092 = vpop.f32.mrb[0].mxu0
        %v3093 = vpop.f32.mrb[0].mxu0
        %v3094 = vpop.f32.mrb[0].mxu0
        %3095 = vdwg.mxu0
        %v3096 = vrcp.pop %v3043
        %v3097 = vmul.f32 %v3091, %v3096
        %v3098 = vpack.c.bf16 %v3097, %v3097
        %3100 = vrot.lane.b32.xlu0 %v3098, 64
        %v3101 = vpop.permute.xlu0 %3100
        %v3104 = vsel %vm2635, %v2978, %v3101
        %3106 = vst [vmem:[#allocation4 + $0x4] sm:$0xf] %v3104
        %v3107 = vld [vmem:[#allocation3 + $0x8] sm:$0xf]
        %v3108 = vld [vmem:[#allocation3 + $0x14] sm:$0xf]
        %v3109 = vld [vmem:[#allocation3 + $0x20] sm:$0xf]
        %v3111 = vsel %vm2635, %v3107, 0
        %v3114 = vsel %vm2635, %v3108, 0
        %3116 = vmatprep.subr.bf16.mxu0 0
        %3117 = vmatpush1.bf16.xpose.msra.mxu0 %v3114
        %3118 = vmatprep.subr.bf16.mxu0 0
        %3119 = vmatpush1.bf16.xpose.msra.mxu0 0
        %3120 = vmatprep.subr.bf16.mxu0 0
        %3121 = vmatpush1.bf16.xpose.msra.mxu0 0
        %3122 = vmatprep.subr.bf16.mxu0 0
        %3123 = vmatpush1.bf16.xpose.msra.mxu0 0
        %3124 = vmatprep.subr.bf16.mxu0 0
        %3125 = vmatpush1.bf16.xpose.msra.mxu0 0
        %3126 = vmatprep.subr.bf16.mxu0 0
        %3127 = vmatpush1.bf16.xpose.msra.mxu0 0
        %3128 = vmatprep.subr.bf16.mxu0 0
        %3129 = vmatpush1.bf16.xpose.msra.mxu0 0
        %3130 = vmatprep.subr.bf16.mxu0 0
        %3131 = vmatpush1.bf16.xpose.msra.mxu0 0
        %3132 = vmatprep.subr.bf16.mxu0 0
        %3133 = vmatpush1.bf16.xpose.msra.mxu0 0
        %3134 = vmatprep.subr.bf16.mxu0 0
        %3135 = vmatpush1.bf16.xpose.msra.mxu0 0
        %3136 = vmatprep.subr.bf16.mxu0 0
        %3137 = vmatpush1.bf16.xpose.msra.mxu0 0
        %3138 = vmatprep.subr.bf16.mxu0 0
        %3139 = vmatpush1.bf16.xpose.msra.mxu0 0
        %3140 = vmatprep.subr.bf16.mxu0 0
        %3141 = vmatpush1.bf16.xpose.msra.mxu0 0
        %3142 = vmatprep.subr.bf16.mxu0 0
        %3143 = vmatpush1.bf16.xpose.msra.mxu0 0
        %3144 = vmatprep.subr.bf16.mxu0 0
        %3145 = vmatpush1.bf16.xpose.msra.mxu0 0
        %3146 = vmatprep.subr.bf16.mxu0 0
        %3147 = vmatpush1.bf16.xpose.msra.mxu0 0
        %3148 = vmatprep.mubr.bf16.mxu0 0
        %3149 = vmatmul.mubr.bf16.gmra.mrb[0].mxu0 %v3111
        %v3150 = vpop.f32.mrb[0].mxu0
        %v3151 = vadd.f32 %v2631, %v3150
        %v3152 = vpop.f32.mrb[0].mxu0
        %v3153 = vpop.f32.mrb[0].mxu0
        %v3154 = vpop.f32.mrb[0].mxu0
        %3155 = vdwg.mxu0
        %v3156 = vsel %vm2682, %v3151, -inf
        %3157 = vmax.xlane.f32.xlu0 %v3156
        %v3158 = vpop.xlane.xlu0 %3157
        %v3159 = vsub.f32 %v3151, %v3158
        %v3160 = vmul.f32 %v3159, 1.442695
        %v3161 = vpow.pop %v3160
        %v3162 = vsel %vm2682, %v3161, 0.0
        %3163 = vadd.xlane.f32.xlu0 %v3162
        %v3164 = vpop.xlane.xlu0 %3163
        %v3165 = vpack.c.bf16 %v3161, %v3161
        %v3167 = vsel %vm2682, %v3165, 0
        %v3170 = vsel %vm2696, %v3109, 0
        %3172 = vmatprep.subr.bf16.mxu0 0
        %3173 = vmatpush1.bf16.msra.mxu0 %v3170
        %3174 = vmatprep.subr.bf16.mxu0 0
        %3175 = vmatpush1.bf16.msra.mxu0 0
        %3176 = vmatprep.subr.bf16.mxu0 0
        %3177 = vmatpush1.bf16.msra.mxu0 0
        %3178 = vmatprep.subr.bf16.mxu0 0
        %3179 = vmatpush1.bf16.msra.mxu0 0
        %3180 = vmatprep.subr.bf16.mxu0 0
        %3181 = vmatpush1.bf16.msra.mxu0 0
        %3182 = vmatprep.subr.bf16.mxu0 0
        %3183 = vmatpush1.bf16.msra.mxu0 0
        %3184 = vmatprep.subr.bf16.mxu0 0
        %3185 = vmatpush1.bf16.msra.mxu0 0
        %3186 = vmatprep.subr.bf16.mxu0 0
        %3187 = vmatpush1.bf16.msra.mxu0 0
        %3188 = vmatprep.subr.bf16.mxu0 0
        %3189 = vmatpush1.bf16.msra.mxu0 0
        %3190 = vmatprep.subr.bf16.mxu0 0
        %3191 = vmatpush1.bf16.msra.mxu0 0
        %3192 = vmatprep.subr.bf16.mxu0 0
        %3193 = vmatpush1.bf16.msra.mxu0 0
        %3194 = vmatprep.subr.bf16.mxu0 0
        %3195 = vmatpush1.bf16.msra.mxu0 0
        %3196 = vmatprep.subr.bf16.mxu0 0
        %3197 = vmatpush1.bf16.msra.mxu0 0
        %3198 = vmatprep.subr.bf16.mxu0 0
        %3199 = vmatpush1.bf16.msra.mxu0 0
        %3200 = vmatprep.subr.bf16.mxu0 0
        %3201 = vmatpush1.bf16.msra.mxu0 0
        %3202 = vmatprep.subr.bf16.mxu0 0
        %3203 = vmatpush1.bf16.msra.mxu0 0
        %3204 = vmatprep.mubr.bf16.mxu0 0
        %3205 = vmatmul.mubr.bf16.gmra.mrb[0].mxu0 %v3167
        %v3206 = vpop.f32.mrb[0].mxu0
        %v3207 = vadd.f32 0.0, %v3206
        %v3208 = vpop.f32.mrb[0].mxu0
        %v3209 = vpop.f32.mrb[0].mxu0
        %v3210 = vpop.f32.mrb[0].mxu0
        %3211 = vdwg.mxu0
        %v3212 = vrcp.pop %v3164
        %v3213 = vmul.f32 %v3207, %v3212
        %v3214 = vpack.c.bf16 %v3213, %v3213
        %v3216 = vunpack.c.l.b16 %v3107
        %v3217 = vpack.c.b16 %v3216, %v3216
        %3218 = vrot.lane.b32.xlu0 %v3217, 64
        %v3219 = vpop.permute.xlu0 %3218
        %v3221 = vunpack.c.l.b16 %v3108
        %v3222 = vpack.c.b16 %v3221, %v3221
        %3223 = vrot.lane.b32.xlu0 %v3222, 64
        %v3224 = vpop.permute.xlu0 %3223
        %v3226 = vsel %vm2635, %v3219, 0
        %v3229 = vsel %vm2635, %v3224, 0
        %3231 = vmatprep.subr.bf16.mxu0 0
        %3232 = vmatpush1.bf16.xpose.msra.mxu0 %v3229
        %3233 = vmatprep.subr.bf16.mxu0 0
        %3234 = vmatpush1.bf16.xpose.msra.mxu0 0
        %3235 = vmatprep.subr.bf16.mxu0 0
        %3236 = vmatpush1.bf16.xpose.msra.mxu0 0
        %3237 = vmatprep.subr.bf16.mxu0 0
        %3238 = vmatpush1.bf16.xpose.msra.mxu0 0
        %3239 = vmatprep.subr.bf16.mxu0 0
        %3240 = vmatpush1.bf16.xpose.msra.mxu0 0
        %3241 = vmatprep.subr.bf16.mxu0 0
        %3242 = vmatpush1.bf16.xpose.msra.mxu0 0
        %3243 = vmatprep.subr.bf16.mxu0 0
        %3244 = vmatpush1.bf16.xpose.msra.mxu0 0
        %3245 = vmatprep.subr.bf16.mxu0 0
        %3246 = vmatpush1.bf16.xpose.msra.mxu0 0
        %3247 = vmatprep.subr.bf16.mxu0 0
        %3248 = vmatpush1.bf16.xpose.msra.mxu0 0
        %3249 = vmatprep.subr.bf16.mxu0 0
        %3250 = vmatpush1.bf16.xpose.msra.mxu0 0
        %3251 = vmatprep.subr.bf16.mxu0 0
        %3252 = vmatpush1.bf16.xpose.msra.mxu0 0
        %3253 = vmatprep.subr.bf16.mxu0 0
        %3254 = vmatpush1.bf16.xpose.msra.mxu0 0
        %3255 = vmatprep.subr.bf16.mxu0 0
        %3256 = vmatpush1.bf16.xpose.msra.mxu0 0
        %3257 = vmatprep.subr.bf16.mxu0 0
        %3258 = vmatpush1.bf16.xpose.msra.mxu0 0
        %3259 = vmatprep.subr.bf16.mxu0 0
        %3260 = vmatpush1.bf16.xpose.msra.mxu0 0
        %3261 = vmatprep.subr.bf16.mxu0 0
        %3262 = vmatpush1.bf16.xpose.msra.mxu0 0
        %3263 = vmatprep.mubr.bf16.mxu0 0
        %3264 = vmatmul.mubr.bf16.gmra.mrb[0].mxu0 %v3226
        %v3265 = vpop.f32.mrb[0].mxu0
        %v3266 = vadd.f32 %v2631, %v3265
        %v3267 = vpop.f32.mrb[0].mxu0
        %v3268 = vpop.f32.mrb[0].mxu0
        %v3269 = vpop.f32.mrb[0].mxu0
        %3270 = vdwg.mxu0
        %v3271 = vsel %vm2682, %v3266, -inf
        %3272 = vmax.xlane.f32.xlu0 %v3271
        %v3273 = vpop.xlane.xlu0 %3272
        %v3274 = vsub.f32 %v3266, %v3273
        %v3275 = vmul.f32 %v3274, 1.442695
        %v3276 = vpow.pop %v3275
        %v3277 = vsel %vm2682, %v3276, 0.0
        %3278 = vadd.xlane.f32.xlu0 %v3277
        %v3279 = vpop.xlane.xlu0 %3278
        %v3280 = vpack.c.bf16 %v3276, %v3276
        %v3282 = vunpack.c.l.b16 %v3109
        %v3283 = vpack.c.b16 %v3282, %v3282
        %3284 = vrot.lane.b32.xlu0 %v3283, 64
        %v3285 = vpop.permute.xlu0 %3284
        %v3287 = vsel %vm2682, %v3280, 0
        %v3290 = vsel %vm2696, %v3285, 0
        %3292 = vmatprep.subr.bf16.mxu0 0
        %3293 = vmatpush1.bf16.msra.mxu0 %v3290
        %3294 = vmatprep.subr.bf16.mxu0 0
        %3295 = vmatpush1.bf16.msra.mxu0 0
        %3296 = vmatprep.subr.bf16.mxu0 0
        %3297 = vmatpush1.bf16.msra.mxu0 0
        %3298 = vmatprep.subr.bf16.mxu0 0
        %3299 = vmatpush1.bf16.msra.mxu0 0
        %3300 = vmatprep.subr.bf16.mxu0 0
        %3301 = vmatpush1.bf16.msra.mxu0 0
        %3302 = vmatprep.subr.bf16.mxu0 0
        %3303 = vmatpush1.bf16.msra.mxu0 0
        %3304 = vmatprep.subr.bf16.mxu0 0
        %3305 = vmatpush1.bf16.msra.mxu0 0
        %3306 = vmatprep.subr.bf16.mxu0 0
        %3307 = vmatpush1.bf16.msra.mxu0 0
        %3308 = vmatprep.subr.bf16.mxu0 0
        %3309 = vmatpush1.bf16.msra.mxu0 0
        %3310 = vmatprep.subr.bf16.mxu0 0
        %3311 = vmatpush1.bf16.msra.mxu0 0
        %3312 = vmatprep.subr.bf16.mxu0 0
        %3313 = vmatpush1.bf16.msra.mxu0 0
        %3314 = vmatprep.subr.bf16.mxu0 0
        %3315 = vmatpush1.bf16.msra.mxu0 0
        %3316 = vmatprep.subr.bf16.mxu0 0
        %3317 = vmatpush1.bf16.msra.mxu0 0
        %3318 = vmatprep.subr.bf16.mxu0 0
        %3319 = vmatpush1.bf16.msra.mxu0 0
        %3320 = vmatprep.subr.bf16.mxu0 0
        %3321 = vmatpush1.bf16.msra.mxu0 0
        %3322 = vmatprep.subr.bf16.mxu0 0
        %3323 = vmatpush1.bf16.msra.mxu0 0
        %3324 = vmatprep.mubr.bf16.mxu0 0
        %3325 = vmatmul.mubr.bf16.gmra.mrb[0].mxu0 %v3287
        %v3326 = vpop.f32.mrb[0].mxu0
        %v3327 = vadd.f32 0.0, %v3326
        %v3328 = vpop.f32.mrb[0].mxu0
        %v3329 = vpop.f32.mrb[0].mxu0
        %v3330 = vpop.f32.mrb[0].mxu0
        %3331 = vdwg.mxu0
        %v3332 = vrcp.pop %v3279
        %v3333 = vmul.f32 %v3327, %v3332
        %v3334 = vpack.c.bf16 %v3333, %v3333
        %3336 = vrot.lane.b32.xlu0 %v3334, 64
        %v3337 = vpop.permute.xlu0 %3336
        %v3340 = vsel %vm2635, %v3214, %v3337
        %3342 = vst [vmem:[#allocation4 + $0x8] sm:$0xf] %v3340
        %v3343 = vld [vmem:[#allocation4] sm:$0xff]
        %v3344 = vld [vmem:[#allocation4 + $0x8] sm:$0xf]
        %s3345 = smul.u32 %s43, 144
        %s3346 = smul.addr %s3345, 4
        %s3347 = scalar_lea.vmem [#allocation12], %s3346
        %v3348 = vld [vmem:[%s3347] sm:$0xff]
        %v3349 = vld [vmem:[%s3347 + $0x8] sm:$0xf]
        %v3350 = vld [vmem:[%s3347 + $0xc] sm:$0xff]
        %v3351 = vld [vmem:[%s3347 + $0x14] sm:$0xf]
        %v3352 = vld [vmem:[%s3347 + $0x18] sm:$0xff]
        %v3353 = vld [vmem:[%s3347 + $0x20] sm:$0xf]
        %v3354 = vld [vmem:[%s3347 + $0x24] sm:$0xff]
        %v3355 = vld [vmem:[%s3347 + $0x2c] sm:$0xf]
        %v3356 = vld [vmem:[%s3347 + $0x30] sm:$0xff]
        %v3357 = vld [vmem:[%s3347 + $0x38] sm:$0xf]
        %v3358 = vld [vmem:[%s3347 + $0x3c] sm:$0xff]
        %v3359 = vld [vmem:[%s3347 + $0x44] sm:$0xf]
        %v3360 = vld [vmem:[%s3347 + $0x48] sm:$0xff]
        %v3361 = vld [vmem:[%s3347 + $0x50] sm:$0xf]
        %v3362 = vld [vmem:[%s3347 + $0x54] sm:$0xff]
        %v3363 = vld [vmem:[%s3347 + $0x5c] sm:$0xf]
        %v3364 = vld [vmem:[%s3347 + $0x60] sm:$0xff]
        %v3365 = vld [vmem:[%s3347 + $0x68] sm:$0xf]
        %v3366 = vld [vmem:[%s3347 + $0x6c] sm:$0xff]
        %v3367 = vld [vmem:[%s3347 + $0x74] sm:$0xf]
        %v3368 = vld [vmem:[%s3347 + $0x78] sm:$0xff]
        %v3369 = vld [vmem:[%s3347 + $0x80] sm:$0xf]
        %v3370 = vld [vmem:[%s3347 + $0x84] sm:$0xff]
        %v3371 = vld [vmem:[%s3347 + $0x8c] sm:$0xf]
        %v3372 = vld [vmem:[%s3347 + $0x90] sm:$0xff]
        %v3373 = vld [vmem:[%s3347 + $0x98] sm:$0xf]
        %v3374 = vld [vmem:[%s3347 + $0x9c] sm:$0xff]
        %v3375 = vld [vmem:[%s3347 + $0xa4] sm:$0xf]
        %v3376 = vld [vmem:[%s3347 + $0xa8] sm:$0xff]
        %v3377 = vld [vmem:[%s3347 + $0xb0] sm:$0xf]
        %v3378 = vld [vmem:[%s3347 + $0xb4] sm:$0xff]
        %v3379 = vld [vmem:[%s3347 + $0xbc] sm:$0xf]
        %v3380 = vld [vmem:[%s3347 + $0xc0] sm:$0xff]
        %v3381 = vld [vmem:[%s3347 + $0xc8] sm:$0xf]
        %v3382 = vld [vmem:[%s3347 + $0xcc] sm:$0xff]
        %v3383 = vld [vmem:[%s3347 + $0xd4] sm:$0xf]
        %v3384 = vld [vmem:[%s3347 + $0xd8] sm:$0xff]
        %v3385 = vld [vmem:[%s3347 + $0xe0] sm:$0xf]
        %v3386 = vld [vmem:[%s3347 + $0xe4] sm:$0xff]
        %v3387 = vld [vmem:[%s3347 + $0xec] sm:$0xf]
        %v3388 = vld [vmem:[%s3347 + $0xf0] sm:$0xff]
        %v3389 = vld [vmem:[%s3347 + $0xf8] sm:$0xf]
        %v3390 = vld [vmem:[%s3347 + $0xfc] sm:$0xff]
        %v3391 = vld [vmem:[%s3347 + $0x104] sm:$0xf]
        %v3392 = vld [vmem:[%s3347 + $0x108] sm:$0xff]
        %v3393 = vld [vmem:[%s3347 + $0x110] sm:$0xf]
        %v3394 = vld [vmem:[%s3347 + $0x114] sm:$0xff]
        %v3395 = vld [vmem:[%s3347 + $0x11c] sm:$0xf]
        %v3396 = vld [vmem:[%s3347 + $0x120] sm:$0xff]
        %v3397 = vld [vmem:[%s3347 + $0x128] sm:$0xf]
        %v3398 = vld [vmem:[%s3347 + $0x12c] sm:$0xff]
        %v3399 = vld [vmem:[%s3347 + $0x134] sm:$0xf]
        %v3400 = vld [vmem:[%s3347 + $0x138] sm:$0xff]
        %v3401 = vld [vmem:[%s3347 + $0x140] sm:$0xf]
        %v3402 = vld [vmem:[%s3347 + $0x144] sm:$0xff]
        %v3403 = vld [vmem:[%s3347 + $0x14c] sm:$0xf]
        %v3404 = vld [vmem:[%s3347 + $0x150] sm:$0xff]
        %v3405 = vld [vmem:[%s3347 + $0x158] sm:$0xf]
        %v3406 = vld [vmem:[%s3347 + $0x15c] sm:$0xff]
        %v3407 = vld [vmem:[%s3347 + $0x164] sm:$0xf]
        %v3408 = vld [vmem:[%s3347 + $0x168] sm:$0xff]
        %v3409 = vld [vmem:[%s3347 + $0x170] sm:$0xf]
        %v3410 = vld [vmem:[%s3347 + $0x174] sm:$0xff]
        %v3411 = vld [vmem:[%s3347 + $0x17c] sm:$0xf]
        %v3412 = vld [vmem:[%s3347 + $0x180] sm:$0xff]
        %v3413 = vld [vmem:[%s3347 + $0x188] sm:$0xf]
        %v3414 = vld [vmem:[%s3347 + $0x18c] sm:$0xff]
        %v3415 = vld [vmem:[%s3347 + $0x194] sm:$0xf]
        %v3416 = vld [vmem:[%s3347 + $0x198] sm:$0xff]
        %v3417 = vld [vmem:[%s3347 + $0x1a0] sm:$0xf]
        %v3418 = vld [vmem:[%s3347 + $0x1a4] sm:$0xff]
        %v3419 = vld [vmem:[%s3347 + $0x1ac] sm:$0xf]
        %v3420 = vld [vmem:[%s3347 + $0x1b0] sm:$0xff]
        %v3421 = vld [vmem:[%s3347 + $0x1b8] sm:$0xf]
        %v3422 = vld [vmem:[%s3347 + $0x1bc] sm:$0xff]
        %v3423 = vld [vmem:[%s3347 + $0x1c4] sm:$0xf]
        %v3424 = vld [vmem:[%s3347 + $0x1c8] sm:$0xff]
        %v3425 = vld [vmem:[%s3347 + $0x1d0] sm:$0xf]
        %v3426 = vld [vmem:[%s3347 + $0x1d4] sm:$0xff]
        %v3427 = vld [vmem:[%s3347 + $0x1dc] sm:$0xf]
        %v3428 = vld [vmem:[%s3347 + $0x1e0] sm:$0xff]
        %v3429 = vld [vmem:[%s3347 + $0x1e8] sm:$0xf]
        %v3430 = vld [vmem:[%s3347 + $0x1ec] sm:$0xff]
        %v3431 = vld [vmem:[%s3347 + $0x1f4] sm:$0xf]
        %v3432 = vld [vmem:[%s3347 + $0x1f8] sm:$0xff]
        %v3433 = vld [vmem:[%s3347 + $0x200] sm:$0xf]
        %v3434 = vld [vmem:[%s3347 + $0x204] sm:$0xff]
        %v3435 = vld [vmem:[%s3347 + $0x20c] sm:$0xf]
        %v3436 = vld [vmem:[%s3347 + $0x210] sm:$0xff]
        %v3437 = vld [vmem:[%s3347 + $0x218] sm:$0xf]
        %v3438 = vld [vmem:[%s3347 + $0x21c] sm:$0xff]
        %v3439 = vld [vmem:[%s3347 + $0x224] sm:$0xf]
        %v3440 = vld [vmem:[%s3347 + $0x228] sm:$0xff]
        %v3441 = vld [vmem:[%s3347 + $0x230] sm:$0xf]
        %v3442 = vld [vmem:[%s3347 + $0x234] sm:$0xff]
        %v3443 = vld [vmem:[%s3347 + $0x23c] sm:$0xf]
        %s3444 = scalar_lea.vmem [#allocation14], %s766
        %v3445 = vld [vmem:[%s3444] sm:$0x7]
        %v3447 = vlaneseq
        %v3448 = vshrl.u32 %v3447, 7
        %v3449 = vsub.s32 0, %v3448
        %v3450 = vrot.slane %v3445, %v3449
        %v3451 = vlaneseq
        %v3452 = vshrl.u32 %v3451, 7
        %v3453 = vsub.s32 1, %v3452
        %v3454 = vrot.slane %v3445, %v3453
        %v3455 = vlaneseq
        %v3456 = vshrl.u32 %v3455, 7
        %v3457 = vsub.s32 2, %v3456
        %v3458 = vrot.slane %v3445, %v3457
        %v3464 = vunpack.c.l.b16 %v3343
        %v3465 = vunpack.c.h.b16 %v3343
        %v3466 = vunpack.c.l.b16 %v3344
        %v3467 = vpack.c.b16 %v3464, %v3464
        %v3468 = vpack.c.b16 %v3465, %v3465
        %v3469 = vpack.c.b16 %v3466, %v3466
        %v3569 = vunpack.c.l.b16 %v3348
        %v3570 = vunpack.c.h.b16 %v3348
        %v3571 = vunpack.c.l.b16 %v3349
        %v3572 = vunpack.c.l.b16 %v3350
        %v3573 = vunpack.c.h.b16 %v3350
        %v3574 = vunpack.c.l.b16 %v3351
        %v3575 = vunpack.c.l.b16 %v3352
        %v3576 = vunpack.c.h.b16 %v3352
        %v3577 = vunpack.c.l.b16 %v3353
        %v3578 = vunpack.c.l.b16 %v3354
        %v3579 = vunpack.c.h.b16 %v3354
        %v3580 = vunpack.c.l.b16 %v3355
        %v3581 = vunpack.c.l.b16 %v3356
        %v3582 = vunpack.c.h.b16 %v3356
        %v3583 = vunpack.c.l.b16 %v3357
        %v3584 = vunpack.c.l.b16 %v3358
        %v3585 = vunpack.c.h.b16 %v3358
        %v3586 = vunpack.c.l.b16 %v3359
        %v3587 = vunpack.c.l.b16 %v3360
        %v3588 = vunpack.c.h.b16 %v3360
        %v3589 = vunpack.c.l.b16 %v3361
        %v3590 = vunpack.c.l.b16 %v3362
        %v3591 = vunpack.c.h.b16 %v3362
        %v3592 = vunpack.c.l.b16 %v3363
        %v3593 = vunpack.c.l.b16 %v3364
        %v3594 = vunpack.c.h.b16 %v3364
        %v3595 = vunpack.c.l.b16 %v3365
        %v3596 = vunpack.c.l.b16 %v3366
        %v3597 = vunpack.c.h.b16 %v3366
        %v3598 = vunpack.c.l.b16 %v3367
        %v3599 = vunpack.c.l.b16 %v3368
        %v3600 = vunpack.c.h.b16 %v3368
        %v3601 = vunpack.c.l.b16 %v3369
        %v3602 = vunpack.c.l.b16 %v3370
        %v3603 = vunpack.c.h.b16 %v3370
        %v3604 = vunpack.c.l.b16 %v3371
        %v3605 = vunpack.c.l.b16 %v3372
        %v3606 = vunpack.c.h.b16 %v3372
        %v3607 = vunpack.c.l.b16 %v3373
        %v3608 = vunpack.c.l.b16 %v3374
        %v3609 = vunpack.c.h.b16 %v3374
        %v3610 = vunpack.c.l.b16 %v3375
        %v3611 = vunpack.c.l.b16 %v3376
        %v3612 = vunpack.c.h.b16 %v3376
        %v3613 = vunpack.c.l.b16 %v3377
        %v3614 = vunpack.c.l.b16 %v3378
        %v3615 = vunpack.c.h.b16 %v3378
        %v3616 = vunpack.c.l.b16 %v3379
        %v3617 = vunpack.c.l.b16 %v3380
        %v3618 = vunpack.c.h.b16 %v3380
        %v3619 = vunpack.c.l.b16 %v3381
        %v3620 = vunpack.c.l.b16 %v3382
        %v3621 = vunpack.c.h.b16 %v3382
        %v3622 = vunpack.c.l.b16 %v3383
        %v3623 = vunpack.c.l.b16 %v3384
        %v3624 = vunpack.c.h.b16 %v3384
        %v3625 = vunpack.c.l.b16 %v3385
        %v3626 = vunpack.c.l.b16 %v3386
        %v3627 = vunpack.c.h.b16 %v3386
        %v3628 = vunpack.c.l.b16 %v3387
        %v3629 = vunpack.c.l.b16 %v3388
        %v3630 = vunpack.c.h.b16 %v3388
        %v3631 = vunpack.c.l.b16 %v3389
        %v3632 = vunpack.c.l.b16 %v3390
        %v3633 = vunpack.c.h.b16 %v3390
        %v3634 = vunpack.c.l.b16 %v3391
        %v3635 = vunpack.c.l.b16 %v3392
        %v3636 = vunpack.c.h.b16 %v3392
        %v3637 = vunpack.c.l.b16 %v3393
        %v3638 = vunpack.c.l.b16 %v3394
        %v3639 = vunpack.c.h.b16 %v3394
        %v3640 = vunpack.c.l.b16 %v3395
        %v3641 = vunpack.c.l.b16 %v3396
        %v3642 = vunpack.c.h.b16 %v3396
        %v3643 = vunpack.c.l.b16 %v3397
        %v3644 = vunpack.c.l.b16 %v3398
        %v3645 = vunpack.c.h.b16 %v3398
        %v3646 = vunpack.c.l.b16 %v3399
        %v3647 = vunpack.c.l.b16 %v3400
        %v3648 = vunpack.c.h.b16 %v3400
        %v3649 = vunpack.c.l.b16 %v3401
        %v3650 = vunpack.c.l.b16 %v3402
        %v3651 = vunpack.c.h.b16 %v3402
        %v3652 = vunpack.c.l.b16 %v3403
        %v3653 = vunpack.c.l.b16 %v3404
        %v3654 = vunpack.c.h.b16 %v3404
        %v3655 = vunpack.c.l.b16 %v3405
        %v3656 = vunpack.c.l.b16 %v3406
        %v3657 = vunpack.c.h.b16 %v3406
        %v3658 = vunpack.c.l.b16 %v3407
        %v3659 = vunpack.c.l.b16 %v3408
        %v3660 = vunpack.c.h.b16 %v3408
        %v3661 = vunpack.c.l.b16 %v3409
        %v3662 = vunpack.c.l.b16 %v3410
        %v3663 = vunpack.c.h.b16 %v3410
        %v3664 = vunpack.c.l.b16 %v3411
        %v3665 = vunpack.c.l.b16 %v3412
        %v3666 = vunpack.c.h.b16 %v3412
        %v3667 = vunpack.c.l.b16 %v3413
        %v3668 = vunpack.c.l.b16 %v3414
        %v3669 = vunpack.c.h.b16 %v3414
        %v3670 = vunpack.c.l.b16 %v3415
        %v3671 = vunpack.c.l.b16 %v3416
        %v3672 = vunpack.c.h.b16 %v3416
        %v3673 = vunpack.c.l.b16 %v3417
        %v3674 = vunpack.c.l.b16 %v3418
        %v3675 = vunpack.c.h.b16 %v3418
        %v3676 = vunpack.c.l.b16 %v3419
        %v3677 = vunpack.c.l.b16 %v3420
        %v3678 = vunpack.c.h.b16 %v3420
        %v3679 = vunpack.c.l.b16 %v3421
        %v3680 = vunpack.c.l.b16 %v3422
        %v3681 = vunpack.c.h.b16 %v3422
        %v3682 = vunpack.c.l.b16 %v3423
        %v3683 = vunpack.c.l.b16 %v3424
        %v3684 = vunpack.c.h.b16 %v3424
        %v3685 = vunpack.c.l.b16 %v3425
        %v3686 = vunpack.c.l.b16 %v3426
        %v3687 = vunpack.c.h.b16 %v3426
        %v3688 = vunpack.c.l.b16 %v3427
        %v3689 = vunpack.c.l.b16 %v3428
        %v3690 = vunpack.c.h.b16 %v3428
        %v3691 = vunpack.c.l.b16 %v3429
        %v3692 = vunpack.c.l.b16 %v3430
        %v3693 = vunpack.c.h.b16 %v3430
        %v3694 = vunpack.c.l.b16 %v3431
        %v3695 = vunpack.c.l.b16 %v3432
        %v3696 = vunpack.c.h.b16 %v3432
        %v3697 = vunpack.c.l.b16 %v3433
        %v3698 = vunpack.c.l.b16 %v3434
        %v3699 = vunpack.c.h.b16 %v3434
        %v3700 = vunpack.c.l.b16 %v3435
        %v3701 = vunpack.c.l.b16 %v3436
        %v3702 = vunpack.c.h.b16 %v3436
        %v3703 = vunpack.c.l.b16 %v3437
        %v3704 = vunpack.c.l.b16 %v3438
        %v3705 = vunpack.c.h.b16 %v3438
        %v3706 = vunpack.c.l.b16 %v3439
        %v3707 = vunpack.c.l.b16 %v3440
        %v3708 = vunpack.c.h.b16 %v3440
        %v3709 = vunpack.c.l.b16 %v3441
        %v3710 = vunpack.c.l.b16 %v3442
        %v3711 = vunpack.c.h.b16 %v3442
        %v3712 = vunpack.c.l.b16 %v3443
        %v3713 = vpack.c.b16 %v3572, %v3569
        %v3714 = vpack.c.b16 %v3573, %v3570
        %v3715 = vpack.c.b16 %v3574, %v3571
        %v3716 = vpack.c.b16 %v3578, %v3575
        %v3717 = vpack.c.b16 %v3579, %v3576
        %v3718 = vpack.c.b16 %v3580, %v3577
        %v3719 = vpack.c.b16 %v3584, %v3581
        %v3720 = vpack.c.b16 %v3585, %v3582
        %v3721 = vpack.c.b16 %v3586, %v3583
        %v3722 = vpack.c.b16 %v3590, %v3587
        %v3723 = vpack.c.b16 %v3591, %v3588
        %v3724 = vpack.c.b16 %v3592, %v3589
        %v3725 = vpack.c.b16 %v3596, %v3593
        %v3726 = vpack.c.b16 %v3597, %v3594
        %v3727 = vpack.c.b16 %v3598, %v3595
        %v3728 = vpack.c.b16 %v3602, %v3599
        %v3729 = vpack.c.b16 %v3603, %v3600
        %v3730 = vpack.c.b16 %v3604, %v3601
        %v3731 = vpack.c.b16 %v3608, %v3605
        %v3732 = vpack.c.b16 %v3609, %v3606
        %v3733 = vpack.c.b16 %v3610, %v3607
        %v3734 = vpack.c.b16 %v3614, %v3611
        %v3735 = vpack.c.b16 %v3615, %v3612
        %v3736 = vpack.c.b16 %v3616, %v3613
        %v3737 = vpack.c.b16 %v3620, %v3617
        %v3738 = vpack.c.b16 %v3621, %v3618
        %v3739 = vpack.c.b16 %v3622, %v3619
        %v3740 = vpack.c.b16 %v3626, %v3623
        %v3741 = vpack.c.b16 %v3627, %v3624
        %v3742 = vpack.c.b16 %v3628, %v3625
        %v3743 = vpack.c.b16 %v3632, %v3629
        %v3744 = vpack.c.b16 %v3633, %v3630
        %v3745 = vpack.c.b16 %v3634, %v3631
        %v3746 = vpack.c.b16 %v3638, %v3635
        %v3747 = vpack.c.b16 %v3639, %v3636
        %v3748 = vpack.c.b16 %v3640, %v3637
        %v3749 = vpack.c.b16 %v3644, %v3641
        %v3750 = vpack.c.b16 %v3645, %v3642
        %v3751 = vpack.c.b16 %v3646, %v3643
        %v3752 = vpack.c.b16 %v3650, %v3647
        %v3753 = vpack.c.b16 %v3651, %v3648
        %v3754 = vpack.c.b16 %v3652, %v3649
        %v3755 = vpack.c.b16 %v3656, %v3653
        %v3756 = vpack.c.b16 %v3657, %v3654
        %v3757 = vpack.c.b16 %v3658, %v3655
        %v3758 = vpack.c.b16 %v3662, %v3659
        %v3759 = vpack.c.b16 %v3663, %v3660
        %v3760 = vpack.c.b16 %v3664, %v3661
        %v3761 = vpack.c.b16 %v3668, %v3665
        %v3762 = vpack.c.b16 %v3669, %v3666
        %v3763 = vpack.c.b16 %v3670, %v3667
        %v3764 = vpack.c.b16 %v3674, %v3671
        %v3765 = vpack.c.b16 %v3675, %v3672
        %v3766 = vpack.c.b16 %v3676, %v3673
        %v3767 = vpack.c.b16 %v3680, %v3677
        %v3768 = vpack.c.b16 %v3681, %v3678
        %v3769 = vpack.c.b16 %v3682, %v3679
        %v3770 = vpack.c.b16 %v3686, %v3683
        %v3771 = vpack.c.b16 %v3687, %v3684
        %v3772 = vpack.c.b16 %v3688, %v3685
        %v3773 = vpack.c.b16 %v3692, %v3689
        %v3774 = vpack.c.b16 %v3693, %v3690
        %v3775 = vpack.c.b16 %v3694, %v3691
        %v3776 = vpack.c.b16 %v3698, %v3695
        %v3777 = vpack.c.b16 %v3699, %v3696
        %v3778 = vpack.c.b16 %v3700, %v3697
        %v3779 = vpack.c.b16 %v3704, %v3701
        %v3780 = vpack.c.b16 %v3705, %v3702
        %v3781 = vpack.c.b16 %v3706, %v3703
        %v3782 = vpack.c.b16 %v3710, %v3707
        %v3783 = vpack.c.b16 %v3711, %v3708
        %v3784 = vpack.c.b16 %v3712, %v3709
        %3857 = vmatprep.subr.bf16.mxu0 %v3714
        %3858 = vmatpush1.bf16.msra.mxu0 %v3713
        %3859 = vmatprep.subr.bf16.mxu0 %v3717
        %3860 = vmatpush1.bf16.msra.mxu0 %v3716
        %3861 = vmatprep.subr.bf16.mxu0 %v3720
        %3862 = vmatpush1.bf16.msra.mxu0 %v3719
        %3863 = vmatprep.subr.bf16.mxu0 %v3723
        %3864 = vmatpush1.bf16.msra.mxu0 %v3722
        %3865 = vmatprep.subr.bf16.mxu0 %v3726
        %3866 = vmatpush1.bf16.msra.mxu0 %v3725
        %3867 = vmatprep.subr.bf16.mxu0 %v3729
        %3868 = vmatpush1.bf16.msra.mxu0 %v3728
        %3869 = vmatprep.subr.bf16.mxu0 %v3732
        %3870 = vmatpush1.bf16.msra.mxu0 %v3731
        %3871 = vmatprep.subr.bf16.mxu0 %v3735
        %3872 = vmatpush1.bf16.msra.mxu0 %v3734
        %3873 = vmatprep.subr.bf16.mxu0 %v3738
        %3874 = vmatpush1.bf16.msra.mxu0 %v3737
        %3875 = vmatprep.subr.bf16.mxu0 %v3741
        %3876 = vmatpush1.bf16.msra.mxu0 %v3740
        %3877 = vmatprep.subr.bf16.mxu0 %v3744
        %3878 = vmatpush1.bf16.msra.mxu0 %v3743
        %3879 = vmatprep.subr.bf16.mxu0 %v3747
        %3880 = vmatpush1.bf16.msra.mxu0 %v3746
        %3881 = vmatprep.subr.bf16.mxu0 %v3750
        %3882 = vmatpush1.bf16.msra.mxu0 %v3749
        %3883 = vmatprep.subr.bf16.mxu0 %v3753
        %3884 = vmatpush1.bf16.msra.mxu0 %v3752
        %3885 = vmatprep.subr.bf16.mxu0 %v3756
        %3886 = vmatpush1.bf16.msra.mxu0 %v3755
        %3887 = vmatprep.subr.bf16.mxu0 %v3759
        %3888 = vmatpush1.bf16.msra.mxu0 %v3758
        %3889 = vmatprep.mubr.bf16.mxu0 %v3468
        %3890 = vmatmul.mubr.bf16.gmra.mrb[0].mxu0 %v3467
        %v3891 = vpop.f32.mrb[0].mxu0
        %v3892 = vadd.f32 %v3450, %v3891
        %v3893 = vpop.f32.mrb[0].mxu0
        %v3894 = vadd.f32 %v3454, %v3893
        %v3895 = vpop.f32.mrb[0].mxu0
        %v3896 = vpop.f32.mrb[0].mxu0
        %3897 = vdwg.mxu0
        %3898 = vmatprep.subr.bf16.mxu0 %v3762
        %3899 = vmatpush1.bf16.msra.mxu0 %v3761
        %3900 = vmatprep.subr.bf16.mxu0 %v3765
        %3901 = vmatpush1.bf16.msra.mxu0 %v3764
        %3902 = vmatprep.subr.bf16.mxu0 %v3768
        %3903 = vmatpush1.bf16.msra.mxu0 %v3767
        %3904 = vmatprep.subr.bf16.mxu0 %v3771
        %3905 = vmatpush1.bf16.msra.mxu0 %v3770
        %3906 = vmatprep.subr.bf16.mxu0 %v3774
        %3907 = vmatpush1.bf16.msra.mxu0 %v3773
        %3908 = vmatprep.subr.bf16.mxu0 %v3777
        %3909 = vmatpush1.bf16.msra.mxu0 %v3776
        %3910 = vmatprep.subr.bf16.mxu0 %v3780
        %3911 = vmatpush1.bf16.msra.mxu0 %v3779
        %3912 = vmatprep.subr.bf16.mxu0 %v3783
        %3913 = vmatpush1.bf16.msra.mxu0 %v3782
        %3914 = vmatprep.subr.bf16.mxu0 0
        %3915 = vmatpush1.bf16.msra.mxu0 0
        %3916 = vmatprep.subr.bf16.mxu0 0
        %3917 = vmatpush1.bf16.msra.mxu0 0
        %3918 = vmatprep.subr.bf16.mxu0 0
        %3919 = vmatpush1.bf16.msra.mxu0 0
        %3920 = vmatprep.subr.bf16.mxu0 0
        %3921 = vmatpush1.bf16.msra.mxu0 0
        %3922 = vmatprep.subr.bf16.mxu0 0
        %3923 = vmatpush1.bf16.msra.mxu0 0
        %3924 = vmatprep.subr.bf16.mxu0 0
        %3925 = vmatpush1.bf16.msra.mxu0 0
        %3926 = vmatprep.subr.bf16.mxu0 0
        %3927 = vmatpush1.bf16.msra.mxu0 0
        %3928 = vmatprep.subr.bf16.mxu0 0
        %3929 = vmatpush1.bf16.msra.mxu0 0
        %3930 = vmatprep.mubr.bf16.mxu0 0
        %3931 = vmatmul.mubr.bf16.gmra.mrb[0].mxu0 %v3469
        %v3932 = vpop.f32.mrb[0].mxu0
        %v3933 = vadd.f32 %v3892, %v3932
        %v3934 = vpop.f32.mrb[0].mxu0
        %v3935 = vadd.f32 %v3894, %v3934
        %v3936 = vpop.f32.mrb[0].mxu0
        %v3937 = vpop.f32.mrb[0].mxu0
        %3938 = vdwg.mxu0
        %3939 = vmatprep.subr.bf16.mxu0 0
        %3940 = vmatpush1.bf16.msra.mxu0 %v3715
        %3941 = vmatprep.subr.bf16.mxu0 0
        %3942 = vmatpush1.bf16.msra.mxu0 %v3718
        %3943 = vmatprep.subr.bf16.mxu0 0
        %3944 = vmatpush1.bf16.msra.mxu0 %v3721
        %3945 = vmatprep.subr.bf16.mxu0 0
        %3946 = vmatpush1.bf16.msra.mxu0 %v3724
        %3947 = vmatprep.subr.bf16.mxu0 0
        %3948 = vmatpush1.bf16.msra.mxu0 %v3727
        %3949 = vmatprep.subr.bf16.mxu0 0
        %3950 = vmatpush1.bf16.msra.mxu0 %v3730
        %3951 = vmatprep.subr.bf16.mxu0 0
        %3952 = vmatpush1.bf16.msra.mxu0 %v3733
        %3953 = vmatprep.subr.bf16.mxu0 0
        %3954 = vmatpush1.bf16.msra.mxu0 %v3736
        %3955 = vmatprep.subr.bf16.mxu0 0
        %3956 = vmatpush1.bf16.msra.mxu0 %v3739
        %3957 = vmatprep.subr.bf16.mxu0 0
        %3958 = vmatpush1.bf16.msra.mxu0 %v3742
        %3959 = vmatprep.subr.bf16.mxu0 0
        %3960 = vmatpush1.bf16.msra.mxu0 %v3745
        %3961 = vmatprep.subr.bf16.mxu0 0
        %3962 = vmatpush1.bf16.msra.mxu0 %v3748
        %3963 = vmatprep.subr.bf16.mxu0 0
        %3964 = vmatpush1.bf16.msra.mxu0 %v3751
        %3965 = vmatprep.subr.bf16.mxu0 0
        %3966 = vmatpush1.bf16.msra.mxu0 %v3754
        %3967 = vmatprep.subr.bf16.mxu0 0
        %3968 = vmatpush1.bf16.msra.mxu0 %v3757
        %3969 = vmatprep.subr.bf16.mxu0 0
        %3970 = vmatpush1.bf16.msra.mxu0 %v3760
        %3971 = vmatprep.mubr.bf16.mxu0 %v3468
        %3972 = vmatmul.mubr.bf16.gmra.mrb[0].mxu0 %v3467
        %v3973 = vpop.f32.mrb[0].mxu0
        %v3974 = vadd.f32 %v3458, %v3973
        %v3975 = vpop.f32.mrb[0].mxu0
        %v3976 = vpop.f32.mrb[0].mxu0
        %v3977 = vpop.f32.mrb[0].mxu0
        %3978 = vdwg.mxu0
        %3979 = vmatprep.subr.bf16.mxu0 0
        %3980 = vmatpush1.bf16.msra.mxu0 %v3763
        %3981 = vmatprep.subr.bf16.mxu0 0
        %3982 = vmatpush1.bf16.msra.mxu0 %v3766
        %3983 = vmatprep.subr.bf16.mxu0 0
        %3984 = vmatpush1.bf16.msra.mxu0 %v3769
        %3985 = vmatprep.subr.bf16.mxu0 0
        %3986 = vmatpush1.bf16.msra.mxu0 %v3772
        %3987 = vmatprep.subr.bf16.mxu0 0
        %3988 = vmatpush1.bf16.msra.mxu0 %v3775
        %3989 = vmatprep.subr.bf16.mxu0 0
        %3990 = vmatpush1.bf16.msra.mxu0 %v3778
        %3991 = vmatprep.subr.bf16.mxu0 0
        %3992 = vmatpush1.bf16.msra.mxu0 %v3781
        %3993 = vmatprep.subr.bf16.mxu0 0
        %3994 = vmatpush1.bf16.msra.mxu0 %v3784
        %3995 = vmatprep.subr.bf16.mxu0 0
        %3996 = vmatpush1.bf16.msra.mxu0 0
        %3997 = vmatprep.subr.bf16.mxu0 0
        %3998 = vmatpush1.bf16.msra.mxu0 0
        %3999 = vmatprep.subr.bf16.mxu0 0
        %4000 = vmatpush1.bf16.msra.mxu0 0
        %4001 = vmatprep.subr.bf16.mxu0 0
        %4002 = vmatpush1.bf16.msra.mxu0 0
        %4003 = vmatprep.subr.bf16.mxu0 0
        %4004 = vmatpush1.bf16.msra.mxu0 0
        %4005 = vmatprep.subr.bf16.mxu0 0
        %4006 = vmatpush1.bf16.msra.mxu0 0
        %4007 = vmatprep.subr.bf16.mxu0 0
        %4008 = vmatpush1.bf16.msra.mxu0 0
        %4009 = vmatprep.subr.bf16.mxu0 0
        %4010 = vmatpush1.bf16.msra.mxu0 0
        %4011 = vmatprep.mubr.bf16.mxu0 0
        %4012 = vmatmul.mubr.bf16.gmra.mrb[0].mxu0 %v3469
        %v4013 = vpop.f32.mrb[0].mxu0
        %v4014 = vadd.f32 %v3974, %v4013
        %v4015 = vpop.f32.mrb[0].mxu0
        %v4016 = vpop.f32.mrb[0].mxu0
        %v4017 = vpop.f32.mrb[0].mxu0
        %4018 = vdwg.mxu0
        %s4019 = scalar_lea.vmem [#allocation15], %s766
        %v4020 = vld [vmem:[%s4019] sm:$0x7]
        %s4021 = scalar_lea.vmem [#allocation17], %s766
        %v4022 = vld [vmem:[%s4021] sm:$0x7]
        %v4023 = vadd.f32 %v3933, %v3935
        %v4024 = vadd.f32 %v4023, %v4014
        %4025 = vadd.xlane.f32.xlu0 %v4024
        %v4026 = vpop.xlane.xlu0 %4025
        %v4027 = vmul.f32 %v4026, %v775
        %v4028 = vsub.f32 %v3933, %v4027
        %v4029 = vsub.f32 %v3935, %v4027
        %v4030 = vsub.f32 %v4014, %v4027
        %v4031 = vmul.f32 %v4028, %v4028
        %v4032 = vmul.f32 %v4029, %v4029
        %v4033 = vmul.f32 %v4030, %v4030
        %v4034 = vadd.f32 %v4031, %v4032
        %v4035 = vadd.f32 %v4034, %v4033
        %4036 = vadd.xlane.f32.xlu0 %v4035
        %v4037 = vpop.xlane.xlu0 %4036
        %v4038 = vmul.f32 %v4037, %v775
        %v4039 = vadd.f32 %v4038, 1e-05
        %v4040 = vrsqrt.pop %v4039
        %v4041 = vmul.f32 %v4028, %v4040
        %v4042 = vmul.f32 %v4029, %v4040
        %v4043 = vmul.f32 %v4030, %v4040
        %v4045 = vlaneseq
        %v4046 = vshrl.u32 %v4045, 7
        %v4047 = vsub.s32 0, %v4046
        %v4048 = vrot.slane %v4020, %v4047
        %v4049 = vlaneseq
        %v4050 = vshrl.u32 %v4049, 7
        %v4051 = vsub.s32 1, %v4050
        %v4052 = vrot.slane %v4020, %v4051
        %v4053 = vlaneseq
        %v4054 = vshrl.u32 %v4053, 7
        %v4055 = vsub.s32 2, %v4054
        %v4056 = vrot.slane %v4020, %v4055
        %v4060 = vmul.f32 %v4041, %v4048
        %v4061 = vmul.f32 %v4042, %v4052
        %v4062 = vmul.f32 %v4043, %v4056
        %v4064 = vlaneseq
        %v4065 = vshrl.u32 %v4064, 7
        %v4066 = vsub.s32 0, %v4065
        %v4067 = vrot.slane %v4022, %v4066
        %v4068 = vlaneseq
        %v4069 = vshrl.u32 %v4068, 7
        %v4070 = vsub.s32 1, %v4069
        %v4071 = vrot.slane %v4022, %v4070
        %v4072 = vlaneseq
        %v4073 = vshrl.u32 %v4072, 7
        %v4074 = vsub.s32 2, %v4073
        %v4075 = vrot.slane %v4022, %v4074
        %v4079 = vadd.f32 %v4060, %v4067
        %v4080 = vadd.f32 %v4061, %v4071
        %v4081 = vadd.f32 %v4062, %v4075
        %v4082 = vpack.c.bf16 %v4079, %v4079
        %v4083 = vpack.c.bf16 %v4080, %v4080
        %v4084 = vpack.c.bf16 %v4081, %v4081
        %s4085 = smul.u32 %s43, 576
        %s4086 = smul.addr %s4085, 4
        %s4087 = scalar_lea.vmem [#allocation18], %s4086
        %v4088 = vld [vmem:[%s4087] sm:$0xff]
        %v4089 = vld [vmem:[%s4087 + $0x8] sm:$0xff]
        %v4090 = vld [vmem:[%s4087 + $0x10] sm:$0xff]
        %v4091 = vld [vmem:[%s4087 + $0x18] sm:$0xff]
        %v4092 = vld [vmem:[%s4087 + $0x20] sm:$0xff]
        %v4093 = vld [vmem:[%s4087 + $0x28] sm:$0xff]
        %v4094 = vld [vmem:[%s4087 + $0x30] sm:$0xff]
        %v4095 = vld [vmem:[%s4087 + $0x38] sm:$0xff]
        %v4096 = vld [vmem:[%s4087 + $0x40] sm:$0xff]
        %v4097 = vld [vmem:[%s4087 + $0x48] sm:$0xff]
        %v4098 = vld [vmem:[%s4087 + $0x50] sm:$0xff]
        %v4099 = vld [vmem:[%s4087 + $0x58] sm:$0xff]
        %v4100 = vld [vmem:[%s4087 + $0x60] sm:$0xff]
        %v4101 = vld [vmem:[%s4087 + $0x68] sm:$0xff]
        %v4102 = vld [vmem:[%s4087 + $0x70] sm:$0xff]
        %v4103 = vld [vmem:[%s4087 + $0x78] sm:$0xff]
        %v4104 = vld [vmem:[%s4087 + $0x80] sm:$0xff]
        %v4105 = vld [vmem:[%s4087 + $0x88] sm:$0xff]
        %v4106 = vld [vmem:[%s4087 + $0x90] sm:$0xff]
        %v4107 = vld [vmem:[%s4087 + $0x98] sm:$0xff]
        %v4108 = vld [vmem:[%s4087 + $0xa0] sm:$0xff]
        %v4109 = vld [vmem:[%s4087 + $0xa8] sm:$0xff]
        %v4110 = vld [vmem:[%s4087 + $0xb0] sm:$0xff]
        %v4111 = vld [vmem:[%s4087 + $0xb8] sm:$0xff]
        %v4112 = vld [vmem:[%s4087 + $0xc0] sm:$0xff]
        %v4113 = vld [vmem:[%s4087 + $0xc8] sm:$0xff]
        %v4114 = vld [vmem:[%s4087 + $0xd0] sm:$0xff]
        %v4115 = vld [vmem:[%s4087 + $0xd8] sm:$0xff]
        %v4116 = vld [vmem:[%s4087 + $0xe0] sm:$0xff]
        %v4117 = vld [vmem:[%s4087 + $0xe8] sm:$0xff]
        %v4118 = vld [vmem:[%s4087 + $0xf0] sm:$0xff]
        %v4119 = vld [vmem:[%s4087 + $0xf8] sm:$0xff]
        %v4120 = vld [vmem:[%s4087 + $0x100] sm:$0xff]
        %v4121 = vld [vmem:[%s4087 + $0x108] sm:$0xff]
        %v4122 = vld [vmem:[%s4087 + $0x110] sm:$0xff]
        %v4123 = vld [vmem:[%s4087 + $0x118] sm:$0xff]
        %v4124 = vld [vmem:[%s4087 + $0x120] sm:$0xff]
        %v4125 = vld [vmem:[%s4087 + $0x128] sm:$0xff]
        %v4126 = vld [vmem:[%s4087 + $0x130] sm:$0xff]
        %v4127 = vld [vmem:[%s4087 + $0x138] sm:$0xff]
        %v4128 = vld [vmem:[%s4087 + $0x140] sm:$0xff]
        %v4129 = vld [vmem:[%s4087 + $0x148] sm:$0xff]
        %v4130 = vld [vmem:[%s4087 + $0x150] sm:$0xff]
        %v4131 = vld [vmem:[%s4087 + $0x158] sm:$0xff]
        %v4132 = vld [vmem:[%s4087 + $0x160] sm:$0xff]
        %v4133 = vld [vmem:[%s4087 + $0x168] sm:$0xff]
        %v4134 = vld [vmem:[%s4087 + $0x170] sm:$0xff]
        %v4135 = vld [vmem:[%s4087 + $0x178] sm:$0xff]
        %v4136 = vld [vmem:[%s4087 + $0x180] sm:$0xff]
        %v4137 = vld [vmem:[%s4087 + $0x188] sm:$0xff]
        %v4138 = vld [vmem:[%s4087 + $0x190] sm:$0xff]
        %v4139 = vld [vmem:[%s4087 + $0x198] sm:$0xff]
        %v4140 = vld [vmem:[%s4087 + $0x1a0] sm:$0xff]
        %v4141 = vld [vmem:[%s4087 + $0x1a8] sm:$0xff]
        %v4142 = vld [vmem:[%s4087 + $0x1b0] sm:$0xff]
        %v4143 = vld [vmem:[%s4087 + $0x1b8] sm:$0xff]
        %v4144 = vld [vmem:[%s4087 + $0x1c0] sm:$0xff]
        %v4145 = vld [vmem:[%s4087 + $0x1c8] sm:$0xff]
        %v4146 = vld [vmem:[%s4087 + $0x1d0] sm:$0xff]
        %v4147 = vld [vmem:[%s4087 + $0x1d8] sm:$0xff]
        %v4148 = vld [vmem:[%s4087 + $0x1e0] sm:$0xff]
        %v4149 = vld [vmem:[%s4087 + $0x1e8] sm:$0xff]
        %v4150 = vld [vmem:[%s4087 + $0x1f0] sm:$0xff]
        %v4151 = vld [vmem:[%s4087 + $0x1f8] sm:$0xff]
        %v4152 = vld [vmem:[%s4087 + $0x200] sm:$0xff]
        %v4153 = vld [vmem:[%s4087 + $0x208] sm:$0xff]
        %v4154 = vld [vmem:[%s4087 + $0x210] sm:$0xff]
        %v4155 = vld [vmem:[%s4087 + $0x218] sm:$0xff]
        %v4156 = vld [vmem:[%s4087 + $0x220] sm:$0xff]
        %v4157 = vld [vmem:[%s4087 + $0x228] sm:$0xff]
        %v4158 = vld [vmem:[%s4087 + $0x230] sm:$0xff]
        %v4159 = vld [vmem:[%s4087 + $0x238] sm:$0xff]
        %v4160 = vld [vmem:[%s4087 + $0x240] sm:$0xff]
        %v4161 = vld [vmem:[%s4087 + $0x248] sm:$0xff]
        %v4162 = vld [vmem:[%s4087 + $0x250] sm:$0xff]
        %v4163 = vld [vmem:[%s4087 + $0x258] sm:$0xff]
        %v4164 = vld [vmem:[%s4087 + $0x260] sm:$0xff]
        %v4165 = vld [vmem:[%s4087 + $0x268] sm:$0xff]
        %v4166 = vld [vmem:[%s4087 + $0x270] sm:$0xff]
        %v4167 = vld [vmem:[%s4087 + $0x278] sm:$0xff]
        %v4168 = vld [vmem:[%s4087 + $0x280] sm:$0xff]
        %v4169 = vld [vmem:[%s4087 + $0x288] sm:$0xff]
        %v4170 = vld [vmem:[%s4087 + $0x290] sm:$0xff]
        %v4171 = vld [vmem:[%s4087 + $0x298] sm:$0xff]
        %v4172 = vld [vmem:[%s4087 + $0x2a0] sm:$0xff]
        %v4173 = vld [vmem:[%s4087 + $0x2a8] sm:$0xff]
        %v4174 = vld [vmem:[%s4087 + $0x2b0] sm:$0xff]
        %v4175 = vld [vmem:[%s4087 + $0x2b8] sm:$0xff]
        %v4176 = vld [vmem:[%s4087 + $0x2c0] sm:$0xff]
        %v4177 = vld [vmem:[%s4087 + $0x2c8] sm:$0xff]
        %v4178 = vld [vmem:[%s4087 + $0x2d0] sm:$0xff]
        %v4179 = vld [vmem:[%s4087 + $0x2d8] sm:$0xff]
        %v4180 = vld [vmem:[%s4087 + $0x2e0] sm:$0xff]
        %v4181 = vld [vmem:[%s4087 + $0x2e8] sm:$0xff]
        %v4182 = vld [vmem:[%s4087 + $0x2f0] sm:$0xff]
        %v4183 = vld [vmem:[%s4087 + $0x2f8] sm:$0xff]
        %v4184 = vld [vmem:[%s4087 + $0x300] sm:$0xff]
        %v4185 = vld [vmem:[%s4087 + $0x308] sm:$0xff]
        %v4186 = vld [vmem:[%s4087 + $0x310] sm:$0xff]
        %v4187 = vld [vmem:[%s4087 + $0x318] sm:$0xff]
        %v4188 = vld [vmem:[%s4087 + $0x320] sm:$0xff]
        %v4189 = vld [vmem:[%s4087 + $0x328] sm:$0xff]
        %v4190 = vld [vmem:[%s4087 + $0x330] sm:$0xff]
        %v4191 = vld [vmem:[%s4087 + $0x338] sm:$0xff]
        %v4192 = vld [vmem:[%s4087 + $0x340] sm:$0xff]
        %v4193 = vld [vmem:[%s4087 + $0x348] sm:$0xff]
        %v4194 = vld [vmem:[%s4087 + $0x350] sm:$0xff]
        %v4195 = vld [vmem:[%s4087 + $0x358] sm:$0xff]
        %v4196 = vld [vmem:[%s4087 + $0x360] sm:$0xff]
        %v4197 = vld [vmem:[%s4087 + $0x368] sm:$0xff]
        %v4198 = vld [vmem:[%s4087 + $0x370] sm:$0xff]
        %v4199 = vld [vmem:[%s4087 + $0x378] sm:$0xff]
        %v4200 = vld [vmem:[%s4087 + $0x380] sm:$0xff]
        %v4201 = vld [vmem:[%s4087 + $0x388] sm:$0xff]
        %v4202 = vld [vmem:[%s4087 + $0x390] sm:$0xff]
        %v4203 = vld [vmem:[%s4087 + $0x398] sm:$0xff]
        %v4204 = vld [vmem:[%s4087 + $0x3a0] sm:$0xff]
        %v4205 = vld [vmem:[%s4087 + $0x3a8] sm:$0xff]
        %v4206 = vld [vmem:[%s4087 + $0x3b0] sm:$0xff]
        %v4207 = vld [vmem:[%s4087 + $0x3b8] sm:$0xff]
        %v4208 = vld [vmem:[%s4087 + $0x3c0] sm:$0xff]
        %v4209 = vld [vmem:[%s4087 + $0x3c8] sm:$0xff]
        %v4210 = vld [vmem:[%s4087 + $0x3d0] sm:$0xff]
        %v4211 = vld [vmem:[%s4087 + $0x3d8] sm:$0xff]
        %v4212 = vld [vmem:[%s4087 + $0x3e0] sm:$0xff]
        %v4213 = vld [vmem:[%s4087 + $0x3e8] sm:$0xff]
        %v4214 = vld [vmem:[%s4087 + $0x3f0] sm:$0xff]
        %v4215 = vld [vmem:[%s4087 + $0x3f8] sm:$0xff]
        %v4216 = vld [vmem:[%s4087 + $0x400] sm:$0xff]
        %v4217 = vld [vmem:[%s4087 + $0x408] sm:$0xff]
        %v4218 = vld [vmem:[%s4087 + $0x410] sm:$0xff]
        %v4219 = vld [vmem:[%s4087 + $0x418] sm:$0xff]
        %v4220 = vld [vmem:[%s4087 + $0x420] sm:$0xff]
        %v4221 = vld [vmem:[%s4087 + $0x428] sm:$0xff]
        %v4222 = vld [vmem:[%s4087 + $0x430] sm:$0xff]
        %v4223 = vld [vmem:[%s4087 + $0x438] sm:$0xff]
        %v4224 = vld [vmem:[%s4087 + $0x440] sm:$0xff]
        %v4225 = vld [vmem:[%s4087 + $0x448] sm:$0xff]
        %v4226 = vld [vmem:[%s4087 + $0x450] sm:$0xff]
        %v4227 = vld [vmem:[%s4087 + $0x458] sm:$0xff]
        %v4228 = vld [vmem:[%s4087 + $0x460] sm:$0xff]
        %v4229 = vld [vmem:[%s4087 + $0x468] sm:$0xff]
        %v4230 = vld [vmem:[%s4087 + $0x470] sm:$0xff]
        %v4231 = vld [vmem:[%s4087 + $0x478] sm:$0xff]
        %v4232 = vld [vmem:[%s4087 + $0x480] sm:$0xff]
        %v4233 = vld [vmem:[%s4087 + $0x488] sm:$0xff]
        %v4234 = vld [vmem:[%s4087 + $0x490] sm:$0xff]
        %v4235 = vld [vmem:[%s4087 + $0x498] sm:$0xff]
        %v4236 = vld [vmem:[%s4087 + $0x4a0] sm:$0xff]
        %v4237 = vld [vmem:[%s4087 + $0x4a8] sm:$0xff]
        %v4238 = vld [vmem:[%s4087 + $0x4b0] sm:$0xff]
        %v4239 = vld [vmem:[%s4087 + $0x4b8] sm:$0xff]
        %v4240 = vld [vmem:[%s4087 + $0x4c0] sm:$0xff]
        %v4241 = vld [vmem:[%s4087 + $0x4c8] sm:$0xff]
        %v4242 = vld [vmem:[%s4087 + $0x4d0] sm:$0xff]
        %v4243 = vld [vmem:[%s4087 + $0x4d8] sm:$0xff]
        %v4244 = vld [vmem:[%s4087 + $0x4e0] sm:$0xff]
        %v4245 = vld [vmem:[%s4087 + $0x4e8] sm:$0xff]
        %v4246 = vld [vmem:[%s4087 + $0x4f0] sm:$0xff]
        %v4247 = vld [vmem:[%s4087 + $0x4f8] sm:$0xff]
        %v4248 = vld [vmem:[%s4087 + $0x500] sm:$0xff]
        %v4249 = vld [vmem:[%s4087 + $0x508] sm:$0xff]
        %v4250 = vld [vmem:[%s4087 + $0x510] sm:$0xff]
        %v4251 = vld [vmem:[%s4087 + $0x518] sm:$0xff]
        %v4252 = vld [vmem:[%s4087 + $0x520] sm:$0xff]
        %v4253 = vld [vmem:[%s4087 + $0x528] sm:$0xff]
        %v4254 = vld [vmem:[%s4087 + $0x530] sm:$0xff]
        %v4255 = vld [vmem:[%s4087 + $0x538] sm:$0xff]
        %v4256 = vld [vmem:[%s4087 + $0x540] sm:$0xff]
        %v4257 = vld [vmem:[%s4087 + $0x548] sm:$0xff]
        %v4258 = vld [vmem:[%s4087 + $0x550] sm:$0xff]
        %v4259 = vld [vmem:[%s4087 + $0x558] sm:$0xff]
        %v4260 = vld [vmem:[%s4087 + $0x560] sm:$0xff]
        %v4261 = vld [vmem:[%s4087 + $0x568] sm:$0xff]
        %v4262 = vld [vmem:[%s4087 + $0x570] sm:$0xff]
        %v4263 = vld [vmem:[%s4087 + $0x578] sm:$0xff]
        %v4264 = vld [vmem:[%s4087 + $0x580] sm:$0xff]
        %v4265 = vld [vmem:[%s4087 + $0x588] sm:$0xff]
        %v4266 = vld [vmem:[%s4087 + $0x590] sm:$0xff]
        %v4267 = vld [vmem:[%s4087 + $0x598] sm:$0xff]
        %v4268 = vld [vmem:[%s4087 + $0x5a0] sm:$0xff]
        %v4269 = vld [vmem:[%s4087 + $0x5a8] sm:$0xff]
        %v4270 = vld [vmem:[%s4087 + $0x5b0] sm:$0xff]
        %v4271 = vld [vmem:[%s4087 + $0x5b8] sm:$0xff]
        %v4272 = vld [vmem:[%s4087 + $0x5c0] sm:$0xff]
        %v4273 = vld [vmem:[%s4087 + $0x5c8] sm:$0xff]
        %v4274 = vld [vmem:[%s4087 + $0x5d0] sm:$0xff]
        %v4275 = vld [vmem:[%s4087 + $0x5d8] sm:$0xff]
        %v4276 = vld [vmem:[%s4087 + $0x5e0] sm:$0xff]
        %v4277 = vld [vmem:[%s4087 + $0x5e8] sm:$0xff]
        %v4278 = vld [vmem:[%s4087 + $0x5f0] sm:$0xff]
        %v4279 = vld [vmem:[%s4087 + $0x5f8] sm:$0xff]
        %v4280 = vld [vmem:[%s4087 + $0x600] sm:$0xff]
        %v4281 = vld [vmem:[%s4087 + $0x608] sm:$0xff]
        %v4282 = vld [vmem:[%s4087 + $0x610] sm:$0xff]
        %v4283 = vld [vmem:[%s4087 + $0x618] sm:$0xff]
        %v4284 = vld [vmem:[%s4087 + $0x620] sm:$0xff]
        %v4285 = vld [vmem:[%s4087 + $0x628] sm:$0xff]
        %v4286 = vld [vmem:[%s4087 + $0x630] sm:$0xff]
        %v4287 = vld [vmem:[%s4087 + $0x638] sm:$0xff]
        %v4288 = vld [vmem:[%s4087 + $0x640] sm:$0xff]
        %v4289 = vld [vmem:[%s4087 + $0x648] sm:$0xff]
        %v4290 = vld [vmem:[%s4087 + $0x650] sm:$0xff]
        %v4291 = vld [vmem:[%s4087 + $0x658] sm:$0xff]
        %v4292 = vld [vmem:[%s4087 + $0x660] sm:$0xff]
        %v4293 = vld [vmem:[%s4087 + $0x668] sm:$0xff]
        %v4294 = vld [vmem:[%s4087 + $0x670] sm:$0xff]
        %v4295 = vld [vmem:[%s4087 + $0x678] sm:$0xff]
        %v4296 = vld [vmem:[%s4087 + $0x680] sm:$0xff]
        %v4297 = vld [vmem:[%s4087 + $0x688] sm:$0xff]
        %v4298 = vld [vmem:[%s4087 + $0x690] sm:$0xff]
        %v4299 = vld [vmem:[%s4087 + $0x698] sm:$0xff]
        %v4300 = vld [vmem:[%s4087 + $0x6a0] sm:$0xff]
        %v4301 = vld [vmem:[%s4087 + $0x6a8] sm:$0xff]
        %v4302 = vld [vmem:[%s4087 + $0x6b0] sm:$0xff]
        %v4303 = vld [vmem:[%s4087 + $0x6b8] sm:$0xff]
        %v4304 = vld [vmem:[%s4087 + $0x6c0] sm:$0xff]
        %v4305 = vld [vmem:[%s4087 + $0x6c8] sm:$0xff]
        %v4306 = vld [vmem:[%s4087 + $0x6d0] sm:$0xff]
        %v4307 = vld [vmem:[%s4087 + $0x6d8] sm:$0xff]
        %v4308 = vld [vmem:[%s4087 + $0x6e0] sm:$0xff]
        %v4309 = vld [vmem:[%s4087 + $0x6e8] sm:$0xff]
        %v4310 = vld [vmem:[%s4087 + $0x6f0] sm:$0xff]
        %v4311 = vld [vmem:[%s4087 + $0x6f8] sm:$0xff]
        %v4312 = vld [vmem:[%s4087 + $0x700] sm:$0xff]
        %v4313 = vld [vmem:[%s4087 + $0x708] sm:$0xff]
        %v4314 = vld [vmem:[%s4087 + $0x710] sm:$0xff]
        %v4315 = vld [vmem:[%s4087 + $0x718] sm:$0xff]
        %v4316 = vld [vmem:[%s4087 + $0x720] sm:$0xff]
        %v4317 = vld [vmem:[%s4087 + $0x728] sm:$0xff]
        %v4318 = vld [vmem:[%s4087 + $0x730] sm:$0xff]
        %v4319 = vld [vmem:[%s4087 + $0x738] sm:$0xff]
        %v4320 = vld [vmem:[%s4087 + $0x740] sm:$0xff]
        %v4321 = vld [vmem:[%s4087 + $0x748] sm:$0xff]
        %v4322 = vld [vmem:[%s4087 + $0x750] sm:$0xff]
        %v4323 = vld [vmem:[%s4087 + $0x758] sm:$0xff]
        %v4324 = vld [vmem:[%s4087 + $0x760] sm:$0xff]
        %v4325 = vld [vmem:[%s4087 + $0x768] sm:$0xff]
        %v4326 = vld [vmem:[%s4087 + $0x770] sm:$0xff]
        %v4327 = vld [vmem:[%s4087 + $0x778] sm:$0xff]
        %v4328 = vld [vmem:[%s4087 + $0x780] sm:$0xff]
        %v4329 = vld [vmem:[%s4087 + $0x788] sm:$0xff]
        %v4330 = vld [vmem:[%s4087 + $0x790] sm:$0xff]
        %v4331 = vld [vmem:[%s4087 + $0x798] sm:$0xff]
        %v4332 = vld [vmem:[%s4087 + $0x7a0] sm:$0xff]
        %v4333 = vld [vmem:[%s4087 + $0x7a8] sm:$0xff]
        %v4334 = vld [vmem:[%s4087 + $0x7b0] sm:$0xff]
        %v4335 = vld [vmem:[%s4087 + $0x7b8] sm:$0xff]
        %v4336 = vld [vmem:[%s4087 + $0x7c0] sm:$0xff]
        %v4337 = vld [vmem:[%s4087 + $0x7c8] sm:$0xff]
        %v4338 = vld [vmem:[%s4087 + $0x7d0] sm:$0xff]
        %v4339 = vld [vmem:[%s4087 + $0x7d8] sm:$0xff]
        %v4340 = vld [vmem:[%s4087 + $0x7e0] sm:$0xff]
        %v4341 = vld [vmem:[%s4087 + $0x7e8] sm:$0xff]
        %v4342 = vld [vmem:[%s4087 + $0x7f0] sm:$0xff]
        %v4343 = vld [vmem:[%s4087 + $0x7f8] sm:$0xff]
        %v4344 = vld [vmem:[%s4087 + $0x800] sm:$0xff]
        %v4345 = vld [vmem:[%s4087 + $0x808] sm:$0xff]
        %v4346 = vld [vmem:[%s4087 + $0x810] sm:$0xff]
        %v4347 = vld [vmem:[%s4087 + $0x818] sm:$0xff]
        %v4348 = vld [vmem:[%s4087 + $0x820] sm:$0xff]
        %v4349 = vld [vmem:[%s4087 + $0x828] sm:$0xff]
        %v4350 = vld [vmem:[%s4087 + $0x830] sm:$0xff]
        %v4351 = vld [vmem:[%s4087 + $0x838] sm:$0xff]
        %v4352 = vld [vmem:[%s4087 + $0x840] sm:$0xff]
        %v4353 = vld [vmem:[%s4087 + $0x848] sm:$0xff]
        %v4354 = vld [vmem:[%s4087 + $0x850] sm:$0xff]
        %v4355 = vld [vmem:[%s4087 + $0x858] sm:$0xff]
        %v4356 = vld [vmem:[%s4087 + $0x860] sm:$0xff]
        %v4357 = vld [vmem:[%s4087 + $0x868] sm:$0xff]
        %v4358 = vld [vmem:[%s4087 + $0x870] sm:$0xff]
        %v4359 = vld [vmem:[%s4087 + $0x878] sm:$0xff]
        %v4360 = vld [vmem:[%s4087 + $0x880] sm:$0xff]
        %v4361 = vld [vmem:[%s4087 + $0x888] sm:$0xff]
        %v4362 = vld [vmem:[%s4087 + $0x890] sm:$0xff]
        %v4363 = vld [vmem:[%s4087 + $0x898] sm:$0xff]
        %v4364 = vld [vmem:[%s4087 + $0x8a0] sm:$0xff]
        %v4365 = vld [vmem:[%s4087 + $0x8a8] sm:$0xff]
        %v4366 = vld [vmem:[%s4087 + $0x8b0] sm:$0xff]
        %v4367 = vld [vmem:[%s4087 + $0x8b8] sm:$0xff]
        %v4368 = vld [vmem:[%s4087 + $0x8c0] sm:$0xff]
        %v4369 = vld [vmem:[%s4087 + $0x8c8] sm:$0xff]
        %v4370 = vld [vmem:[%s4087 + $0x8d0] sm:$0xff]
        %v4371 = vld [vmem:[%s4087 + $0x8d8] sm:$0xff]
        %v4372 = vld [vmem:[%s4087 + $0x8e0] sm:$0xff]
        %v4373 = vld [vmem:[%s4087 + $0x8e8] sm:$0xff]
        %v4374 = vld [vmem:[%s4087 + $0x8f0] sm:$0xff]
        %v4375 = vld [vmem:[%s4087 + $0x8f8] sm:$0xff]
        %s4376 = smul.u32 %s43, 12
        %s4377 = scalar_lea.vmem [#allocation20], %s4376
        %v4378 = vld [vmem:[%s4377] sm:$0xff]
        %v4379 = vld [vmem:[%s4377 + $0x8] sm:$0xf]
        %v4382 = vlaneseq
        %v4383 = vshrl.u32 %v4382, 7
        %v4384 = vsub.s32 0, %v4383
        %v4385 = vrot.slane %v4378, %v4384
        %v4386 = vlaneseq
        %v4387 = vshrl.u32 %v4386, 7
        %v4388 = vsub.s32 1, %v4387
        %v4389 = vrot.slane %v4378, %v4388
        %v4390 = vlaneseq
        %v4391 = vshrl.u32 %v4390, 7
        %v4392 = vsub.s32 2, %v4391
        %v4393 = vrot.slane %v4378, %v4392
        %v4394 = vlaneseq
        %v4395 = vshrl.u32 %v4394, 7
        %v4396 = vsub.s32 3, %v4395
        %v4397 = vrot.slane %v4378, %v4396
        %v4398 = vlaneseq
        %v4399 = vshrl.u32 %v4398, 7
        %v4400 = vsub.s32 4, %v4399
        %v4401 = vrot.slane %v4378, %v4400
        %v4402 = vlaneseq
        %v4403 = vshrl.u32 %v4402, 7
        %v4404 = vsub.s32 5, %v4403
        %v4405 = vrot.slane %v4378, %v4404
        %v4406 = vlaneseq
        %v4407 = vshrl.u32 %v4406, 7
        %v4408 = vsub.s32 6, %v4407
        %v4409 = vrot.slane %v4378, %v4408
        %v4410 = vlaneseq
        %v4411 = vshrl.u32 %v4410, 7
        %v4412 = vsub.s32 7, %v4411
        %v4413 = vrot.slane %v4378, %v4412
        %v4414 = vlaneseq
        %v4415 = vshrl.u32 %v4414, 7
        %v4416 = vsub.s32 0, %v4415
        %v4417 = vrot.slane %v4379, %v4416
        %v4418 = vlaneseq
        %v4419 = vshrl.u32 %v4418, 7
        %v4420 = vsub.s32 1, %v4419
        %v4421 = vrot.slane %v4379, %v4420
        %v4422 = vlaneseq
        %v4423 = vshrl.u32 %v4422, 7
        %v4424 = vsub.s32 2, %v4423
        %v4425 = vrot.slane %v4379, %v4424
        %v4426 = vlaneseq
        %v4427 = vshrl.u32 %v4426, 7
        %v4428 = vsub.s32 3, %v4427
        %v4429 = vrot.slane %v4379, %v4428
        %v4730 = vunpack.c.l.b16 %v4088
        %v4731 = vunpack.c.h.b16 %v4088
        %v4732 = vunpack.c.l.b16 %v4089
        %v4733 = vunpack.c.h.b16 %v4089
        %v4734 = vunpack.c.l.b16 %v4090
        %v4735 = vunpack.c.h.b16 %v4090
        %v4736 = vunpack.c.l.b16 %v4091
        %v4737 = vunpack.c.h.b16 %v4091
        %v4738 = vunpack.c.l.b16 %v4092
        %v4739 = vunpack.c.h.b16 %v4092
        %v4740 = vunpack.c.l.b16 %v4093
        %v4741 = vunpack.c.h.b16 %v4093
        %v4742 = vunpack.c.l.b16 %v4094
        %v4743 = vunpack.c.h.b16 %v4094
        %v4744 = vunpack.c.l.b16 %v4095
        %v4745 = vunpack.c.h.b16 %v4095
        %v4746 = vunpack.c.l.b16 %v4096
        %v4747 = vunpack.c.h.b16 %v4096
        %v4748 = vunpack.c.l.b16 %v4097
        %v4749 = vunpack.c.h.b16 %v4097
        %v4750 = vunpack.c.l.b16 %v4098
        %v4751 = vunpack.c.h.b16 %v4098
        %v4752 = vunpack.c.l.b16 %v4099
        %v4753 = vunpack.c.h.b16 %v4099
        %v4754 = vunpack.c.l.b16 %v4100
        %v4755 = vunpack.c.h.b16 %v4100
        %v4756 = vunpack.c.l.b16 %v4101
        %v4757 = vunpack.c.h.b16 %v4101
        %v4758 = vunpack.c.l.b16 %v4102
        %v4759 = vunpack.c.h.b16 %v4102
        %v4760 = vunpack.c.l.b16 %v4103
        %v4761 = vunpack.c.h.b16 %v4103
        %v4762 = vunpack.c.l.b16 %v4104
        %v4763 = vunpack.c.h.b16 %v4104
        %v4764 = vunpack.c.l.b16 %v4105
        %v4765 = vunpack.c.h.b16 %v4105
        %v4766 = vunpack.c.l.b16 %v4106
        %v4767 = vunpack.c.h.b16 %v4106
        %v4768 = vunpack.c.l.b16 %v4107
        %v4769 = vunpack.c.h.b16 %v4107
        %v4770 = vunpack.c.l.b16 %v4108
        %v4771 = vunpack.c.h.b16 %v4108
        %v4772 = vunpack.c.l.b16 %v4109
        %v4773 = vunpack.c.h.b16 %v4109
        %v4774 = vunpack.c.l.b16 %v4110
        %v4775 = vunpack.c.h.b16 %v4110
        %v4776 = vunpack.c.l.b16 %v4111
        %v4777 = vunpack.c.h.b16 %v4111
        %v4778 = vunpack.c.l.b16 %v4112
        %v4779 = vunpack.c.h.b16 %v4112
        %v4780 = vunpack.c.l.b16 %v4113
        %v4781 = vunpack.c.h.b16 %v4113
        %v4782 = vunpack.c.l.b16 %v4114
        %v4783 = vunpack.c.h.b16 %v4114
        %v4784 = vunpack.c.l.b16 %v4115
        %v4785 = vunpack.c.h.b16 %v4115
        %v4786 = vunpack.c.l.b16 %v4116
        %v4787 = vunpack.c.h.b16 %v4116
        %v4788 = vunpack.c.l.b16 %v4117
        %v4789 = vunpack.c.h.b16 %v4117
        %v4790 = vunpack.c.l.b16 %v4118
        %v4791 = vunpack.c.h.b16 %v4118
        %v4792 = vunpack.c.l.b16 %v4119
        %v4793 = vunpack.c.h.b16 %v4119
        %v4794 = vunpack.c.l.b16 %v4120
        %v4795 = vunpack.c.h.b16 %v4120
        %v4796 = vunpack.c.l.b16 %v4121
        %v4797 = vunpack.c.h.b16 %v4121
        %v4798 = vunpack.c.l.b16 %v4122
        %v4799 = vunpack.c.h.b16 %v4122
        %v4800 = vunpack.c.l.b16 %v4123
        %v4801 = vunpack.c.h.b16 %v4123
        %v4802 = vunpack.c.l.b16 %v4124
        %v4803 = vunpack.c.h.b16 %v4124
        %v4804 = vunpack.c.l.b16 %v4125
        %v4805 = vunpack.c.h.b16 %v4125
        %v4806 = vunpack.c.l.b16 %v4126
        %v4807 = vunpack.c.h.b16 %v4126
        %v4808 = vunpack.c.l.b16 %v4127
        %v4809 = vunpack.c.h.b16 %v4127
        %v4810 = vunpack.c.l.b16 %v4128
        %v4811 = vunpack.c.h.b16 %v4128
        %v4812 = vunpack.c.l.b16 %v4129
        %v4813 = vunpack.c.h.b16 %v4129
        %v4814 = vunpack.c.l.b16 %v4130
        %v4815 = vunpack.c.h.b16 %v4130
        %v4816 = vunpack.c.l.b16 %v4131
        %v4817 = vunpack.c.h.b16 %v4131
        %v4818 = vunpack.c.l.b16 %v4132
        %v4819 = vunpack.c.h.b16 %v4132
        %v4820 = vunpack.c.l.b16 %v4133
        %v4821 = vunpack.c.h.b16 %v4133
        %v4822 = vunpack.c.l.b16 %v4134
        %v4823 = vunpack.c.h.b16 %v4134
        %v4824 = vunpack.c.l.b16 %v4135
        %v4825 = vunpack.c.h.b16 %v4135
        %v4826 = vunpack.c.l.b16 %v4136
        %v4827 = vunpack.c.h.b16 %v4136
        %v4828 = vunpack.c.l.b16 %v4137
        %v4829 = vunpack.c.h.b16 %v4137
        %v4830 = vunpack.c.l.b16 %v4138
        %v4831 = vunpack.c.h.b16 %v4138
        %v4832 = vunpack.c.l.b16 %v4139
        %v4833 = vunpack.c.h.b16 %v4139
        %v4834 = vunpack.c.l.b16 %v4140
        %v4835 = vunpack.c.h.b16 %v4140
        %v4836 = vunpack.c.l.b16 %v4141
        %v4837 = vunpack.c.h.b16 %v4141
        %v4838 = vunpack.c.l.b16 %v4142
        %v4839 = vunpack.c.h.b16 %v4142
        %v4840 = vunpack.c.l.b16 %v4143
        %v4841 = vunpack.c.h.b16 %v4143
        %v4842 = vunpack.c.l.b16 %v4144
        %v4843 = vunpack.c.h.b16 %v4144
        %v4844 = vunpack.c.l.b16 %v4145
        %v4845 = vunpack.c.h.b16 %v4145
        %v4846 = vunpack.c.l.b16 %v4146
        %v4847 = vunpack.c.h.b16 %v4146
        %v4848 = vunpack.c.l.b16 %v4147
        %v4849 = vunpack.c.h.b16 %v4147
        %v4850 = vunpack.c.l.b16 %v4148
        %v4851 = vunpack.c.h.b16 %v4148
        %v4852 = vunpack.c.l.b16 %v4149
        %v4853 = vunpack.c.h.b16 %v4149
        %v4854 = vunpack.c.l.b16 %v4150
        %v4855 = vunpack.c.h.b16 %v4150
        %v4856 = vunpack.c.l.b16 %v4151
        %v4857 = vunpack.c.h.b16 %v4151
        %v4858 = vunpack.c.l.b16 %v4152
        %v4859 = vunpack.c.h.b16 %v4152
        %v4860 = vunpack.c.l.b16 %v4153
        %v4861 = vunpack.c.h.b16 %v4153
        %v4862 = vunpack.c.l.b16 %v4154
        %v4863 = vunpack.c.h.b16 %v4154
        %v4864 = vunpack.c.l.b16 %v4155
        %v4865 = vunpack.c.h.b16 %v4155
        %v4866 = vunpack.c.l.b16 %v4156
        %v4867 = vunpack.c.h.b16 %v4156
        %v4868 = vunpack.c.l.b16 %v4157
        %v4869 = vunpack.c.h.b16 %v4157
        %v4870 = vunpack.c.l.b16 %v4158
        %v4871 = vunpack.c.h.b16 %v4158
        %v4872 = vunpack.c.l.b16 %v4159
        %v4873 = vunpack.c.h.b16 %v4159
        %v4874 = vunpack.c.l.b16 %v4160
        %v4875 = vunpack.c.h.b16 %v4160
        %v4876 = vunpack.c.l.b16 %v4161
        %v4877 = vunpack.c.h.b16 %v4161
        %v4878 = vunpack.c.l.b16 %v4162
        %v4879 = vunpack.c.h.b16 %v4162
        %v4880 = vunpack.c.l.b16 %v4163
        %v4881 = vunpack.c.h.b16 %v4163
        %v4882 = vunpack.c.l.b16 %v4164
        %v4883 = vunpack.c.h.b16 %v4164
        %v4884 = vunpack.c.l.b16 %v4165
        %v4885 = vunpack.c.h.b16 %v4165
        %v4886 = vunpack.c.l.b16 %v4166
        %v4887 = vunpack.c.h.b16 %v4166
        %v4888 = vunpack.c.l.b16 %v4167
        %v4889 = vunpack.c.h.b16 %v4167
        %v4890 = vunpack.c.l.b16 %v4168
        %v4891 = vunpack.c.h.b16 %v4168
        %v4892 = vunpack.c.l.b16 %v4169
        %v4893 = vunpack.c.h.b16 %v4169
        %v4894 = vunpack.c.l.b16 %v4170
        %v4895 = vunpack.c.h.b16 %v4170
        %v4896 = vunpack.c.l.b16 %v4171
        %v4897 = vunpack.c.h.b16 %v4171
        %v4898 = vunpack.c.l.b16 %v4172
        %v4899 = vunpack.c.h.b16 %v4172
        %v4900 = vunpack.c.l.b16 %v4173
        %v4901 = vunpack.c.h.b16 %v4173
        %v4902 = vunpack.c.l.b16 %v4174
        %v4903 = vunpack.c.h.b16 %v4174
        %v4904 = vunpack.c.l.b16 %v4175
        %v4905 = vunpack.c.h.b16 %v4175
        %v4906 = vunpack.c.l.b16 %v4176
        %v4907 = vunpack.c.h.b16 %v4176
        %v4908 = vunpack.c.l.b16 %v4177
        %v4909 = vunpack.c.h.b16 %v4177
        %v4910 = vunpack.c.l.b16 %v4178
        %v4911 = vunpack.c.h.b16 %v4178
        %v4912 = vunpack.c.l.b16 %v4179
        %v4913 = vunpack.c.h.b16 %v4179
        %v4914 = vunpack.c.l.b16 %v4180
        %v4915 = vunpack.c.h.b16 %v4180
        %v4916 = vunpack.c.l.b16 %v4181
        %v4917 = vunpack.c.h.b16 %v4181
        %v4918 = vunpack.c.l.b16 %v4182
        %v4919 = vunpack.c.h.b16 %v4182
        %v4920 = vunpack.c.l.b16 %v4183
        %v4921 = vunpack.c.h.b16 %v4183
        %v4922 = vunpack.c.l.b16 %v4184
        %v4923 = vunpack.c.h.b16 %v4184
        %v4924 = vunpack.c.l.b16 %v4185
        %v4925 = vunpack.c.h.b16 %v4185
        %v4926 = vunpack.c.l.b16 %v4186
        %v4927 = vunpack.c.h.b16 %v4186
        %v4928 = vunpack.c.l.b16 %v4187
        %v4929 = vunpack.c.h.b16 %v4187
        %v4930 = vunpack.c.l.b16 %v4188
        %v4931 = vunpack.c.h.b16 %v4188
        %v4932 = vunpack.c.l.b16 %v4189
        %v4933 = vunpack.c.h.b16 %v4189
        %v4934 = vunpack.c.l.b16 %v4190
        %v4935 = vunpack.c.h.b16 %v4190
        %v4936 = vunpack.c.l.b16 %v4191
        %v4937 = vunpack.c.h.b16 %v4191
        %v4938 = vunpack.c.l.b16 %v4192
        %v4939 = vunpack.c.h.b16 %v4192
        %v4940 = vunpack.c.l.b16 %v4193
        %v4941 = vunpack.c.h.b16 %v4193
        %v4942 = vunpack.c.l.b16 %v4194
        %v4943 = vunpack.c.h.b16 %v4194
        %v4944 = vunpack.c.l.b16 %v4195
        %v4945 = vunpack.c.h.b16 %v4195
        %v4946 = vunpack.c.l.b16 %v4196
        %v4947 = vunpack.c.h.b16 %v4196
        %v4948 = vunpack.c.l.b16 %v4197
        %v4949 = vunpack.c.h.b16 %v4197
        %v4950 = vunpack.c.l.b16 %v4198
        %v4951 = vunpack.c.h.b16 %v4198
        %v4952 = vunpack.c.l.b16 %v4199
        %v4953 = vunpack.c.h.b16 %v4199
        %v4954 = vunpack.c.l.b16 %v4200
        %v4955 = vunpack.c.h.b16 %v4200
        %v4956 = vunpack.c.l.b16 %v4201
        %v4957 = vunpack.c.h.b16 %v4201
        %v4958 = vunpack.c.l.b16 %v4202
        %v4959 = vunpack.c.h.b16 %v4202
        %v4960 = vunpack.c.l.b16 %v4203
        %v4961 = vunpack.c.h.b16 %v4203
        %v4962 = vunpack.c.l.b16 %v4204
        %v4963 = vunpack.c.h.b16 %v4204
        %v4964 = vunpack.c.l.b16 %v4205
        %v4965 = vunpack.c.h.b16 %v4205
        %v4966 = vunpack.c.l.b16 %v4206
        %v4967 = vunpack.c.h.b16 %v4206
        %v4968 = vunpack.c.l.b16 %v4207
        %v4969 = vunpack.c.h.b16 %v4207
        %v4970 = vunpack.c.l.b16 %v4208
        %v4971 = vunpack.c.h.b16 %v4208
        %v4972 = vunpack.c.l.b16 %v4209
        %v4973 = vunpack.c.h.b16 %v4209
        %v4974 = vunpack.c.l.b16 %v4210
        %v4975 = vunpack.c.h.b16 %v4210
        %v4976 = vunpack.c.l.b16 %v4211
        %v4977 = vunpack.c.h.b16 %v4211
        %v4978 = vunpack.c.l.b16 %v4212
        %v4979 = vunpack.c.h.b16 %v4212
        %v4980 = vunpack.c.l.b16 %v4213
        %v4981 = vunpack.c.h.b16 %v4213
        %v4982 = vunpack.c.l.b16 %v4214
        %v4983 = vunpack.c.h.b16 %v4214
        %v4984 = vunpack.c.l.b16 %v4215
        %v4985 = vunpack.c.h.b16 %v4215
        %v4986 = vunpack.c.l.b16 %v4216
        %v4987 = vunpack.c.h.b16 %v4216
        %v4988 = vunpack.c.l.b16 %v4217
        %v4989 = vunpack.c.h.b16 %v4217
        %v4990 = vunpack.c.l.b16 %v4218
        %v4991 = vunpack.c.h.b16 %v4218
        %v4992 = vunpack.c.l.b16 %v4219
        %v4993 = vunpack.c.h.b16 %v4219
        %v4994 = vunpack.c.l.b16 %v4220
        %v4995 = vunpack.c.h.b16 %v4220
        %v4996 = vunpack.c.l.b16 %v4221
        %v4997 = vunpack.c.h.b16 %v4221
        %v4998 = vunpack.c.l.b16 %v4222
        %v4999 = vunpack.c.h.b16 %v4222
        %v5000 = vunpack.c.l.b16 %v4223
        %v5001 = vunpack.c.h.b16 %v4223
        %v5002 = vunpack.c.l.b16 %v4224
        %v5003 = vunpack.c.h.b16 %v4224
        %v5004 = vunpack.c.l.b16 %v4225
        %v5005 = vunpack.c.h.b16 %v4225
        %v5006 = vunpack.c.l.b16 %v4226
        %v5007 = vunpack.c.h.b16 %v4226
        %v5008 = vunpack.c.l.b16 %v4227
        %v5009 = vunpack.c.h.b16 %v4227
        %v5010 = vunpack.c.l.b16 %v4228
        %v5011 = vunpack.c.h.b16 %v4228
        %v5012 = vunpack.c.l.b16 %v4229
        %v5013 = vunpack.c.h.b16 %v4229
        %v5014 = vunpack.c.l.b16 %v4230
        %v5015 = vunpack.c.h.b16 %v4230
        %v5016 = vunpack.c.l.b16 %v4231
        %v5017 = vunpack.c.h.b16 %v4231
        %v5018 = vunpack.c.l.b16 %v4232
        %v5019 = vunpack.c.h.b16 %v4232
        %v5020 = vunpack.c.l.b16 %v4233
        %v5021 = vunpack.c.h.b16 %v4233
        %v5022 = vunpack.c.l.b16 %v4234
        %v5023 = vunpack.c.h.b16 %v4234
        %v5024 = vunpack.c.l.b16 %v4235
        %v5025 = vunpack.c.h.b16 %v4235
        %v5026 = vunpack.c.l.b16 %v4236
        %v5027 = vunpack.c.h.b16 %v4236
        %v5028 = vunpack.c.l.b16 %v4237
        %v5029 = vunpack.c.h.b16 %v4237
        %v5030 = vunpack.c.l.b16 %v4238
        %v5031 = vunpack.c.h.b16 %v4238
        %v5032 = vunpack.c.l.b16 %v4239
        %v5033 = vunpack.c.h.b16 %v4239
        %v5034 = vunpack.c.l.b16 %v4240
        %v5035 = vunpack.c.h.b16 %v4240
        %v5036 = vunpack.c.l.b16 %v4241
        %v5037 = vunpack.c.h.b16 %v4241
        %v5038 = vunpack.c.l.b16 %v4242
        %v5039 = vunpack.c.h.b16 %v4242
        %v5040 = vunpack.c.l.b16 %v4243
        %v5041 = vunpack.c.h.b16 %v4243
        %v5042 = vunpack.c.l.b16 %v4244
        %v5043 = vunpack.c.h.b16 %v4244
        %v5044 = vunpack.c.l.b16 %v4245
        %v5045 = vunpack.c.h.b16 %v4245
        %v5046 = vunpack.c.l.b16 %v4246
        %v5047 = vunpack.c.h.b16 %v4246
        %v5048 = vunpack.c.l.b16 %v4247
        %v5049 = vunpack.c.h.b16 %v4247
        %v5050 = vunpack.c.l.b16 %v4248
        %v5051 = vunpack.c.h.b16 %v4248
        %v5052 = vunpack.c.l.b16 %v4249
        %v5053 = vunpack.c.h.b16 %v4249
        %v5054 = vunpack.c.l.b16 %v4250
        %v5055 = vunpack.c.h.b16 %v4250
        %v5056 = vunpack.c.l.b16 %v4251
        %v5057 = vunpack.c.h.b16 %v4251
        %v5058 = vunpack.c.l.b16 %v4252
        %v5059 = vunpack.c.h.b16 %v4252
        %v5060 = vunpack.c.l.b16 %v4253
        %v5061 = vunpack.c.h.b16 %v4253
        %v5062 = vunpack.c.l.b16 %v4254
        %v5063 = vunpack.c.h.b16 %v4254
        %v5064 = vunpack.c.l.b16 %v4255
        %v5065 = vunpack.c.h.b16 %v4255
        %v5066 = vunpack.c.l.b16 %v4256
        %v5067 = vunpack.c.h.b16 %v4256
        %v5068 = vunpack.c.l.b16 %v4257
        %v5069 = vunpack.c.h.b16 %v4257
        %v5070 = vunpack.c.l.b16 %v4258
        %v5071 = vunpack.c.h.b16 %v4258
        %v5072 = vunpack.c.l.b16 %v4259
        %v5073 = vunpack.c.h.b16 %v4259
        %v5074 = vunpack.c.l.b16 %v4260
        %v5075 = vunpack.c.h.b16 %v4260
        %v5076 = vunpack.c.l.b16 %v4261
        %v5077 = vunpack.c.h.b16 %v4261
        %v5078 = vunpack.c.l.b16 %v4262
        %v5079 = vunpack.c.h.b16 %v4262
        %v5080 = vunpack.c.l.b16 %v4263
        %v5081 = vunpack.c.h.b16 %v4263
        %v5082 = vunpack.c.l.b16 %v4264
        %v5083 = vunpack.c.h.b16 %v4264
        %v5084 = vunpack.c.l.b16 %v4265
        %v5085 = vunpack.c.h.b16 %v4265
        %v5086 = vunpack.c.l.b16 %v4266
        %v5087 = vunpack.c.h.b16 %v4266
        %v5088 = vunpack.c.l.b16 %v4267
        %v5089 = vunpack.c.h.b16 %v4267
        %v5090 = vunpack.c.l.b16 %v4268
        %v5091 = vunpack.c.h.b16 %v4268
        %v5092 = vunpack.c.l.b16 %v4269
        %v5093 = vunpack.c.h.b16 %v4269
        %v5094 = vunpack.c.l.b16 %v4270
        %v5095 = vunpack.c.h.b16 %v4270
        %v5096 = vunpack.c.l.b16 %v4271
        %v5097 = vunpack.c.h.b16 %v4271
        %v5098 = vunpack.c.l.b16 %v4272
        %v5099 = vunpack.c.h.b16 %v4272
        %v5100 = vunpack.c.l.b16 %v4273
        %v5101 = vunpack.c.h.b16 %v4273
        %v5102 = vunpack.c.l.b16 %v4274
        %v5103 = vunpack.c.h.b16 %v4274
        %v5104 = vunpack.c.l.b16 %v4275
        %v5105 = vunpack.c.h.b16 %v4275
        %v5106 = vunpack.c.l.b16 %v4276
        %v5107 = vunpack.c.h.b16 %v4276
        %v5108 = vunpack.c.l.b16 %v4277
        %v5109 = vunpack.c.h.b16 %v4277
        %v5110 = vunpack.c.l.b16 %v4278
        %v5111 = vunpack.c.h.b16 %v4278
        %v5112 = vunpack.c.l.b16 %v4279
        %v5113 = vunpack.c.h.b16 %v4279
        %v5114 = vunpack.c.l.b16 %v4280
        %v5115 = vunpack.c.h.b16 %v4280
        %v5116 = vunpack.c.l.b16 %v4281
        %v5117 = vunpack.c.h.b16 %v4281
        %v5118 = vunpack.c.l.b16 %v4282
        %v5119 = vunpack.c.h.b16 %v4282
        %v5120 = vunpack.c.l.b16 %v4283
        %v5121 = vunpack.c.h.b16 %v4283
        %v5122 = vunpack.c.l.b16 %v4284
        %v5123 = vunpack.c.h.b16 %v4284
        %v5124 = vunpack.c.l.b16 %v4285
        %v5125 = vunpack.c.h.b16 %v4285
        %v5126 = vunpack.c.l.b16 %v4286
        %v5127 = vunpack.c.h.b16 %v4286
        %v5128 = vunpack.c.l.b16 %v4287
        %v5129 = vunpack.c.h.b16 %v4287
        %v5130 = vunpack.c.l.b16 %v4288
        %v5131 = vunpack.c.h.b16 %v4288
        %v5132 = vunpack.c.l.b16 %v4289
        %v5133 = vunpack.c.h.b16 %v4289
        %v5134 = vunpack.c.l.b16 %v4290
        %v5135 = vunpack.c.h.b16 %v4290
        %v5136 = vunpack.c.l.b16 %v4291
        %v5137 = vunpack.c.h.b16 %v4291
        %v5138 = vunpack.c.l.b16 %v4292
        %v5139 = vunpack.c.h.b16 %v4292
        %v5140 = vunpack.c.l.b16 %v4293
        %v5141 = vunpack.c.h.b16 %v4293
        %v5142 = vunpack.c.l.b16 %v4294
        %v5143 = vunpack.c.h.b16 %v4294
        %v5144 = vunpack.c.l.b16 %v4295
        %v5145 = vunpack.c.h.b16 %v4295
        %v5146 = vunpack.c.l.b16 %v4296
        %v5147 = vunpack.c.h.b16 %v4296
        %v5148 = vunpack.c.l.b16 %v4297
        %v5149 = vunpack.c.h.b16 %v4297
        %v5150 = vunpack.c.l.b16 %v4298
        %v5151 = vunpack.c.h.b16 %v4298
        %v5152 = vunpack.c.l.b16 %v4299
        %v5153 = vunpack.c.h.b16 %v4299
        %v5154 = vunpack.c.l.b16 %v4300
        %v5155 = vunpack.c.h.b16 %v4300
        %v5156 = vunpack.c.l.b16 %v4301
        %v5157 = vunpack.c.h.b16 %v4301
        %v5158 = vunpack.c.l.b16 %v4302
        %v5159 = vunpack.c.h.b16 %v4302
        %v5160 = vunpack.c.l.b16 %v4303
        %v5161 = vunpack.c.h.b16 %v4303
        %v5162 = vunpack.c.l.b16 %v4304
        %v5163 = vunpack.c.h.b16 %v4304
        %v5164 = vunpack.c.l.b16 %v4305
        %v5165 = vunpack.c.h.b16 %v4305
        %v5166 = vunpack.c.l.b16 %v4306
        %v5167 = vunpack.c.h.b16 %v4306
        %v5168 = vunpack.c.l.b16 %v4307
        %v5169 = vunpack.c.h.b16 %v4307
        %v5170 = vunpack.c.l.b16 %v4308
        %v5171 = vunpack.c.h.b16 %v4308
        %v5172 = vunpack.c.l.b16 %v4309
        %v5173 = vunpack.c.h.b16 %v4309
        %v5174 = vunpack.c.l.b16 %v4310
        %v5175 = vunpack.c.h.b16 %v4310
        %v5176 = vunpack.c.l.b16 %v4311
        %v5177 = vunpack.c.h.b16 %v4311
        %v5178 = vunpack.c.l.b16 %v4312
        %v5179 = vunpack.c.h.b16 %v4312
        %v5180 = vunpack.c.l.b16 %v4313
        %v5181 = vunpack.c.h.b16 %v4313
        %v5182 = vunpack.c.l.b16 %v4314
        %v5183 = vunpack.c.h.b16 %v4314
        %v5184 = vunpack.c.l.b16 %v4315
        %v5185 = vunpack.c.h.b16 %v4315
        %v5186 = vunpack.c.l.b16 %v4316
        %v5187 = vunpack.c.h.b16 %v4316
        %v5188 = vunpack.c.l.b16 %v4317
        %v5189 = vunpack.c.h.b16 %v4317
        %v5190 = vunpack.c.l.b16 %v4318
        %v5191 = vunpack.c.h.b16 %v4318
        %v5192 = vunpack.c.l.b16 %v4319
        %v5193 = vunpack.c.h.b16 %v4319
        %v5194 = vunpack.c.l.b16 %v4320
        %v5195 = vunpack.c.h.b16 %v4320
        %v5196 = vunpack.c.l.b16 %v4321
        %v5197 = vunpack.c.h.b16 %v4321
        %v5198 = vunpack.c.l.b16 %v4322
        %v5199 = vunpack.c.h.b16 %v4322
        %v5200 = vunpack.c.l.b16 %v4323
        %v5201 = vunpack.c.h.b16 %v4323
        %v5202 = vunpack.c.l.b16 %v4324
        %v5203 = vunpack.c.h.b16 %v4324
        %v5204 = vunpack.c.l.b16 %v4325
        %v5205 = vunpack.c.h.b16 %v4325
        %v5206 = vunpack.c.l.b16 %v4326
        %v5207 = vunpack.c.h.b16 %v4326
        %v5208 = vunpack.c.l.b16 %v4327
        %v5209 = vunpack.c.h.b16 %v4327
        %v5210 = vunpack.c.l.b16 %v4328
        %v5211 = vunpack.c.h.b16 %v4328
        %v5212 = vunpack.c.l.b16 %v4329
        %v5213 = vunpack.c.h.b16 %v4329
        %v5214 = vunpack.c.l.b16 %v4330
        %v5215 = vunpack.c.h.b16 %v4330
        %v5216 = vunpack.c.l.b16 %v4331
        %v5217 = vunpack.c.h.b16 %v4331
        %v5218 = vunpack.c.l.b16 %v4332
        %v5219 = vunpack.c.h.b16 %v4332
        %v5220 = vunpack.c.l.b16 %v4333
        %v5221 = vunpack.c.h.b16 %v4333
        %v5222 = vunpack.c.l.b16 %v4334
        %v5223 = vunpack.c.h.b16 %v4334
        %v5224 = vunpack.c.l.b16 %v4335
        %v5225 = vunpack.c.h.b16 %v4335
        %v5226 = vunpack.c.l.b16 %v4336
        %v5227 = vunpack.c.h.b16 %v4336
        %v5228 = vunpack.c.l.b16 %v4337
        %v5229 = vunpack.c.h.b16 %v4337
        %v5230 = vunpack.c.l.b16 %v4338
        %v5231 = vunpack.c.h.b16 %v4338
        %v5232 = vunpack.c.l.b16 %v4339
        %v5233 = vunpack.c.h.b16 %v4339
        %v5234 = vunpack.c.l.b16 %v4340
        %v5235 = vunpack.c.h.b16 %v4340
        %v5236 = vunpack.c.l.b16 %v4341
        %v5237 = vunpack.c.h.b16 %v4341
        %v5238 = vunpack.c.l.b16 %v4342
        %v5239 = vunpack.c.h.b16 %v4342
        %v5240 = vunpack.c.l.b16 %v4343
        %v5241 = vunpack.c.h.b16 %v4343
        %v5242 = vunpack.c.l.b16 %v4344
        %v5243 = vunpack.c.h.b16 %v4344
        %v5244 = vunpack.c.l.b16 %v4345
        %v5245 = vunpack.c.h.b16 %v4345
        %v5246 = vunpack.c.l.b16 %v4346
        %v5247 = vunpack.c.h.b16 %v4346
        %v5248 = vunpack.c.l.b16 %v4347
        %v5249 = vunpack.c.h.b16 %v4347
        %v5250 = vunpack.c.l.b16 %v4348
        %v5251 = vunpack.c.h.b16 %v4348
        %v5252 = vunpack.c.l.b16 %v4349
        %v5253 = vunpack.c.h.b16 %v4349
        %v5254 = vunpack.c.l.b16 %v4350
        %v5255 = vunpack.c.h.b16 %v4350
        %v5256 = vunpack.c.l.b16 %v4351
        %v5257 = vunpack.c.h.b16 %v4351
        %v5258 = vunpack.c.l.b16 %v4352
        %v5259 = vunpack.c.h.b16 %v4352
        %v5260 = vunpack.c.l.b16 %v4353
        %v5261 = vunpack.c.h.b16 %v4353
        %v5262 = vunpack.c.l.b16 %v4354
        %v5263 = vunpack.c.h.b16 %v4354
        %v5264 = vunpack.c.l.b16 %v4355
        %v5265 = vunpack.c.h.b16 %v4355
        %v5266 = vunpack.c.l.b16 %v4356
        %v5267 = vunpack.c.h.b16 %v4356
        %v5268 = vunpack.c.l.b16 %v4357
        %v5269 = vunpack.c.h.b16 %v4357
        %v5270 = vunpack.c.l.b16 %v4358
        %v5271 = vunpack.c.h.b16 %v4358
        %v5272 = vunpack.c.l.b16 %v4359
        %v5273 = vunpack.c.h.b16 %v4359
        %v5274 = vunpack.c.l.b16 %v4360
        %v5275 = vunpack.c.h.b16 %v4360
        %v5276 = vunpack.c.l.b16 %v4361
        %v5277 = vunpack.c.h.b16 %v4361
        %v5278 = vunpack.c.l.b16 %v4362
        %v5279 = vunpack.c.h.b16 %v4362
        %v5280 = vunpack.c.l.b16 %v4363
        %v5281 = vunpack.c.h.b16 %v4363
        %v5282 = vunpack.c.l.b16 %v4364
        %v5283 = vunpack.c.h.b16 %v4364
        %v5284 = vunpack.c.l.b16 %v4365
        %v5285 = vunpack.c.h.b16 %v4365
        %v5286 = vunpack.c.l.b16 %v4366
        %v5287 = vunpack.c.h.b16 %v4366
        %v5288 = vunpack.c.l.b16 %v4367
        %v5289 = vunpack.c.h.b16 %v4367
        %v5290 = vunpack.c.l.b16 %v4368
        %v5291 = vunpack.c.h.b16 %v4368
        %v5292 = vunpack.c.l.b16 %v4369
        %v5293 = vunpack.c.h.b16 %v4369
        %v5294 = vunpack.c.l.b16 %v4370
        %v5295 = vunpack.c.h.b16 %v4370
        %v5296 = vunpack.c.l.b16 %v4371
        %v5297 = vunpack.c.h.b16 %v4371
        %v5298 = vunpack.c.l.b16 %v4372
        %v5299 = vunpack.c.h.b16 %v4372
        %v5300 = vunpack.c.l.b16 %v4373
        %v5301 = vunpack.c.h.b16 %v4373
        %v5302 = vunpack.c.l.b16 %v4374
        %v5303 = vunpack.c.h.b16 %v4374
        %v5304 = vunpack.c.l.b16 %v4375
        %v5305 = vunpack.c.h.b16 %v4375
        %v5306 = vpack.c.b16 %v4742, %v4730
        %v5307 = vpack.c.b16 %v4743, %v4731
        %v5308 = vpack.c.b16 %v4744, %v4732
        %v5309 = vpack.c.b16 %v4745, %v4733
        %v5310 = vpack.c.b16 %v4746, %v4734
        %v5311 = vpack.c.b16 %v4747, %v4735
        %v5312 = vpack.c.b16 %v4748, %v4736
        %v5313 = vpack.c.b16 %v4749, %v4737
        %v5314 = vpack.c.b16 %v4750, %v4738
        %v5315 = vpack.c.b16 %v4751, %v4739
        %v5316 = vpack.c.b16 %v4752, %v4740
        %v5317 = vpack.c.b16 %v4753, %v4741
        %v5318 = vpack.c.b16 %v4766, %v4754
        %v5319 = vpack.c.b16 %v4767, %v4755
        %v5320 = vpack.c.b16 %v4768, %v4756
        %v5321 = vpack.c.b16 %v4769, %v4757
        %v5322 = vpack.c.b16 %v4770, %v4758
        %v5323 = vpack.c.b16 %v4771, %v4759
        %v5324 = vpack.c.b16 %v4772, %v4760
        %v5325 = vpack.c.b16 %v4773, %v4761
        %v5326 = vpack.c.b16 %v4774, %v4762
        %v5327 = vpack.c.b16 %v4775, %v4763
        %v5328 = vpack.c.b16 %v4776, %v4764
        %v5329 = vpack.c.b16 %v4777, %v4765
        %v5330 = vpack.c.b16 %v4790, %v4778
        %v5331 = vpack.c.b16 %v4791, %v4779
        %v5332 = vpack.c.b16 %v4792, %v4780
        %v5333 = vpack.c.b16 %v4793, %v4781
        %v5334 = vpack.c.b16 %v4794, %v4782
        %v5335 = vpack.c.b16 %v4795, %v4783
        %v5336 = vpack.c.b16 %v4796, %v4784
        %v5337 = vpack.c.b16 %v4797, %v4785
        %v5338 = vpack.c.b16 %v4798, %v4786
        %v5339 = vpack.c.b16 %v4799, %v4787
        %v5340 = vpack.c.b16 %v4800, %v4788
        %v5341 = vpack.c.b16 %v4801, %v4789
        %v5342 = vpack.c.b16 %v4814, %v4802
        %v5343 = vpack.c.b16 %v4815, %v4803
        %v5344 = vpack.c.b16 %v4816, %v4804
        %v5345 = vpack.c.b16 %v4817, %v4805
        %v5346 = vpack.c.b16 %v4818, %v4806
        %v5347 = vpack.c.b16 %v4819, %v4807
        %v5348 = vpack.c.b16 %v4820, %v4808
        %v5349 = vpack.c.b16 %v4821, %v4809
        %v5350 = vpack.c.b16 %v4822, %v4810
        %v5351 = vpack.c.b16 %v4823, %v4811
        %v5352 = vpack.c.b16 %v4824, %v4812
        %v5353 = vpack.c.b16 %v4825, %v4813
        %v5354 = vpack.c.b16 %v4838, %v4826
        %v5355 = vpack.c.b16 %v4839, %v4827
        %v5356 = vpack.c.b16 %v4840, %v4828
        %v5357 = vpack.c.b16 %v4841, %v4829
        %v5358 = vpack.c.b16 %v4842, %v4830
        %v5359 = vpack.c.b16 %v4843, %v4831
        %v5360 = vpack.c.b16 %v4844, %v4832
        %v5361 = vpack.c.b16 %v4845, %v4833
        %v5362 = vpack.c.b16 %v4846, %v4834
        %v5363 = vpack.c.b16 %v4847, %v4835
        %v5364 = vpack.c.b16 %v4848, %v4836
        %v5365 = vpack.c.b16 %v4849, %v4837
        %v5366 = vpack.c.b16 %v4862, %v4850
        %v5367 = vpack.c.b16 %v4863, %v4851
        %v5368 = vpack.c.b16 %v4864, %v4852
        %v5369 = vpack.c.b16 %v4865, %v4853
        %v5370 = vpack.c.b16 %v4866, %v4854
        %v5371 = vpack.c.b16 %v4867, %v4855
        %v5372 = vpack.c.b16 %v4868, %v4856
        %v5373 = vpack.c.b16 %v4869, %v4857
        %v5374 = vpack.c.b16 %v4870, %v4858
        %v5375 = vpack.c.b16 %v4871, %v4859
        %v5376 = vpack.c.b16 %v4872, %v4860
        %v5377 = vpack.c.b16 %v4873, %v4861
        %v5378 = vpack.c.b16 %v4886, %v4874
        %v5379 = vpack.c.b16 %v4887, %v4875
        %v5380 = vpack.c.b16 %v4888, %v4876
        %v5381 = vpack.c.b16 %v4889, %v4877
        %v5382 = vpack.c.b16 %v4890, %v4878
        %v5383 = vpack.c.b16 %v4891, %v4879
        %v5384 = vpack.c.b16 %v4892, %v4880
        %v5385 = vpack.c.b16 %v4893, %v4881
        %v5386 = vpack.c.b16 %v4894, %v4882
        %v5387 = vpack.c.b16 %v4895, %v4883
        %v5388 = vpack.c.b16 %v4896, %v4884
        %v5389 = vpack.c.b16 %v4897, %v4885
        %v5390 = vpack.c.b16 %v4910, %v4898
        %v5391 = vpack.c.b16 %v4911, %v4899
        %v5392 = vpack.c.b16 %v4912, %v4900
        %v5393 = vpack.c.b16 %v4913, %v4901
        %v5394 = vpack.c.b16 %v4914, %v4902
        %v5395 = vpack.c.b16 %v4915, %v4903
        %v5396 = vpack.c.b16 %v4916, %v4904
        %v5397 = vpack.c.b16 %v4917, %v4905
        %v5398 = vpack.c.b16 %v4918, %v4906
        %v5399 = vpack.c.b16 %v4919, %v4907
        %v5400 = vpack.c.b16 %v4920, %v4908
        %v5401 = vpack.c.b16 %v4921, %v4909
        %v5402 = vpack.c.b16 %v4934, %v4922
        %v5403 = vpack.c.b16 %v4935, %v4923
        %v5404 = vpack.c.b16 %v4936, %v4924
        %v5405 = vpack.c.b16 %v4937, %v4925
        %v5406 = vpack.c.b16 %v4938, %v4926
        %v5407 = vpack.c.b16 %v4939, %v4927
        %v5408 = vpack.c.b16 %v4940, %v4928
        %v5409 = vpack.c.b16 %v4941, %v4929
        %v5410 = vpack.c.b16 %v4942, %v4930
        %v5411 = vpack.c.b16 %v4943, %v4931
        %v5412 = vpack.c.b16 %v4944, %v4932
        %v5413 = vpack.c.b16 %v4945, %v4933
        %v5414 = vpack.c.b16 %v4958, %v4946
        %v5415 = vpack.c.b16 %v4959, %v4947
        %v5416 = vpack.c.b16 %v4960, %v4948
        %v5417 = vpack.c.b16 %v4961, %v4949
        %v5418 = vpack.c.b16 %v4962, %v4950
        %v5419 = vpack.c.b16 %v4963, %v4951
        %v5420 = vpack.c.b16 %v4964, %v4952
        %v5421 = vpack.c.b16 %v4965, %v4953
        %v5422 = vpack.c.b16 %v4966, %v4954
        %v5423 = vpack.c.b16 %v4967, %v4955
        %v5424 = vpack.c.b16 %v4968, %v4956
        %v5425 = vpack.c.b16 %v4969, %v4957
        %v5426 = vpack.c.b16 %v4982, %v4970
        %v5427 = vpack.c.b16 %v4983, %v4971
        %v5428 = vpack.c.b16 %v4984, %v4972
        %v5429 = vpack.c.b16 %v4985, %v4973
        %v5430 = vpack.c.b16 %v4986, %v4974
        %v5431 = vpack.c.b16 %v4987, %v4975
        %v5432 = vpack.c.b16 %v4988, %v4976
        %v5433 = vpack.c.b16 %v4989, %v4977
        %v5434 = vpack.c.b16 %v4990, %v4978
        %v5435 = vpack.c.b16 %v4991, %v4979
        %v5436 = vpack.c.b16 %v4992, %v4980
        %v5437 = vpack.c.b16 %v4993, %v4981
        %v5438 = vpack.c.b16 %v5006, %v4994
        %v5439 = vpack.c.b16 %v5007, %v4995
        %v5440 = vpack.c.b16 %v5008, %v4996
        %v5441 = vpack.c.b16 %v5009, %v4997
        %v5442 = vpack.c.b16 %v5010, %v4998
        %v5443 = vpack.c.b16 %v5011, %v4999
        %v5444 = vpack.c.b16 %v5012, %v5000
        %v5445 = vpack.c.b16 %v5013, %v5001
        %v5446 = vpack.c.b16 %v5014, %v5002
        %v5447 = vpack.c.b16 %v5015, %v5003
        %v5448 = vpack.c.b16 %v5016, %v5004
        %v5449 = vpack.c.b16 %v5017, %v5005
        %v5450 = vpack.c.b16 %v5030, %v5018
        %v5451 = vpack.c.b16 %v5031, %v5019
        %v5452 = vpack.c.b16 %v5032, %v5020
        %v5453 = vpack.c.b16 %v5033, %v5021
        %v5454 = vpack.c.b16 %v5034, %v5022
        %v5455 = vpack.c.b16 %v5035, %v5023
        %v5456 = vpack.c.b16 %v5036, %v5024
        %v5457 = vpack.c.b16 %v5037, %v5025
        %v5458 = vpack.c.b16 %v5038, %v5026
        %v5459 = vpack.c.b16 %v5039, %v5027
        %v5460 = vpack.c.b16 %v5040, %v5028
        %v5461 = vpack.c.b16 %v5041, %v5029
        %v5462 = vpack.c.b16 %v5054, %v5042
        %v5463 = vpack.c.b16 %v5055, %v5043
        %v5464 = vpack.c.b16 %v5056, %v5044
        %v5465 = vpack.c.b16 %v5057, %v5045
        %v5466 = vpack.c.b16 %v5058, %v5046
        %v5467 = vpack.c.b16 %v5059, %v5047
        %v5468 = vpack.c.b16 %v5060, %v5048
        %v5469 = vpack.c.b16 %v5061, %v5049
        %v5470 = vpack.c.b16 %v5062, %v5050
        %v5471 = vpack.c.b16 %v5063, %v5051
        %v5472 = vpack.c.b16 %v5064, %v5052
        %v5473 = vpack.c.b16 %v5065, %v5053
        %v5474 = vpack.c.b16 %v5078, %v5066
        %v5475 = vpack.c.b16 %v5079, %v5067
        %v5476 = vpack.c.b16 %v5080, %v5068
        %v5477 = vpack.c.b16 %v5081, %v5069
        %v5478 = vpack.c.b16 %v5082, %v5070
        %v5479 = vpack.c.b16 %v5083, %v5071
        %v5480 = vpack.c.b16 %v5084, %v5072
        %v5481 = vpack.c.b16 %v5085, %v5073
        %v5482 = vpack.c.b16 %v5086, %v5074
        %v5483 = vpack.c.b16 %v5087, %v5075
        %v5484 = vpack.c.b16 %v5088, %v5076
        %v5485 = vpack.c.b16 %v5089, %v5077
        %v5486 = vpack.c.b16 %v5102, %v5090
        %v5487 = vpack.c.b16 %v5103, %v5091
        %v5488 = vpack.c.b16 %v5104, %v5092
        %v5489 = vpack.c.b16 %v5105, %v5093
        %v5490 = vpack.c.b16 %v5106, %v5094
        %v5491 = vpack.c.b16 %v5107, %v5095
        %v5492 = vpack.c.b16 %v5108, %v5096
        %v5493 = vpack.c.b16 %v5109, %v5097
        %v5494 = vpack.c.b16 %v5110, %v5098
        %v5495 = vpack.c.b16 %v5111, %v5099
        %v5496 = vpack.c.b16 %v5112, %v5100
        %v5497 = vpack.c.b16 %v5113, %v5101
        %v5498 = vpack.c.b16 %v5126, %v5114
        %v5499 = vpack.c.b16 %v5127, %v5115
        %v5500 = vpack.c.b16 %v5128, %v5116
        %v5501 = vpack.c.b16 %v5129, %v5117
        %v5502 = vpack.c.b16 %v5130, %v5118
        %v5503 = vpack.c.b16 %v5131, %v5119
        %v5504 = vpack.c.b16 %v5132, %v5120
        %v5505 = vpack.c.b16 %v5133, %v5121
        %v5506 = vpack.c.b16 %v5134, %v5122
        %v5507 = vpack.c.b16 %v5135, %v5123
        %v5508 = vpack.c.b16 %v5136, %v5124
        %v5509 = vpack.c.b16 %v5137, %v5125
        %v5510 = vpack.c.b16 %v5150, %v5138
        %v5511 = vpack.c.b16 %v5151, %v5139
        %v5512 = vpack.c.b16 %v5152, %v5140
        %v5513 = vpack.c.b16 %v5153, %v5141
        %v5514 = vpack.c.b16 %v5154, %v5142
        %v5515 = vpack.c.b16 %v5155, %v5143
        %v5516 = vpack.c.b16 %v5156, %v5144
        %v5517 = vpack.c.b16 %v5157, %v5145
        %v5518 = vpack.c.b16 %v5158, %v5146
        %v5519 = vpack.c.b16 %v5159, %v5147
        %v5520 = vpack.c.b16 %v5160, %v5148
        %v5521 = vpack.c.b16 %v5161, %v5149
        %v5522 = vpack.c.b16 %v5174, %v5162
        %v5523 = vpack.c.b16 %v5175, %v5163
        %v5524 = vpack.c.b16 %v5176, %v5164
        %v5525 = vpack.c.b16 %v5177, %v5165
        %v5526 = vpack.c.b16 %v5178, %v5166
        %v5527 = vpack.c.b16 %v5179, %v5167
        %v5528 = vpack.c.b16 %v5180, %v5168
        %v5529 = vpack.c.b16 %v5181, %v5169
        %v5530 = vpack.c.b16 %v5182, %v5170
        %v5531 = vpack.c.b16 %v5183, %v5171
        %v5532 = vpack.c.b16 %v5184, %v5172
        %v5533 = vpack.c.b16 %v5185, %v5173
        %v5534 = vpack.c.b16 %v5198, %v5186
        %v5535 = vpack.c.b16 %v5199, %v5187
        %v5536 = vpack.c.b16 %v5200, %v5188
        %v5537 = vpack.c.b16 %v5201, %v5189
        %v5538 = vpack.c.b16 %v5202, %v5190
        %v5539 = vpack.c.b16 %v5203, %v5191
        %v5540 = vpack.c.b16 %v5204, %v5192
        %v5541 = vpack.c.b16 %v5205, %v5193
        %v5542 = vpack.c.b16 %v5206, %v5194
        %v5543 = vpack.c.b16 %v5207, %v5195
        %v5544 = vpack.c.b16 %v5208, %v5196
        %v5545 = vpack.c.b16 %v5209, %v5197
        %v5546 = vpack.c.b16 %v5222, %v5210
        %v5547 = vpack.c.b16 %v5223, %v5211
        %v5548 = vpack.c.b16 %v5224, %v5212
        %v5549 = vpack.c.b16 %v5225, %v5213
        %v5550 = vpack.c.b16 %v5226, %v5214
        %v5551 = vpack.c.b16 %v5227, %v5215
        %v5552 = vpack.c.b16 %v5228, %v5216
        %v5553 = vpack.c.b16 %v5229, %v5217
        %v5554 = vpack.c.b16 %v5230, %v5218
        %v5555 = vpack.c.b16 %v5231, %v5219
        %v5556 = vpack.c.b16 %v5232, %v5220
        %v5557 = vpack.c.b16 %v5233, %v5221
        %v5558 = vpack.c.b16 %v5246, %v5234
        %v5559 = vpack.c.b16 %v5247, %v5235
        %v5560 = vpack.c.b16 %v5248, %v5236
        %v5561 = vpack.c.b16 %v5249, %v5237
        %v5562 = vpack.c.b16 %v5250, %v5238
        %v5563 = vpack.c.b16 %v5251, %v5239
        %v5564 = vpack.c.b16 %v5252, %v5240
        %v5565 = vpack.c.b16 %v5253, %v5241
        %v5566 = vpack.c.b16 %v5254, %v5242
        %v5567 = vpack.c.b16 %v5255, %v5243
        %v5568 = vpack.c.b16 %v5256, %v5244
        %v5569 = vpack.c.b16 %v5257, %v5245
        %v5570 = vpack.c.b16 %v5270, %v5258
        %v5571 = vpack.c.b16 %v5271, %v5259
        %v5572 = vpack.c.b16 %v5272, %v5260
        %v5573 = vpack.c.b16 %v5273, %v5261
        %v5574 = vpack.c.b16 %v5274, %v5262
        %v5575 = vpack.c.b16 %v5275, %v5263
        %v5576 = vpack.c.b16 %v5276, %v5264
        %v5577 = vpack.c.b16 %v5277, %v5265
        %v5578 = vpack.c.b16 %v5278, %v5266
        %v5579 = vpack.c.b16 %v5279, %v5267
        %v5580 = vpack.c.b16 %v5280, %v5268
        %v5581 = vpack.c.b16 %v5281, %v5269
        %v5582 = vpack.c.b16 %v5294, %v5282
        %v5583 = vpack.c.b16 %v5295, %v5283
        %v5584 = vpack.c.b16 %v5296, %v5284
        %v5585 = vpack.c.b16 %v5297, %v5285
        %v5586 = vpack.c.b16 %v5298, %v5286
        %v5587 = vpack.c.b16 %v5299, %v5287
        %v5588 = vpack.c.b16 %v5300, %v5288
        %v5589 = vpack.c.b16 %v5301, %v5289
        %v5590 = vpack.c.b16 %v5302, %v5290
        %v5591 = vpack.c.b16 %v5303, %v5291
        %v5592 = vpack.c.b16 %v5304, %v5292
        %v5593 = vpack.c.b16 %v5305, %v5293
        %5882 = vmatprep.subr.bf16.mxu0 %v5307
        %5883 = vmatpush1.bf16.msra.mxu0 %v5306
        %5884 = vmatprep.subr.bf16.mxu0 %v5319
        %5885 = vmatpush1.bf16.msra.mxu0 %v5318
        %5886 = vmatprep.subr.bf16.mxu0 %v5331
        %5887 = vmatpush1.bf16.msra.mxu0 %v5330
        %5888 = vmatprep.subr.bf16.mxu0 %v5343
        %5889 = vmatpush1.bf16.msra.mxu0 %v5342
        %5890 = vmatprep.subr.bf16.mxu0 %v5355
        %5891 = vmatpush1.bf16.msra.mxu0 %v5354
        %5892 = vmatprep.subr.bf16.mxu0 %v5367
        %5893 = vmatpush1.bf16.msra.mxu0 %v5366
        %5894 = vmatprep.subr.bf16.mxu0 %v5379
        %5895 = vmatpush1.bf16.msra.mxu0 %v5378
        %5896 = vmatprep.subr.bf16.mxu0 %v5391
        %5897 = vmatpush1.bf16.msra.mxu0 %v5390
        %5898 = vmatprep.subr.bf16.mxu0 %v5403
        %5899 = vmatpush1.bf16.msra.mxu0 %v5402
        %5900 = vmatprep.subr.bf16.mxu0 %v5415
        %5901 = vmatpush1.bf16.msra.mxu0 %v5414
        %5902 = vmatprep.subr.bf16.mxu0 %v5427
        %5903 = vmatpush1.bf16.msra.mxu0 %v5426
        %5904 = vmatprep.subr.bf16.mxu0 %v5439
        %5905 = vmatpush1.bf16.msra.mxu0 %v5438
        %5906 = vmatprep.subr.bf16.mxu0 %v5451
        %5907 = vmatpush1.bf16.msra.mxu0 %v5450
        %5908 = vmatprep.subr.bf16.mxu0 %v5463
        %5909 = vmatpush1.bf16.msra.mxu0 %v5462
        %5910 = vmatprep.subr.bf16.mxu0 %v5475
        %5911 = vmatpush1.bf16.msra.mxu0 %v5474
        %5912 = vmatprep.subr.bf16.mxu0 %v5487
        %5913 = vmatpush1.bf16.msra.mxu0 %v5486
        %5914 = vmatprep.mubr.bf16.mxu0 %v4083
        %5915 = vmatmul.mubr.bf16.gmra.mrb[0].mxu0 %v4082
        %v5916 = vpop.f32.mrb[0].mxu0
        %v5917 = vadd.f32 %v4385, %v5916
        %v5918 = vpop.f32.mrb[0].mxu0
        %v5919 = vadd.f32 %v4389, %v5918
        %v5920 = vpop.f32.mrb[0].mxu0
        %v5921 = vpop.f32.mrb[0].mxu0
        %5922 = vdwg.mxu0
        %5923 = vmatprep.subr.bf16.mxu0 %v5499
        %5924 = vmatpush1.bf16.msra.mxu0 %v5498
        %5925 = vmatprep.subr.bf16.mxu0 %v5511
        %5926 = vmatpush1.bf16.msra.mxu0 %v5510
        %5927 = vmatprep.subr.bf16.mxu0 %v5523
        %5928 = vmatpush1.bf16.msra.mxu0 %v5522
        %5929 = vmatprep.subr.bf16.mxu0 %v5535
        %5930 = vmatpush1.bf16.msra.mxu0 %v5534
        %5931 = vmatprep.subr.bf16.mxu0 %v5547
        %5932 = vmatpush1.bf16.msra.mxu0 %v5546
        %5933 = vmatprep.subr.bf16.mxu0 %v5559
        %5934 = vmatpush1.bf16.msra.mxu0 %v5558
        %5935 = vmatprep.subr.bf16.mxu0 %v5571
        %5936 = vmatpush1.bf16.msra.mxu0 %v5570
        %5937 = vmatprep.subr.bf16.mxu0 %v5583
        %5938 = vmatpush1.bf16.msra.mxu0 %v5582
        %5939 = vmatprep.subr.bf16.mxu0 0
        %5940 = vmatpush1.bf16.msra.mxu0 0
        %5941 = vmatprep.subr.bf16.mxu0 0
        %5942 = vmatpush1.bf16.msra.mxu0 0
        %5943 = vmatprep.subr.bf16.mxu0 0
        %5944 = vmatpush1.bf16.msra.mxu0 0
        %5945 = vmatprep.subr.bf16.mxu0 0
        %5946 = vmatpush1.bf16.msra.mxu0 0
        %5947 = vmatprep.subr.bf16.mxu0 0
        %5948 = vmatpush1.bf16.msra.mxu0 0
        %5949 = vmatprep.subr.bf16.mxu0 0
        %5950 = vmatpush1.bf16.msra.mxu0 0
        %5951 = vmatprep.subr.bf16.mxu0 0
        %5952 = vmatpush1.bf16.msra.mxu0 0
        %5953 = vmatprep.subr.bf16.mxu0 0
        %5954 = vmatpush1.bf16.msra.mxu0 0
        %5955 = vmatprep.mubr.bf16.mxu0 0
        %5956 = vmatmul.mubr.bf16.gmra.mrb[0].mxu0 %v4084
        %v5957 = vpop.f32.mrb[0].mxu0
        %v5958 = vadd.f32 %v5917, %v5957
        %v5959 = vpop.f32.mrb[0].mxu0
        %v5960 = vadd.f32 %v5919, %v5959
        %v5961 = vpop.f32.mrb[0].mxu0
        %v5962 = vpop.f32.mrb[0].mxu0
        %5963 = vdwg.mxu0
        %5964 = vmatprep.subr.bf16.mxu0 %v5309
        %5965 = vmatpush1.bf16.msra.mxu0 %v5308
        %5966 = vmatprep.subr.bf16.mxu0 %v5321
        %5967 = vmatpush1.bf16.msra.mxu0 %v5320
        %5968 = vmatprep.subr.bf16.mxu0 %v5333
        %5969 = vmatpush1.bf16.msra.mxu0 %v5332
        %5970 = vmatprep.subr.bf16.mxu0 %v5345
        %5971 = vmatpush1.bf16.msra.mxu0 %v5344
        %5972 = vmatprep.subr.bf16.mxu0 %v5357
        %5973 = vmatpush1.bf16.msra.mxu0 %v5356
        %5974 = vmatprep.subr.bf16.mxu0 %v5369
        %5975 = vmatpush1.bf16.msra.mxu0 %v5368
        %5976 = vmatprep.subr.bf16.mxu0 %v5381
        %5977 = vmatpush1.bf16.msra.mxu0 %v5380
        %5978 = vmatprep.subr.bf16.mxu0 %v5393
        %5979 = vmatpush1.bf16.msra.mxu0 %v5392
        %5980 = vmatprep.subr.bf16.mxu0 %v5405
        %5981 = vmatpush1.bf16.msra.mxu0 %v5404
        %5982 = vmatprep.subr.bf16.mxu0 %v5417
        %5983 = vmatpush1.bf16.msra.mxu0 %v5416
        %5984 = vmatprep.subr.bf16.mxu0 %v5429
        %5985 = vmatpush1.bf16.msra.mxu0 %v5428
        %5986 = vmatprep.subr.bf16.mxu0 %v5441
        %5987 = vmatpush1.bf16.msra.mxu0 %v5440
        %5988 = vmatprep.subr.bf16.mxu0 %v5453
        %5989 = vmatpush1.bf16.msra.mxu0 %v5452
        %5990 = vmatprep.subr.bf16.mxu0 %v5465
        %5991 = vmatpush1.bf16.msra.mxu0 %v5464
        %5992 = vmatprep.subr.bf16.mxu0 %v5477
        %5993 = vmatpush1.bf16.msra.mxu0 %v5476
        %5994 = vmatprep.subr.bf16.mxu0 %v5489
        %5995 = vmatpush1.bf16.msra.mxu0 %v5488
        %5996 = vmatprep.mubr.bf16.mxu0 %v4083
        %5997 = vmatmul.mubr.bf16.gmra.mrb[0].mxu0 %v4082
        %v5998 = vpop.f32.mrb[0].mxu0
        %v5999 = vadd.f32 %v4393, %v5998
        %v6000 = vpop.f32.mrb[0].mxu0
        %v6001 = vadd.f32 %v4397, %v6000
        %v6002 = vpop.f32.mrb[0].mxu0
        %v6003 = vpop.f32.mrb[0].mxu0
        %6004 = vdwg.mxu0
        %6005 = vmatprep.subr.bf16.mxu0 %v5501
        %6006 = vmatpush1.bf16.msra.mxu0 %v5500
        %6007 = vmatprep.subr.bf16.mxu0 %v5513
        %6008 = vmatpush1.bf16.msra.mxu0 %v5512
        %6009 = vmatprep.subr.bf16.mxu0 %v5525
        %6010 = vmatpush1.bf16.msra.mxu0 %v5524
        %6011 = vmatprep.subr.bf16.mxu0 %v5537
        %6012 = vmatpush1.bf16.msra.mxu0 %v5536
        %6013 = vmatprep.subr.bf16.mxu0 %v5549
        %6014 = vmatpush1.bf16.msra.mxu0 %v5548
        %6015 = vmatprep.subr.bf16.mxu0 %v5561
        %6016 = vmatpush1.bf16.msra.mxu0 %v5560
        %6017 = vmatprep.subr.bf16.mxu0 %v5573
        %6018 = vmatpush1.bf16.msra.mxu0 %v5572
        %6019 = vmatprep.subr.bf16.mxu0 %v5585
        %6020 = vmatpush1.bf16.msra.mxu0 %v5584
        %6021 = vmatprep.subr.bf16.mxu0 0
        %6022 = vmatpush1.bf16.msra.mxu0 0
        %6023 = vmatprep.subr.bf16.mxu0 0
        %6024 = vmatpush1.bf16.msra.mxu0 0
        %6025 = vmatprep.subr.bf16.mxu0 0
        %6026 = vmatpush1.bf16.msra.mxu0 0
        %6027 = vmatprep.subr.bf16.mxu0 0
        %6028 = vmatpush1.bf16.msra.mxu0 0
        %6029 = vmatprep.subr.bf16.mxu0 0
        %6030 = vmatpush1.bf16.msra.mxu0 0
        %6031 = vmatprep.subr.bf16.mxu0 0
        %6032 = vmatpush1.bf16.msra.mxu0 0
        %6033 = vmatprep.subr.bf16.mxu0 0
        %6034 = vmatpush1.bf16.msra.mxu0 0
        %6035 = vmatprep.subr.bf16.mxu0 0
        %6036 = vmatpush1.bf16.msra.mxu0 0
        %6037 = vmatprep.mubr.bf16.mxu0 0
        %6038 = vmatmul.mubr.bf16.gmra.mrb[0].mxu0 %v4084
        %v6039 = vpop.f32.mrb[0].mxu0
        %v6040 = vadd.f32 %v5999, %v6039
        %v6041 = vpop.f32.mrb[0].mxu0
        %v6042 = vadd.f32 %v6001, %v6041
        %v6043 = vpop.f32.mrb[0].mxu0
        %v6044 = vpop.f32.mrb[0].mxu0
        %6045 = vdwg.mxu0
        %6046 = vmatprep.subr.bf16.mxu0 %v5311
        %6047 = vmatpush1.bf16.msra.mxu0 %v5310
        %6048 = vmatprep.subr.bf16.mxu0 %v5323
        %6049 = vmatpush1.bf16.msra.mxu0 %v5322
        %6050 = vmatprep.subr.bf16.mxu0 %v5335
        %6051 = vmatpush1.bf16.msra.mxu0 %v5334
        %6052 = vmatprep.subr.bf16.mxu0 %v5347
        %6053 = vmatpush1.bf16.msra.mxu0 %v5346
        %6054 = vmatprep.subr.bf16.mxu0 %v5359
        %6055 = vmatpush1.bf16.msra.mxu0 %v5358
        %6056 = vmatprep.subr.bf16.mxu0 %v5371
        %6057 = vmatpush1.bf16.msra.mxu0 %v5370
        %6058 = vmatprep.subr.bf16.mxu0 %v5383
        %6059 = vmatpush1.bf16.msra.mxu0 %v5382
        %6060 = vmatprep.subr.bf16.mxu0 %v5395
        %6061 = vmatpush1.bf16.msra.mxu0 %v5394
        %6062 = vmatprep.subr.bf16.mxu0 %v5407
        %6063 = vmatpush1.bf16.msra.mxu0 %v5406
        %6064 = vmatprep.subr.bf16.mxu0 %v5419
        %6065 = vmatpush1.bf16.msra.mxu0 %v5418
        %6066 = vmatprep.subr.bf16.mxu0 %v5431
        %6067 = vmatpush1.bf16.msra.mxu0 %v5430
        %6068 = vmatprep.subr.bf16.mxu0 %v5443
        %6069 = vmatpush1.bf16.msra.mxu0 %v5442
        %6070 = vmatprep.subr.bf16.mxu0 %v5455
        %6071 = vmatpush1.bf16.msra.mxu0 %v5454
        %6072 = vmatprep.subr.bf16.mxu0 %v5467
        %6073 = vmatpush1.bf16.msra.mxu0 %v5466
        %6074 = vmatprep.subr.bf16.mxu0 %v5479
        %6075 = vmatpush1.bf16.msra.mxu0 %v5478
        %6076 = vmatprep.subr.bf16.mxu0 %v5491
        %6077 = vmatpush1.bf16.msra.mxu0 %v5490
        %6078 = vmatprep.mubr.bf16.mxu0 %v4083
        %6079 = vmatmul.mubr.bf16.gmra.mrb[0].mxu0 %v4082
        %v6080 = vpop.f32.mrb[0].mxu0
        %v6081 = vadd.f32 %v4401, %v6080
        %v6082 = vpop.f32.mrb[0].mxu0
        %v6083 = vadd.f32 %v4405, %v6082
        %v6084 = vpop.f32.mrb[0].mxu0
        %v6085 = vpop.f32.mrb[0].mxu0
        %6086 = vdwg.mxu0
        %6087 = vmatprep.subr.bf16.mxu0 %v5503
        %6088 = vmatpush1.bf16.msra.mxu0 %v5502
        %6089 = vmatprep.subr.bf16.mxu0 %v5515
        %6090 = vmatpush1.bf16.msra.mxu0 %v5514
        %6091 = vmatprep.subr.bf16.mxu0 %v5527
        %6092 = vmatpush1.bf16.msra.mxu0 %v5526
        %6093 = vmatprep.subr.bf16.mxu0 %v5539
        %6094 = vmatpush1.bf16.msra.mxu0 %v5538
        %6095 = vmatprep.subr.bf16.mxu0 %v5551
        %6096 = vmatpush1.bf16.msra.mxu0 %v5550
        %6097 = vmatprep.subr.bf16.mxu0 %v5563
        %6098 = vmatpush1.bf16.msra.mxu0 %v5562
        %6099 = vmatprep.subr.bf16.mxu0 %v5575
        %6100 = vmatpush1.bf16.msra.mxu0 %v5574
        %6101 = vmatprep.subr.bf16.mxu0 %v5587
        %6102 = vmatpush1.bf16.msra.mxu0 %v5586
        %6103 = vmatprep.subr.bf16.mxu0 0
        %6104 = vmatpush1.bf16.msra.mxu0 0
        %6105 = vmatprep.subr.bf16.mxu0 0
        %6106 = vmatpush1.bf16.msra.mxu0 0
        %6107 = vmatprep.subr.bf16.mxu0 0
        %6108 = vmatpush1.bf16.msra.mxu0 0
        %6109 = vmatprep.subr.bf16.mxu0 0
        %6110 = vmatpush1.bf16.msra.mxu0 0
        %6111 = vmatprep.subr.bf16.mxu0 0
        %6112 = vmatpush1.bf16.msra.mxu0 0
        %6113 = vmatprep.subr.bf16.mxu0 0
        %6114 = vmatpush1.bf16.msra.mxu0 0
        %6115 = vmatprep.subr.bf16.mxu0 0
        %6116 = vmatpush1.bf16.msra.mxu0 0
        %6117 = vmatprep.subr.bf16.mxu0 0
        %6118 = vmatpush1.bf16.msra.mxu0 0
        %6119 = vmatprep.mubr.bf16.mxu0 0
        %6120 = vmatmul.mubr.bf16.gmra.mrb[0].mxu0 %v4084
        %v6121 = vpop.f32.mrb[0].mxu0
        %v6122 = vadd.f32 %v6081, %v6121
        %v6123 = vpop.f32.mrb[0].mxu0
        %v6124 = vadd.f32 %v6083, %v6123
        %v6125 = vpop.f32.mrb[0].mxu0
        %v6126 = vpop.f32.mrb[0].mxu0
        %6127 = vdwg.mxu0
        %6128 = vmatprep.subr.bf16.mxu0 %v5313
        %6129 = vmatpush1.bf16.msra.mxu0 %v5312
        %6130 = vmatprep.subr.bf16.mxu0 %v5325
        %6131 = vmatpush1.bf16.msra.mxu0 %v5324
        %6132 = vmatprep.subr.bf16.mxu0 %v5337
        %6133 = vmatpush1.bf16.msra.mxu0 %v5336
        %6134 = vmatprep.subr.bf16.mxu0 %v5349
        %6135 = vmatpush1.bf16.msra.mxu0 %v5348
        %6136 = vmatprep.subr.bf16.mxu0 %v5361
        %6137 = vmatpush1.bf16.msra.mxu0 %v5360
        %6138 = vmatprep.subr.bf16.mxu0 %v5373
        %6139 = vmatpush1.bf16.msra.mxu0 %v5372
        %6140 = vmatprep.subr.bf16.mxu0 %v5385
        %6141 = vmatpush1.bf16.msra.mxu0 %v5384
        %6142 = vmatprep.subr.bf16.mxu0 %v5397
        %6143 = vmatpush1.bf16.msra.mxu0 %v5396
        %6144 = vmatprep.subr.bf16.mxu0 %v5409
        %6145 = vmatpush1.bf16.msra.mxu0 %v5408
        %6146 = vmatprep.subr.bf16.mxu0 %v5421
        %6147 = vmatpush1.bf16.msra.mxu0 %v5420
        %6148 = vmatprep.subr.bf16.mxu0 %v5433
        %6149 = vmatpush1.bf16.msra.mxu0 %v5432
        %6150 = vmatprep.subr.bf16.mxu0 %v5445
        %6151 = vmatpush1.bf16.msra.mxu0 %v5444
        %6152 = vmatprep.subr.bf16.mxu0 %v5457
        %6153 = vmatpush1.bf16.msra.mxu0 %v5456
        %6154 = vmatprep.subr.bf16.mxu0 %v5469
        %6155 = vmatpush1.bf16.msra.mxu0 %v5468
        %6156 = vmatprep.subr.bf16.mxu0 %v5481
        %6157 = vmatpush1.bf16.msra.mxu0 %v5480
        %6158 = vmatprep.subr.bf16.mxu0 %v5493
        %6159 = vmatpush1.bf16.msra.mxu0 %v5492
        %6160 = vmatprep.mubr.bf16.mxu0 %v4083
        %6161 = vmatmul.mubr.bf16.gmra.mrb[0].mxu0 %v4082
        %v6162 = vpop.f32.mrb[0].mxu0
        %v6163 = vadd.f32 %v4409, %v6162
        %v6164 = vpop.f32.mrb[0].mxu0
        %v6165 = vadd.f32 %v4413, %v6164
        %v6166 = vpop.f32.mrb[0].mxu0
        %v6167 = vpop.f32.mrb[0].mxu0
        %6168 = vdwg.mxu0
        %6169 = vmatprep.subr.bf16.mxu0 %v5505
        %6170 = vmatpush1.bf16.msra.mxu0 %v5504
        %6171 = vmatprep.subr.bf16.mxu0 %v5517
        %6172 = vmatpush1.bf16.msra.mxu0 %v5516
        %6173 = vmatprep.subr.bf16.mxu0 %v5529
        %6174 = vmatpush1.bf16.msra.mxu0 %v5528
        %6175 = vmatprep.subr.bf16.mxu0 %v5541
        %6176 = vmatpush1.bf16.msra.mxu0 %v5540
        %6177 = vmatprep.subr.bf16.mxu0 %v5553
        %6178 = vmatpush1.bf16.msra.mxu0 %v5552
        %6179 = vmatprep.subr.bf16.mxu0 %v5565
        %6180 = vmatpush1.bf16.msra.mxu0 %v5564
        %6181 = vmatprep.subr.bf16.mxu0 %v5577
        %6182 = vmatpush1.bf16.msra.mxu0 %v5576
        %6183 = vmatprep.subr.bf16.mxu0 %v5589
        %6184 = vmatpush1.bf16.msra.mxu0 %v5588
        %6185 = vmatprep.subr.bf16.mxu0 0
        %6186 = vmatpush1.bf16.msra.mxu0 0
        %6187 = vmatprep.subr.bf16.mxu0 0
        %6188 = vmatpush1.bf16.msra.mxu0 0
        %6189 = vmatprep.subr.bf16.mxu0 0
        %6190 = vmatpush1.bf16.msra.mxu0 0
        %6191 = vmatprep.subr.bf16.mxu0 0
        %6192 = vmatpush1.bf16.msra.mxu0 0
        %6193 = vmatprep.subr.bf16.mxu0 0
        %6194 = vmatpush1.bf16.msra.mxu0 0
        %6195 = vmatprep.subr.bf16.mxu0 0
        %6196 = vmatpush1.bf16.msra.mxu0 0
        %6197 = vmatprep.subr.bf16.mxu0 0
        %6198 = vmatpush1.bf16.msra.mxu0 0
        %6199 = vmatprep.subr.bf16.mxu0 0
        %6200 = vmatpush1.bf16.msra.mxu0 0
        %6201 = vmatprep.mubr.bf16.mxu0 0
        %6202 = vmatmul.mubr.bf16.gmra.mrb[0].mxu0 %v4084
        %v6203 = vpop.f32.mrb[0].mxu0
        %v6204 = vadd.f32 %v6163, %v6203
        %v6205 = vpop.f32.mrb[0].mxu0
        %v6206 = vadd.f32 %v6165, %v6205
        %v6207 = vpop.f32.mrb[0].mxu0
        %v6208 = vpop.f32.mrb[0].mxu0
        %6209 = vdwg.mxu0
        %6210 = vmatprep.subr.bf16.mxu0 %v5315
        %6211 = vmatpush1.bf16.msra.mxu0 %v5314
        %6212 = vmatprep.subr.bf16.mxu0 %v5327
        %6213 = vmatpush1.bf16.msra.mxu0 %v5326
        %6214 = vmatprep.subr.bf16.mxu0 %v5339
        %6215 = vmatpush1.bf16.msra.mxu0 %v5338
        %6216 = vmatprep.subr.bf16.mxu0 %v5351
        %6217 = vmatpush1.bf16.msra.mxu0 %v5350
        %6218 = vmatprep.subr.bf16.mxu0 %v5363
        %6219 = vmatpush1.bf16.msra.mxu0 %v5362
        %6220 = vmatprep.subr.bf16.mxu0 %v5375
        %6221 = vmatpush1.bf16.msra.mxu0 %v5374
        %6222 = vmatprep.subr.bf16.mxu0 %v5387
        %6223 = vmatpush1.bf16.msra.mxu0 %v5386
        %6224 = vmatprep.subr.bf16.mxu0 %v5399
        %6225 = vmatpush1.bf16.msra.mxu0 %v5398
        %6226 = vmatprep.subr.bf16.mxu0 %v5411
        %6227 = vmatpush1.bf16.msra.mxu0 %v5410
        %6228 = vmatprep.subr.bf16.mxu0 %v5423
        %6229 = vmatpush1.bf16.msra.mxu0 %v5422
        %6230 = vmatprep.subr.bf16.mxu0 %v5435
        %6231 = vmatpush1.bf16.msra.mxu0 %v5434
        %6232 = vmatprep.subr.bf16.mxu0 %v5447
        %6233 = vmatpush1.bf16.msra.mxu0 %v5446
        %6234 = vmatprep.subr.bf16.mxu0 %v5459
        %6235 = vmatpush1.bf16.msra.mxu0 %v5458
        %6236 = vmatprep.subr.bf16.mxu0 %v5471
        %6237 = vmatpush1.bf16.msra.mxu0 %v5470
        %6238 = vmatprep.subr.bf16.mxu0 %v5483
        %6239 = vmatpush1.bf16.msra.mxu0 %v5482
        %6240 = vmatprep.subr.bf16.mxu0 %v5495
        %6241 = vmatpush1.bf16.msra.mxu0 %v5494
        %6242 = vmatprep.mubr.bf16.mxu0 %v4083
        %6243 = vmatmul.mubr.bf16.gmra.mrb[0].mxu0 %v4082
        %v6244 = vpop.f32.mrb[0].mxu0
        %v6245 = vadd.f32 %v4417, %v6244
        %v6246 = vpop.f32.mrb[0].mxu0
        %v6247 = vadd.f32 %v4421, %v6246
        %v6248 = vpop.f32.mrb[0].mxu0
        %v6249 = vpop.f32.mrb[0].mxu0
        %6250 = vdwg.mxu0
        %6251 = vmatprep.subr.bf16.mxu0 %v5507
        %6252 = vmatpush1.bf16.msra.mxu0 %v5506
        %6253 = vmatprep.subr.bf16.mxu0 %v5519
        %6254 = vmatpush1.bf16.msra.mxu0 %v5518
        %6255 = vmatprep.subr.bf16.mxu0 %v5531
        %6256 = vmatpush1.bf16.msra.mxu0 %v5530
        %6257 = vmatprep.subr.bf16.mxu0 %v5543
        %6258 = vmatpush1.bf16.msra.mxu0 %v5542
        %6259 = vmatprep.subr.bf16.mxu0 %v5555
        %6260 = vmatpush1.bf16.msra.mxu0 %v5554
        %6261 = vmatprep.subr.bf16.mxu0 %v5567
        %6262 = vmatpush1.bf16.msra.mxu0 %v5566
        %6263 = vmatprep.subr.bf16.mxu0 %v5579
        %6264 = vmatpush1.bf16.msra.mxu0 %v5578
        %6265 = vmatprep.subr.bf16.mxu0 %v5591
        %6266 = vmatpush1.bf16.msra.mxu0 %v5590
        %6267 = vmatprep.subr.bf16.mxu0 0
        %6268 = vmatpush1.bf16.msra.mxu0 0
        %6269 = vmatprep.subr.bf16.mxu0 0
        %6270 = vmatpush1.bf16.msra.mxu0 0
        %6271 = vmatprep.subr.bf16.mxu0 0
        %6272 = vmatpush1.bf16.msra.mxu0 0
        %6273 = vmatprep.subr.bf16.mxu0 0
        %6274 = vmatpush1.bf16.msra.mxu0 0
        %6275 = vmatprep.subr.bf16.mxu0 0
        %6276 = vmatpush1.bf16.msra.mxu0 0
        %6277 = vmatprep.subr.bf16.mxu0 0
        %6278 = vmatpush1.bf16.msra.mxu0 0
        %6279 = vmatprep.subr.bf16.mxu0 0
        %6280 = vmatpush1.bf16.msra.mxu0 0
        %6281 = vmatprep.subr.bf16.mxu0 0
        %6282 = vmatpush1.bf16.msra.mxu0 0
        %6283 = vmatprep.mubr.bf16.mxu0 0
        %6284 = vmatmul.mubr.bf16.gmra.mrb[0].mxu0 %v4084
        %v6285 = vpop.f32.mrb[0].mxu0
        %v6286 = vadd.f32 %v6245, %v6285
        %v6287 = vpop.f32.mrb[0].mxu0
        %v6288 = vadd.f32 %v6247, %v6287
        %v6289 = vpop.f32.mrb[0].mxu0
        %v6290 = vpop.f32.mrb[0].mxu0
        %6291 = vdwg.mxu0
        %6292 = vmatprep.subr.bf16.mxu0 %v5317
        %6293 = vmatpush1.bf16.msra.mxu0 %v5316
        %6294 = vmatprep.subr.bf16.mxu0 %v5329
        %6295 = vmatpush1.bf16.msra.mxu0 %v5328
        %6296 = vmatprep.subr.bf16.mxu0 %v5341
        %6297 = vmatpush1.bf16.msra.mxu0 %v5340
        %6298 = vmatprep.subr.bf16.mxu0 %v5353
        %6299 = vmatpush1.bf16.msra.mxu0 %v5352
        %6300 = vmatprep.subr.bf16.mxu0 %v5365
        %6301 = vmatpush1.bf16.msra.mxu0 %v5364
        %6302 = vmatprep.subr.bf16.mxu0 %v5377
        %6303 = vmatpush1.bf16.msra.mxu0 %v5376
        %6304 = vmatprep.subr.bf16.mxu0 %v5389
        %6305 = vmatpush1.bf16.msra.mxu0 %v5388
        %6306 = vmatprep.subr.bf16.mxu0 %v5401
        %6307 = vmatpush1.bf16.msra.mxu0 %v5400
        %6308 = vmatprep.subr.bf16.mxu0 %v5413
        %6309 = vmatpush1.bf16.msra.mxu0 %v5412
        %6310 = vmatprep.subr.bf16.mxu0 %v5425
        %6311 = vmatpush1.bf16.msra.mxu0 %v5424
        %6312 = vmatprep.subr.bf16.mxu0 %v5437
        %6313 = vmatpush1.bf16.msra.mxu0 %v5436
        %6314 = vmatprep.subr.bf16.mxu0 %v5449
        %6315 = vmatpush1.bf16.msra.mxu0 %v5448
        %6316 = vmatprep.subr.bf16.mxu0 %v5461
        %6317 = vmatpush1.bf16.msra.mxu0 %v5460
        %6318 = vmatprep.subr.bf16.mxu0 %v5473
        %6319 = vmatpush1.bf16.msra.mxu0 %v5472
        %6320 = vmatprep.subr.bf16.mxu0 %v5485
        %6321 = vmatpush1.bf16.msra.mxu0 %v5484
        %6322 = vmatprep.subr.bf16.mxu0 %v5497
        %6323 = vmatpush1.bf16.msra.mxu0 %v5496
        %6324 = vmatprep.mubr.bf16.mxu0 %v4083
        %6325 = vmatmul.mubr.bf16.gmra.mrb[0].mxu0 %v4082
        %v6326 = vpop.f32.mrb[0].mxu0
        %v6327 = vadd.f32 %v4425, %v6326
        %v6328 = vpop.f32.mrb[0].mxu0
        %v6329 = vadd.f32 %v4429, %v6328
        %v6330 = vpop.f32.mrb[0].mxu0
        %v6331 = vpop.f32.mrb[0].mxu0
        %6332 = vdwg.mxu0
        %6333 = vmatprep.subr.bf16.mxu0 %v5509
        %6334 = vmatpush1.bf16.msra.mxu0 %v5508
        %6335 = vmatprep.subr.bf16.mxu0 %v5521
        %6336 = vmatpush1.bf16.msra.mxu0 %v5520
        %6337 = vmatprep.subr.bf16.mxu0 %v5533
        %6338 = vmatpush1.bf16.msra.mxu0 %v5532
        %6339 = vmatprep.subr.bf16.mxu0 %v5545
        %6340 = vmatpush1.bf16.msra.mxu0 %v5544
        %6341 = vmatprep.subr.bf16.mxu0 %v5557
        %6342 = vmatpush1.bf16.msra.mxu0 %v5556
        %6343 = vmatprep.subr.bf16.mxu0 %v5569
        %6344 = vmatpush1.bf16.msra.mxu0 %v5568
        %6345 = vmatprep.subr.bf16.mxu0 %v5581
        %6346 = vmatpush1.bf16.msra.mxu0 %v5580
        %6347 = vmatprep.subr.bf16.mxu0 %v5593
        %6348 = vmatpush1.bf16.msra.mxu0 %v5592
        %6349 = vmatprep.subr.bf16.mxu0 0
        %6350 = vmatpush1.bf16.msra.mxu0 0
        %6351 = vmatprep.subr.bf16.mxu0 0
        %6352 = vmatpush1.bf16.msra.mxu0 0
        %6353 = vmatprep.subr.bf16.mxu0 0
        %6354 = vmatpush1.bf16.msra.mxu0 0
        %6355 = vmatprep.subr.bf16.mxu0 0
        %6356 = vmatpush1.bf16.msra.mxu0 0
        %6357 = vmatprep.subr.bf16.mxu0 0
        %6358 = vmatpush1.bf16.msra.mxu0 0
        %6359 = vmatprep.subr.bf16.mxu0 0
        %6360 = vmatpush1.bf16.msra.mxu0 0
        %6361 = vmatprep.subr.bf16.mxu0 0
        %6362 = vmatpush1.bf16.msra.mxu0 0
        %6363 = vmatprep.subr.bf16.mxu0 0
        %6364 = vmatpush1.bf16.msra.mxu0 0
        %6365 = vmatprep.mubr.bf16.mxu0 0
        %6366 = vmatmul.mubr.bf16.gmra.mrb[0].mxu0 %v4084
        %v6367 = vpop.f32.mrb[0].mxu0
        %v6368 = vadd.f32 %v6327, %v6367
        %v6369 = vpop.f32.mrb[0].mxu0
        %v6370 = vadd.f32 %v6329, %v6369
        %v6371 = vpop.f32.mrb[0].mxu0
        %v6372 = vpop.f32.mrb[0].mxu0
        %6373 = vdwg.mxu0
        %v6374 = vmax.f32 %v5958, 0.0
        %v6375 = vmax.f32 %v5960, 0.0
        %v6376 = vmax.f32 %v6040, 0.0
        %v6377 = vmax.f32 %v6042, 0.0
        %v6378 = vmax.f32 %v6122, 0.0
        %v6379 = vmax.f32 %v6124, 0.0
        %v6380 = vmax.f32 %v6204, 0.0
        %v6381 = vmax.f32 %v6206, 0.0
        %v6382 = vmax.f32 %v6286, 0.0
        %v6383 = vmax.f32 %v6288, 0.0
        %v6384 = vmax.f32 %v6368, 0.0
        %v6385 = vmax.f32 %v6370, 0.0
        %v6386 = vpack.c.bf16 %v6374, %v6374
        %v6387 = vpack.c.bf16 %v6375, %v6375
        %v6388 = vpack.c.bf16 %v6376, %v6376
        %v6389 = vpack.c.bf16 %v6377, %v6377
        %v6390 = vpack.c.bf16 %v6378, %v6378
        %v6391 = vpack.c.bf16 %v6379, %v6379
        %v6392 = vpack.c.bf16 %v6380, %v6380
        %v6393 = vpack.c.bf16 %v6381, %v6381
        %v6394 = vpack.c.bf16 %v6382, %v6382
        %v6395 = vpack.c.bf16 %v6383, %v6383
        %v6396 = vpack.c.bf16 %v6384, %v6384
        %v6397 = vpack.c.bf16 %v6385, %v6385
        %s6398 = smul.addr %s4085, 4
        %s6399 = scalar_lea.vmem [#allocation21], %s6398
        %v6400 = vld [vmem:[%s6399] sm:$0xff]
        %v6401 = vld [vmem:[%s6399 + $0x8] sm:$0xf]
        %v6402 = vld [vmem:[%s6399 + $0xc] sm:$0xff]
        %v6403 = vld [vmem:[%s6399 + $0x14] sm:$0xf]
        %v6404 = vld [vmem:[%s6399 + $0x18] sm:$0xff]
        %v6405 = vld [vmem:[%s6399 + $0x20] sm:$0xf]
        %v6406 = vld [vmem:[%s6399 + $0x24] sm:$0xff]
        %v6407 = vld [vmem:[%s6399 + $0x2c] sm:$0xf]
        %v6408 = vld [vmem:[%s6399 + $0x30] sm:$0xff]
        %v6409 = vld [vmem:[%s6399 + $0x38] sm:$0xf]
        %v6410 = vld [vmem:[%s6399 + $0x3c] sm:$0xff]
        %v6411 = vld [vmem:[%s6399 + $0x44] sm:$0xf]
        %v6412 = vld [vmem:[%s6399 + $0x48] sm:$0xff]
        %v6413 = vld [vmem:[%s6399 + $0x50] sm:$0xf]
        %v6414 = vld [vmem:[%s6399 + $0x54] sm:$0xff]
        %v6415 = vld [vmem:[%s6399 + $0x5c] sm:$0xf]
        %v6416 = vld [vmem:[%s6399 + $0x60] sm:$0xff]
        %v6417 = vld [vmem:[%s6399 + $0x68] sm:$0xf]
        %v6418 = vld [vmem:[%s6399 + $0x6c] sm:$0xff]
        %v6419 = vld [vmem:[%s6399 + $0x74] sm:$0xf]
        %v6420 = vld [vmem:[%s6399 + $0x78] sm:$0xff]
        %v6421 = vld [vmem:[%s6399 + $0x80] sm:$0xf]
        %v6422 = vld [vmem:[%s6399 + $0x84] sm:$0xff]
        %v6423 = vld [vmem:[%s6399 + $0x8c] sm:$0xf]
        %v6424 = vld [vmem:[%s6399 + $0x90] sm:$0xff]
        %v6425 = vld [vmem:[%s6399 + $0x98] sm:$0xf]
        %v6426 = vld [vmem:[%s6399 + $0x9c] sm:$0xff]
        %v6427 = vld [vmem:[%s6399 + $0xa4] sm:$0xf]
        %v6428 = vld [vmem:[%s6399 + $0xa8] sm:$0xff]
        %v6429 = vld [vmem:[%s6399 + $0xb0] sm:$0xf]
        %v6430 = vld [vmem:[%s6399 + $0xb4] sm:$0xff]
        %v6431 = vld [vmem:[%s6399 + $0xbc] sm:$0xf]
        %v6432 = vld [vmem:[%s6399 + $0xc0] sm:$0xff]
        %v6433 = vld [vmem:[%s6399 + $0xc8] sm:$0xf]
        %v6434 = vld [vmem:[%s6399 + $0xcc] sm:$0xff]
        %v6435 = vld [vmem:[%s6399 + $0xd4] sm:$0xf]
        %v6436 = vld [vmem:[%s6399 + $0xd8] sm:$0xff]
        %v6437 = vld [vmem:[%s6399 + $0xe0] sm:$0xf]
        %v6438 = vld [vmem:[%s6399 + $0xe4] sm:$0xff]
        %v6439 = vld [vmem:[%s6399 + $0xec] sm:$0xf]
        %v6440 = vld [vmem:[%s6399 + $0xf0] sm:$0xff]
        %v6441 = vld [vmem:[%s6399 + $0xf8] sm:$0xf]
        %v6442 = vld [vmem:[%s6399 + $0xfc] sm:$0xff]
        %v6443 = vld [vmem:[%s6399 + $0x104] sm:$0xf]
        %v6444 = vld [vmem:[%s6399 + $0x108] sm:$0xff]
        %v6445 = vld [vmem:[%s6399 + $0x110] sm:$0xf]
        %v6446 = vld [vmem:[%s6399 + $0x114] sm:$0xff]
        %v6447 = vld [vmem:[%s6399 + $0x11c] sm:$0xf]
        %v6448 = vld [vmem:[%s6399 + $0x120] sm:$0xff]
        %v6449 = vld [vmem:[%s6399 + $0x128] sm:$0xf]
        %v6450 = vld [vmem:[%s6399 + $0x12c] sm:$0xff]
        %v6451 = vld [vmem:[%s6399 + $0x134] sm:$0xf]
        %v6452 = vld [vmem:[%s6399 + $0x138] sm:$0xff]
        %v6453 = vld [vmem:[%s6399 + $0x140] sm:$0xf]
        %v6454 = vld [vmem:[%s6399 + $0x144] sm:$0xff]
        %v6455 = vld [vmem:[%s6399 + $0x14c] sm:$0xf]
        %v6456 = vld [vmem:[%s6399 + $0x150] sm:$0xff]
        %v6457 = vld [vmem:[%s6399 + $0x158] sm:$0xf]
        %v6458 = vld [vmem:[%s6399 + $0x15c] sm:$0xff]
        %v6459 = vld [vmem:[%s6399 + $0x164] sm:$0xf]
        %v6460 = vld [vmem:[%s6399 + $0x168] sm:$0xff]
        %v6461 = vld [vmem:[%s6399 + $0x170] sm:$0xf]
        %v6462 = vld [vmem:[%s6399 + $0x174] sm:$0xff]
        %v6463 = vld [vmem:[%s6399 + $0x17c] sm:$0xf]
        %v6464 = vld [vmem:[%s6399 + $0x180] sm:$0xff]
        %v6465 = vld [vmem:[%s6399 + $0x188] sm:$0xf]
        %v6466 = vld [vmem:[%s6399 + $0x18c] sm:$0xff]
        %v6467 = vld [vmem:[%s6399 + $0x194] sm:$0xf]
        %v6468 = vld [vmem:[%s6399 + $0x198] sm:$0xff]
        %v6469 = vld [vmem:[%s6399 + $0x1a0] sm:$0xf]
        %v6470 = vld [vmem:[%s6399 + $0x1a4] sm:$0xff]
        %v6471 = vld [vmem:[%s6399 + $0x1ac] sm:$0xf]
        %v6472 = vld [vmem:[%s6399 + $0x1b0] sm:$0xff]
        %v6473 = vld [vmem:[%s6399 + $0x1b8] sm:$0xf]
        %v6474 = vld [vmem:[%s6399 + $0x1bc] sm:$0xff]
        %v6475 = vld [vmem:[%s6399 + $0x1c4] sm:$0xf]
        %v6476 = vld [vmem:[%s6399 + $0x1c8] sm:$0xff]
        %v6477 = vld [vmem:[%s6399 + $0x1d0] sm:$0xf]
        %v6478 = vld [vmem:[%s6399 + $0x1d4] sm:$0xff]
        %v6479 = vld [vmem:[%s6399 + $0x1dc] sm:$0xf]
        %v6480 = vld [vmem:[%s6399 + $0x1e0] sm:$0xff]
        %v6481 = vld [vmem:[%s6399 + $0x1e8] sm:$0xf]
        %v6482 = vld [vmem:[%s6399 + $0x1ec] sm:$0xff]
        %v6483 = vld [vmem:[%s6399 + $0x1f4] sm:$0xf]
        %v6484 = vld [vmem:[%s6399 + $0x1f8] sm:$0xff]
        %v6485 = vld [vmem:[%s6399 + $0x200] sm:$0xf]
        %v6486 = vld [vmem:[%s6399 + $0x204] sm:$0xff]
        %v6487 = vld [vmem:[%s6399 + $0x20c] sm:$0xf]
        %v6488 = vld [vmem:[%s6399 + $0x210] sm:$0xff]
        %v6489 = vld [vmem:[%s6399 + $0x218] sm:$0xf]
        %v6490 = vld [vmem:[%s6399 + $0x21c] sm:$0xff]
        %v6491 = vld [vmem:[%s6399 + $0x224] sm:$0xf]
        %v6492 = vld [vmem:[%s6399 + $0x228] sm:$0xff]
        %v6493 = vld [vmem:[%s6399 + $0x230] sm:$0xf]
        %v6494 = vld [vmem:[%s6399 + $0x234] sm:$0xff]
        %v6495 = vld [vmem:[%s6399 + $0x23c] sm:$0xf]
        %v6496 = vld [vmem:[%s6399 + $0x240] sm:$0xff]
        %v6497 = vld [vmem:[%s6399 + $0x248] sm:$0xf]
        %v6498 = vld [vmem:[%s6399 + $0x24c] sm:$0xff]
        %v6499 = vld [vmem:[%s6399 + $0x254] sm:$0xf]
        %v6500 = vld [vmem:[%s6399 + $0x258] sm:$0xff]
        %v6501 = vld [vmem:[%s6399 + $0x260] sm:$0xf]
        %v6502 = vld [vmem:[%s6399 + $0x264] sm:$0xff]
        %v6503 = vld [vmem:[%s6399 + $0x26c] sm:$0xf]
        %v6504 = vld [vmem:[%s6399 + $0x270] sm:$0xff]
        %v6505 = vld [vmem:[%s6399 + $0x278] sm:$0xf]
        %v6506 = vld [vmem:[%s6399 + $0x27c] sm:$0xff]
        %v6507 = vld [vmem:[%s6399 + $0x284] sm:$0xf]
        %v6508 = vld [vmem:[%s6399 + $0x288] sm:$0xff]
        %v6509 = vld [vmem:[%s6399 + $0x290] sm:$0xf]
        %v6510 = vld [vmem:[%s6399 + $0x294] sm:$0xff]
        %v6511 = vld [vmem:[%s6399 + $0x29c] sm:$0xf]
        %v6512 = vld [vmem:[%s6399 + $0x2a0] sm:$0xff]
        %v6513 = vld [vmem:[%s6399 + $0x2a8] sm:$0xf]
        %v6514 = vld [vmem:[%s6399 + $0x2ac] sm:$0xff]
        %v6515 = vld [vmem:[%s6399 + $0x2b4] sm:$0xf]
        %v6516 = vld [vmem:[%s6399 + $0x2b8] sm:$0xff]
        %v6517 = vld [vmem:[%s6399 + $0x2c0] sm:$0xf]
        %v6518 = vld [vmem:[%s6399 + $0x2c4] sm:$0xff]
        %v6519 = vld [vmem:[%s6399 + $0x2cc] sm:$0xf]
        %v6520 = vld [vmem:[%s6399 + $0x2d0] sm:$0xff]
        %v6521 = vld [vmem:[%s6399 + $0x2d8] sm:$0xf]
        %v6522 = vld [vmem:[%s6399 + $0x2dc] sm:$0xff]
        %v6523 = vld [vmem:[%s6399 + $0x2e4] sm:$0xf]
        %v6524 = vld [vmem:[%s6399 + $0x2e8] sm:$0xff]
        %v6525 = vld [vmem:[%s6399 + $0x2f0] sm:$0xf]
        %v6526 = vld [vmem:[%s6399 + $0x2f4] sm:$0xff]
        %v6527 = vld [vmem:[%s6399 + $0x2fc] sm:$0xf]
        %v6528 = vld [vmem:[%s6399 + $0x300] sm:$0xff]
        %v6529 = vld [vmem:[%s6399 + $0x308] sm:$0xf]
        %v6530 = vld [vmem:[%s6399 + $0x30c] sm:$0xff]
        %v6531 = vld [vmem:[%s6399 + $0x314] sm:$0xf]
        %v6532 = vld [vmem:[%s6399 + $0x318] sm:$0xff]
        %v6533 = vld [vmem:[%s6399 + $0x320] sm:$0xf]
        %v6534 = vld [vmem:[%s6399 + $0x324] sm:$0xff]
        %v6535 = vld [vmem:[%s6399 + $0x32c] sm:$0xf]
        %v6536 = vld [vmem:[%s6399 + $0x330] sm:$0xff]
        %v6537 = vld [vmem:[%s6399 + $0x338] sm:$0xf]
        %v6538 = vld [vmem:[%s6399 + $0x33c] sm:$0xff]
        %v6539 = vld [vmem:[%s6399 + $0x344] sm:$0xf]
        %v6540 = vld [vmem:[%s6399 + $0x348] sm:$0xff]
        %v6541 = vld [vmem:[%s6399 + $0x350] sm:$0xf]
        %v6542 = vld [vmem:[%s6399 + $0x354] sm:$0xff]
        %v6543 = vld [vmem:[%s6399 + $0x35c] sm:$0xf]
        %v6544 = vld [vmem:[%s6399 + $0x360] sm:$0xff]
        %v6545 = vld [vmem:[%s6399 + $0x368] sm:$0xf]
        %v6546 = vld [vmem:[%s6399 + $0x36c] sm:$0xff]
        %v6547 = vld [vmem:[%s6399 + $0x374] sm:$0xf]
        %v6548 = vld [vmem:[%s6399 + $0x378] sm:$0xff]
        %v6549 = vld [vmem:[%s6399 + $0x380] sm:$0xf]
        %v6550 = vld [vmem:[%s6399 + $0x384] sm:$0xff]
        %v6551 = vld [vmem:[%s6399 + $0x38c] sm:$0xf]
        %v6552 = vld [vmem:[%s6399 + $0x390] sm:$0xff]
        %v6553 = vld [vmem:[%s6399 + $0x398] sm:$0xf]
        %v6554 = vld [vmem:[%s6399 + $0x39c] sm:$0xff]
        %v6555 = vld [vmem:[%s6399 + $0x3a4] sm:$0xf]
        %v6556 = vld [vmem:[%s6399 + $0x3a8] sm:$0xff]
        %v6557 = vld [vmem:[%s6399 + $0x3b0] sm:$0xf]
        %v6558 = vld [vmem:[%s6399 + $0x3b4] sm:$0xff]
        %v6559 = vld [vmem:[%s6399 + $0x3bc] sm:$0xf]
        %v6560 = vld [vmem:[%s6399 + $0x3c0] sm:$0xff]
        %v6561 = vld [vmem:[%s6399 + $0x3c8] sm:$0xf]
        %v6562 = vld [vmem:[%s6399 + $0x3cc] sm:$0xff]
        %v6563 = vld [vmem:[%s6399 + $0x3d4] sm:$0xf]
        %v6564 = vld [vmem:[%s6399 + $0x3d8] sm:$0xff]
        %v6565 = vld [vmem:[%s6399 + $0x3e0] sm:$0xf]
        %v6566 = vld [vmem:[%s6399 + $0x3e4] sm:$0xff]
        %v6567 = vld [vmem:[%s6399 + $0x3ec] sm:$0xf]
        %v6568 = vld [vmem:[%s6399 + $0x3f0] sm:$0xff]
        %v6569 = vld [vmem:[%s6399 + $0x3f8] sm:$0xf]
        %v6570 = vld [vmem:[%s6399 + $0x3fc] sm:$0xff]
        %v6571 = vld [vmem:[%s6399 + $0x404] sm:$0xf]
        %v6572 = vld [vmem:[%s6399 + $0x408] sm:$0xff]
        %v6573 = vld [vmem:[%s6399 + $0x410] sm:$0xf]
        %v6574 = vld [vmem:[%s6399 + $0x414] sm:$0xff]
        %v6575 = vld [vmem:[%s6399 + $0x41c] sm:$0xf]
        %v6576 = vld [vmem:[%s6399 + $0x420] sm:$0xff]
        %v6577 = vld [vmem:[%s6399 + $0x428] sm:$0xf]
        %v6578 = vld [vmem:[%s6399 + $0x42c] sm:$0xff]
        %v6579 = vld [vmem:[%s6399 + $0x434] sm:$0xf]
        %v6580 = vld [vmem:[%s6399 + $0x438] sm:$0xff]
        %v6581 = vld [vmem:[%s6399 + $0x440] sm:$0xf]
        %v6582 = vld [vmem:[%s6399 + $0x444] sm:$0xff]
        %v6583 = vld [vmem:[%s6399 + $0x44c] sm:$0xf]
        %v6584 = vld [vmem:[%s6399 + $0x450] sm:$0xff]
        %v6585 = vld [vmem:[%s6399 + $0x458] sm:$0xf]
        %v6586 = vld [vmem:[%s6399 + $0x45c] sm:$0xff]
        %v6587 = vld [vmem:[%s6399 + $0x464] sm:$0xf]
        %v6588 = vld [vmem:[%s6399 + $0x468] sm:$0xff]
        %v6589 = vld [vmem:[%s6399 + $0x470] sm:$0xf]
        %v6590 = vld [vmem:[%s6399 + $0x474] sm:$0xff]
        %v6591 = vld [vmem:[%s6399 + $0x47c] sm:$0xf]
        %v6592 = vld [vmem:[%s6399 + $0x480] sm:$0xff]
        %v6593 = vld [vmem:[%s6399 + $0x488] sm:$0xf]
        %v6594 = vld [vmem:[%s6399 + $0x48c] sm:$0xff]
        %v6595 = vld [vmem:[%s6399 + $0x494] sm:$0xf]
        %v6596 = vld [vmem:[%s6399 + $0x498] sm:$0xff]
        %v6597 = vld [vmem:[%s6399 + $0x4a0] sm:$0xf]
        %v6598 = vld [vmem:[%s6399 + $0x4a4] sm:$0xff]
        %v6599 = vld [vmem:[%s6399 + $0x4ac] sm:$0xf]
        %v6600 = vld [vmem:[%s6399 + $0x4b0] sm:$0xff]
        %v6601 = vld [vmem:[%s6399 + $0x4b8] sm:$0xf]
        %v6602 = vld [vmem:[%s6399 + $0x4bc] sm:$0xff]
        %v6603 = vld [vmem:[%s6399 + $0x4c4] sm:$0xf]
        %v6604 = vld [vmem:[%s6399 + $0x4c8] sm:$0xff]
        %v6605 = vld [vmem:[%s6399 + $0x4d0] sm:$0xf]
        %v6606 = vld [vmem:[%s6399 + $0x4d4] sm:$0xff]
        %v6607 = vld [vmem:[%s6399 + $0x4dc] sm:$0xf]
        %v6608 = vld [vmem:[%s6399 + $0x4e0] sm:$0xff]
        %v6609 = vld [vmem:[%s6399 + $0x4e8] sm:$0xf]
        %v6610 = vld [vmem:[%s6399 + $0x4ec] sm:$0xff]
        %v6611 = vld [vmem:[%s6399 + $0x4f4] sm:$0xf]
        %v6612 = vld [vmem:[%s6399 + $0x4f8] sm:$0xff]
        %v6613 = vld [vmem:[%s6399 + $0x500] sm:$0xf]
        %v6614 = vld [vmem:[%s6399 + $0x504] sm:$0xff]
        %v6615 = vld [vmem:[%s6399 + $0x50c] sm:$0xf]
        %v6616 = vld [vmem:[%s6399 + $0x510] sm:$0xff]
        %v6617 = vld [vmem:[%s6399 + $0x518] sm:$0xf]
        %v6618 = vld [vmem:[%s6399 + $0x51c] sm:$0xff]
        %v6619 = vld [vmem:[%s6399 + $0x524] sm:$0xf]
        %v6620 = vld [vmem:[%s6399 + $0x528] sm:$0xff]
        %v6621 = vld [vmem:[%s6399 + $0x530] sm:$0xf]
        %v6622 = vld [vmem:[%s6399 + $0x534] sm:$0xff]
        %v6623 = vld [vmem:[%s6399 + $0x53c] sm:$0xf]
        %v6624 = vld [vmem:[%s6399 + $0x540] sm:$0xff]
        %v6625 = vld [vmem:[%s6399 + $0x548] sm:$0xf]
        %v6626 = vld [vmem:[%s6399 + $0x54c] sm:$0xff]
        %v6627 = vld [vmem:[%s6399 + $0x554] sm:$0xf]
        %v6628 = vld [vmem:[%s6399 + $0x558] sm:$0xff]
        %v6629 = vld [vmem:[%s6399 + $0x560] sm:$0xf]
        %v6630 = vld [vmem:[%s6399 + $0x564] sm:$0xff]
        %v6631 = vld [vmem:[%s6399 + $0x56c] sm:$0xf]
        %v6632 = vld [vmem:[%s6399 + $0x570] sm:$0xff]
        %v6633 = vld [vmem:[%s6399 + $0x578] sm:$0xf]
        %v6634 = vld [vmem:[%s6399 + $0x57c] sm:$0xff]
        %v6635 = vld [vmem:[%s6399 + $0x584] sm:$0xf]
        %v6636 = vld [vmem:[%s6399 + $0x588] sm:$0xff]
        %v6637 = vld [vmem:[%s6399 + $0x590] sm:$0xf]
        %v6638 = vld [vmem:[%s6399 + $0x594] sm:$0xff]
        %v6639 = vld [vmem:[%s6399 + $0x59c] sm:$0xf]
        %v6640 = vld [vmem:[%s6399 + $0x5a0] sm:$0xff]
        %v6641 = vld [vmem:[%s6399 + $0x5a8] sm:$0xf]
        %v6642 = vld [vmem:[%s6399 + $0x5ac] sm:$0xff]
        %v6643 = vld [vmem:[%s6399 + $0x5b4] sm:$0xf]
        %v6644 = vld [vmem:[%s6399 + $0x5b8] sm:$0xff]
        %v6645 = vld [vmem:[%s6399 + $0x5c0] sm:$0xf]
        %v6646 = vld [vmem:[%s6399 + $0x5c4] sm:$0xff]
        %v6647 = vld [vmem:[%s6399 + $0x5cc] sm:$0xf]
        %v6648 = vld [vmem:[%s6399 + $0x5d0] sm:$0xff]
        %v6649 = vld [vmem:[%s6399 + $0x5d8] sm:$0xf]
        %v6650 = vld [vmem:[%s6399 + $0x5dc] sm:$0xff]
        %v6651 = vld [vmem:[%s6399 + $0x5e4] sm:$0xf]
        %v6652 = vld [vmem:[%s6399 + $0x5e8] sm:$0xff]
        %v6653 = vld [vmem:[%s6399 + $0x5f0] sm:$0xf]
        %v6654 = vld [vmem:[%s6399 + $0x5f4] sm:$0xff]
        %v6655 = vld [vmem:[%s6399 + $0x5fc] sm:$0xf]
        %v6656 = vld [vmem:[%s6399 + $0x600] sm:$0xff]
        %v6657 = vld [vmem:[%s6399 + $0x608] sm:$0xf]
        %v6658 = vld [vmem:[%s6399 + $0x60c] sm:$0xff]
        %v6659 = vld [vmem:[%s6399 + $0x614] sm:$0xf]
        %v6660 = vld [vmem:[%s6399 + $0x618] sm:$0xff]
        %v6661 = vld [vmem:[%s6399 + $0x620] sm:$0xf]
        %v6662 = vld [vmem:[%s6399 + $0x624] sm:$0xff]
        %v6663 = vld [vmem:[%s6399 + $0x62c] sm:$0xf]
        %v6664 = vld [vmem:[%s6399 + $0x630] sm:$0xff]
        %v6665 = vld [vmem:[%s6399 + $0x638] sm:$0xf]
        %v6666 = vld [vmem:[%s6399 + $0x63c] sm:$0xff]
        %v6667 = vld [vmem:[%s6399 + $0x644] sm:$0xf]
        %v6668 = vld [vmem:[%s6399 + $0x648] sm:$0xff]
        %v6669 = vld [vmem:[%s6399 + $0x650] sm:$0xf]
        %v6670 = vld [vmem:[%s6399 + $0x654] sm:$0xff]
        %v6671 = vld [vmem:[%s6399 + $0x65c] sm:$0xf]
        %v6672 = vld [vmem:[%s6399 + $0x660] sm:$0xff]
        %v6673 = vld [vmem:[%s6399 + $0x668] sm:$0xf]
        %v6674 = vld [vmem:[%s6399 + $0x66c] sm:$0xff]
        %v6675 = vld [vmem:[%s6399 + $0x674] sm:$0xf]
        %v6676 = vld [vmem:[%s6399 + $0x678] sm:$0xff]
        %v6677 = vld [vmem:[%s6399 + $0x680] sm:$0xf]
        %v6678 = vld [vmem:[%s6399 + $0x684] sm:$0xff]
        %v6679 = vld [vmem:[%s6399 + $0x68c] sm:$0xf]
        %v6680 = vld [vmem:[%s6399 + $0x690] sm:$0xff]
        %v6681 = vld [vmem:[%s6399 + $0x698] sm:$0xf]
        %v6682 = vld [vmem:[%s6399 + $0x69c] sm:$0xff]
        %v6683 = vld [vmem:[%s6399 + $0x6a4] sm:$0xf]
        %v6684 = vld [vmem:[%s6399 + $0x6a8] sm:$0xff]
        %v6685 = vld [vmem:[%s6399 + $0x6b0] sm:$0xf]
        %v6686 = vld [vmem:[%s6399 + $0x6b4] sm:$0xff]
        %v6687 = vld [vmem:[%s6399 + $0x6bc] sm:$0xf]
        %v6688 = vld [vmem:[%s6399 + $0x6c0] sm:$0xff]
        %v6689 = vld [vmem:[%s6399 + $0x6c8] sm:$0xf]
        %v6690 = vld [vmem:[%s6399 + $0x6cc] sm:$0xff]
        %v6691 = vld [vmem:[%s6399 + $0x6d4] sm:$0xf]
        %v6692 = vld [vmem:[%s6399 + $0x6d8] sm:$0xff]
        %v6693 = vld [vmem:[%s6399 + $0x6e0] sm:$0xf]
        %v6694 = vld [vmem:[%s6399 + $0x6e4] sm:$0xff]
        %v6695 = vld [vmem:[%s6399 + $0x6ec] sm:$0xf]
        %v6696 = vld [vmem:[%s6399 + $0x6f0] sm:$0xff]
        %v6697 = vld [vmem:[%s6399 + $0x6f8] sm:$0xf]
        %v6698 = vld [vmem:[%s6399 + $0x6fc] sm:$0xff]
        %v6699 = vld [vmem:[%s6399 + $0x704] sm:$0xf]
        %v6700 = vld [vmem:[%s6399 + $0x708] sm:$0xff]
        %v6701 = vld [vmem:[%s6399 + $0x710] sm:$0xf]
        %v6702 = vld [vmem:[%s6399 + $0x714] sm:$0xff]
        %v6703 = vld [vmem:[%s6399 + $0x71c] sm:$0xf]
        %v6704 = vld [vmem:[%s6399 + $0x720] sm:$0xff]
        %v6705 = vld [vmem:[%s6399 + $0x728] sm:$0xf]
        %v6706 = vld [vmem:[%s6399 + $0x72c] sm:$0xff]
        %v6707 = vld [vmem:[%s6399 + $0x734] sm:$0xf]
        %v6708 = vld [vmem:[%s6399 + $0x738] sm:$0xff]
        %v6709 = vld [vmem:[%s6399 + $0x740] sm:$0xf]
        %v6710 = vld [vmem:[%s6399 + $0x744] sm:$0xff]
        %v6711 = vld [vmem:[%s6399 + $0x74c] sm:$0xf]
        %v6712 = vld [vmem:[%s6399 + $0x750] sm:$0xff]
        %v6713 = vld [vmem:[%s6399 + $0x758] sm:$0xf]
        %v6714 = vld [vmem:[%s6399 + $0x75c] sm:$0xff]
        %v6715 = vld [vmem:[%s6399 + $0x764] sm:$0xf]
        %v6716 = vld [vmem:[%s6399 + $0x768] sm:$0xff]
        %v6717 = vld [vmem:[%s6399 + $0x770] sm:$0xf]
        %v6718 = vld [vmem:[%s6399 + $0x774] sm:$0xff]
        %v6719 = vld [vmem:[%s6399 + $0x77c] sm:$0xf]
        %v6720 = vld [vmem:[%s6399 + $0x780] sm:$0xff]
        %v6721 = vld [vmem:[%s6399 + $0x788] sm:$0xf]
        %v6722 = vld [vmem:[%s6399 + $0x78c] sm:$0xff]
        %v6723 = vld [vmem:[%s6399 + $0x794] sm:$0xf]
        %v6724 = vld [vmem:[%s6399 + $0x798] sm:$0xff]
        %v6725 = vld [vmem:[%s6399 + $0x7a0] sm:$0xf]
        %v6726 = vld [vmem:[%s6399 + $0x7a4] sm:$0xff]
        %v6727 = vld [vmem:[%s6399 + $0x7ac] sm:$0xf]
        %v6728 = vld [vmem:[%s6399 + $0x7b0] sm:$0xff]
        %v6729 = vld [vmem:[%s6399 + $0x7b8] sm:$0xf]
        %v6730 = vld [vmem:[%s6399 + $0x7bc] sm:$0xff]
        %v6731 = vld [vmem:[%s6399 + $0x7c4] sm:$0xf]
        %v6732 = vld [vmem:[%s6399 + $0x7c8] sm:$0xff]
        %v6733 = vld [vmem:[%s6399 + $0x7d0] sm:$0xf]
        %v6734 = vld [vmem:[%s6399 + $0x7d4] sm:$0xff]
        %v6735 = vld [vmem:[%s6399 + $0x7dc] sm:$0xf]
        %v6736 = vld [vmem:[%s6399 + $0x7e0] sm:$0xff]
        %v6737 = vld [vmem:[%s6399 + $0x7e8] sm:$0xf]
        %v6738 = vld [vmem:[%s6399 + $0x7ec] sm:$0xff]
        %v6739 = vld [vmem:[%s6399 + $0x7f4] sm:$0xf]
        %v6740 = vld [vmem:[%s6399 + $0x7f8] sm:$0xff]
        %v6741 = vld [vmem:[%s6399 + $0x800] sm:$0xf]
        %v6742 = vld [vmem:[%s6399 + $0x804] sm:$0xff]
        %v6743 = vld [vmem:[%s6399 + $0x80c] sm:$0xf]
        %v6744 = vld [vmem:[%s6399 + $0x810] sm:$0xff]
        %v6745 = vld [vmem:[%s6399 + $0x818] sm:$0xf]
        %v6746 = vld [vmem:[%s6399 + $0x81c] sm:$0xff]
        %v6747 = vld [vmem:[%s6399 + $0x824] sm:$0xf]
        %v6748 = vld [vmem:[%s6399 + $0x828] sm:$0xff]
        %v6749 = vld [vmem:[%s6399 + $0x830] sm:$0xf]
        %v6750 = vld [vmem:[%s6399 + $0x834] sm:$0xff]
        %v6751 = vld [vmem:[%s6399 + $0x83c] sm:$0xf]
        %v6752 = vld [vmem:[%s6399 + $0x840] sm:$0xff]
        %v6753 = vld [vmem:[%s6399 + $0x848] sm:$0xf]
        %v6754 = vld [vmem:[%s6399 + $0x84c] sm:$0xff]
        %v6755 = vld [vmem:[%s6399 + $0x854] sm:$0xf]
        %v6756 = vld [vmem:[%s6399 + $0x858] sm:$0xff]
        %v6757 = vld [vmem:[%s6399 + $0x860] sm:$0xf]
        %v6758 = vld [vmem:[%s6399 + $0x864] sm:$0xff]
        %v6759 = vld [vmem:[%s6399 + $0x86c] sm:$0xf]
        %v6760 = vld [vmem:[%s6399 + $0x870] sm:$0xff]
        %v6761 = vld [vmem:[%s6399 + $0x878] sm:$0xf]
        %v6762 = vld [vmem:[%s6399 + $0x87c] sm:$0xff]
        %v6763 = vld [vmem:[%s6399 + $0x884] sm:$0xf]
        %v6764 = vld [vmem:[%s6399 + $0x888] sm:$0xff]
        %v6765 = vld [vmem:[%s6399 + $0x890] sm:$0xf]
        %v6766 = vld [vmem:[%s6399 + $0x894] sm:$0xff]
        %v6767 = vld [vmem:[%s6399 + $0x89c] sm:$0xf]
        %v6768 = vld [vmem:[%s6399 + $0x8a0] sm:$0xff]
        %v6769 = vld [vmem:[%s6399 + $0x8a8] sm:$0xf]
        %v6770 = vld [vmem:[%s6399 + $0x8ac] sm:$0xff]
        %v6771 = vld [vmem:[%s6399 + $0x8b4] sm:$0xf]
        %v6772 = vld [vmem:[%s6399 + $0x8b8] sm:$0xff]
        %v6773 = vld [vmem:[%s6399 + $0x8c0] sm:$0xf]
        %v6774 = vld [vmem:[%s6399 + $0x8c4] sm:$0xff]
        %v6775 = vld [vmem:[%s6399 + $0x8cc] sm:$0xf]
        %v6776 = vld [vmem:[%s6399 + $0x8d0] sm:$0xff]
        %v6777 = vld [vmem:[%s6399 + $0x8d8] sm:$0xf]
        %v6778 = vld [vmem:[%s6399 + $0x8dc] sm:$0xff]
        %v6779 = vld [vmem:[%s6399 + $0x8e4] sm:$0xf]
        %v6780 = vld [vmem:[%s6399 + $0x8e8] sm:$0xff]
        %v6781 = vld [vmem:[%s6399 + $0x8f0] sm:$0xf]
        %v6782 = vld [vmem:[%s6399 + $0x8f4] sm:$0xff]
        %v6783 = vld [vmem:[%s6399 + $0x8fc] sm:$0xf]
        %s6784 = scalar_lea.vmem [#allocation23], %s766
        %v6785 = vld [vmem:[%s6784] sm:$0x7]
        %v6787 = vlaneseq
        %v6788 = vshrl.u32 %v6787, 7
        %v6789 = vsub.s32 0, %v6788
        %v6790 = vrot.slane %v6785, %v6789
        %v6791 = vlaneseq
        %v6792 = vshrl.u32 %v6791, 7
        %v6793 = vsub.s32 1, %v6792
        %v6794 = vrot.slane %v6785, %v6793
        %v6795 = vlaneseq
        %v6796 = vshrl.u32 %v6795, 7
        %v6797 = vsub.s32 2, %v6796
        %v6798 = vrot.slane %v6785, %v6797
        %v7186 = vunpack.c.l.b16 %v6400
        %v7187 = vunpack.c.h.b16 %v6400
        %v7188 = vunpack.c.l.b16 %v6401
        %v7189 = vunpack.c.l.b16 %v6402
        %v7190 = vunpack.c.h.b16 %v6402
        %v7191 = vunpack.c.l.b16 %v6403
        %v7192 = vunpack.c.l.b16 %v6404
        %v7193 = vunpack.c.h.b16 %v6404
        %v7194 = vunpack.c.l.b16 %v6405
        %v7195 = vunpack.c.l.b16 %v6406
        %v7196 = vunpack.c.h.b16 %v6406
        %v7197 = vunpack.c.l.b16 %v6407
        %v7198 = vunpack.c.l.b16 %v6408
        %v7199 = vunpack.c.h.b16 %v6408
        %v7200 = vunpack.c.l.b16 %v6409
        %v7201 = vunpack.c.l.b16 %v6410
        %v7202 = vunpack.c.h.b16 %v6410
        %v7203 = vunpack.c.l.b16 %v6411
        %v7204 = vunpack.c.l.b16 %v6412
        %v7205 = vunpack.c.h.b16 %v6412
        %v7206 = vunpack.c.l.b16 %v6413
        %v7207 = vunpack.c.l.b16 %v6414
        %v7208 = vunpack.c.h.b16 %v6414
        %v7209 = vunpack.c.l.b16 %v6415
        %v7210 = vunpack.c.l.b16 %v6416
        %v7211 = vunpack.c.h.b16 %v6416
        %v7212 = vunpack.c.l.b16 %v6417
        %v7213 = vunpack.c.l.b16 %v6418
        %v7214 = vunpack.c.h.b16 %v6418
        %v7215 = vunpack.c.l.b16 %v6419
        %v7216 = vunpack.c.l.b16 %v6420
        %v7217 = vunpack.c.h.b16 %v6420
        %v7218 = vunpack.c.l.b16 %v6421
        %v7219 = vunpack.c.l.b16 %v6422
        %v7220 = vunpack.c.h.b16 %v6422
        %v7221 = vunpack.c.l.b16 %v6423
        %v7222 = vunpack.c.l.b16 %v6424
        %v7223 = vunpack.c.h.b16 %v6424
        %v7224 = vunpack.c.l.b16 %v6425
        %v7225 = vunpack.c.l.b16 %v6426
        %v7226 = vunpack.c.h.b16 %v6426
        %v7227 = vunpack.c.l.b16 %v6427
        %v7228 = vunpack.c.l.b16 %v6428
        %v7229 = vunpack.c.h.b16 %v6428
        %v7230 = vunpack.c.l.b16 %v6429
        %v7231 = vunpack.c.l.b16 %v6430
        %v7232 = vunpack.c.h.b16 %v6430
        %v7233 = vunpack.c.l.b16 %v6431
        %v7234 = vunpack.c.l.b16 %v6432
        %v7235 = vunpack.c.h.b16 %v6432
        %v7236 = vunpack.c.l.b16 %v6433
        %v7237 = vunpack.c.l.b16 %v6434
        %v7238 = vunpack.c.h.b16 %v6434
        %v7239 = vunpack.c.l.b16 %v6435
        %v7240 = vunpack.c.l.b16 %v6436
        %v7241 = vunpack.c.h.b16 %v6436
        %v7242 = vunpack.c.l.b16 %v6437
        %v7243 = vunpack.c.l.b16 %v6438
        %v7244 = vunpack.c.h.b16 %v6438
        %v7245 = vunpack.c.l.b16 %v6439
        %v7246 = vunpack.c.l.b16 %v6440
        %v7247 = vunpack.c.h.b16 %v6440
        %v7248 = vunpack.c.l.b16 %v6441
        %v7249 = vunpack.c.l.b16 %v6442
        %v7250 = vunpack.c.h.b16 %v6442
        %v7251 = vunpack.c.l.b16 %v6443
        %v7252 = vunpack.c.l.b16 %v6444
        %v7253 = vunpack.c.h.b16 %v6444
        %v7254 = vunpack.c.l.b16 %v6445
        %v7255 = vunpack.c.l.b16 %v6446
        %v7256 = vunpack.c.h.b16 %v6446
        %v7257 = vunpack.c.l.b16 %v6447
        %v7258 = vunpack.c.l.b16 %v6448
        %v7259 = vunpack.c.h.b16 %v6448
        %v7260 = vunpack.c.l.b16 %v6449
        %v7261 = vunpack.c.l.b16 %v6450
        %v7262 = vunpack.c.h.b16 %v6450
        %v7263 = vunpack.c.l.b16 %v6451
        %v7264 = vunpack.c.l.b16 %v6452
        %v7265 = vunpack.c.h.b16 %v6452
        %v7266 = vunpack.c.l.b16 %v6453
        %v7267 = vunpack.c.l.b16 %v6454
        %v7268 = vunpack.c.h.b16 %v6454
        %v7269 = vunpack.c.l.b16 %v6455
        %v7270 = vunpack.c.l.b16 %v6456
        %v7271 = vunpack.c.h.b16 %v6456
        %v7272 = vunpack.c.l.b16 %v6457
        %v7273 = vunpack.c.l.b16 %v6458
        %v7274 = vunpack.c.h.b16 %v6458
        %v7275 = vunpack.c.l.b16 %v6459
        %v7276 = vunpack.c.l.b16 %v6460
        %v7277 = vunpack.c.h.b16 %v6460
        %v7278 = vunpack.c.l.b16 %v6461
        %v7279 = vunpack.c.l.b16 %v6462
        %v7280 = vunpack.c.h.b16 %v6462
        %v7281 = vunpack.c.l.b16 %v6463
        %v7282 = vunpack.c.l.b16 %v6464
        %v7283 = vunpack.c.h.b16 %v6464
        %v7284 = vunpack.c.l.b16 %v6465
        %v7285 = vunpack.c.l.b16 %v6466
        %v7286 = vunpack.c.h.b16 %v6466
        %v7287 = vunpack.c.l.b16 %v6467
        %v7288 = vunpack.c.l.b16 %v6468
        %v7289 = vunpack.c.h.b16 %v6468
        %v7290 = vunpack.c.l.b16 %v6469
        %v7291 = vunpack.c.l.b16 %v6470
        %v7292 = vunpack.c.h.b16 %v6470
        %v7293 = vunpack.c.l.b16 %v6471
        %v7294 = vunpack.c.l.b16 %v6472
        %v7295 = vunpack.c.h.b16 %v6472
        %v7296 = vunpack.c.l.b16 %v6473
        %v7297 = vunpack.c.l.b16 %v6474
        %v7298 = vunpack.c.h.b16 %v6474
        %v7299 = vunpack.c.l.b16 %v6475
        %v7300 = vunpack.c.l.b16 %v6476
        %v7301 = vunpack.c.h.b16 %v6476
        %v7302 = vunpack.c.l.b16 %v6477
        %v7303 = vunpack.c.l.b16 %v6478
        %v7304 = vunpack.c.h.b16 %v6478
        %v7305 = vunpack.c.l.b16 %v6479
        %v7306 = vunpack.c.l.b16 %v6480
        %v7307 = vunpack.c.h.b16 %v6480
        %v7308 = vunpack.c.l.b16 %v6481
        %v7309 = vunpack.c.l.b16 %v6482
        %v7310 = vunpack.c.h.b16 %v6482
        %v7311 = vunpack.c.l.b16 %v6483
        %v7312 = vunpack.c.l.b16 %v6484
        %v7313 = vunpack.c.h.b16 %v6484
        %v7314 = vunpack.c.l.b16 %v6485
        %v7315 = vunpack.c.l.b16 %v6486
        %v7316 = vunpack.c.h.b16 %v6486
        %v7317 = vunpack.c.l.b16 %v6487
        %v7318 = vunpack.c.l.b16 %v6488
        %v7319 = vunpack.c.h.b16 %v6488
        %v7320 = vunpack.c.l.b16 %v6489
        %v7321 = vunpack.c.l.b16 %v6490
        %v7322 = vunpack.c.h.b16 %v6490
        %v7323 = vunpack.c.l.b16 %v6491
        %v7324 = vunpack.c.l.b16 %v6492
        %v7325 = vunpack.c.h.b16 %v6492
        %v7326 = vunpack.c.l.b16 %v6493
        %v7327 = vunpack.c.l.b16 %v6494
        %v7328 = vunpack.c.h.b16 %v6494
        %v7329 = vunpack.c.l.b16 %v6495
        %v7330 = vunpack.c.l.b16 %v6496
        %v7331 = vunpack.c.h.b16 %v6496
        %v7332 = vunpack.c.l.b16 %v6497
        %v7333 = vunpack.c.l.b16 %v6498
        %v7334 = vunpack.c.h.b16 %v6498
        %v7335 = vunpack.c.l.b16 %v6499
        %v7336 = vunpack.c.l.b16 %v6500
        %v7337 = vunpack.c.h.b16 %v6500
        %v7338 = vunpack.c.l.b16 %v6501
        %v7339 = vunpack.c.l.b16 %v6502
        %v7340 = vunpack.c.h.b16 %v6502
        %v7341 = vunpack.c.l.b16 %v6503
        %v7342 = vunpack.c.l.b16 %v6504
        %v7343 = vunpack.c.h.b16 %v6504
        %v7344 = vunpack.c.l.b16 %v6505
        %v7345 = vunpack.c.l.b16 %v6506
        %v7346 = vunpack.c.h.b16 %v6506
        %v7347 = vunpack.c.l.b16 %v6507
        %v7348 = vunpack.c.l.b16 %v6508
        %v7349 = vunpack.c.h.b16 %v6508
        %v7350 = vunpack.c.l.b16 %v6509
        %v7351 = vunpack.c.l.b16 %v6510
        %v7352 = vunpack.c.h.b16 %v6510
        %v7353 = vunpack.c.l.b16 %v6511
        %v7354 = vunpack.c.l.b16 %v6512
        %v7355 = vunpack.c.h.b16 %v6512
        %v7356 = vunpack.c.l.b16 %v6513
        %v7357 = vunpack.c.l.b16 %v6514
        %v7358 = vunpack.c.h.b16 %v6514
        %v7359 = vunpack.c.l.b16 %v6515
        %v7360 = vunpack.c.l.b16 %v6516
        %v7361 = vunpack.c.h.b16 %v6516
        %v7362 = vunpack.c.l.b16 %v6517
        %v7363 = vunpack.c.l.b16 %v6518
        %v7364 = vunpack.c.h.b16 %v6518
        %v7365 = vunpack.c.l.b16 %v6519
        %v7366 = vunpack.c.l.b16 %v6520
        %v7367 = vunpack.c.h.b16 %v6520
        %v7368 = vunpack.c.l.b16 %v6521
        %v7369 = vunpack.c.l.b16 %v6522
        %v7370 = vunpack.c.h.b16 %v6522
        %v7371 = vunpack.c.l.b16 %v6523
        %v7372 = vunpack.c.l.b16 %v6524
        %v7373 = vunpack.c.h.b16 %v6524
        %v7374 = vunpack.c.l.b16 %v6525
        %v7375 = vunpack.c.l.b16 %v6526
        %v7376 = vunpack.c.h.b16 %v6526
        %v7377 = vunpack.c.l.b16 %v6527
        %v7378 = vunpack.c.l.b16 %v6528
        %v7379 = vunpack.c.h.b16 %v6528
        %v7380 = vunpack.c.l.b16 %v6529
        %v7381 = vunpack.c.l.b16 %v6530
        %v7382 = vunpack.c.h.b16 %v6530
        %v7383 = vunpack.c.l.b16 %v6531
        %v7384 = vunpack.c.l.b16 %v6532
        %v7385 = vunpack.c.h.b16 %v6532
        %v7386 = vunpack.c.l.b16 %v6533
        %v7387 = vunpack.c.l.b16 %v6534
        %v7388 = vunpack.c.h.b16 %v6534
        %v7389 = vunpack.c.l.b16 %v6535
        %v7390 = vunpack.c.l.b16 %v6536
        %v7391 = vunpack.c.h.b16 %v6536
        %v7392 = vunpack.c.l.b16 %v6537
        %v7393 = vunpack.c.l.b16 %v6538
        %v7394 = vunpack.c.h.b16 %v6538
        %v7395 = vunpack.c.l.b16 %v6539
        %v7396 = vunpack.c.l.b16 %v6540
        %v7397 = vunpack.c.h.b16 %v6540
        %v7398 = vunpack.c.l.b16 %v6541
        %v7399 = vunpack.c.l.b16 %v6542
        %v7400 = vunpack.c.h.b16 %v6542
        %v7401 = vunpack.c.l.b16 %v6543
        %v7402 = vunpack.c.l.b16 %v6544
        %v7403 = vunpack.c.h.b16 %v6544
        %v7404 = vunpack.c.l.b16 %v6545
        %v7405 = vunpack.c.l.b16 %v6546
        %v7406 = vunpack.c.h.b16 %v6546
        %v7407 = vunpack.c.l.b16 %v6547
        %v7408 = vunpack.c.l.b16 %v6548
        %v7409 = vunpack.c.h.b16 %v6548
        %v7410 = vunpack.c.l.b16 %v6549
        %v7411 = vunpack.c.l.b16 %v6550
        %v7412 = vunpack.c.h.b16 %v6550
        %v7413 = vunpack.c.l.b16 %v6551
        %v7414 = vunpack.c.l.b16 %v6552
        %v7415 = vunpack.c.h.b16 %v6552
        %v7416 = vunpack.c.l.b16 %v6553
        %v7417 = vunpack.c.l.b16 %v6554
        %v7418 = vunpack.c.h.b16 %v6554
        %v7419 = vunpack.c.l.b16 %v6555
        %v7420 = vunpack.c.l.b16 %v6556
        %v7421 = vunpack.c.h.b16 %v6556
        %v7422 = vunpack.c.l.b16 %v6557
        %v7423 = vunpack.c.l.b16 %v6558
        %v7424 = vunpack.c.h.b16 %v6558
        %v7425 = vunpack.c.l.b16 %v6559
        %v7426 = vunpack.c.l.b16 %v6560
        %v7427 = vunpack.c.h.b16 %v6560
        %v7428 = vunpack.c.l.b16 %v6561
        %v7429 = vunpack.c.l.b16 %v6562
        %v7430 = vunpack.c.h.b16 %v6562
        %v7431 = vunpack.c.l.b16 %v6563
        %v7432 = vunpack.c.l.b16 %v6564
        %v7433 = vunpack.c.h.b16 %v6564
        %v7434 = vunpack.c.l.b16 %v6565
        %v7435 = vunpack.c.l.b16 %v6566
        %v7436 = vunpack.c.h.b16 %v6566
        %v7437 = vunpack.c.l.b16 %v6567
        %v7438 = vunpack.c.l.b16 %v6568
        %v7439 = vunpack.c.h.b16 %v6568
        %v7440 = vunpack.c.l.b16 %v6569
        %v7441 = vunpack.c.l.b16 %v6570
        %v7442 = vunpack.c.h.b16 %v6570
        %v7443 = vunpack.c.l.b16 %v6571
        %v7444 = vunpack.c.l.b16 %v6572
        %v7445 = vunpack.c.h.b16 %v6572
        %v7446 = vunpack.c.l.b16 %v6573
        %v7447 = vunpack.c.l.b16 %v6574
        %v7448 = vunpack.c.h.b16 %v6574
        %v7449 = vunpack.c.l.b16 %v6575
        %v7450 = vunpack.c.l.b16 %v6576
        %v7451 = vunpack.c.h.b16 %v6576
        %v7452 = vunpack.c.l.b16 %v6577
        %v7453 = vunpack.c.l.b16 %v6578
        %v7454 = vunpack.c.h.b16 %v6578
        %v7455 = vunpack.c.l.b16 %v6579
        %v7456 = vunpack.c.l.b16 %v6580
        %v7457 = vunpack.c.h.b16 %v6580
        %v7458 = vunpack.c.l.b16 %v6581
        %v7459 = vunpack.c.l.b16 %v6582
        %v7460 = vunpack.c.h.b16 %v6582
        %v7461 = vunpack.c.l.b16 %v6583
        %v7462 = vunpack.c.l.b16 %v6584
        %v7463 = vunpack.c.h.b16 %v6584
        %v7464 = vunpack.c.l.b16 %v6585
        %v7465 = vunpack.c.l.b16 %v6586
        %v7466 = vunpack.c.h.b16 %v6586
        %v7467 = vunpack.c.l.b16 %v6587
        %v7468 = vunpack.c.l.b16 %v6588
        %v7469 = vunpack.c.h.b16 %v6588
        %v7470 = vunpack.c.l.b16 %v6589
        %v7471 = vunpack.c.l.b16 %v6590
        %v7472 = vunpack.c.h.b16 %v6590
        %v7473 = vunpack.c.l.b16 %v6591
        %v7474 = vunpack.c.l.b16 %v6592
        %v7475 = vunpack.c.h.b16 %v6592
        %v7476 = vunpack.c.l.b16 %v6593
        %v7477 = vunpack.c.l.b16 %v6594
        %v7478 = vunpack.c.h.b16 %v6594
        %v7479 = vunpack.c.l.b16 %v6595
        %v7480 = vunpack.c.l.b16 %v6596
        %v7481 = vunpack.c.h.b16 %v6596
        %v7482 = vunpack.c.l.b16 %v6597
        %v7483 = vunpack.c.l.b16 %v6598
        %v7484 = vunpack.c.h.b16 %v6598
        %v7485 = vunpack.c.l.b16 %v6599
        %v7486 = vunpack.c.l.b16 %v6600
        %v7487 = vunpack.c.h.b16 %v6600
        %v7488 = vunpack.c.l.b16 %v6601
        %v7489 = vunpack.c.l.b16 %v6602
        %v7490 = vunpack.c.h.b16 %v6602
        %v7491 = vunpack.c.l.b16 %v6603
        %v7492 = vunpack.c.l.b16 %v6604
        %v7493 = vunpack.c.h.b16 %v6604
        %v7494 = vunpack.c.l.b16 %v6605
        %v7495 = vunpack.c.l.b16 %v6606
        %v7496 = vunpack.c.h.b16 %v6606
        %v7497 = vunpack.c.l.b16 %v6607
        %v7498 = vunpack.c.l.b16 %v6608
        %v7499 = vunpack.c.h.b16 %v6608
        %v7500 = vunpack.c.l.b16 %v6609
        %v7501 = vunpack.c.l.b16 %v6610
        %v7502 = vunpack.c.h.b16 %v6610
        %v7503 = vunpack.c.l.b16 %v6611
        %v7504 = vunpack.c.l.b16 %v6612
        %v7505 = vunpack.c.h.b16 %v6612
        %v7506 = vunpack.c.l.b16 %v6613
        %v7507 = vunpack.c.l.b16 %v6614
        %v7508 = vunpack.c.h.b16 %v6614
        %v7509 = vunpack.c.l.b16 %v6615
        %v7510 = vunpack.c.l.b16 %v6616
        %v7511 = vunpack.c.h.b16 %v6616
        %v7512 = vunpack.c.l.b16 %v6617
        %v7513 = vunpack.c.l.b16 %v6618
        %v7514 = vunpack.c.h.b16 %v6618
        %v7515 = vunpack.c.l.b16 %v6619
        %v7516 = vunpack.c.l.b16 %v6620
        %v7517 = vunpack.c.h.b16 %v6620
        %v7518 = vunpack.c.l.b16 %v6621
        %v7519 = vunpack.c.l.b16 %v6622
        %v7520 = vunpack.c.h.b16 %v6622
        %v7521 = vunpack.c.l.b16 %v6623
        %v7522 = vunpack.c.l.b16 %v6624
        %v7523 = vunpack.c.h.b16 %v6624
        %v7524 = vunpack.c.l.b16 %v6625
        %v7525 = vunpack.c.l.b16 %v6626
        %v7526 = vunpack.c.h.b16 %v6626
        %v7527 = vunpack.c.l.b16 %v6627
        %v7528 = vunpack.c.l.b16 %v6628
        %v7529 = vunpack.c.h.b16 %v6628
        %v7530 = vunpack.c.l.b16 %v6629
        %v7531 = vunpack.c.l.b16 %v6630
        %v7532 = vunpack.c.h.b16 %v6630
        %v7533 = vunpack.c.l.b16 %v6631
        %v7534 = vunpack.c.l.b16 %v6632
        %v7535 = vunpack.c.h.b16 %v6632
        %v7536 = vunpack.c.l.b16 %v6633
        %v7537 = vunpack.c.l.b16 %v6634
        %v7538 = vunpack.c.h.b16 %v6634
        %v7539 = vunpack.c.l.b16 %v6635
        %v7540 = vunpack.c.l.b16 %v6636
        %v7541 = vunpack.c.h.b16 %v6636
        %v7542 = vunpack.c.l.b16 %v6637
        %v7543 = vunpack.c.l.b16 %v6638
        %v7544 = vunpack.c.h.b16 %v6638
        %v7545 = vunpack.c.l.b16 %v6639
        %v7546 = vunpack.c.l.b16 %v6640
        %v7547 = vunpack.c.h.b16 %v6640
        %v7548 = vunpack.c.l.b16 %v6641
        %v7549 = vunpack.c.l.b16 %v6642
        %v7550 = vunpack.c.h.b16 %v6642
        %v7551 = vunpack.c.l.b16 %v6643
        %v7552 = vunpack.c.l.b16 %v6644
        %v7553 = vunpack.c.h.b16 %v6644
        %v7554 = vunpack.c.l.b16 %v6645
        %v7555 = vunpack.c.l.b16 %v6646
        %v7556 = vunpack.c.h.b16 %v6646
        %v7557 = vunpack.c.l.b16 %v6647
        %v7558 = vunpack.c.l.b16 %v6648
        %v7559 = vunpack.c.h.b16 %v6648
        %v7560 = vunpack.c.l.b16 %v6649
        %v7561 = vunpack.c.l.b16 %v6650
        %v7562 = vunpack.c.h.b16 %v6650
        %v7563 = vunpack.c.l.b16 %v6651
        %v7564 = vunpack.c.l.b16 %v6652
        %v7565 = vunpack.c.h.b16 %v6652
        %v7566 = vunpack.c.l.b16 %v6653
        %v7567 = vunpack.c.l.b16 %v6654
        %v7568 = vunpack.c.h.b16 %v6654
        %v7569 = vunpack.c.l.b16 %v6655
        %v7570 = vunpack.c.l.b16 %v6656
        %v7571 = vunpack.c.h.b16 %v6656
        %v7572 = vunpack.c.l.b16 %v6657
        %v7573 = vunpack.c.l.b16 %v6658
        %v7574 = vunpack.c.h.b16 %v6658
        %v7575 = vunpack.c.l.b16 %v6659
        %v7576 = vunpack.c.l.b16 %v6660
        %v7577 = vunpack.c.h.b16 %v6660
        %v7578 = vunpack.c.l.b16 %v6661
        %v7579 = vunpack.c.l.b16 %v6662
        %v7580 = vunpack.c.h.b16 %v6662
        %v7581 = vunpack.c.l.b16 %v6663
        %v7582 = vunpack.c.l.b16 %v6664
        %v7583 = vunpack.c.h.b16 %v6664
        %v7584 = vunpack.c.l.b16 %v6665
        %v7585 = vunpack.c.l.b16 %v6666
        %v7586 = vunpack.c.h.b16 %v6666
        %v7587 = vunpack.c.l.b16 %v6667
        %v7588 = vunpack.c.l.b16 %v6668
        %v7589 = vunpack.c.h.b16 %v6668
        %v7590 = vunpack.c.l.b16 %v6669
        %v7591 = vunpack.c.l.b16 %v6670
        %v7592 = vunpack.c.h.b16 %v6670
        %v7593 = vunpack.c.l.b16 %v6671
        %v7594 = vunpack.c.l.b16 %v6672
        %v7595 = vunpack.c.h.b16 %v6672
        %v7596 = vunpack.c.l.b16 %v6673
        %v7597 = vunpack.c.l.b16 %v6674
        %v7598 = vunpack.c.h.b16 %v6674
        %v7599 = vunpack.c.l.b16 %v6675
        %v7600 = vunpack.c.l.b16 %v6676
        %v7601 = vunpack.c.h.b16 %v6676
        %v7602 = vunpack.c.l.b16 %v6677
        %v7603 = vunpack.c.l.b16 %v6678
        %v7604 = vunpack.c.h.b16 %v6678
        %v7605 = vunpack.c.l.b16 %v6679
        %v7606 = vunpack.c.l.b16 %v6680
        %v7607 = vunpack.c.h.b16 %v6680
        %v7608 = vunpack.c.l.b16 %v6681
        %v7609 = vunpack.c.l.b16 %v6682
        %v7610 = vunpack.c.h.b16 %v6682
        %v7611 = vunpack.c.l.b16 %v6683
        %v7612 = vunpack.c.l.b16 %v6684
        %v7613 = vunpack.c.h.b16 %v6684
        %v7614 = vunpack.c.l.b16 %v6685
        %v7615 = vunpack.c.l.b16 %v6686
        %v7616 = vunpack.c.h.b16 %v6686
        %v7617 = vunpack.c.l.b16 %v6687
        %v7618 = vunpack.c.l.b16 %v6688
        %v7619 = vunpack.c.h.b16 %v6688
        %v7620 = vunpack.c.l.b16 %v6689
        %v7621 = vunpack.c.l.b16 %v6690
        %v7622 = vunpack.c.h.b16 %v6690
        %v7623 = vunpack.c.l.b16 %v6691
        %v7624 = vunpack.c.l.b16 %v6692
        %v7625 = vunpack.c.h.b16 %v6692
        %v7626 = vunpack.c.l.b16 %v6693
        %v7627 = vunpack.c.l.b16 %v6694
        %v7628 = vunpack.c.h.b16 %v6694
        %v7629 = vunpack.c.l.b16 %v6695
        %v7630 = vunpack.c.l.b16 %v6696
        %v7631 = vunpack.c.h.b16 %v6696
        %v7632 = vunpack.c.l.b16 %v6697
        %v7633 = vunpack.c.l.b16 %v6698
        %v7634 = vunpack.c.h.b16 %v6698
        %v7635 = vunpack.c.l.b16 %v6699
        %v7636 = vunpack.c.l.b16 %v6700
        %v7637 = vunpack.c.h.b16 %v6700
        %v7638 = vunpack.c.l.b16 %v6701
        %v7639 = vunpack.c.l.b16 %v6702
        %v7640 = vunpack.c.h.b16 %v6702
        %v7641 = vunpack.c.l.b16 %v6703
        %v7642 = vunpack.c.l.b16 %v6704
        %v7643 = vunpack.c.h.b16 %v6704
        %v7644 = vunpack.c.l.b16 %v6705
        %v7645 = vunpack.c.l.b16 %v6706
        %v7646 = vunpack.c.h.b16 %v6706
        %v7647 = vunpack.c.l.b16 %v6707
        %v7648 = vunpack.c.l.b16 %v6708
        %v7649 = vunpack.c.h.b16 %v6708
        %v7650 = vunpack.c.l.b16 %v6709
        %v7651 = vunpack.c.l.b16 %v6710
        %v7652 = vunpack.c.h.b16 %v6710
        %v7653 = vunpack.c.l.b16 %v6711
        %v7654 = vunpack.c.l.b16 %v6712
        %v7655 = vunpack.c.h.b16 %v6712
        %v7656 = vunpack.c.l.b16 %v6713
        %v7657 = vunpack.c.l.b16 %v6714
        %v7658 = vunpack.c.h.b16 %v6714
        %v7659 = vunpack.c.l.b16 %v6715
        %v7660 = vunpack.c.l.b16 %v6716
        %v7661 = vunpack.c.h.b16 %v6716
        %v7662 = vunpack.c.l.b16 %v6717
        %v7663 = vunpack.c.l.b16 %v6718
        %v7664 = vunpack.c.h.b16 %v6718
        %v7665 = vunpack.c.l.b16 %v6719
        %v7666 = vunpack.c.l.b16 %v6720
        %v7667 = vunpack.c.h.b16 %v6720
        %v7668 = vunpack.c.l.b16 %v6721
        %v7669 = vunpack.c.l.b16 %v6722
        %v7670 = vunpack.c.h.b16 %v6722
        %v7671 = vunpack.c.l.b16 %v6723
        %v7672 = vunpack.c.l.b16 %v6724
        %v7673 = vunpack.c.h.b16 %v6724
        %v7674 = vunpack.c.l.b16 %v6725
        %v7675 = vunpack.c.l.b16 %v6726
        %v7676 = vunpack.c.h.b16 %v6726
        %v7677 = vunpack.c.l.b16 %v6727
        %v7678 = vunpack.c.l.b16 %v6728
        %v7679 = vunpack.c.h.b16 %v6728
        %v7680 = vunpack.c.l.b16 %v6729
        %v7681 = vunpack.c.l.b16 %v6730
        %v7682 = vunpack.c.h.b16 %v6730
        %v7683 = vunpack.c.l.b16 %v6731
        %v7684 = vunpack.c.l.b16 %v6732
        %v7685 = vunpack.c.h.b16 %v6732
        %v7686 = vunpack.c.l.b16 %v6733
        %v7687 = vunpack.c.l.b16 %v6734
        %v7688 = vunpack.c.h.b16 %v6734
        %v7689 = vunpack.c.l.b16 %v6735
        %v7690 = vunpack.c.l.b16 %v6736
        %v7691 = vunpack.c.h.b16 %v6736
        %v7692 = vunpack.c.l.b16 %v6737
        %v7693 = vunpack.c.l.b16 %v6738
        %v7694 = vunpack.c.h.b16 %v6738
        %v7695 = vunpack.c.l.b16 %v6739
        %v7696 = vunpack.c.l.b16 %v6740
        %v7697 = vunpack.c.h.b16 %v6740
        %v7698 = vunpack.c.l.b16 %v6741
        %v7699 = vunpack.c.l.b16 %v6742
        %v7700 = vunpack.c.h.b16 %v6742
        %v7701 = vunpack.c.l.b16 %v6743
        %v7702 = vunpack.c.l.b16 %v6744
        %v7703 = vunpack.c.h.b16 %v6744
        %v7704 = vunpack.c.l.b16 %v6745
        %v7705 = vunpack.c.l.b16 %v6746
        %v7706 = vunpack.c.h.b16 %v6746
        %v7707 = vunpack.c.l.b16 %v6747
        %v7708 = vunpack.c.l.b16 %v6748
        %v7709 = vunpack.c.h.b16 %v6748
        %v7710 = vunpack.c.l.b16 %v6749
        %v7711 = vunpack.c.l.b16 %v6750
        %v7712 = vunpack.c.h.b16 %v6750
        %v7713 = vunpack.c.l.b16 %v6751
        %v7714 = vunpack.c.l.b16 %v6752
        %v7715 = vunpack.c.h.b16 %v6752
        %v7716 = vunpack.c.l.b16 %v6753
        %v7717 = vunpack.c.l.b16 %v6754
        %v7718 = vunpack.c.h.b16 %v6754
        %v7719 = vunpack.c.l.b16 %v6755
        %v7720 = vunpack.c.l.b16 %v6756
        %v7721 = vunpack.c.h.b16 %v6756
        %v7722 = vunpack.c.l.b16 %v6757
        %v7723 = vunpack.c.l.b16 %v6758
        %v7724 = vunpack.c.h.b16 %v6758
        %v7725 = vunpack.c.l.b16 %v6759
        %v7726 = vunpack.c.l.b16 %v6760
        %v7727 = vunpack.c.h.b16 %v6760
        %v7728 = vunpack.c.l.b16 %v6761
        %v7729 = vunpack.c.l.b16 %v6762
        %v7730 = vunpack.c.h.b16 %v6762
        %v7731 = vunpack.c.l.b16 %v6763
        %v7732 = vunpack.c.l.b16 %v6764
        %v7733 = vunpack.c.h.b16 %v6764
        %v7734 = vunpack.c.l.b16 %v6765
        %v7735 = vunpack.c.l.b16 %v6766
        %v7736 = vunpack.c.h.b16 %v6766
        %v7737 = vunpack.c.l.b16 %v6767
        %v7738 = vunpack.c.l.b16 %v6768
        %v7739 = vunpack.c.h.b16 %v6768
        %v7740 = vunpack.c.l.b16 %v6769
        %v7741 = vunpack.c.l.b16 %v6770
        %v7742 = vunpack.c.h.b16 %v6770
        %v7743 = vunpack.c.l.b16 %v6771
        %v7744 = vunpack.c.l.b16 %v6772
        %v7745 = vunpack.c.h.b16 %v6772
        %v7746 = vunpack.c.l.b16 %v6773
        %v7747 = vunpack.c.l.b16 %v6774
        %v7748 = vunpack.c.h.b16 %v6774
        %v7749 = vunpack.c.l.b16 %v6775
        %v7750 = vunpack.c.l.b16 %v6776
        %v7751 = vunpack.c.h.b16 %v6776
        %v7752 = vunpack.c.l.b16 %v6777
        %v7753 = vunpack.c.l.b16 %v6778
        %v7754 = vunpack.c.h.b16 %v6778
        %v7755 = vunpack.c.l.b16 %v6779
        %v7756 = vunpack.c.l.b16 %v6780
        %v7757 = vunpack.c.h.b16 %v6780
        %v7758 = vunpack.c.l.b16 %v6781
        %v7759 = vunpack.c.l.b16 %v6782
        %v7760 = vunpack.c.h.b16 %v6782
        %v7761 = vunpack.c.l.b16 %v6783
        %v7762 = vpack.c.b16 %v7189, %v7186
        %v7763 = vpack.c.b16 %v7190, %v7187
        %v7764 = vpack.c.b16 %v7191, %v7188
        %v7765 = vpack.c.b16 %v7195, %v7192
        %v7766 = vpack.c.b16 %v7196, %v7193
        %v7767 = vpack.c.b16 %v7197, %v7194
        %v7768 = vpack.c.b16 %v7201, %v7198
        %v7769 = vpack.c.b16 %v7202, %v7199
        %v7770 = vpack.c.b16 %v7203, %v7200
        %v7771 = vpack.c.b16 %v7207, %v7204
        %v7772 = vpack.c.b16 %v7208, %v7205
        %v7773 = vpack.c.b16 %v7209, %v7206
        %v7774 = vpack.c.b16 %v7213, %v7210
        %v7775 = vpack.c.b16 %v7214, %v7211
        %v7776 = vpack.c.b16 %v7215, %v7212
        %v7777 = vpack.c.b16 %v7219, %v7216
        %v7778 = vpack.c.b16 %v7220, %v7217
        %v7779 = vpack.c.b16 %v7221, %v7218
        %v7780 = vpack.c.b16 %v7225, %v7222
        %v7781 = vpack.c.b16 %v7226, %v7223
        %v7782 = vpack.c.b16 %v7227, %v7224
        %v7783 = vpack.c.b16 %v7231, %v7228
        %v7784 = vpack.c.b16 %v7232, %v7229
        %v7785 = vpack.c.b16 %v7233, %v7230
        %v7786 = vpack.c.b16 %v7237, %v7234
        %v7787 = vpack.c.b16 %v7238, %v7235
        %v7788 = vpack.c.b16 %v7239, %v7236
        %v7789 = vpack.c.b16 %v7243, %v7240
        %v7790 = vpack.c.b16 %v7244, %v7241
        %v7791 = vpack.c.b16 %v7245, %v7242
        %v7792 = vpack.c.b16 %v7249, %v7246
        %v7793 = vpack.c.b16 %v7250, %v7247
        %v7794 = vpack.c.b16 %v7251, %v7248
        %v7795 = vpack.c.b16 %v7255, %v7252
        %v7796 = vpack.c.b16 %v7256, %v7253
        %v7797 = vpack.c.b16 %v7257, %v7254
        %v7798 = vpack.c.b16 %v7261, %v7258
        %v7799 = vpack.c.b16 %v7262, %v7259
        %v7800 = vpack.c.b16 %v7263, %v7260
        %v7801 = vpack.c.b16 %v7267, %v7264
        %v7802 = vpack.c.b16 %v7268, %v7265
        %v7803 = vpack.c.b16 %v7269, %v7266
        %v7804 = vpack.c.b16 %v7273, %v7270
        %v7805 = vpack.c.b16 %v7274, %v7271
        %v7806 = vpack.c.b16 %v7275, %v7272
        %v7807 = vpack.c.b16 %v7279, %v7276
        %v7808 = vpack.c.b16 %v7280, %v7277
        %v7809 = vpack.c.b16 %v7281, %v7278
        %v7810 = vpack.c.b16 %v7285, %v7282
        %v7811 = vpack.c.b16 %v7286, %v7283
        %v7812 = vpack.c.b16 %v7287, %v7284
        %v7813 = vpack.c.b16 %v7291, %v7288
        %v7814 = vpack.c.b16 %v7292, %v7289
        %v7815 = vpack.c.b16 %v7293, %v7290
        %v7816 = vpack.c.b16 %v7297, %v7294
        %v7817 = vpack.c.b16 %v7298, %v7295
        %v7818 = vpack.c.b16 %v7299, %v7296
        %v7819 = vpack.c.b16 %v7303, %v7300
        %v7820 = vpack.c.b16 %v7304, %v7301
        %v7821 = vpack.c.b16 %v7305, %v7302
        %v7822 = vpack.c.b16 %v7309, %v7306
        %v7823 = vpack.c.b16 %v7310, %v7307
        %v7824 = vpack.c.b16 %v7311, %v7308
        %v7825 = vpack.c.b16 %v7315, %v7312
        %v7826 = vpack.c.b16 %v7316, %v7313
        %v7827 = vpack.c.b16 %v7317, %v7314
        %v7828 = vpack.c.b16 %v7321, %v7318
        %v7829 = vpack.c.b16 %v7322, %v7319
        %v7830 = vpack.c.b16 %v7323, %v7320
        %v7831 = vpack.c.b16 %v7327, %v7324
        %v7832 = vpack.c.b16 %v7328, %v7325
        %v7833 = vpack.c.b16 %v7329, %v7326
        %v7834 = vpack.c.b16 %v7333, %v7330
        %v7835 = vpack.c.b16 %v7334, %v7331
        %v7836 = vpack.c.b16 %v7335, %v7332
        %v7837 = vpack.c.b16 %v7339, %v7336
        %v7838 = vpack.c.b16 %v7340, %v7337
        %v7839 = vpack.c.b16 %v7341, %v7338
        %v7840 = vpack.c.b16 %v7345, %v7342
        %v7841 = vpack.c.b16 %v7346, %v7343
        %v7842 = vpack.c.b16 %v7347, %v7344
        %v7843 = vpack.c.b16 %v7351, %v7348
        %v7844 = vpack.c.b16 %v7352, %v7349
        %v7845 = vpack.c.b16 %v7353, %v7350
        %v7846 = vpack.c.b16 %v7357, %v7354
        %v7847 = vpack.c.b16 %v7358, %v7355
        %v7848 = vpack.c.b16 %v7359, %v7356
        %v7849 = vpack.c.b16 %v7363, %v7360
        %v7850 = vpack.c.b16 %v7364, %v7361
        %v7851 = vpack.c.b16 %v7365, %v7362
        %v7852 = vpack.c.b16 %v7369, %v7366
        %v7853 = vpack.c.b16 %v7370, %v7367
        %v7854 = vpack.c.b16 %v7371, %v7368
        %v7855 = vpack.c.b16 %v7375, %v7372
        %v7856 = vpack.c.b16 %v7376, %v7373
        %v7857 = vpack.c.b16 %v7377, %v7374
        %v7858 = vpack.c.b16 %v7381, %v7378
        %v7859 = vpack.c.b16 %v7382, %v7379
        %v7860 = vpack.c.b16 %v7383, %v7380
        %v7861 = vpack.c.b16 %v7387, %v7384
        %v7862 = vpack.c.b16 %v7388, %v7385
        %v7863 = vpack.c.b16 %v7389, %v7386
        %v7864 = vpack.c.b16 %v7393, %v7390
        %v7865 = vpack.c.b16 %v7394, %v7391
        %v7866 = vpack.c.b16 %v7395, %v7392
        %v7867 = vpack.c.b16 %v7399, %v7396
        %v7868 = vpack.c.b16 %v7400, %v7397
        %v7869 = vpack.c.b16 %v7401, %v7398
        %v7870 = vpack.c.b16 %v7405, %v7402
        %v7871 = vpack.c.b16 %v7406, %v7403
        %v7872 = vpack.c.b16 %v7407, %v7404
        %v7873 = vpack.c.b16 %v7411, %v7408
        %v7874 = vpack.c.b16 %v7412, %v7409
        %v7875 = vpack.c.b16 %v7413, %v7410
        %v7876 = vpack.c.b16 %v7417, %v7414
        %v7877 = vpack.c.b16 %v7418, %v7415
        %v7878 = vpack.c.b16 %v7419, %v7416
        %v7879 = vpack.c.b16 %v7423, %v7420
        %v7880 = vpack.c.b16 %v7424, %v7421
        %v7881 = vpack.c.b16 %v7425, %v7422
        %v7882 = vpack.c.b16 %v7429, %v7426
        %v7883 = vpack.c.b16 %v7430, %v7427
        %v7884 = vpack.c.b16 %v7431, %v7428
        %v7885 = vpack.c.b16 %v7435, %v7432
        %v7886 = vpack.c.b16 %v7436, %v7433
        %v7887 = vpack.c.b16 %v7437, %v7434
        %v7888 = vpack.c.b16 %v7441, %v7438
        %v7889 = vpack.c.b16 %v7442, %v7439
        %v7890 = vpack.c.b16 %v7443, %v7440
        %v7891 = vpack.c.b16 %v7447, %v7444
        %v7892 = vpack.c.b16 %v7448, %v7445
        %v7893 = vpack.c.b16 %v7449, %v7446
        %v7894 = vpack.c.b16 %v7453, %v7450
        %v7895 = vpack.c.b16 %v7454, %v7451
        %v7896 = vpack.c.b16 %v7455, %v7452
        %v7897 = vpack.c.b16 %v7459, %v7456
        %v7898 = vpack.c.b16 %v7460, %v7457
        %v7899 = vpack.c.b16 %v7461, %v7458
        %v7900 = vpack.c.b16 %v7465, %v7462
        %v7901 = vpack.c.b16 %v7466, %v7463
        %v7902 = vpack.c.b16 %v7467, %v7464
        %v7903 = vpack.c.b16 %v7471, %v7468
        %v7904 = vpack.c.b16 %v7472, %v7469
        %v7905 = vpack.c.b16 %v7473, %v7470
        %v7906 = vpack.c.b16 %v7477, %v7474
        %v7907 = vpack.c.b16 %v7478, %v7475
        %v7908 = vpack.c.b16 %v7479, %v7476
        %v7909 = vpack.c.b16 %v7483, %v7480
        %v7910 = vpack.c.b16 %v7484, %v7481
        %v7911 = vpack.c.b16 %v7485, %v7482
        %v7912 = vpack.c.b16 %v7489, %v7486
        %v7913 = vpack.c.b16 %v7490, %v7487
        %v7914 = vpack.c.b16 %v7491, %v7488
        %v7915 = vpack.c.b16 %v7495, %v7492
        %v7916 = vpack.c.b16 %v7496, %v7493
        %v7917 = vpack.c.b16 %v7497, %v7494
        %v7918 = vpack.c.b16 %v7501, %v7498
        %v7919 = vpack.c.b16 %v7502, %v7499
        %v7920 = vpack.c.b16 %v7503, %v7500
        %v7921 = vpack.c.b16 %v7507, %v7504
        %v7922 = vpack.c.b16 %v7508, %v7505
        %v7923 = vpack.c.b16 %v7509, %v7506
        %v7924 = vpack.c.b16 %v7513, %v7510
        %v7925 = vpack.c.b16 %v7514, %v7511
        %v7926 = vpack.c.b16 %v7515, %v7512
        %v7927 = vpack.c.b16 %v7519, %v7516
        %v7928 = vpack.c.b16 %v7520, %v7517
        %v7929 = vpack.c.b16 %v7521, %v7518
        %v7930 = vpack.c.b16 %v7525, %v7522
        %v7931 = vpack.c.b16 %v7526, %v7523
        %v7932 = vpack.c.b16 %v7527, %v7524
        %v7933 = vpack.c.b16 %v7531, %v7528
        %v7934 = vpack.c.b16 %v7532, %v7529
        %v7935 = vpack.c.b16 %v7533, %v7530
        %v7936 = vpack.c.b16 %v7537, %v7534
        %v7937 = vpack.c.b16 %v7538, %v7535
        %v7938 = vpack.c.b16 %v7539, %v7536
        %v7939 = vpack.c.b16 %v7543, %v7540
        %v7940 = vpack.c.b16 %v7544, %v7541
        %v7941 = vpack.c.b16 %v7545, %v7542
        %v7942 = vpack.c.b16 %v7549, %v7546
        %v7943 = vpack.c.b16 %v7550, %v7547
        %v7944 = vpack.c.b16 %v7551, %v7548
        %v7945 = vpack.c.b16 %v7555, %v7552
        %v7946 = vpack.c.b16 %v7556, %v7553
        %v7947 = vpack.c.b16 %v7557, %v7554
        %v7948 = vpack.c.b16 %v7561, %v7558
        %v7949 = vpack.c.b16 %v7562, %v7559
        %v7950 = vpack.c.b16 %v7563, %v7560
        %v7951 = vpack.c.b16 %v7567, %v7564
        %v7952 = vpack.c.b16 %v7568, %v7565
        %v7953 = vpack.c.b16 %v7569, %v7566
        %v7954 = vpack.c.b16 %v7573, %v7570
        %v7955 = vpack.c.b16 %v7574, %v7571
        %v7956 = vpack.c.b16 %v7575, %v7572
        %v7957 = vpack.c.b16 %v7579, %v7576
        %v7958 = vpack.c.b16 %v7580, %v7577
        %v7959 = vpack.c.b16 %v7581, %v7578
        %v7960 = vpack.c.b16 %v7585, %v7582
        %v7961 = vpack.c.b16 %v7586, %v7583
        %v7962 = vpack.c.b16 %v7587, %v7584
        %v7963 = vpack.c.b16 %v7591, %v7588
        %v7964 = vpack.c.b16 %v7592, %v7589
        %v7965 = vpack.c.b16 %v7593, %v7590
        %v7966 = vpack.c.b16 %v7597, %v7594
        %v7967 = vpack.c.b16 %v7598, %v7595
        %v7968 = vpack.c.b16 %v7599, %v7596
        %v7969 = vpack.c.b16 %v7603, %v7600
        %v7970 = vpack.c.b16 %v7604, %v7601
        %v7971 = vpack.c.b16 %v7605, %v7602
        %v7972 = vpack.c.b16 %v7609, %v7606
        %v7973 = vpack.c.b16 %v7610, %v7607
        %v7974 = vpack.c.b16 %v7611, %v7608
        %v7975 = vpack.c.b16 %v7615, %v7612
        %v7976 = vpack.c.b16 %v7616, %v7613
        %v7977 = vpack.c.b16 %v7617, %v7614
        %v7978 = vpack.c.b16 %v7621, %v7618
        %v7979 = vpack.c.b16 %v7622, %v7619
        %v7980 = vpack.c.b16 %v7623, %v7620
        %v7981 = vpack.c.b16 %v7627, %v7624
        %v7982 = vpack.c.b16 %v7628, %v7625
        %v7983 = vpack.c.b16 %v7629, %v7626
        %v7984 = vpack.c.b16 %v7633, %v7630
        %v7985 = vpack.c.b16 %v7634, %v7631
        %v7986 = vpack.c.b16 %v7635, %v7632
        %v7987 = vpack.c.b16 %v7639, %v7636
        %v7988 = vpack.c.b16 %v7640, %v7637
        %v7989 = vpack.c.b16 %v7641, %v7638
        %v7990 = vpack.c.b16 %v7645, %v7642
        %v7991 = vpack.c.b16 %v7646, %v7643
        %v7992 = vpack.c.b16 %v7647, %v7644
        %v7993 = vpack.c.b16 %v7651, %v7648
        %v7994 = vpack.c.b16 %v7652, %v7649
        %v7995 = vpack.c.b16 %v7653, %v7650
        %v7996 = vpack.c.b16 %v7657, %v7654
        %v7997 = vpack.c.b16 %v7658, %v7655
        %v7998 = vpack.c.b16 %v7659, %v7656
        %v7999 = vpack.c.b16 %v7663, %v7660
        %v8000 = vpack.c.b16 %v7664, %v7661
        %v8001 = vpack.c.b16 %v7665, %v7662
        %v8002 = vpack.c.b16 %v7669, %v7666
        %v8003 = vpack.c.b16 %v7670, %v7667
        %v8004 = vpack.c.b16 %v7671, %v7668
        %v8005 = vpack.c.b16 %v7675, %v7672
        %v8006 = vpack.c.b16 %v7676, %v7673
        %v8007 = vpack.c.b16 %v7677, %v7674
        %v8008 = vpack.c.b16 %v7681, %v7678
        %v8009 = vpack.c.b16 %v7682, %v7679
        %v8010 = vpack.c.b16 %v7683, %v7680
        %v8011 = vpack.c.b16 %v7687, %v7684
        %v8012 = vpack.c.b16 %v7688, %v7685
        %v8013 = vpack.c.b16 %v7689, %v7686
        %v8014 = vpack.c.b16 %v7693, %v7690
        %v8015 = vpack.c.b16 %v7694, %v7691
        %v8016 = vpack.c.b16 %v7695, %v7692
        %v8017 = vpack.c.b16 %v7699, %v7696
        %v8018 = vpack.c.b16 %v7700, %v7697
        %v8019 = vpack.c.b16 %v7701, %v7698
        %v8020 = vpack.c.b16 %v7705, %v7702
        %v8021 = vpack.c.b16 %v7706, %v7703
        %v8022 = vpack.c.b16 %v7707, %v7704
        %v8023 = vpack.c.b16 %v7711, %v7708
        %v8024 = vpack.c.b16 %v7712, %v7709
        %v8025 = vpack.c.b16 %v7713, %v7710
        %v8026 = vpack.c.b16 %v7717, %v7714
        %v8027 = vpack.c.b16 %v7718, %v7715
        %v8028 = vpack.c.b16 %v7719, %v7716
        %v8029 = vpack.c.b16 %v7723, %v7720
        %v8030 = vpack.c.b16 %v7724, %v7721
        %v8031 = vpack.c.b16 %v7725, %v7722
        %v8032 = vpack.c.b16 %v7729, %v7726
        %v8033 = vpack.c.b16 %v7730, %v7727
        %v8034 = vpack.c.b16 %v7731, %v7728
        %v8035 = vpack.c.b16 %v7735, %v7732
        %v8036 = vpack.c.b16 %v7736, %v7733
        %v8037 = vpack.c.b16 %v7737, %v7734
        %v8038 = vpack.c.b16 %v7741, %v7738
        %v8039 = vpack.c.b16 %v7742, %v7739
        %v8040 = vpack.c.b16 %v7743, %v7740
        %v8041 = vpack.c.b16 %v7747, %v7744
        %v8042 = vpack.c.b16 %v7748, %v7745
        %v8043 = vpack.c.b16 %v7749, %v7746
        %v8044 = vpack.c.b16 %v7753, %v7750
        %v8045 = vpack.c.b16 %v7754, %v7751
        %v8046 = vpack.c.b16 %v7755, %v7752
        %v8047 = vpack.c.b16 %v7759, %v7756
        %v8048 = vpack.c.b16 %v7760, %v7757
        %v8049 = vpack.c.b16 %v7761, %v7758
        %8338 = vmatprep.subr.bf16.mxu0 %v7763
        %8339 = vmatpush1.bf16.msra.mxu0 %v7762
        %8340 = vmatprep.subr.bf16.mxu0 %v7766
        %8341 = vmatpush1.bf16.msra.mxu0 %v7765
        %8342 = vmatprep.subr.bf16.mxu0 %v7769
        %8343 = vmatpush1.bf16.msra.mxu0 %v7768
        %8344 = vmatprep.subr.bf16.mxu0 %v7772
        %8345 = vmatpush1.bf16.msra.mxu0 %v7771
        %8346 = vmatprep.subr.bf16.mxu0 %v7775
        %8347 = vmatpush1.bf16.msra.mxu0 %v7774
        %8348 = vmatprep.subr.bf16.mxu0 %v7778
        %8349 = vmatpush1.bf16.msra.mxu0 %v7777
        %8350 = vmatprep.subr.bf16.mxu0 %v7781
        %8351 = vmatpush1.bf16.msra.mxu0 %v7780
        %8352 = vmatprep.subr.bf16.mxu0 %v7784
        %8353 = vmatpush1.bf16.msra.mxu0 %v7783
        %8354 = vmatprep.subr.bf16.mxu0 %v7787
        %8355 = vmatpush1.bf16.msra.mxu0 %v7786
        %8356 = vmatprep.subr.bf16.mxu0 %v7790
        %8357 = vmatpush1.bf16.msra.mxu0 %v7789
        %8358 = vmatprep.subr.bf16.mxu0 %v7793
        %8359 = vmatpush1.bf16.msra.mxu0 %v7792
        %8360 = vmatprep.subr.bf16.mxu0 %v7796
        %8361 = vmatpush1.bf16.msra.mxu0 %v7795
        %8362 = vmatprep.subr.bf16.mxu0 %v7799
        %8363 = vmatpush1.bf16.msra.mxu0 %v7798
        %8364 = vmatprep.subr.bf16.mxu0 %v7802
        %8365 = vmatpush1.bf16.msra.mxu0 %v7801
        %8366 = vmatprep.subr.bf16.mxu0 %v7805
        %8367 = vmatpush1.bf16.msra.mxu0 %v7804
        %8368 = vmatprep.subr.bf16.mxu0 %v7808
        %8369 = vmatpush1.bf16.msra.mxu0 %v7807
        %8370 = vmatprep.mubr.bf16.mxu0 %v6387
        %8371 = vmatmul.mubr.bf16.gmra.mrb[0].mxu0 %v6386
        %v8372 = vpop.f32.mrb[0].mxu0
        %v8373 = vadd.f32 %v6790, %v8372
        %v8374 = vpop.f32.mrb[0].mxu0
        %v8375 = vadd.f32 %v6794, %v8374
        %v8376 = vpop.f32.mrb[0].mxu0
        %v8377 = vpop.f32.mrb[0].mxu0
        %8378 = vdwg.mxu0
        %8379 = vmatprep.subr.bf16.mxu0 %v7811
        %8380 = vmatpush1.bf16.msra.mxu0 %v7810
        %8381 = vmatprep.subr.bf16.mxu0 %v7814
        %8382 = vmatpush1.bf16.msra.mxu0 %v7813
        %8383 = vmatprep.subr.bf16.mxu0 %v7817
        %8384 = vmatpush1.bf16.msra.mxu0 %v7816
        %8385 = vmatprep.subr.bf16.mxu0 %v7820
        %8386 = vmatpush1.bf16.msra.mxu0 %v7819
        %8387 = vmatprep.subr.bf16.mxu0 %v7823
        %8388 = vmatpush1.bf16.msra.mxu0 %v7822
        %8389 = vmatprep.subr.bf16.mxu0 %v7826
        %8390 = vmatpush1.bf16.msra.mxu0 %v7825
        %8391 = vmatprep.subr.bf16.mxu0 %v7829
        %8392 = vmatpush1.bf16.msra.mxu0 %v7828
        %8393 = vmatprep.subr.bf16.mxu0 %v7832
        %8394 = vmatpush1.bf16.msra.mxu0 %v7831
        %8395 = vmatprep.subr.bf16.mxu0 %v7835
        %8396 = vmatpush1.bf16.msra.mxu0 %v7834
        %8397 = vmatprep.subr.bf16.mxu0 %v7838
        %8398 = vmatpush1.bf16.msra.mxu0 %v7837
        %8399 = vmatprep.subr.bf16.mxu0 %v7841
        %8400 = vmatpush1.bf16.msra.mxu0 %v7840
        %8401 = vmatprep.subr.bf16.mxu0 %v7844
        %8402 = vmatpush1.bf16.msra.mxu0 %v7843
        %8403 = vmatprep.subr.bf16.mxu0 %v7847
        %8404 = vmatpush1.bf16.msra.mxu0 %v7846
        %8405 = vmatprep.subr.bf16.mxu0 %v7850
        %8406 = vmatpush1.bf16.msra.mxu0 %v7849
        %8407 = vmatprep.subr.bf16.mxu0 %v7853
        %8408 = vmatpush1.bf16.msra.mxu0 %v7852
        %8409 = vmatprep.subr.bf16.mxu0 %v7856
        %8410 = vmatpush1.bf16.msra.mxu0 %v7855
        %8411 = vmatprep.mubr.bf16.mxu0 %v6389
        %8412 = vmatmul.mubr.bf16.gmra.mrb[0].mxu0 %v6388
        %v8413 = vpop.f32.mrb[0].mxu0
        %v8414 = vadd.f32 %v8373, %v8413
        %v8415 = vpop.f32.mrb[0].mxu0
        %v8416 = vadd.f32 %v8375, %v8415
        %v8417 = vpop.f32.mrb[0].mxu0
        %v8418 = vpop.f32.mrb[0].mxu0
        %8419 = vdwg.mxu0
        %8420 = vmatprep.subr.bf16.mxu0 %v7859
        %8421 = vmatpush1.bf16.msra.mxu0 %v7858
        %8422 = vmatprep.subr.bf16.mxu0 %v7862
        %8423 = vmatpush1.bf16.msra.mxu0 %v7861
        %8424 = vmatprep.subr.bf16.mxu0 %v7865
        %8425 = vmatpush1.bf16.msra.mxu0 %v7864
        %8426 = vmatprep.subr.bf16.mxu0 %v7868
        %8427 = vmatpush1.bf16.msra.mxu0 %v7867
        %8428 = vmatprep.subr.bf16.mxu0 %v7871
        %8429 = vmatpush1.bf16.msra.mxu0 %v7870
        %8430 = vmatprep.subr.bf16.mxu0 %v7874
        %8431 = vmatpush1.bf16.msra.mxu0 %v7873
        %8432 = vmatprep.subr.bf16.mxu0 %v7877
        %8433 = vmatpush1.bf16.msra.mxu0 %v7876
        %8434 = vmatprep.subr.bf16.mxu0 %v7880
        %8435 = vmatpush1.bf16.msra.mxu0 %v7879
        %8436 = vmatprep.subr.bf16.mxu0 %v7883
        %8437 = vmatpush1.bf16.msra.mxu0 %v7882
        %8438 = vmatprep.subr.bf16.mxu0 %v7886
        %8439 = vmatpush1.bf16.msra.mxu0 %v7885
        %8440 = vmatprep.subr.bf16.mxu0 %v7889
        %8441 = vmatpush1.bf16.msra.mxu0 %v7888
        %8442 = vmatprep.subr.bf16.mxu0 %v7892
        %8443 = vmatpush1.bf16.msra.mxu0 %v7891
        %8444 = vmatprep.subr.bf16.mxu0 %v7895
        %8445 = vmatpush1.bf16.msra.mxu0 %v7894
        %8446 = vmatprep.subr.bf16.mxu0 %v7898
        %8447 = vmatpush1.bf16.msra.mxu0 %v7897
        %8448 = vmatprep.subr.bf16.mxu0 %v7901
        %8449 = vmatpush1.bf16.msra.mxu0 %v7900
        %8450 = vmatprep.subr.bf16.mxu0 %v7904
        %8451 = vmatpush1.bf16.msra.mxu0 %v7903
        %8452 = vmatprep.mubr.bf16.mxu0 %v6391
        %8453 = vmatmul.mubr.bf16.gmra.mrb[0].mxu0 %v6390
        %v8454 = vpop.f32.mrb[0].mxu0
        %v8455 = vadd.f32 %v8414, %v8454
        %v8456 = vpop.f32.mrb[0].mxu0
        %v8457 = vadd.f32 %v8416, %v8456
        %v8458 = vpop.f32.mrb[0].mxu0
        %v8459 = vpop.f32.mrb[0].mxu0
        %8460 = vdwg.mxu0
        %8461 = vmatprep.subr.bf16.mxu0 %v7907
        %8462 = vmatpush1.bf16.msra.mxu0 %v7906
        %8463 = vmatprep.subr.bf16.mxu0 %v7910
        %8464 = vmatpush1.bf16.msra.mxu0 %v7909
        %8465 = vmatprep.subr.bf16.mxu0 %v7913
        %8466 = vmatpush1.bf16.msra.mxu0 %v7912
        %8467 = vmatprep.subr.bf16.mxu0 %v7916
        %8468 = vmatpush1.bf16.msra.mxu0 %v7915
        %8469 = vmatprep.subr.bf16.mxu0 %v7919
        %8470 = vmatpush1.bf16.msra.mxu0 %v7918
        %8471 = vmatprep.subr.bf16.mxu0 %v7922
        %8472 = vmatpush1.bf16.msra.mxu0 %v7921
        %8473 = vmatprep.subr.bf16.mxu0 %v7925
        %8474 = vmatpush1.bf16.msra.mxu0 %v7924
        %8475 = vmatprep.subr.bf16.mxu0 %v7928
        %8476 = vmatpush1.bf16.msra.mxu0 %v7927
        %8477 = vmatprep.subr.bf16.mxu0 %v7931
        %8478 = vmatpush1.bf16.msra.mxu0 %v7930
        %8479 = vmatprep.subr.bf16.mxu0 %v7934
        %8480 = vmatpush1.bf16.msra.mxu0 %v7933
        %8481 = vmatprep.subr.bf16.mxu0 %v7937
        %8482 = vmatpush1.bf16.msra.mxu0 %v7936
        %8483 = vmatprep.subr.bf16.mxu0 %v7940
        %8484 = vmatpush1.bf16.msra.mxu0 %v7939
        %8485 = vmatprep.subr.bf16.mxu0 %v7943
        %8486 = vmatpush1.bf16.msra.mxu0 %v7942
        %8487 = vmatprep.subr.bf16.mxu0 %v7946
        %8488 = vmatpush1.bf16.msra.mxu0 %v7945
        %8489 = vmatprep.subr.bf16.mxu0 %v7949
        %8490 = vmatpush1.bf16.msra.mxu0 %v7948
        %8491 = vmatprep.subr.bf16.mxu0 %v7952
        %8492 = vmatpush1.bf16.msra.mxu0 %v7951
        %8493 = vmatprep.mubr.bf16.mxu0 %v6393
        %8494 = vmatmul.mubr.bf16.gmra.mrb[0].mxu0 %v6392
        %v8495 = vpop.f32.mrb[0].mxu0
        %v8496 = vadd.f32 %v8455, %v8495
        %v8497 = vpop.f32.mrb[0].mxu0
        %v8498 = vadd.f32 %v8457, %v8497
        %v8499 = vpop.f32.mrb[0].mxu0
        %v8500 = vpop.f32.mrb[0].mxu0
        %8501 = vdwg.mxu0
        %8502 = vmatprep.subr.bf16.mxu0 %v7955
        %8503 = vmatpush1.bf16.msra.mxu0 %v7954
        %8504 = vmatprep.subr.bf16.mxu0 %v7958
        %8505 = vmatpush1.bf16.msra.mxu0 %v7957
        %8506 = vmatprep.subr.bf16.mxu0 %v7961
        %8507 = vmatpush1.bf16.msra.mxu0 %v7960
        %8508 = vmatprep.subr.bf16.mxu0 %v7964
        %8509 = vmatpush1.bf16.msra.mxu0 %v7963
        %8510 = vmatprep.subr.bf16.mxu0 %v7967
        %8511 = vmatpush1.bf16.msra.mxu0 %v7966
        %8512 = vmatprep.subr.bf16.mxu0 %v7970
        %8513 = vmatpush1.bf16.msra.mxu0 %v7969
        %8514 = vmatprep.subr.bf16.mxu0 %v7973
        %8515 = vmatpush1.bf16.msra.mxu0 %v7972
        %8516 = vmatprep.subr.bf16.mxu0 %v7976
        %8517 = vmatpush1.bf16.msra.mxu0 %v7975
        %8518 = vmatprep.subr.bf16.mxu0 %v7979
        %8519 = vmatpush1.bf16.msra.mxu0 %v7978
        %8520 = vmatprep.subr.bf16.mxu0 %v7982
        %8521 = vmatpush1.bf16.msra.mxu0 %v7981
        %8522 = vmatprep.subr.bf16.mxu0 %v7985
        %8523 = vmatpush1.bf16.msra.mxu0 %v7984
        %8524 = vmatprep.subr.bf16.mxu0 %v7988
        %8525 = vmatpush1.bf16.msra.mxu0 %v7987
        %8526 = vmatprep.subr.bf16.mxu0 %v7991
        %8527 = vmatpush1.bf16.msra.mxu0 %v7990
        %8528 = vmatprep.subr.bf16.mxu0 %v7994
        %8529 = vmatpush1.bf16.msra.mxu0 %v7993
        %8530 = vmatprep.subr.bf16.mxu0 %v7997
        %8531 = vmatpush1.bf16.msra.mxu0 %v7996
        %8532 = vmatprep.subr.bf16.mxu0 %v8000
        %8533 = vmatpush1.bf16.msra.mxu0 %v7999
        %8534 = vmatprep.mubr.bf16.mxu0 %v6395
        %8535 = vmatmul.mubr.bf16.gmra.mrb[0].mxu0 %v6394
        %v8536 = vpop.f32.mrb[0].mxu0
        %v8537 = vadd.f32 %v8496, %v8536
        %v8538 = vpop.f32.mrb[0].mxu0
        %v8539 = vadd.f32 %v8498, %v8538
        %v8540 = vpop.f32.mrb[0].mxu0
        %v8541 = vpop.f32.mrb[0].mxu0
        %8542 = vdwg.mxu0
        %8543 = vmatprep.subr.bf16.mxu0 %v8003
        %8544 = vmatpush1.bf16.msra.mxu0 %v8002
        %8545 = vmatprep.subr.bf16.mxu0 %v8006
        %8546 = vmatpush1.bf16.msra.mxu0 %v8005
        %8547 = vmatprep.subr.bf16.mxu0 %v8009
        %8548 = vmatpush1.bf16.msra.mxu0 %v8008
        %8549 = vmatprep.subr.bf16.mxu0 %v8012
        %8550 = vmatpush1.bf16.msra.mxu0 %v8011
        %8551 = vmatprep.subr.bf16.mxu0 %v8015
        %8552 = vmatpush1.bf16.msra.mxu0 %v8014
        %8553 = vmatprep.subr.bf16.mxu0 %v8018
        %8554 = vmatpush1.bf16.msra.mxu0 %v8017
        %8555 = vmatprep.subr.bf16.mxu0 %v8021
        %8556 = vmatpush1.bf16.msra.mxu0 %v8020
        %8557 = vmatprep.subr.bf16.mxu0 %v8024
        %8558 = vmatpush1.bf16.msra.mxu0 %v8023
        %8559 = vmatprep.subr.bf16.mxu0 %v8027
        %8560 = vmatpush1.bf16.msra.mxu0 %v8026
        %8561 = vmatprep.subr.bf16.mxu0 %v8030
        %8562 = vmatpush1.bf16.msra.mxu0 %v8029
        %8563 = vmatprep.subr.bf16.mxu0 %v8033
        %8564 = vmatpush1.bf16.msra.mxu0 %v8032
        %8565 = vmatprep.subr.bf16.mxu0 %v8036
        %8566 = vmatpush1.bf16.msra.mxu0 %v8035
        %8567 = vmatprep.subr.bf16.mxu0 %v8039
        %8568 = vmatpush1.bf16.msra.mxu0 %v8038
        %8569 = vmatprep.subr.bf16.mxu0 %v8042
        %8570 = vmatpush1.bf16.msra.mxu0 %v8041
        %8571 = vmatprep.subr.bf16.mxu0 %v8045
        %8572 = vmatpush1.bf16.msra.mxu0 %v8044
        %8573 = vmatprep.subr.bf16.mxu0 %v8048
        %8574 = vmatpush1.bf16.msra.mxu0 %v8047
        %8575 = vmatprep.mubr.bf16.mxu0 %v6397
        %8576 = vmatmul.mubr.bf16.gmra.mrb[0].mxu0 %v6396
        %v8577 = vpop.f32.mrb[0].mxu0
        %v8578 = vadd.f32 %v8537, %v8577
        %v8579 = vpop.f32.mrb[0].mxu0
        %v8580 = vadd.f32 %v8539, %v8579
        %v8581 = vpop.f32.mrb[0].mxu0
        %v8582 = vpop.f32.mrb[0].mxu0
        %8583 = vdwg.mxu0
        %8584 = vmatprep.subr.bf16.mxu0 0
        %8585 = vmatpush1.bf16.msra.mxu0 %v7764
        %8586 = vmatprep.subr.bf16.mxu0 0
        %8587 = vmatpush1.bf16.msra.mxu0 %v7767
        %8588 = vmatprep.subr.bf16.mxu0 0
        %8589 = vmatpush1.bf16.msra.mxu0 %v7770
        %8590 = vmatprep.subr.bf16.mxu0 0
        %8591 = vmatpush1.bf16.msra.mxu0 %v7773
        %8592 = vmatprep.subr.bf16.mxu0 0
        %8593 = vmatpush1.bf16.msra.mxu0 %v7776
        %8594 = vmatprep.subr.bf16.mxu0 0
        %8595 = vmatpush1.bf16.msra.mxu0 %v7779
        %8596 = vmatprep.subr.bf16.mxu0 0
        %8597 = vmatpush1.bf16.msra.mxu0 %v7782
        %8598 = vmatprep.subr.bf16.mxu0 0
        %8599 = vmatpush1.bf16.msra.mxu0 %v7785
        %8600 = vmatprep.subr.bf16.mxu0 0
        %8601 = vmatpush1.bf16.msra.mxu0 %v7788
        %8602 = vmatprep.subr.bf16.mxu0 0
        %8603 = vmatpush1.bf16.msra.mxu0 %v7791
        %8604 = vmatprep.subr.bf16.mxu0 0
        %8605 = vmatpush1.bf16.msra.mxu0 %v7794
        %8606 = vmatprep.subr.bf16.mxu0 0
        %8607 = vmatpush1.bf16.msra.mxu0 %v7797
        %8608 = vmatprep.subr.bf16.mxu0 0
        %8609 = vmatpush1.bf16.msra.mxu0 %v7800
        %8610 = vmatprep.subr.bf16.mxu0 0
        %8611 = vmatpush1.bf16.msra.mxu0 %v7803
        %8612 = vmatprep.subr.bf16.mxu0 0
        %8613 = vmatpush1.bf16.msra.mxu0 %v7806
        %8614 = vmatprep.subr.bf16.mxu0 0
        %8615 = vmatpush1.bf16.msra.mxu0 %v7809
        %8616 = vmatprep.mubr.bf16.mxu0 %v6387
        %8617 = vmatmul.mubr.bf16.gmra.mrb[0].mxu0 %v6386
        %v8618 = vpop.f32.mrb[0].mxu0
        %v8619 = vadd.f32 %v6798, %v8618
        %v8620 = vpop.f32.mrb[0].mxu0
        %v8621 = vpop.f32.mrb[0].mxu0
        %v8622 = vpop.f32.mrb[0].mxu0
        %8623 = vdwg.mxu0
        %8624 = vmatprep.subr.bf16.mxu0 0
        %8625 = vmatpush1.bf16.msra.mxu0 %v7812
        %8626 = vmatprep.subr.bf16.mxu0 0
        %8627 = vmatpush1.bf16.msra.mxu0 %v7815
        %8628 = vmatprep.subr.bf16.mxu0 0
        %8629 = vmatpush1.bf16.msra.mxu0 %v7818
        %8630 = vmatprep.subr.bf16.mxu0 0
        %8631 = vmatpush1.bf16.msra.mxu0 %v7821
        %8632 = vmatprep.subr.bf16.mxu0 0
        %8633 = vmatpush1.bf16.msra.mxu0 %v7824
        %8634 = vmatprep.subr.bf16.mxu0 0
        %8635 = vmatpush1.bf16.msra.mxu0 %v7827
        %8636 = vmatprep.subr.bf16.mxu0 0
        %8637 = vmatpush1.bf16.msra.mxu0 %v7830
        %8638 = vmatprep.subr.bf16.mxu0 0
        %8639 = vmatpush1.bf16.msra.mxu0 %v7833
        %8640 = vmatprep.subr.bf16.mxu0 0
        %8641 = vmatpush1.bf16.msra.mxu0 %v7836
        %8642 = vmatprep.subr.bf16.mxu0 0
        %8643 = vmatpush1.bf16.msra.mxu0 %v7839
        %8644 = vmatprep.subr.bf16.mxu0 0
        %8645 = vmatpush1.bf16.msra.mxu0 %v7842
        %8646 = vmatprep.subr.bf16.mxu0 0
        %8647 = vmatpush1.bf16.msra.mxu0 %v7845
        %8648 = vmatprep.subr.bf16.mxu0 0
        %8649 = vmatpush1.bf16.msra.mxu0 %v7848
        %8650 = vmatprep.subr.bf16.mxu0 0
        %8651 = vmatpush1.bf16.msra.mxu0 %v7851
        %8652 = vmatprep.subr.bf16.mxu0 0
        %8653 = vmatpush1.bf16.msra.mxu0 %v7854
        %8654 = vmatprep.subr.bf16.mxu0 0
        %8655 = vmatpush1.bf16.msra.mxu0 %v7857
        %8656 = vmatprep.mubr.bf16.mxu0 %v6389
        %8657 = vmatmul.mubr.bf16.gmra.mrb[0].mxu0 %v6388
        %v8658 = vpop.f32.mrb[0].mxu0
        %v8659 = vadd.f32 %v8619, %v8658
        %v8660 = vpop.f32.mrb[0].mxu0
        %v8661 = vpop.f32.mrb[0].mxu0
        %v8662 = vpop.f32.mrb[0].mxu0
        %8663 = vdwg.mxu0
        %8664 = vmatprep.subr.bf16.mxu0 0
        %8665 = vmatpush1.bf16.msra.mxu0 %v7860
        %8666 = vmatprep.subr.bf16.mxu0 0
        %8667 = vmatpush1.bf16.msra.mxu0 %v7863
        %8668 = vmatprep.subr.bf16.mxu0 0
        %8669 = vmatpush1.bf16.msra.mxu0 %v7866
        %8670 = vmatprep.subr.bf16.mxu0 0
        %8671 = vmatpush1.bf16.msra.mxu0 %v7869
        %8672 = vmatprep.subr.bf16.mxu0 0
        %8673 = vmatpush1.bf16.msra.mxu0 %v7872
        %8674 = vmatprep.subr.bf16.mxu0 0
        %8675 = vmatpush1.bf16.msra.mxu0 %v7875
        %8676 = vmatprep.subr.bf16.mxu0 0
        %8677 = vmatpush1.bf16.msra.mxu0 %v7878
        %8678 = vmatprep.subr.bf16.mxu0 0
        %8679 = vmatpush1.bf16.msra.mxu0 %v7881
        %8680 = vmatprep.subr.bf16.mxu0 0
        %8681 = vmatpush1.bf16.msra.mxu0 %v7884
        %8682 = vmatprep.subr.bf16.mxu0 0
        %8683 = vmatpush1.bf16.msra.mxu0 %v7887
        %8684 = vmatprep.subr.bf16.mxu0 0
        %8685 = vmatpush1.bf16.msra.mxu0 %v7890
        %8686 = vmatprep.subr.bf16.mxu0 0
        %8687 = vmatpush1.bf16.msra.mxu0 %v7893
        %8688 = vmatprep.subr.bf16.mxu0 0
        %8689 = vmatpush1.bf16.msra.mxu0 %v7896
        %8690 = vmatprep.subr.bf16.mxu0 0
        %8691 = vmatpush1.bf16.msra.mxu0 %v7899
        %8692 = vmatprep.subr.bf16.mxu0 0
        %8693 = vmatpush1.bf16.msra.mxu0 %v7902
        %8694 = vmatprep.subr.bf16.mxu0 0
        %8695 = vmatpush1.bf16.msra.mxu0 %v7905
        %8696 = vmatprep.mubr.bf16.mxu0 %v6391
        %8697 = vmatmul.mubr.bf16.gmra.mrb[0].mxu0 %v6390
        %v8698 = vpop.f32.mrb[0].mxu0
        %v8699 = vadd.f32 %v8659, %v8698
        %v8700 = vpop.f32.mrb[0].mxu0
        %v8701 = vpop.f32.mrb[0].mxu0
        %v8702 = vpop.f32.mrb[0].mxu0
        %8703 = vdwg.mxu0
        %8704 = vmatprep.subr.bf16.mxu0 0
        %8705 = vmatpush1.bf16.msra.mxu0 %v7908
        %8706 = vmatprep.subr.bf16.mxu0 0
        %8707 = vmatpush1.bf16.msra.mxu0 %v7911
        %8708 = vmatprep.subr.bf16.mxu0 0
        %8709 = vmatpush1.bf16.msra.mxu0 %v7914
        %8710 = vmatprep.subr.bf16.mxu0 0
        %8711 = vmatpush1.bf16.msra.mxu0 %v7917
        %8712 = vmatprep.subr.bf16.mxu0 0
        %8713 = vmatpush1.bf16.msra.mxu0 %v7920
        %8714 = vmatprep.subr.bf16.mxu0 0
        %8715 = vmatpush1.bf16.msra.mxu0 %v7923
        %8716 = vmatprep.subr.bf16.mxu0 0
        %8717 = vmatpush1.bf16.msra.mxu0 %v7926
        %8718 = vmatprep.subr.bf16.mxu0 0
        %8719 = vmatpush1.bf16.msra.mxu0 %v7929
        %8720 = vmatprep.subr.bf16.mxu0 0
        %8721 = vmatpush1.bf16.msra.mxu0 %v7932
        %8722 = vmatprep.subr.bf16.mxu0 0
        %8723 = vmatpush1.bf16.msra.mxu0 %v7935
        %8724 = vmatprep.subr.bf16.mxu0 0
        %8725 = vmatpush1.bf16.msra.mxu0 %v7938
        %8726 = vmatprep.subr.bf16.mxu0 0
        %8727 = vmatpush1.bf16.msra.mxu0 %v7941
        %8728 = vmatprep.subr.bf16.mxu0 0
        %8729 = vmatpush1.bf16.msra.mxu0 %v7944
        %8730 = vmatprep.subr.bf16.mxu0 0
        %8731 = vmatpush1.bf16.msra.mxu0 %v7947
        %8732 = vmatprep.subr.bf16.mxu0 0
        %8733 = vmatpush1.bf16.msra.mxu0 %v7950
        %8734 = vmatprep.subr.bf16.mxu0 0
        %8735 = vmatpush1.bf16.msra.mxu0 %v7953
        %8736 = vmatprep.mubr.bf16.mxu0 %v6393
        %8737 = vmatmul.mubr.bf16.gmra.mrb[0].mxu0 %v6392
        %v8738 = vpop.f32.mrb[0].mxu0
        %v8739 = vadd.f32 %v8699, %v8738
        %v8740 = vpop.f32.mrb[0].mxu0
        %v8741 = vpop.f32.mrb[0].mxu0
        %v8742 = vpop.f32.mrb[0].mxu0
        %8743 = vdwg.mxu0
        %8744 = vmatprep.subr.bf16.mxu0 0
        %8745 = vmatpush1.bf16.msra.mxu0 %v7956
        %8746 = vmatprep.subr.bf16.mxu0 0
        %8747 = vmatpush1.bf16.msra.mxu0 %v7959
        %8748 = vmatprep.subr.bf16.mxu0 0
        %8749 = vmatpush1.bf16.msra.mxu0 %v7962
        %8750 = vmatprep.subr.bf16.mxu0 0
        %8751 = vmatpush1.bf16.msra.mxu0 %v7965
        %8752 = vmatprep.subr.bf16.mxu0 0
        %8753 = vmatpush1.bf16.msra.mxu0 %v7968
        %8754 = vmatprep.subr.bf16.mxu0 0
        %8755 = vmatpush1.bf16.msra.mxu0 %v7971
        %8756 = vmatprep.subr.bf16.mxu0 0
        %8757 = vmatpush1.bf16.msra.mxu0 %v7974
        %8758 = vmatprep.subr.bf16.mxu0 0
        %8759 = vmatpush1.bf16.msra.mxu0 %v7977
        %8760 = vmatprep.subr.bf16.mxu0 0
        %8761 = vmatpush1.bf16.msra.mxu0 %v7980
        %8762 = vmatprep.subr.bf16.mxu0 0
        %8763 = vmatpush1.bf16.msra.mxu0 %v7983
        %8764 = vmatprep.subr.bf16.mxu0 0
        %8765 = vmatpush1.bf16.msra.mxu0 %v7986
        %8766 = vmatprep.subr.bf16.mxu0 0
        %8767 = vmatpush1.bf16.msra.mxu0 %v7989
        %8768 = vmatprep.subr.bf16.mxu0 0
        %8769 = vmatpush1.bf16.msra.mxu0 %v7992
        %8770 = vmatprep.subr.bf16.mxu0 0
        %8771 = vmatpush1.bf16.msra.mxu0 %v7995
        %8772 = vmatprep.subr.bf16.mxu0 0
        %8773 = vmatpush1.bf16.msra.mxu0 %v7998
        %8774 = vmatprep.subr.bf16.mxu0 0
        %8775 = vmatpush1.bf16.msra.mxu0 %v8001
        %8776 = vmatprep.mubr.bf16.mxu0 %v6395
        %8777 = vmatmul.mubr.bf16.gmra.mrb[0].mxu0 %v6394
        %v8778 = vpop.f32.mrb[0].mxu0
        %v8779 = vadd.f32 %v8739, %v8778
        %v8780 = vpop.f32.mrb[0].mxu0
        %v8781 = vpop.f32.mrb[0].mxu0
        %v8782 = vpop.f32.mrb[0].mxu0
        %8783 = vdwg.mxu0
        %8784 = vmatprep.subr.bf16.mxu0 0
        %8785 = vmatpush1.bf16.msra.mxu0 %v8004
        %8786 = vmatprep.subr.bf16.mxu0 0
        %8787 = vmatpush1.bf16.msra.mxu0 %v8007
        %8788 = vmatprep.subr.bf16.mxu0 0
        %8789 = vmatpush1.bf16.msra.mxu0 %v8010
        %8790 = vmatprep.subr.bf16.mxu0 0
        %8791 = vmatpush1.bf16.msra.mxu0 %v8013
        %8792 = vmatprep.subr.bf16.mxu0 0
        %8793 = vmatpush1.bf16.msra.mxu0 %v8016
        %8794 = vmatprep.subr.bf16.mxu0 0
        %8795 = vmatpush1.bf16.msra.mxu0 %v8019
        %8796 = vmatprep.subr.bf16.mxu0 0
        %8797 = vmatpush1.bf16.msra.mxu0 %v8022
        %8798 = vmatprep.subr.bf16.mxu0 0
        %8799 = vmatpush1.bf16.msra.mxu0 %v8025
        %8800 = vmatprep.subr.bf16.mxu0 0
        %8801 = vmatpush1.bf16.msra.mxu0 %v8028
        %8802 = vmatprep.subr.bf16.mxu0 0
        %8803 = vmatpush1.bf16.msra.mxu0 %v8031
        %8804 = vmatprep.subr.bf16.mxu0 0
        %8805 = vmatpush1.bf16.msra.mxu0 %v8034
        %8806 = vmatprep.subr.bf16.mxu0 0
        %8807 = vmatpush1.bf16.msra.mxu0 %v8037
        %8808 = vmatprep.subr.bf16.mxu0 0
        %8809 = vmatpush1.bf16.msra.mxu0 %v8040
        %8810 = vmatprep.subr.bf16.mxu0 0
        %8811 = vmatpush1.bf16.msra.mxu0 %v8043
        %8812 = vmatprep.subr.bf16.mxu0 0
        %8813 = vmatpush1.bf16.msra.mxu0 %v8046
        %8814 = vmatprep.subr.bf16.mxu0 0
        %8815 = vmatpush1.bf16.msra.mxu0 %v8049
        %8816 = vmatprep.mubr.bf16.mxu0 %v6397
        %8817 = vmatmul.mubr.bf16.gmra.mrb[0].mxu0 %v6396
        %v8818 = vpop.f32.mrb[0].mxu0
        %v8819 = vadd.f32 %v8779, %v8818
        %v8820 = vpop.f32.mrb[0].mxu0
        %v8821 = vpop.f32.mrb[0].mxu0
        %v8822 = vpop.f32.mrb[0].mxu0
        %8823 = vdwg.mxu0
        %8824 = vst [vmem:[#allocation2] sm:$0xff] %v8578
        %8825 = vst [vmem:[#allocation2 + $0x8] sm:$0xff] %v8580
        %8826 = vst [vmem:[#allocation2 + $0x10] sm:$0xff] %v8819
        %p8827 = scmp.eq.s32.totalorder %s43, 5
        // Predicated region
        $region149: #{bigram_forward.1} parent=83 // pred_check
          %p8828 = pneg %p8827
        $region150: #{bigram_forward.1} parent=83 // pred_check_branch
          %8830 = sbr.rel (%p8828) target = $region152
        $region151: #{bigram_forward.1} parent=83 // pred_region
          %v8831 = vld [vmem:[#allocation24] sm:$0x7]
          %v8832 = vld [vmem:[#allocation26] sm:$0x7]
          %v8833 = vadd.f32 %v8578, %v8580
          %v8834 = vadd.f32 %v8833, %v8819
          %8835 = vadd.xlane.f32.xlu0 %v8834
          %v8836 = vpop.xlane.xlu0 %8835
          %v8837 = vmul.f32 %v8836, %v775
          %v8838 = vsub.f32 %v8578, %v8837
          %v8839 = vsub.f32 %v8580, %v8837
          %v8840 = vsub.f32 %v8819, %v8837
          %v8841 = vmul.f32 %v8838, %v8838
          %v8842 = vmul.f32 %v8839, %v8839
          %v8843 = vmul.f32 %v8840, %v8840
          %v8844 = vadd.f32 %v8841, %v8842
          %v8845 = vadd.f32 %v8844, %v8843
          %8846 = vadd.xlane.f32.xlu0 %v8845
          %v8847 = vpop.xlane.xlu0 %8846
          %v8848 = vmul.f32 %v8847, %v775
          %v8849 = vadd.f32 %v8848, 1e-05
          %v8850 = vrsqrt.pop %v8849
          %v8851 = vmul.f32 %v8838, %v8850
          %v8852 = vmul.f32 %v8839, %v8850
          %v8853 = vmul.f32 %v8840, %v8850
          %v8855 = vlaneseq
          %v8856 = vshrl.u32 %v8855, 7
          %v8857 = vsub.s32 0, %v8856
          %v8858 = vrot.slane %v8831, %v8857
          %v8859 = vlaneseq
          %v8860 = vshrl.u32 %v8859, 7
          %v8861 = vsub.s32 1, %v8860
          %v8862 = vrot.slane %v8831, %v8861
          %v8863 = vlaneseq
          %v8864 = vshrl.u32 %v8863, 7
          %v8865 = vsub.s32 2, %v8864
          %v8866 = vrot.slane %v8831, %v8865
          %v8870 = vmul.f32 %v8851, %v8858
          %v8871 = vmul.f32 %v8852, %v8862
          %v8872 = vmul.f32 %v8853, %v8866
          %v8874 = vlaneseq
          %v8875 = vshrl.u32 %v8874, 7
          %v8876 = vsub.s32 0, %v8875
          %v8877 = vrot.slane %v8832, %v8876
          %v8878 = vlaneseq
          %v8879 = vshrl.u32 %v8878, 7
          %v8880 = vsub.s32 1, %v8879
          %v8881 = vrot.slane %v8832, %v8880
          %v8882 = vlaneseq
          %v8883 = vshrl.u32 %v8882, 7
          %v8884 = vsub.s32 2, %v8883
          %v8885 = vrot.slane %v8832, %v8884
          %v8889 = vadd.f32 %v8870, %v8877
          %v8890 = vadd.f32 %v8871, %v8881
          %v8891 = vadd.f32 %v8872, %v8885
          %v8892 = vpack.c.bf16 %v8889, %v8889
          %v8893 = vpack.c.bf16 %v8890, %v8890
          %v8894 = vpack.c.bf16 %v8891, %v8891
          %v8895 = vld [vmem:[#allocation27] sm:$0xf]
          %v8896 = vld [vmem:[#allocation27 + $0x4] sm:$0xf]
          %v8897 = vld [vmem:[#allocation27 + $0x8] sm:$0xf]
          %v8898 = vld [vmem:[#allocation27 + $0xc] sm:$0xf]
          %v8899 = vld [vmem:[#allocation27 + $0x10] sm:$0xf]
          %v8900 = vld [vmem:[#allocation27 + $0x14] sm:$0xf]
          %v8901 = vld [vmem:[#allocation27 + $0x18] sm:$0xf]
          %v8902 = vld [vmem:[#allocation27 + $0x1c] sm:$0xf]
          %v8903 = vld [vmem:[#allocation27 + $0x20] sm:$0xf]
          %v8904 = vld [vmem:[#allocation27 + $0x24] sm:$0xf]
          %v8905 = vld [vmem:[#allocation27 + $0x28] sm:$0xf]
          %v8906 = vld [vmem:[#allocation27 + $0x2c] sm:$0xf]
          %v8907 = vld [vmem:[#allocation27 + $0x30] sm:$0xf]
          %v8908 = vld [vmem:[#allocation27 + $0x34] sm:$0xf]
          %v8909 = vld [vmem:[#allocation27 + $0x38] sm:$0xf]
          %v8910 = vld [vmem:[#allocation27 + $0x3c] sm:$0xf]
          %v8911 = vld [vmem:[#allocation27 + $0x40] sm:$0xf]
          %v8912 = vld [vmem:[#allocation27 + $0x44] sm:$0xf]
          %v8913 = vld [vmem:[#allocation27 + $0x48] sm:$0xf]
          %v8914 = vld [vmem:[#allocation27 + $0x4c] sm:$0xf]
          %v8915 = vld [vmem:[#allocation27 + $0x50] sm:$0xf]
          %v8916 = vld [vmem:[#allocation27 + $0x54] sm:$0xf]
          %v8917 = vld [vmem:[#allocation27 + $0x58] sm:$0xf]
          %v8918 = vld [vmem:[#allocation27 + $0x5c] sm:$0xf]
          %v8919 = vld [vmem:[#allocation27 + $0x60] sm:$0xf]
          %v8920 = vld [vmem:[#allocation27 + $0x64] sm:$0xf]
          %v8921 = vld [vmem:[#allocation27 + $0x68] sm:$0xf]
          %v8922 = vld [vmem:[#allocation27 + $0x6c] sm:$0xf]
          %v8923 = vld [vmem:[#allocation27 + $0x70] sm:$0xf]
          %v8924 = vld [vmem:[#allocation27 + $0x74] sm:$0xf]
          %v8925 = vld [vmem:[#allocation27 + $0x78] sm:$0xf]
          %v8926 = vld [vmem:[#allocation27 + $0x7c] sm:$0xf]
          %v8927 = vld [vmem:[#allocation27 + $0x80] sm:$0xf]
          %v8928 = vld [vmem:[#allocation27 + $0x84] sm:$0xf]
          %v8929 = vld [vmem:[#allocation27 + $0x88] sm:$0xf]
          %v8930 = vld [vmem:[#allocation27 + $0x8c] sm:$0xf]
          %v8931 = vld [vmem:[#allocation27 + $0x90] sm:$0xf]
          %v8932 = vld [vmem:[#allocation27 + $0x94] sm:$0xf]
          %v8933 = vld [vmem:[#allocation27 + $0x98] sm:$0xf]
          %v8934 = vld [vmem:[#allocation27 + $0x9c] sm:$0xf]
          %v8935 = vld [vmem:[#allocation27 + $0xa0] sm:$0xf]
          %v8936 = vld [vmem:[#allocation27 + $0xa4] sm:$0xf]
          %v8937 = vld [vmem:[#allocation27 + $0xa8] sm:$0xf]
          %v8938 = vld [vmem:[#allocation27 + $0xac] sm:$0xf]
          %v8939 = vld [vmem:[#allocation27 + $0xb0] sm:$0xf]
          %v8940 = vld [vmem:[#allocation27 + $0xb4] sm:$0xf]
          %v8941 = vld [vmem:[#allocation27 + $0xb8] sm:$0xf]
          %v8942 = vld [vmem:[#allocation27 + $0xbc] sm:$0xf]
          %v8943 = vld [vmem:[#allocation29] sm:$0x1]
          %v8945 = vlaneseq
          %v8946 = vshrl.u32 %v8945, 7
          %v8947 = vsub.s32 0, %v8946
          %v8948 = vrot.slane %v8943, %v8947
          %v8998 = vunpack.c.l.b16 %v8895
          %v8999 = vunpack.c.l.b16 %v8896
          %v9000 = vunpack.c.l.b16 %v8897
          %v9001 = vunpack.c.l.b16 %v8898
          %v9002 = vunpack.c.l.b16 %v8899
          %v9003 = vunpack.c.l.b16 %v8900
          %v9004 = vunpack.c.l.b16 %v8901
          %v9005 = vunpack.c.l.b16 %v8902
          %v9006 = vunpack.c.l.b16 %v8903
          %v9007 = vunpack.c.l.b16 %v8904
          %v9008 = vunpack.c.l.b16 %v8905
          %v9009 = vunpack.c.l.b16 %v8906
          %v9010 = vunpack.c.l.b16 %v8907
          %v9011 = vunpack.c.l.b16 %v8908
          %v9012 = vunpack.c.l.b16 %v8909
          %v9013 = vunpack.c.l.b16 %v8910
          %v9014 = vunpack.c.l.b16 %v8911
          %v9015 = vunpack.c.l.b16 %v8912
          %v9016 = vunpack.c.l.b16 %v8913
          %v9017 = vunpack.c.l.b16 %v8914
          %v9018 = vunpack.c.l.b16 %v8915
          %v9019 = vunpack.c.l.b16 %v8916
          %v9020 = vunpack.c.l.b16 %v8917
          %v9021 = vunpack.c.l.b16 %v8918
          %v9022 = vunpack.c.l.b16 %v8919
          %v9023 = vunpack.c.l.b16 %v8920
          %v9024 = vunpack.c.l.b16 %v8921
          %v9025 = vunpack.c.l.b16 %v8922
          %v9026 = vunpack.c.l.b16 %v8923
          %v9027 = vunpack.c.l.b16 %v8924
          %v9028 = vunpack.c.l.b16 %v8925
          %v9029 = vunpack.c.l.b16 %v8926
          %v9030 = vunpack.c.l.b16 %v8927
          %v9031 = vunpack.c.l.b16 %v8928
          %v9032 = vunpack.c.l.b16 %v8929
          %v9033 = vunpack.c.l.b16 %v8930
          %v9034 = vunpack.c.l.b16 %v8931
          %v9035 = vunpack.c.l.b16 %v8932
          %v9036 = vunpack.c.l.b16 %v8933
          %v9037 = vunpack.c.l.b16 %v8934
          %v9038 = vunpack.c.l.b16 %v8935
          %v9039 = vunpack.c.l.b16 %v8936
          %v9040 = vunpack.c.l.b16 %v8937
          %v9041 = vunpack.c.l.b16 %v8938
          %v9042 = vunpack.c.l.b16 %v8939
          %v9043 = vunpack.c.l.b16 %v8940
          %v9044 = vunpack.c.l.b16 %v8941
          %v9045 = vunpack.c.l.b16 %v8942
          %v9046 = vpack.c.b16 %v8999, %v8998
          %v9047 = vpack.c.b16 %v9001, %v9000
          %v9048 = vpack.c.b16 %v9003, %v9002
          %v9049 = vpack.c.b16 %v9005, %v9004
          %v9050 = vpack.c.b16 %v9007, %v9006
          %v9051 = vpack.c.b16 %v9009, %v9008
          %v9052 = vpack.c.b16 %v9011, %v9010
          %v9053 = vpack.c.b16 %v9013, %v9012
          %v9054 = vpack.c.b16 %v9015, %v9014
          %v9055 = vpack.c.b16 %v9017, %v9016
          %v9056 = vpack.c.b16 %v9019, %v9018
          %v9057 = vpack.c.b16 %v9021, %v9020
          %v9058 = vpack.c.b16 %v9023, %v9022
          %v9059 = vpack.c.b16 %v9025, %v9024
          %v9060 = vpack.c.b16 %v9027, %v9026
          %v9061 = vpack.c.b16 %v9029, %v9028
          %v9062 = vpack.c.b16 %v9031, %v9030
          %v9063 = vpack.c.b16 %v9033, %v9032
          %v9064 = vpack.c.b16 %v9035, %v9034
          %v9065 = vpack.c.b16 %v9037, %v9036
          %v9066 = vpack.c.b16 %v9039, %v9038
          %v9067 = vpack.c.b16 %v9041, %v9040
          %v9068 = vpack.c.b16 %v9043, %v9042
          %v9069 = vpack.c.b16 %v9045, %v9044
          %9094 = vmatprep.subr.bf16.mxu0 0
          %9095 = vmatpush1.bf16.msra.mxu0 %v9046
          %9096 = vmatprep.subr.bf16.mxu0 0
          %9097 = vmatpush1.bf16.msra.mxu0 %v9047
          %9098 = vmatprep.subr.bf16.mxu0 0
          %9099 = vmatpush1.bf16.msra.mxu0 %v9048
          %9100 = vmatprep.subr.bf16.mxu0 0
          %9101 = vmatpush1.bf16.msra.mxu0 %v9049
          %9102 = vmatprep.subr.bf16.mxu0 0
          %9103 = vmatpush1.bf16.msra.mxu0 %v9050
          %9104 = vmatprep.subr.bf16.mxu0 0
          %9105 = vmatpush1.bf16.msra.mxu0 %v9051
          %9106 = vmatprep.subr.bf16.mxu0 0
          %9107 = vmatpush1.bf16.msra.mxu0 %v9052
          %9108 = vmatprep.subr.bf16.mxu0 0
          %9109 = vmatpush1.bf16.msra.mxu0 %v9053
          %9110 = vmatprep.subr.bf16.mxu0 0
          %9111 = vmatpush1.bf16.msra.mxu0 %v9054
          %9112 = vmatprep.subr.bf16.mxu0 0
          %9113 = vmatpush1.bf16.msra.mxu0 %v9055
          %9114 = vmatprep.subr.bf16.mxu0 0
          %9115 = vmatpush1.bf16.msra.mxu0 %v9056
          %9116 = vmatprep.subr.bf16.mxu0 0
          %9117 = vmatpush1.bf16.msra.mxu0 %v9057
          %9118 = vmatprep.subr.bf16.mxu0 0
          %9119 = vmatpush1.bf16.msra.mxu0 %v9058
          %9120 = vmatprep.subr.bf16.mxu0 0
          %9121 = vmatpush1.bf16.msra.mxu0 %v9059
          %9122 = vmatprep.subr.bf16.mxu0 0
          %9123 = vmatpush1.bf16.msra.mxu0 %v9060
          %9124 = vmatprep.subr.bf16.mxu0 0
          %9125 = vmatpush1.bf16.msra.mxu0 %v9061
          %9126 = vmatprep.mubr.bf16.mxu0 %v8893
          %9127 = vmatmul.mubr.bf16.gmra.mrb[0].mxu0 %v8892
          %v9128 = vpop.f32.mrb[0].mxu0
          %v9129 = vadd.f32 %v8948, %v9128
          %v9130 = vpop.f32.mrb[0].mxu0
          %v9131 = vpop.f32.mrb[0].mxu0
          %v9132 = vpop.f32.mrb[0].mxu0
          %9133 = vdwg.mxu0
          %9134 = vmatprep.subr.bf16.mxu0 0
          %9135 = vmatpush1.bf16.msra.mxu0 %v9062
          %9136 = vmatprep.subr.bf16.mxu0 0
          %9137 = vmatpush1.bf16.msra.mxu0 %v9063
          %9138 = vmatprep.subr.bf16.mxu0 0
          %9139 = vmatpush1.bf16.msra.mxu0 %v9064
          %9140 = vmatprep.subr.bf16.mxu0 0
          %9141 = vmatpush1.bf16.msra.mxu0 %v9065
          %9142 = vmatprep.subr.bf16.mxu0 0
          %9143 = vmatpush1.bf16.msra.mxu0 %v9066
          %9144 = vmatprep.subr.bf16.mxu0 0
          %9145 = vmatpush1.bf16.msra.mxu0 %v9067
          %9146 = vmatprep.subr.bf16.mxu0 0
          %9147 = vmatpush1.bf16.msra.mxu0 %v9068
          %9148 = vmatprep.subr.bf16.mxu0 0
          %9149 = vmatpush1.bf16.msra.mxu0 %v9069
          %9150 = vmatprep.subr.bf16.mxu0 0
          %9151 = vmatpush1.bf16.msra.mxu0 0
          %9152 = vmatprep.subr.bf16.mxu0 0
          %9153 = vmatpush1.bf16.msra.mxu0 0
          %9154 = vmatprep.subr.bf16.mxu0 0
          %9155 = vmatpush1.bf16.msra.mxu0 0
          %9156 = vmatprep.subr.bf16.mxu0 0
          %9157 = vmatpush1.bf16.msra.mxu0 0
          %9158 = vmatprep.subr.bf16.mxu0 0
          %9159 = vmatpush1.bf16.msra.mxu0 0
          %9160 = vmatprep.subr.bf16.mxu0 0
          %9161 = vmatpush1.bf16.msra.mxu0 0
          %9162 = vmatprep.subr.bf16.mxu0 0
          %9163 = vmatpush1.bf16.msra.mxu0 0
          %9164 = vmatprep.subr.bf16.mxu0 0
          %9165 = vmatpush1.bf16.msra.mxu0 0
          %9166 = vmatprep.mubr.bf16.mxu0 0
          %9167 = vmatmul.mubr.bf16.gmra.mrb[0].mxu0 %v8894
          %v9168 = vpop.f32.mrb[0].mxu0
          %v9169 = vadd.f32 %v9129, %v9168
          %v9170 = vpop.f32.mrb[0].mxu0
          %v9171 = vpop.f32.mrb[0].mxu0
          %v9172 = vpop.f32.mrb[0].mxu0
          %9173 = vdwg.mxu0
          %9174 = vst [vmem:[%s738] sm:$0xff] %v9169
        $region152: #{bigram_forward.1} parent=83 // pred_fallthru
          _
        %s9175 = sand.u32 %s399, 1
        %s9176 = scalar_lea.sflag [#allocation8], %s9175
        %s9177 = sand.u32 %s399, 1
        %s9178 = smul.addr %s9177, 8
        %s9179 = scalar_lea.vmem [#allocation30], %s9178
        // Predicated region
        $region153: #{bigram_forward.1} parent=83 // pred_check
          %p9180 = pneg %p409
        $region154: #{bigram_forward.1} parent=83 // pred_check_branch
          %9182 = sbr.rel (%p9180) target = $region156
        $region155: #{bigram_forward.1} parent=83 // pred_region
          %s9184 = ssub.s32 128, 128
          %9185 = vsyncadd %s9176, %s9184
          %s9186 = smul.addr %s42, 128
          %s9187 = scalar_lea.hbm %s16, %s9186
          %s9189 = sshll.u32 %s9179, 4
          %s9190 = int_to_ptr.vmem [resolvable:$true] %s9189
          %9192 = dma.vmem_to_hbm [thread:$0]  %s9190, 128, %s9187, %s9176
        $region156: #{bigram_forward.1} parent=83 // pred_fallthru
          _
      $region84: #{bigram_forward.1} parent=5 // pred_fallthru
        _
      %p9193 = scmp.le.s32.totalorder 2, %s33
      // Predicated region
      $region157: #{bigram_forward.1} parent=5 // pred_check
        %p9194 = pneg %p9193
      $region158: #{bigram_forward.1} parent=5 // pred_check_branch
        %9196 = sbr.rel (%p9194) target = $region160
      $region159: #{bigram_forward.1} parent=5 // pred_region
        %s9197 = ssub.s32 %s33, 2
        // Predicated region
        $region161: #{bigram_forward.1} parent=159 // pred_check
          %p9198 = pneg %p415
        $region162: #{bigram_forward.1} parent=159 // pred_check_branch
          %9200 = sbr.rel (%p9198) target = $region164
        $region163: #{bigram_forward.1} parent=159 // pred_region
          %s9201 = sand.u32 %s400, 1
          %s9202 = scalar_lea.sflag [#allocation8], %s9201
          %s9203 = sand.u32 %s400, 1
          %s9204 = smul.addr %s9203, 8
          %s9205 = scalar_lea.vmem [#allocation30], %s9204
          %9206 = dma.done %s9202, 128
        $region164: #{bigram_forward.1} parent=159 // pred_fallthru
          _
      $region160: #{bigram_forward.1} parent=5 // pred_fallthru
        _
    $region6: #{bigram_forward.1} parent=1 // loop_footer
      %s37 = sadd.s32 1, %s33
    $region7: #{bigram_forward.1} parent=1 // loop_footer_branch
      %32 = sbr.rel target = $region3
    $region8: #{bigram_forward.1} parent=1 // loop_exit
      _
    %9207 = vsyncpa [#allocation7], 1
    %s9208 = scalar_lea.sflag [#allocation7], 1
    %9209 = vsyncpa %s9208, 1
    %9210 = vsyncpa [#allocation10], 1
    %9211 = vsyncpa [#allocation13], 1
    %9212 = vsyncpa [#allocation16], 1
    %9213 = vsyncpa [#allocation19], 1
    %9214 = vsyncpa [#allocation22], 1
    %9215 = vsyncpa [#allocation25], 1
    %9216 = vsyncpa [#allocation28], 1
    %9217 = vsyncpa [#allocation8], 1
    %s9218 = scalar_lea.sflag [#allocation8], 1
    %9219 = vsyncpa %s9218, 1

</llo_original>
